<compile_context>
chip_gen: v7x
topology: tpu7x:2x2x1
jax: 0.10.0
libtpu: 0.0.40
codegen_flags: <defaults>
</compile_context>

<pallas_src>
import jax
import jax.numpy as jnp
from jax.experimental import pallas as pl
from jax.experimental.pallas import tpu as pltpu

TB_MAX = 64  # images per grid step (multiple of 16)


def _round_up(x, m):
    return ((x + m - 1) // m) * m


# ----------------------------- fused kernel --------------------------------

def _mnist_net_kernel(p_ref, w1_ref, b1_ref, w2_ref, b2_ref,
                      fw1_ref, fb1_ref, fw2_ref, fb2_ref, out_ref):
    f32, bf16 = jnp.float32, jnp.bfloat16
    tb = out_ref.shape[0]

    # ---- conv1: single K=100 matmul ---------------------------------------
    # patches block (144, tb, 100): rows ordered (h1*12+w1, b); lanes are
    # (pool phase p in 2x2) x (5x5 tap).  The block-diagonal weight puts each
    # pool phase's 20 output channels in its own lane group.
    lhs1 = p_ref[...].reshape(144 * tb, 100)                        # bf16
    c1 = jnp.dot(lhs1, w1_ref[...], preferred_element_type=f32)     # (144*tb, 80)

    # ---- maxpool1 (2x2): max over the 4 phase lane-groups ------------------
    m1 = jnp.maximum(jnp.maximum(c1[:, 0:20], c1[:, 20:40]),
                     jnp.maximum(c1[:, 40:60], c1[:, 60:80]))
    act1 = jnp.maximum(m1 + b1_ref[...], 0.0).astype(bf16)          # (144*tb, 20)
    act1 = act1.reshape(12, 12, tb, 20)                             # (h1, w1, b, c)

    # ---- conv2: one K=500 matmul; lhs = concat of the 25 tap windows -------
    taps = [act1[i:i + 8, j:j + 8] for i in range(5) for j in range(5)]
    lhs2 = jnp.concatenate(taps, axis=-1).reshape(64 * tb, 500)     # rows (oh,ow,b)
    c2 = jnp.dot(lhs2, w2_ref[...], preferred_element_type=f32)     # (64*tb, 50)

    # ---- maxpool2 (2x2): two leading-axis maxes ----------------------------
    c2 = c2.reshape(4, 2, 8 * tb, 50)                               # (oh2, dh, ow*b, c)
    m2 = jnp.maximum(c2[:, 0], c2[:, 1])                            # pool over oh parity
    m2 = m2.reshape(4, 4, 2, tb, 50)                                # (oh2, ow2, dw, b, c)
    m2 = jnp.maximum(m2[:, :, 0], m2[:, :, 1])                      # pool over ow parity
    act2 = jnp.maximum(m2 + b2_ref[...], 0.0).astype(bf16)          # (4, 4, tb, 50)

    # ---- fc1: one K=800 matmul (PyTorch's (c,h,w) flatten folded into fw1) --
    lhs3 = jnp.concatenate([act2[h, w] for h in range(4) for w in range(4)],
                           axis=-1)                                  # (tb, 800)
    hfc1 = jnp.dot(lhs3, fw1_ref[...], preferred_element_type=f32)
    hfc1 = jnp.maximum(hfc1 + fb1_ref[...], 0.0)                     # (tb, 500) f32

    # ---- fc2 (output padded to 128 lanes -> unmasked stores) ---------------
    out = jnp.dot(hfc1.astype(bf16), fw2_ref[...],
                  preferred_element_type=f32) + fb2_ref[...]
    out_ref[...] = out.astype(out_ref.dtype)                         # (tb, 128)


def _fused_net_call(patches, kp, tb, npad):
    return pl.pallas_call(
        _mnist_net_kernel,
        grid=(npad // tb,),
        out_shape=jax.ShapeDtypeStruct((npad, 128), jnp.float32),
        in_specs=[
            pl.BlockSpec((144, tb, 100), lambda nb: (0, nb, 0)),
            pl.BlockSpec((100, 80), lambda nb: (0, 0)),
            pl.BlockSpec((1, 20), lambda nb: (0, 0)),
            pl.BlockSpec((500, 50), lambda nb: (0, 0)),
            pl.BlockSpec((1, 50), lambda nb: (0, 0)),
            pl.BlockSpec((800, 500), lambda nb: (0, 0)),
            pl.BlockSpec((1, 500), lambda nb: (0, 0)),
            pl.BlockSpec((500, 128), lambda nb: (0, 0)),
            pl.BlockSpec((1, 128), lambda nb: (0, 0)),
        ],
        out_specs=pl.BlockSpec((tb, 128), lambda nb: (nb, 0)),
        compiler_params=pltpu.CompilerParams(
            dimension_semantics=("parallel",),
            vmem_limit_bytes=48 * 1024 * 1024,
        ),
    )(patches, kp["w1"], kp["b1"], kp["w2"], kp["b2"],
      kp["fw1"], kp["fb1"], kp["fw2"], kp["fb2"])


# -------------------------- parameter preparation ---------------------------

def init_params(key):
    """PyTorch-layout parameters (deterministic)."""
    ks = jax.random.split(key, 8)
    s = 0.05
    return {
        "conv1_w": jax.random.normal(ks[0], (20, 1, 5, 5), jnp.float32) * s,
        "conv1_b": jax.random.normal(ks[1], (20,), jnp.float32) * s,
        "conv2_w": jax.random.normal(ks[2], (50, 20, 5, 5), jnp.float32) * s,
        "conv2_b": jax.random.normal(ks[3], (50,), jnp.float32) * s,
        "fc1_w": jax.random.normal(ks[4], (500, 800), jnp.float32) * s,   # (out, in)
        "fc1_b": jax.random.normal(ks[5], (500,), jnp.float32) * s,
        "fc2_w": jax.random.normal(ks[6], (10, 500), jnp.float32) * s,    # (out, in)
        "fc2_b": jax.random.normal(ks[7], (10,), jnp.float32) * s,
    }


def prepare_kernel_params(params):
    """One-time re-layout to the kernel's resident bf16 MXU formats."""
    bf16, f32 = jnp.bfloat16, jnp.float32
    # conv1 taps -> (25, 20), then block-diagonal over the 4 pool phases so the
    # fused conv1+pool1 is a single K=100 matmul with 80 output lanes.
    w1t = jnp.transpose(params["conv1_w"], (2, 3, 1, 0)).reshape(25, 20)
    w1bd = jnp.kron(jnp.eye(4, dtype=f32), w1t)                      # (100, 80)
    # conv2 -> ((kh*5+kw)*20 + cin, cout) = (500, 50)
    w2 = jnp.transpose(params["conv2_w"], (2, 3, 1, 0)).reshape(500, 50)
    # fc1: fold PyTorch's NCHW flatten (c*16 + h*4 + w) into (h*200 + w*50 + c).
    fw1 = (params["fc1_w"].T.reshape(50, 4, 4, 500)
           .transpose(1, 2, 0, 3).reshape(800, 500))
    # fc2: transpose + zero-pad the 10 output lanes to 128 (lane-dense stores).
    fw2 = jnp.zeros((500, 128), f32).at[:, :10].set(params["fc2_w"].T)
    fb2 = jnp.zeros((1, 128), f32).at[0, :10].set(params["fc2_b"])
    return {
        "w1": w1bd.astype(bf16), "b1": params["conv1_b"].reshape(1, 20).astype(f32),
        "w2": w2.astype(bf16),   "b2": params["conv2_b"].reshape(1, 50).astype(f32),
        "fw1": fw1.astype(bf16), "fb1": params["fc1_b"].reshape(1, 500).astype(f32),
        "fw2": fw2.astype(bf16), "fb2": fb2,
    }


# ------------------------------ forward pass --------------------------------

def net_forward(kparams, x_nchw):
    """x_nchw: (N, 1, 28, 28) float32 -> logits (N, 10) float32."""
    n = x_nchw.shape[0]
    tb = min(TB_MAX, _round_up(n, 16))
    npad = _round_up(n, tb)
    x = x_nchw[:, 0, :, :]                                    # (N, 28, 28)
    if npad != n:
        x = jnp.pad(x, ((0, npad - n), (0, 0), (0, 0)))

    # conv1 im2col with the 2x2 pool phases folded into the lane axis:
    #   p[h1*12 + w1, b, (di*2+dj)*25 + i*5 + j] = x[b, 2*h1+di+i, 2*w1+dj+j]
    # Batch sits on the middle (contiguously sliced) axis so each grid step's
    # DMA is 144 contiguous runs of tb*200 bytes.
    xt = jnp.transpose(x, (1, 2, 0))                          # (28, 28, Np) — tiny
    cols = []
    for di in range(2):
        for dj in range(2):
            for i in range(5):
                for j in range(5):
                    cols.append(xt[di + i:di + i + 23:2, dj + j:dj + j + 23:2, :])
    p = jnp.stack(cols, axis=-1).reshape(144, npad, 100).astype(jnp.bfloat16)
    # TODO(synk): build this im2col in-kernel from raw (tb, 28, 28) images to
    # cut patch HBM traffic ~7x (the unaligned window gather is the hard part).

    logits = _fused_net_call(p, kparams, tb, npad)
    return logits[:n, :10]


# ------------------------------ f32 reference -------------------------------

def reference_forward(params, x):
    hi = jax.lax.Precision.HIGHEST
    y = jax.lax.conv_general_dilated(
        x, params["conv1_w"], (1, 1), "VALID",
        dimension_numbers=("NCHW", "OIHW", "NCHW"), precision=hi)
    y = jax.nn.relu(y + params["conv1_b"][None, :, None, None])
    n, c, h, w = y.shape
    y = y.reshape(n, c, h // 2, 2, w // 2, 2).max(axis=(3, 5))
    y = jax.lax.conv_general_dilated(
        y, params["conv2_w"], (1, 1), "VALID",
        dimension_numbers=("NCHW", "OIHW", "NCHW"), precision=hi)
    y = jax.nn.relu(y + params["conv2_b"][None, :, None, None])
    n, c, h, w = y.shape
    y = y.reshape(n, c, h // 2, 2, w // 2, 2).max(axis=(3, 5))
    y = y.reshape(n, 800)
    y = jax.nn.relu(jnp.dot(y, params["fc1_w"].T, precision=hi) + params["fc1_b"])
    return jnp.dot(y, params["fc2_w"].T, precision=hi) + params["fc2_b"]


if __name__ == "__main__":
    key = jax.random.PRNGKey(0)
    pkey, xkey = jax.random.split(key)
    params = init_params(pkey)
    kparams = prepare_kernel_params(params)

    # MNIST-shaped input (fc1 hard-codes 28x28 via 4*4*50), small batch.
    x = jax.random.normal(xkey, (2, 1, 28, 28), jnp.float32)

    logits = jax.jit(net_forward)(kparams, x)
    jax.block_until_ready(logits)
    assert logits.shape == (2, 10) and logits.dtype == jnp.float32

    ref = reference_forward(params, x)
    err = float(jnp.max(jnp.abs(logits - ref)))
    assert err < 5e-2, f"kernel/reference mismatch: max abs err = {err}"
    print("KERNEL_OK")
</pallas_src>

<mosaic_0001>
module attributes {stable_mosaic.version = 11 : i64} {
  func.func @_mnist_net_kernel(%arg0: i32, %arg1: memref<144x16x100xbf16, #tpu.memory_space<vmem>>, %arg2: memref<100x80xbf16, #tpu.memory_space<vmem>>, %arg3: memref<1x20xf32, #tpu.memory_space<vmem>>, %arg4: memref<500x50xbf16, #tpu.memory_space<vmem>>, %arg5: memref<1x50xf32, #tpu.memory_space<vmem>>, %arg6: memref<800x500xbf16, #tpu.memory_space<vmem>>, %arg7: memref<1x500xf32, #tpu.memory_space<vmem>>, %arg8: memref<500x128xbf16, #tpu.memory_space<vmem>>, %arg9: memref<1x128xf32, #tpu.memory_space<vmem>>, %arg10: memref<16x128xf32, #tpu.memory_space<vmem>>) attributes {dimension_semantics = [#tpu.dimension_semantics<parallel>], iteration_bounds = array<i64: 1>, scalar_prefetch = 0 : i64, scratch_operands = 0 : i64, tpu.core_type = #tpu.core_type<tc>, window_params = [{transform_indices = @transform_0, window_bounds = array<i64: 144, 16, 100>}, {pipeline_mode = #tpu.pipeline_mode<synchronous>, transform_indices = @transform_1, window_bounds = array<i64: 100, 80>}, {pipeline_mode = #tpu.pipeline_mode<synchronous>, transform_indices = @transform_2, window_bounds = array<i64: 1, 20>}, {pipeline_mode = #tpu.pipeline_mode<synchronous>, transform_indices = @transform_3, window_bounds = array<i64: 500, 50>}, {pipeline_mode = #tpu.pipeline_mode<synchronous>, transform_indices = @transform_4, window_bounds = array<i64: 1, 50>}, {pipeline_mode = #tpu.pipeline_mode<synchronous>, transform_indices = @transform_5, window_bounds = array<i64: 800, 500>}, {pipeline_mode = #tpu.pipeline_mode<synchronous>, transform_indices = @transform_6, window_bounds = array<i64: 1, 500>}, {pipeline_mode = #tpu.pipeline_mode<synchronous>, transform_indices = @transform_7, window_bounds = array<i64: 500, 128>}, {pipeline_mode = #tpu.pipeline_mode<synchronous>, transform_indices = @transform_8, window_bounds = array<i64: 1, 128>}, {transform_indices = @transform_9, window_bounds = array<i64: 16, 128>}]} {
    %c0 = arith.constant 0 : index
    %c0_0 = arith.constant 0 : index
    %c0_1 = arith.constant 0 : index
    %0 = vector.load %arg1[%c0, %c0_0, %c0_1] : memref<144x16x100xbf16, #tpu.memory_space<vmem>>, vector<144x16x100xbf16>
    %1 = vector.shape_cast %0 : vector<144x16x100xbf16> to vector<2304x100xbf16>
    %c0_2 = arith.constant 0 : index
    %c0_3 = arith.constant 0 : index
    %2 = vector.load %arg2[%c0_2, %c0_3] : memref<100x80xbf16, #tpu.memory_space<vmem>>, vector<100x80xbf16>
    %cst = arith.constant dense<0.000000e+00> : vector<2304x80xf32>
    %3 = tpu.matmul %1, %2, %cst {dimension_numbers = #tpu.dot_dimension_numbers<[1], [0], [0], [1], [0, 0, 1, 1], [], []>} : vector<2304x100xbf16>, vector<100x80xbf16>, vector<2304x80xf32> -> vector<2304x80xf32>
    %4 = vector.extract_strided_slice %3 {offsets = [0, 0], sizes = [2304, 20], strides = [1, 1]} : vector<2304x80xf32> to vector<2304x20xf32>
    %5 = vector.extract_strided_slice %3 {offsets = [0, 20], sizes = [2304, 20], strides = [1, 1]} : vector<2304x80xf32> to vector<2304x20xf32>
    %6 = arith.maximumf %4, %5 : vector<2304x20xf32>
    %7 = vector.extract_strided_slice %3 {offsets = [0, 40], sizes = [2304, 20], strides = [1, 1]} : vector<2304x80xf32> to vector<2304x20xf32>
    %8 = vector.extract_strided_slice %3 {offsets = [0, 60], sizes = [2304, 20], strides = [1, 1]} : vector<2304x80xf32> to vector<2304x20xf32>
    %9 = arith.maximumf %7, %8 : vector<2304x20xf32>
    %10 = arith.maximumf %6, %9 : vector<2304x20xf32>
    %c0_4 = arith.constant 0 : index
    %c0_5 = arith.constant 0 : index
    %11 = vector.load %arg3[%c0_4, %c0_5] : memref<1x20xf32, #tpu.memory_space<vmem>>, vector<1x20xf32>
    %12 = vector.broadcast %11 : vector<1x20xf32> to vector<2304x20xf32>
    %13 = arith.addf %10, %12 : vector<2304x20xf32>
    %cst_6 = arith.constant 0.000000e+00 : f32
    %14 = vector.broadcast %cst_6 : f32 to vector<2304x20xf32>
    %15 = arith.maximumf %13, %14 : vector<2304x20xf32>
    %16 = arith.truncf %15 : vector<2304x20xf32> to vector<2304x20xbf16>
    %17 = vector.shape_cast %16 : vector<2304x20xbf16> to vector<12x12x16x20xbf16>
    %18 = vector.extract_strided_slice %17 {offsets = [0, 0, 0, 0], sizes = [8, 8, 16, 20], strides = [1, 1, 1, 1]} : vector<12x12x16x20xbf16> to vector<8x8x16x20xbf16>
    %19 = vector.extract_strided_slice %17 {offsets = [0, 1, 0, 0], sizes = [8, 8, 16, 20], strides = [1, 1, 1, 1]} : vector<12x12x16x20xbf16> to vector<8x8x16x20xbf16>
    %20 = vector.extract_strided_slice %17 {offsets = [0, 2, 0, 0], sizes = [8, 8, 16, 20], strides = [1, 1, 1, 1]} : vector<12x12x16x20xbf16> to vector<8x8x16x20xbf16>
    %21 = vector.extract_strided_slice %17 {offsets = [0, 3, 0, 0], sizes = [8, 8, 16, 20], strides = [1, 1, 1, 1]} : vector<12x12x16x20xbf16> to vector<8x8x16x20xbf16>
    %22 = vector.extract_strided_slice %17 {offsets = [0, 4, 0, 0], sizes = [8, 8, 16, 20], strides = [1, 1, 1, 1]} : vector<12x12x16x20xbf16> to vector<8x8x16x20xbf16>
    %23 = vector.extract_strided_slice %17 {offsets = [1, 0, 0, 0], sizes = [8, 8, 16, 20], strides = [1, 1, 1, 1]} : vector<12x12x16x20xbf16> to vector<8x8x16x20xbf16>
    %24 = vector.extract_strided_slice %17 {offsets = [1, 1, 0, 0], sizes = [8, 8, 16, 20], strides = [1, 1, 1, 1]} : vector<12x12x16x20xbf16> to vector<8x8x16x20xbf16>
    %25 = vector.extract_strided_slice %17 {offsets = [1, 2, 0, 0], sizes = [8, 8, 16, 20], strides = [1, 1, 1, 1]} : vector<12x12x16x20xbf16> to vector<8x8x16x20xbf16>
    %26 = vector.extract_strided_slice %17 {offsets = [1, 3, 0, 0], sizes = [8, 8, 16, 20], strides = [1, 1, 1, 1]} : vector<12x12x16x20xbf16> to vector<8x8x16x20xbf16>
    %27 = vector.extract_strided_slice %17 {offsets = [1, 4, 0, 0], sizes = [8, 8, 16, 20], strides = [1, 1, 1, 1]} : vector<12x12x16x20xbf16> to vector<8x8x16x20xbf16>
    %28 = vector.extract_strided_slice %17 {offsets = [2, 0, 0, 0], sizes = [8, 8, 16, 20], strides = [1, 1, 1, 1]} : vector<12x12x16x20xbf16> to vector<8x8x16x20xbf16>
    %29 = vector.extract_strided_slice %17 {offsets = [2, 1, 0, 0], sizes = [8, 8, 16, 20], strides = [1, 1, 1, 1]} : vector<12x12x16x20xbf16> to vector<8x8x16x20xbf16>
    %30 = vector.extract_strided_slice %17 {offsets = [2, 2, 0, 0], sizes = [8, 8, 16, 20], strides = [1, 1, 1, 1]} : vector<12x12x16x20xbf16> to vector<8x8x16x20xbf16>
    %31 = vector.extract_strided_slice %17 {offsets = [2, 3, 0, 0], sizes = [8, 8, 16, 20], strides = [1, 1, 1, 1]} : vector<12x12x16x20xbf16> to vector<8x8x16x20xbf16>
    %32 = vector.extract_strided_slice %17 {offsets = [2, 4, 0, 0], sizes = [8, 8, 16, 20], strides = [1, 1, 1, 1]} : vector<12x12x16x20xbf16> to vector<8x8x16x20xbf16>
    %33 = vector.extract_strided_slice %17 {offsets = [3, 0, 0, 0], sizes = [8, 8, 16, 20], strides = [1, 1, 1, 1]} : vector<12x12x16x20xbf16> to vector<8x8x16x20xbf16>
    %34 = vector.extract_strided_slice %17 {offsets = [3, 1, 0, 0], sizes = [8, 8, 16, 20], strides = [1, 1, 1, 1]} : vector<12x12x16x20xbf16> to vector<8x8x16x20xbf16>
    %35 = vector.extract_strided_slice %17 {offsets = [3, 2, 0, 0], sizes = [8, 8, 16, 20], strides = [1, 1, 1, 1]} : vector<12x12x16x20xbf16> to vector<8x8x16x20xbf16>
    %36 = vector.extract_strided_slice %17 {offsets = [3, 3, 0, 0], sizes = [8, 8, 16, 20], strides = [1, 1, 1, 1]} : vector<12x12x16x20xbf16> to vector<8x8x16x20xbf16>
    %37 = vector.extract_strided_slice %17 {offsets = [3, 4, 0, 0], sizes = [8, 8, 16, 20], strides = [1, 1, 1, 1]} : vector<12x12x16x20xbf16> to vector<8x8x16x20xbf16>
    %38 = vector.extract_strided_slice %17 {offsets = [4, 0, 0, 0], sizes = [8, 8, 16, 20], strides = [1, 1, 1, 1]} : vector<12x12x16x20xbf16> to vector<8x8x16x20xbf16>
    %39 = vector.extract_strided_slice %17 {offsets = [4, 1, 0, 0], sizes = [8, 8, 16, 20], strides = [1, 1, 1, 1]} : vector<12x12x16x20xbf16> to vector<8x8x16x20xbf16>
    %40 = vector.extract_strided_slice %17 {offsets = [4, 2, 0, 0], sizes = [8, 8, 16, 20], strides = [1, 1, 1, 1]} : vector<12x12x16x20xbf16> to vector<8x8x16x20xbf16>
    %41 = vector.extract_strided_slice %17 {offsets = [4, 3, 0, 0], sizes = [8, 8, 16, 20], strides = [1, 1, 1, 1]} : vector<12x12x16x20xbf16> to vector<8x8x16x20xbf16>
    %42 = vector.extract_strided_slice %17 {offsets = [4, 4, 0, 0], sizes = [8, 8, 16, 20], strides = [1, 1, 1, 1]} : vector<12x12x16x20xbf16> to vector<8x8x16x20xbf16>
    %43 = tpu.concatenate %18, %19, %20, %21, %22, %23, %24, %25, %26, %27, %28, %29, %30, %31, %32, %33 in 3 : vector<8x8x16x20xbf16>, vector<8x8x16x20xbf16>, vector<8x8x16x20xbf16>, vector<8x8x16x20xbf16>, vector<8x8x16x20xbf16>, vector<8x8x16x20xbf16>, vector<8x8x16x20xbf16>, vector<8x8x16x20xbf16>, vector<8x8x16x20xbf16>, vector<8x8x16x20xbf16>, vector<8x8x16x20xbf16>, vector<8x8x16x20xbf16>, vector<8x8x16x20xbf16>, vector<8x8x16x20xbf16>, vector<8x8x16x20xbf16>, vector<8x8x16x20xbf16> -> vector<8x8x16x320xbf16>
    %44 = tpu.concatenate %34, %35, %36, %37, %38, %39, %40, %41, %42 in 3 : vector<8x8x16x20xbf16>, vector<8x8x16x20xbf16>, vector<8x8x16x20xbf16>, vector<8x8x16x20xbf16>, vector<8x8x16x20xbf16>, vector<8x8x16x20xbf16>, vector<8x8x16x20xbf16>, vector<8x8x16x20xbf16>, vector<8x8x16x20xbf16> -> vector<8x8x16x180xbf16>
    %45 = tpu.concatenate %43, %44 in 3 : vector<8x8x16x320xbf16>, vector<8x8x16x180xbf16> -> vector<8x8x16x500xbf16>
    %46 = vector.shape_cast %45 : vector<8x8x16x500xbf16> to vector<1024x500xbf16>
    %c0_7 = arith.constant 0 : index
    %c0_8 = arith.constant 0 : index
    %47 = vector.load %arg4[%c0_7, %c0_8] : memref<500x50xbf16, #tpu.memory_space<vmem>>, vector<500x50xbf16>
    %cst_9 = arith.constant dense<0.000000e+00> : vector<1024x50xf32>
    %48 = tpu.matmul %46, %47, %cst_9 {dimension_numbers = #tpu.dot_dimension_numbers<[1], [0], [0], [1], [0, 0, 1, 1], [], []>} : vector<1024x500xbf16>, vector<500x50xbf16>, vector<1024x50xf32> -> vector<1024x50xf32>
    %49 = vector.shape_cast %48 : vector<1024x50xf32> to vector<4x2x128x50xf32>
    %50 = vector.extract_strided_slice %49 {offsets = [0, 0, 0, 0], sizes = [4, 1, 128, 50], strides = [1, 1, 1, 1]} : vector<4x2x128x50xf32> to vector<4x1x128x50xf32>
    %51 = vector.shape_cast %50 : vector<4x1x128x50xf32> to vector<4x128x50xf32>
    %52 = vector.extract_strided_slice %49 {offsets = [0, 1, 0, 0], sizes = [4, 1, 128, 50], strides = [1, 1, 1, 1]} : vector<4x2x128x50xf32> to vector<4x1x128x50xf32>
    %53 = vector.shape_cast %52 : vector<4x1x128x50xf32> to vector<4x128x50xf32>
    %54 = arith.maximumf %51, %53 : vector<4x128x50xf32>
    %55 = vector.shape_cast %54 : vector<4x128x50xf32> to vector<4x4x2x16x50xf32>
    %56 = vector.extract_strided_slice %55 {offsets = [0, 0, 0, 0, 0], sizes = [4, 4, 1, 16, 50], strides = [1, 1, 1, 1, 1]} : vector<4x4x2x16x50xf32> to vector<4x4x1x16x50xf32>
    %57 = vector.shape_cast %56 : vector<4x4x1x16x50xf32> to vector<4x4x16x50xf32>
    %58 = vector.extract_strided_slice %55 {offsets = [0, 0, 1, 0, 0], sizes = [4, 4, 1, 16, 50], strides = [1, 1, 1, 1, 1]} : vector<4x4x2x16x50xf32> to vector<4x4x1x16x50xf32>
    %59 = vector.shape_cast %58 : vector<4x4x1x16x50xf32> to vector<4x4x16x50xf32>
    %60 = arith.maximumf %57, %59 : vector<4x4x16x50xf32>
    %c0_10 = arith.constant 0 : index
    %c0_11 = arith.constant 0 : index
    %61 = vector.load %arg5[%c0_10, %c0_11] : memref<1x50xf32, #tpu.memory_space<vmem>>, vector<1x50xf32>
    %62 = vector.shape_cast %61 : vector<1x50xf32> to vector<1x1x1x50xf32>
    %63 = vector.broadcast %62 : vector<1x1x1x50xf32> to vector<4x4x16x50xf32>
    %64 = arith.addf %60, %63 : vector<4x4x16x50xf32>
    %cst_12 = arith.constant 0.000000e+00 : f32
    %65 = vector.broadcast %cst_12 : f32 to vector<4x4x16x50xf32>
    %66 = arith.maximumf %64, %65 : vector<4x4x16x50xf32>
    %67 = arith.truncf %66 : vector<4x4x16x50xf32> to vector<4x4x16x50xbf16>
    %68 = vector.extract_strided_slice %67 {offsets = [0, 0, 0, 0], sizes = [1, 1, 16, 50], strides = [1, 1, 1, 1]} : vector<4x4x16x50xbf16> to vector<1x1x16x50xbf16>
    %69 = vector.shape_cast %68 : vector<1x1x16x50xbf16> to vector<16x50xbf16>
    %70 = vector.extract_strided_slice %67 {offsets = [0, 1, 0, 0], sizes = [1, 1, 16, 50], strides = [1, 1, 1, 1]} : vector<4x4x16x50xbf16> to vector<1x1x16x50xbf16>
    %71 = vector.shape_cast %70 : vector<1x1x16x50xbf16> to vector<16x50xbf16>
    %72 = vector.extract_strided_slice %67 {offsets = [0, 2, 0, 0], sizes = [1, 1, 16, 50], strides = [1, 1, 1, 1]} : vector<4x4x16x50xbf16> to vector<1x1x16x50xbf16>
    %73 = vector.shape_cast %72 : vector<1x1x16x50xbf16> to vector<16x50xbf16>
    %74 = vector.extract_strided_slice %67 {offsets = [0, 3, 0, 0], sizes = [1, 1, 16, 50], strides = [1, 1, 1, 1]} : vector<4x4x16x50xbf16> to vector<1x1x16x50xbf16>
    %75 = vector.shape_cast %74 : vector<1x1x16x50xbf16> to vector<16x50xbf16>
    %76 = vector.extract_strided_slice %67 {offsets = [1, 0, 0, 0], sizes = [1, 1, 16, 50], strides = [1, 1, 1, 1]} : vector<4x4x16x50xbf16> to vector<1x1x16x50xbf16>
    %77 = vector.shape_cast %76 : vector<1x1x16x50xbf16> to vector<16x50xbf16>
    %78 = vector.extract_strided_slice %67 {offsets = [1, 1, 0, 0], sizes = [1, 1, 16, 50], strides = [1, 1, 1, 1]} : vector<4x4x16x50xbf16> to vector<1x1x16x50xbf16>
    %79 = vector.shape_cast %78 : vector<1x1x16x50xbf16> to vector<16x50xbf16>
    %80 = vector.extract_strided_slice %67 {offsets = [1, 2, 0, 0], sizes = [1, 1, 16, 50], strides = [1, 1, 1, 1]} : vector<4x4x16x50xbf16> to vector<1x1x16x50xbf16>
    %81 = vector.shape_cast %80 : vector<1x1x16x50xbf16> to vector<16x50xbf16>
    %82 = vector.extract_strided_slice %67 {offsets = [1, 3, 0, 0], sizes = [1, 1, 16, 50], strides = [1, 1, 1, 1]} : vector<4x4x16x50xbf16> to vector<1x1x16x50xbf16>
    %83 = vector.shape_cast %82 : vector<1x1x16x50xbf16> to vector<16x50xbf16>
    %84 = vector.extract_strided_slice %67 {offsets = [2, 0, 0, 0], sizes = [1, 1, 16, 50], strides = [1, 1, 1, 1]} : vector<4x4x16x50xbf16> to vector<1x1x16x50xbf16>
    %85 = vector.shape_cast %84 : vector<1x1x16x50xbf16> to vector<16x50xbf16>
    %86 = vector.extract_strided_slice %67 {offsets = [2, 1, 0, 0], sizes = [1, 1, 16, 50], strides = [1, 1, 1, 1]} : vector<4x4x16x50xbf16> to vector<1x1x16x50xbf16>
    %87 = vector.shape_cast %86 : vector<1x1x16x50xbf16> to vector<16x50xbf16>
    %88 = vector.extract_strided_slice %67 {offsets = [2, 2, 0, 0], sizes = [1, 1, 16, 50], strides = [1, 1, 1, 1]} : vector<4x4x16x50xbf16> to vector<1x1x16x50xbf16>
    %89 = vector.shape_cast %88 : vector<1x1x16x50xbf16> to vector<16x50xbf16>
    %90 = vector.extract_strided_slice %67 {offsets = [2, 3, 0, 0], sizes = [1, 1, 16, 50], strides = [1, 1, 1, 1]} : vector<4x4x16x50xbf16> to vector<1x1x16x50xbf16>
    %91 = vector.shape_cast %90 : vector<1x1x16x50xbf16> to vector<16x50xbf16>
    %92 = vector.extract_strided_slice %67 {offsets = [3, 0, 0, 0], sizes = [1, 1, 16, 50], strides = [1, 1, 1, 1]} : vector<4x4x16x50xbf16> to vector<1x1x16x50xbf16>
    %93 = vector.shape_cast %92 : vector<1x1x16x50xbf16> to vector<16x50xbf16>
    %94 = vector.extract_strided_slice %67 {offsets = [3, 1, 0, 0], sizes = [1, 1, 16, 50], strides = [1, 1, 1, 1]} : vector<4x4x16x50xbf16> to vector<1x1x16x50xbf16>
    %95 = vector.shape_cast %94 : vector<1x1x16x50xbf16> to vector<16x50xbf16>
    %96 = vector.extract_strided_slice %67 {offsets = [3, 2, 0, 0], sizes = [1, 1, 16, 50], strides = [1, 1, 1, 1]} : vector<4x4x16x50xbf16> to vector<1x1x16x50xbf16>
    %97 = vector.shape_cast %96 : vector<1x1x16x50xbf16> to vector<16x50xbf16>
    %98 = vector.extract_strided_slice %67 {offsets = [3, 3, 0, 0], sizes = [1, 1, 16, 50], strides = [1, 1, 1, 1]} : vector<4x4x16x50xbf16> to vector<1x1x16x50xbf16>
    %99 = vector.shape_cast %98 : vector<1x1x16x50xbf16> to vector<16x50xbf16>
    %100 = tpu.concatenate %69, %71, %73, %75, %77, %79, %81, %83, %85, %87, %89, %91, %93, %95, %97, %99 in 1 : vector<16x50xbf16>, vector<16x50xbf16>, vector<16x50xbf16>, vector<16x50xbf16>, vector<16x50xbf16>, vector<16x50xbf16>, vector<16x50xbf16>, vector<16x50xbf16>, vector<16x50xbf16>, vector<16x50xbf16>, vector<16x50xbf16>, vector<16x50xbf16>, vector<16x50xbf16>, vector<16x50xbf16>, vector<16x50xbf16>, vector<16x50xbf16> -> vector<16x800xbf16>
    %c0_13 = arith.constant 0 : index
    %c0_14 = arith.constant 0 : index
    %101 = vector.load %arg6[%c0_13, %c0_14] : memref<800x500xbf16, #tpu.memory_space<vmem>>, vector<800x500xbf16>
    %cst_15 = arith.constant dense<0.000000e+00> : vector<16x500xf32>
    %102 = tpu.matmul %100, %101, %cst_15 {dimension_numbers = #tpu.dot_dimension_numbers<[1], [0], [0], [1], [0, 0, 1, 1], [], []>} : vector<16x800xbf16>, vector<800x500xbf16>, vector<16x500xf32> -> vector<16x500xf32>
    %c0_16 = arith.constant 0 : index
    %c0_17 = arith.constant 0 : index
    %103 = vector.load %arg7[%c0_16, %c0_17] : memref<1x500xf32, #tpu.memory_space<vmem>>, vector<1x500xf32>
    %104 = vector.broadcast %103 : vector<1x500xf32> to vector<16x500xf32>
    %105 = arith.addf %102, %104 : vector<16x500xf32>
    %cst_18 = arith.constant 0.000000e+00 : f32
    %106 = vector.broadcast %cst_18 : f32 to vector<16x500xf32>
    %107 = arith.maximumf %105, %106 : vector<16x500xf32>
    %108 = arith.truncf %107 : vector<16x500xf32> to vector<16x500xbf16>
    %c0_19 = arith.constant 0 : index
    %c0_20 = arith.constant 0 : index
    %109 = vector.load %arg8[%c0_19, %c0_20] : memref<500x128xbf16, #tpu.memory_space<vmem>>, vector<500x128xbf16>
    %cst_21 = arith.constant dense<0.000000e+00> : vector<16x128xf32>
    %110 = tpu.matmul %108, %109, %cst_21 {dimension_numbers = #tpu.dot_dimension_numbers<[1], [0], [0], [1], [0, 0, 1, 1], [], []>} : vector<16x500xbf16>, vector<500x128xbf16>, vector<16x128xf32> -> vector<16x128xf32>
    %c0_22 = arith.constant 0 : index
    %c0_23 = arith.constant 0 : index
    %111 = vector.load %arg9[%c0_22, %c0_23] : memref<1x128xf32, #tpu.memory_space<vmem>>, vector<1x128xf32>
    %112 = vector.broadcast %111 : vector<1x128xf32> to vector<16x128xf32>
    %113 = arith.addf %110, %112 : vector<16x128xf32>
    %c0_24 = arith.constant 0 : index
    %c0_25 = arith.constant 0 : index
    %114 = vector.load %arg10[%c0_24, %c0_25] : memref<16x128xf32, #tpu.memory_space<vmem>>, vector<16x128xf32>
    tpu.vector_store %arg10[%c0_24, %c0_25], %113 {strides = array<i32>} : memref<16x128xf32, #tpu.memory_space<vmem>>, vector<16x128xf32>,
    return
  }
  func.func @transform_0(%arg0: i32) -> (i32, i32, i32) {
    %c0_i32 = arith.constant 0 : i32
    %c0_i32_0 = arith.constant 0 : i32
    %c0_i32_1 = arith.constant 0 : i32
    return %c0_i32, %arg0, %c0_i32_0 : i32, i32, i32
  }
  func.func @transform_1(%arg0: i32) -> (i32, i32) {
    %c0_i32 = arith.constant 0 : i32
    %c0_i32_0 = arith.constant 0 : i32
    %c0_i32_1 = arith.constant 0 : i32
    return %c0_i32, %c0_i32_0 : i32, i32
  }
  func.func @transform_2(%arg0: i32) -> (i32, i32) {
    %c0_i32 = arith.constant 0 : i32
    %c0_i32_0 = arith.constant 0 : i32
    %c0_i32_1 = arith.constant 0 : i32
    return %c0_i32, %c0_i32_0 : i32, i32
  }
  func.func @transform_3(%arg0: i32) -> (i32, i32) {
    %c0_i32 = arith.constant 0 : i32
    %c0_i32_0 = arith.constant 0 : i32
    %c0_i32_1 = arith.constant 0 : i32
    return %c0_i32, %c0_i32_0 : i32, i32
  }
  func.func @transform_4(%arg0: i32) -> (i32, i32) {
    %c0_i32 = arith.constant 0 : i32
    %c0_i32_0 = arith.constant 0 : i32
    %c0_i32_1 = arith.constant 0 : i32
    return %c0_i32, %c0_i32_0 : i32, i32
  }
  func.func @transform_5(%arg0: i32) -> (i32, i32) {
    %c0_i32 = arith.constant 0 : i32
    %c0_i32_0 = arith.constant 0 : i32
    %c0_i32_1 = arith.constant 0 : i32
    return %c0_i32, %c0_i32_0 : i32, i32
  }
  func.func @transform_6(%arg0: i32) -> (i32, i32) {
    %c0_i32 = arith.constant 0 : i32
    %c0_i32_0 = arith.constant 0 : i32
    %c0_i32_1 = arith.constant 0 : i32
    return %c0_i32, %c0_i32_0 : i32, i32
  }
  func.func @transform_7(%arg0: i32) -> (i32, i32) {
    %c0_i32 = arith.constant 0 : i32
    %c0_i32_0 = arith.constant 0 : i32
    %c0_i32_1 = arith.constant 0 : i32
    return %c0_i32, %c0_i32_0 : i32, i32
  }
  func.func @transform_8(%arg0: i32) -> (i32, i32) {
    %c0_i32 = arith.constant 0 : i32
    %c0_i32_0 = arith.constant 0 : i32
    %c0_i32_1 = arith.constant 0 : i32
    return %c0_i32, %c0_i32_0 : i32, i32
  }
  func.func @transform_9(%arg0: i32) -> (i32, i32) {
    %c0_i32 = arith.constant 0 : i32
    %c0_i32_0 = arith.constant 0 : i32
    return %arg0, %c0_i32 : i32, i32
  }
}

</mosaic_0001>

<llo_original>
// kernel: net_forward.1
$region0: #{net_forward.1}
  #allocation0 [shape = 'u32[]', space=smem, size = 0x4, offset = 0x4, fixed_abs, tag = 'smem constant byte address 0x4 - core index']
  #allocation1 [shape = 'u32[144,128]{1,0:T(1,128)}', space=vmem, size = 0x12000, scoped, tag = 'internal scratch']
  %s0 = inlined_call_operand.vmem [shape: bf16[144,16,100], index: 0, kind: input, shape index: {}]
  %s1 = inlined_call_operand.vmem [shape: bf16[100,80], index: 1, kind: input, shape index: {}]
  %s2 = inlined_call_operand.vmem [shape: f32[1,20], index: 2, kind: input, shape index: {}]
  %s3 = inlined_call_operand.vmem [shape: bf16[500,50], index: 3, kind: input, shape index: {}]
  %s4 = inlined_call_operand.vmem [shape: f32[1,50], index: 4, kind: input, shape index: {}]
  %s5 = inlined_call_operand.vmem [shape: bf16[800,500], index: 5, kind: input, shape index: {}]
  %s6 = inlined_call_operand.vmem [shape: f32[1,500], index: 6, kind: input, shape index: {}]
  %s7 = inlined_call_operand.vmem [shape: bf16[500,128], index: 7, kind: input, shape index: {}]
  %s8 = inlined_call_operand.vmem [shape: f32[1,128], index: 8, kind: input, shape index: {}]
  %s9 = inlined_call_operand.vmem [shape: f32[16,128], index: 9, kind: output, shape index: {}]
  %s10 = sld [smem:[#allocation0]]
  $region46: #{net_forward.1} parent=0
    _
  %s12 = ssub.s32 1, %s10
  %s13 = scalar_select 0, %s12, %s10
  // Predicated region
  $region2: #{net_forward.1} parent=0 // pred_check
    _
  $region3: #{net_forward.1} parent=0 // pred_check_branch
    %15 = sbr.rel (0) target = $region5
  $region4: #{net_forward.1} parent=0 // pred_region
    _
  $region5: #{net_forward.1} parent=0 // pred_fallthru
    _
  // Predicated region
  $region6: #{net_forward.1} parent=0 // pred_check
    _
  $region7: #{net_forward.1} parent=0 // pred_check_branch
    %17 = sbr.rel (0) target = $region9
  $region8: #{net_forward.1} parent=0 // pred_region
    _
  $region9: #{net_forward.1} parent=0 // pred_fallthru
    _
  // Predicated region
  $region10: #{net_forward.1} parent=0 // pred_check
    _
  $region11: #{net_forward.1} parent=0 // pred_check_branch
    %19 = sbr.rel (0) target = $region13
  $region12: #{net_forward.1} parent=0 // pred_region
    _
  $region13: #{net_forward.1} parent=0 // pred_fallthru
    _
  // Predicated region
  $region14: #{net_forward.1} parent=0 // pred_check
    _
  $region15: #{net_forward.1} parent=0 // pred_check_branch
    %21 = sbr.rel (0) target = $region17
  $region16: #{net_forward.1} parent=0 // pred_region
    _
  $region17: #{net_forward.1} parent=0 // pred_fallthru
    _
  // Predicated region
  $region18: #{net_forward.1} parent=0 // pred_check
    _
  $region19: #{net_forward.1} parent=0 // pred_check_branch
    %23 = sbr.rel (0) target = $region21
  $region20: #{net_forward.1} parent=0 // pred_region
    _
  $region21: #{net_forward.1} parent=0 // pred_fallthru
    _
  // Predicated region
  $region22: #{net_forward.1} parent=0 // pred_check
    _
  $region23: #{net_forward.1} parent=0 // pred_check_branch
    %25 = sbr.rel (0) target = $region25
  $region24: #{net_forward.1} parent=0 // pred_region
    _
  $region25: #{net_forward.1} parent=0 // pred_fallthru
    _
  // Predicated region
  $region26: #{net_forward.1} parent=0 // pred_check
    _
  $region27: #{net_forward.1} parent=0 // pred_check_branch
    %27 = sbr.rel (0) target = $region29
  $region28: #{net_forward.1} parent=0 // pred_region
    _
  $region29: #{net_forward.1} parent=0 // pred_fallthru
    _
  // Predicated region
  $region30: #{net_forward.1} parent=0 // pred_check
    _
  $region31: #{net_forward.1} parent=0 // pred_check_branch
    %29 = sbr.rel (0) target = $region33
  $region32: #{net_forward.1} parent=0 // pred_region
    _
  $region33: #{net_forward.1} parent=0 // pred_fallthru
    _
  // Predicated region
  $region34: #{net_forward.1} parent=0 // pred_check
    _
  $region35: #{net_forward.1} parent=0 // pred_check_branch
    %31 = sbr.rel (0) target = $region37
  $region36: #{net_forward.1} parent=0 // pred_region
    _
  $region37: #{net_forward.1} parent=0 // pred_fallthru
    _
  %v33 = vld [vmem:[%s0] sm:$0xf]
  %v34 = vld [vmem:[%s0 + $0x4] sm:$0xf]
  %v35 = vld [vmem:[%s0 + $0x8] sm:$0xf]
  %v36 = vld [vmem:[%s0 + $0xc] sm:$0xf]
  %v37 = vld [vmem:[%s0 + $0x10] sm:$0xf]
  %v38 = vld [vmem:[%s0 + $0x14] sm:$0xf]
  %v39 = vld [vmem:[%s0 + $0x18] sm:$0xf]
  %v40 = vld [vmem:[%s0 + $0x1c] sm:$0xf]
  %v41 = vld [vmem:[%s0 + $0x20] sm:$0xf]
  %v42 = vld [vmem:[%s0 + $0x24] sm:$0xf]
  %v43 = vld [vmem:[%s0 + $0x28] sm:$0xf]
  %v44 = vld [vmem:[%s0 + $0x2c] sm:$0xf]
  %v45 = vld [vmem:[%s0 + $0x30] sm:$0xf]
  %v46 = vld [vmem:[%s0 + $0x34] sm:$0xf]
  %v47 = vld [vmem:[%s0 + $0x38] sm:$0xf]
  %v48 = vld [vmem:[%s0 + $0x3c] sm:$0xf]
  %v49 = vld [vmem:[%s0 + $0x40] sm:$0xf]
  %v50 = vld [vmem:[%s0 + $0x44] sm:$0xf]
  %v51 = vld [vmem:[%s0 + $0x48] sm:$0xf]
  %v52 = vld [vmem:[%s0 + $0x4c] sm:$0xf]
  %v53 = vld [vmem:[%s0 + $0x50] sm:$0xf]
  %v54 = vld [vmem:[%s0 + $0x54] sm:$0xf]
  %v55 = vld [vmem:[%s0 + $0x58] sm:$0xf]
  %v56 = vld [vmem:[%s0 + $0x5c] sm:$0xf]
  %v57 = vld [vmem:[%s0 + $0x60] sm:$0xf]
  %v58 = vld [vmem:[%s0 + $0x64] sm:$0xf]
  %v59 = vld [vmem:[%s0 + $0x68] sm:$0xf]
  %v60 = vld [vmem:[%s0 + $0x6c] sm:$0xf]
  %v61 = vld [vmem:[%s0 + $0x70] sm:$0xf]
  %v62 = vld [vmem:[%s0 + $0x74] sm:$0xf]
  %v63 = vld [vmem:[%s0 + $0x78] sm:$0xf]
  %v64 = vld [vmem:[%s0 + $0x7c] sm:$0xf]
  %v65 = vld [vmem:[%s0 + $0x80] sm:$0xf]
  %v66 = vld [vmem:[%s0 + $0x84] sm:$0xf]
  %v67 = vld [vmem:[%s0 + $0x88] sm:$0xf]
  %v68 = vld [vmem:[%s0 + $0x8c] sm:$0xf]
  %v69 = vld [vmem:[%s0 + $0x90] sm:$0xf]
  %v70 = vld [vmem:[%s0 + $0x94] sm:$0xf]
  %v71 = vld [vmem:[%s0 + $0x98] sm:$0xf]
  %v72 = vld [vmem:[%s0 + $0x9c] sm:$0xf]
  %v73 = vld [vmem:[%s0 + $0xa0] sm:$0xf]
  %v74 = vld [vmem:[%s0 + $0xa4] sm:$0xf]
  %v75 = vld [vmem:[%s0 + $0xa8] sm:$0xf]
  %v76 = vld [vmem:[%s0 + $0xac] sm:$0xf]
  %v77 = vld [vmem:[%s0 + $0xb0] sm:$0xf]
  %v78 = vld [vmem:[%s0 + $0xb4] sm:$0xf]
  %v79 = vld [vmem:[%s0 + $0xb8] sm:$0xf]
  %v80 = vld [vmem:[%s0 + $0xbc] sm:$0xf]
  %v81 = vld [vmem:[%s0 + $0xc0] sm:$0xf]
  %v82 = vld [vmem:[%s0 + $0xc4] sm:$0xf]
  %v83 = vld [vmem:[%s0 + $0xc8] sm:$0xf]
  %v84 = vld [vmem:[%s0 + $0xcc] sm:$0xf]
  %v85 = vld [vmem:[%s0 + $0xd0] sm:$0xf]
  %v86 = vld [vmem:[%s0 + $0xd4] sm:$0xf]
  %v87 = vld [vmem:[%s0 + $0xd8] sm:$0xf]
  %v88 = vld [vmem:[%s0 + $0xdc] sm:$0xf]
  %v89 = vld [vmem:[%s0 + $0xe0] sm:$0xf]
  %v90 = vld [vmem:[%s0 + $0xe4] sm:$0xf]
  %v91 = vld [vmem:[%s0 + $0xe8] sm:$0xf]
  %v92 = vld [vmem:[%s0 + $0xec] sm:$0xf]
  %v93 = vld [vmem:[%s0 + $0xf0] sm:$0xf]
  %v94 = vld [vmem:[%s0 + $0xf4] sm:$0xf]
  %v95 = vld [vmem:[%s0 + $0xf8] sm:$0xf]
  %v96 = vld [vmem:[%s0 + $0xfc] sm:$0xf]
  %v97 = vld [vmem:[%s0 + $0x100] sm:$0xf]
  %v98 = vld [vmem:[%s0 + $0x104] sm:$0xf]
  %v99 = vld [vmem:[%s0 + $0x108] sm:$0xf]
  %v100 = vld [vmem:[%s0 + $0x10c] sm:$0xf]
  %v101 = vld [vmem:[%s0 + $0x110] sm:$0xf]
  %v102 = vld [vmem:[%s0 + $0x114] sm:$0xf]
  %v103 = vld [vmem:[%s0 + $0x118] sm:$0xf]
  %v104 = vld [vmem:[%s0 + $0x11c] sm:$0xf]
  %v105 = vld [vmem:[%s0 + $0x120] sm:$0xf]
  %v106 = vld [vmem:[%s0 + $0x124] sm:$0xf]
  %v107 = vld [vmem:[%s0 + $0x128] sm:$0xf]
  %v108 = vld [vmem:[%s0 + $0x12c] sm:$0xf]
  %v109 = vld [vmem:[%s0 + $0x130] sm:$0xf]
  %v110 = vld [vmem:[%s0 + $0x134] sm:$0xf]
  %v111 = vld [vmem:[%s0 + $0x138] sm:$0xf]
  %v112 = vld [vmem:[%s0 + $0x13c] sm:$0xf]
  %v113 = vld [vmem:[%s0 + $0x140] sm:$0xf]
  %v114 = vld [vmem:[%s0 + $0x144] sm:$0xf]
  %v115 = vld [vmem:[%s0 + $0x148] sm:$0xf]
  %v116 = vld [vmem:[%s0 + $0x14c] sm:$0xf]
  %v117 = vld [vmem:[%s0 + $0x150] sm:$0xf]
  %v118 = vld [vmem:[%s0 + $0x154] sm:$0xf]
  %v119 = vld [vmem:[%s0 + $0x158] sm:$0xf]
  %v120 = vld [vmem:[%s0 + $0x15c] sm:$0xf]
  %v121 = vld [vmem:[%s0 + $0x160] sm:$0xf]
  %v122 = vld [vmem:[%s0 + $0x164] sm:$0xf]
  %v123 = vld [vmem:[%s0 + $0x168] sm:$0xf]
  %v124 = vld [vmem:[%s0 + $0x16c] sm:$0xf]
  %v125 = vld [vmem:[%s0 + $0x170] sm:$0xf]
  %v126 = vld [vmem:[%s0 + $0x174] sm:$0xf]
  %v127 = vld [vmem:[%s0 + $0x178] sm:$0xf]
  %v128 = vld [vmem:[%s0 + $0x17c] sm:$0xf]
  %v129 = vld [vmem:[%s0 + $0x180] sm:$0xf]
  %v130 = vld [vmem:[%s0 + $0x184] sm:$0xf]
  %v131 = vld [vmem:[%s0 + $0x188] sm:$0xf]
  %v132 = vld [vmem:[%s0 + $0x18c] sm:$0xf]
  %v133 = vld [vmem:[%s0 + $0x190] sm:$0xf]
  %v134 = vld [vmem:[%s0 + $0x194] sm:$0xf]
  %v135 = vld [vmem:[%s0 + $0x198] sm:$0xf]
  %v136 = vld [vmem:[%s0 + $0x19c] sm:$0xf]
  %v137 = vld [vmem:[%s0 + $0x1a0] sm:$0xf]
  %v138 = vld [vmem:[%s0 + $0x1a4] sm:$0xf]
  %v139 = vld [vmem:[%s0 + $0x1a8] sm:$0xf]
  %v140 = vld [vmem:[%s0 + $0x1ac] sm:$0xf]
  %v141 = vld [vmem:[%s0 + $0x1b0] sm:$0xf]
  %v142 = vld [vmem:[%s0 + $0x1b4] sm:$0xf]
  %v143 = vld [vmem:[%s0 + $0x1b8] sm:$0xf]
  %v144 = vld [vmem:[%s0 + $0x1bc] sm:$0xf]
  %v145 = vld [vmem:[%s0 + $0x1c0] sm:$0xf]
  %v146 = vld [vmem:[%s0 + $0x1c4] sm:$0xf]
  %v147 = vld [vmem:[%s0 + $0x1c8] sm:$0xf]
  %v148 = vld [vmem:[%s0 + $0x1cc] sm:$0xf]
  %v149 = vld [vmem:[%s0 + $0x1d0] sm:$0xf]
  %v150 = vld [vmem:[%s0 + $0x1d4] sm:$0xf]
  %v151 = vld [vmem:[%s0 + $0x1d8] sm:$0xf]
  %v152 = vld [vmem:[%s0 + $0x1dc] sm:$0xf]
  %v153 = vld [vmem:[%s0 + $0x1e0] sm:$0xf]
  %v154 = vld [vmem:[%s0 + $0x1e4] sm:$0xf]
  %v155 = vld [vmem:[%s0 + $0x1e8] sm:$0xf]
  %v156 = vld [vmem:[%s0 + $0x1ec] sm:$0xf]
  %v157 = vld [vmem:[%s0 + $0x1f0] sm:$0xf]
  %v158 = vld [vmem:[%s0 + $0x1f4] sm:$0xf]
  %v159 = vld [vmem:[%s0 + $0x1f8] sm:$0xf]
  %v160 = vld [vmem:[%s0 + $0x1fc] sm:$0xf]
  %v161 = vld [vmem:[%s0 + $0x200] sm:$0xf]
  %v162 = vld [vmem:[%s0 + $0x204] sm:$0xf]
  %v163 = vld [vmem:[%s0 + $0x208] sm:$0xf]
  %v164 = vld [vmem:[%s0 + $0x20c] sm:$0xf]
  %v165 = vld [vmem:[%s0 + $0x210] sm:$0xf]
  %v166 = vld [vmem:[%s0 + $0x214] sm:$0xf]
  %v167 = vld [vmem:[%s0 + $0x218] sm:$0xf]
  %v168 = vld [vmem:[%s0 + $0x21c] sm:$0xf]
  %v169 = vld [vmem:[%s0 + $0x220] sm:$0xf]
  %v170 = vld [vmem:[%s0 + $0x224] sm:$0xf]
  %v171 = vld [vmem:[%s0 + $0x228] sm:$0xf]
  %v172 = vld [vmem:[%s0 + $0x22c] sm:$0xf]
  %v173 = vld [vmem:[%s0 + $0x230] sm:$0xf]
  %v174 = vld [vmem:[%s0 + $0x234] sm:$0xf]
  %v175 = vld [vmem:[%s0 + $0x238] sm:$0xf]
  %v176 = vld [vmem:[%s0 + $0x23c] sm:$0xf]
  %v177 = vld [vmem:[%s0 + $0x240] sm:$0xf]
  %v178 = vld [vmem:[%s0 + $0x244] sm:$0xf]
  %v179 = vld [vmem:[%s0 + $0x248] sm:$0xf]
  %v180 = vld [vmem:[%s0 + $0x24c] sm:$0xf]
  %v181 = vld [vmem:[%s0 + $0x250] sm:$0xf]
  %v182 = vld [vmem:[%s0 + $0x254] sm:$0xf]
  %v183 = vld [vmem:[%s0 + $0x258] sm:$0xf]
  %v184 = vld [vmem:[%s0 + $0x25c] sm:$0xf]
  %v185 = vld [vmem:[%s0 + $0x260] sm:$0xf]
  %v186 = vld [vmem:[%s0 + $0x264] sm:$0xf]
  %v187 = vld [vmem:[%s0 + $0x268] sm:$0xf]
  %v188 = vld [vmem:[%s0 + $0x26c] sm:$0xf]
  %v189 = vld [vmem:[%s0 + $0x270] sm:$0xf]
  %v190 = vld [vmem:[%s0 + $0x274] sm:$0xf]
  %v191 = vld [vmem:[%s0 + $0x278] sm:$0xf]
  %v192 = vld [vmem:[%s0 + $0x27c] sm:$0xf]
  %v193 = vld [vmem:[%s0 + $0x280] sm:$0xf]
  %v194 = vld [vmem:[%s0 + $0x284] sm:$0xf]
  %v195 = vld [vmem:[%s0 + $0x288] sm:$0xf]
  %v196 = vld [vmem:[%s0 + $0x28c] sm:$0xf]
  %v197 = vld [vmem:[%s0 + $0x290] sm:$0xf]
  %v198 = vld [vmem:[%s0 + $0x294] sm:$0xf]
  %v199 = vld [vmem:[%s0 + $0x298] sm:$0xf]
  %v200 = vld [vmem:[%s0 + $0x29c] sm:$0xf]
  %v201 = vld [vmem:[%s0 + $0x2a0] sm:$0xf]
  %v202 = vld [vmem:[%s0 + $0x2a4] sm:$0xf]
  %v203 = vld [vmem:[%s0 + $0x2a8] sm:$0xf]
  %v204 = vld [vmem:[%s0 + $0x2ac] sm:$0xf]
  %v205 = vld [vmem:[%s0 + $0x2b0] sm:$0xf]
  %v206 = vld [vmem:[%s0 + $0x2b4] sm:$0xf]
  %v207 = vld [vmem:[%s0 + $0x2b8] sm:$0xf]
  %v208 = vld [vmem:[%s0 + $0x2bc] sm:$0xf]
  %v209 = vld [vmem:[%s0 + $0x2c0] sm:$0xf]
  %v210 = vld [vmem:[%s0 + $0x2c4] sm:$0xf]
  %v211 = vld [vmem:[%s0 + $0x2c8] sm:$0xf]
  %v212 = vld [vmem:[%s0 + $0x2cc] sm:$0xf]
  %v213 = vld [vmem:[%s0 + $0x2d0] sm:$0xf]
  %v214 = vld [vmem:[%s0 + $0x2d4] sm:$0xf]
  %v215 = vld [vmem:[%s0 + $0x2d8] sm:$0xf]
  %v216 = vld [vmem:[%s0 + $0x2dc] sm:$0xf]
  %v217 = vld [vmem:[%s0 + $0x2e0] sm:$0xf]
  %v218 = vld [vmem:[%s0 + $0x2e4] sm:$0xf]
  %v219 = vld [vmem:[%s0 + $0x2e8] sm:$0xf]
  %v220 = vld [vmem:[%s0 + $0x2ec] sm:$0xf]
  %v221 = vld [vmem:[%s0 + $0x2f0] sm:$0xf]
  %v222 = vld [vmem:[%s0 + $0x2f4] sm:$0xf]
  %v223 = vld [vmem:[%s0 + $0x2f8] sm:$0xf]
  %v224 = vld [vmem:[%s0 + $0x2fc] sm:$0xf]
  %v225 = vld [vmem:[%s0 + $0x300] sm:$0xf]
  %v226 = vld [vmem:[%s0 + $0x304] sm:$0xf]
  %v227 = vld [vmem:[%s0 + $0x308] sm:$0xf]
  %v228 = vld [vmem:[%s0 + $0x30c] sm:$0xf]
  %v229 = vld [vmem:[%s0 + $0x310] sm:$0xf]
  %v230 = vld [vmem:[%s0 + $0x314] sm:$0xf]
  %v231 = vld [vmem:[%s0 + $0x318] sm:$0xf]
  %v232 = vld [vmem:[%s0 + $0x31c] sm:$0xf]
  %v233 = vld [vmem:[%s0 + $0x320] sm:$0xf]
  %v234 = vld [vmem:[%s0 + $0x324] sm:$0xf]
  %v235 = vld [vmem:[%s0 + $0x328] sm:$0xf]
  %v236 = vld [vmem:[%s0 + $0x32c] sm:$0xf]
  %v237 = vld [vmem:[%s0 + $0x330] sm:$0xf]
  %v238 = vld [vmem:[%s0 + $0x334] sm:$0xf]
  %v239 = vld [vmem:[%s0 + $0x338] sm:$0xf]
  %v240 = vld [vmem:[%s0 + $0x33c] sm:$0xf]
  %v241 = vld [vmem:[%s0 + $0x340] sm:$0xf]
  %v242 = vld [vmem:[%s0 + $0x344] sm:$0xf]
  %v243 = vld [vmem:[%s0 + $0x348] sm:$0xf]
  %v244 = vld [vmem:[%s0 + $0x34c] sm:$0xf]
  %v245 = vld [vmem:[%s0 + $0x350] sm:$0xf]
  %v246 = vld [vmem:[%s0 + $0x354] sm:$0xf]
  %v247 = vld [vmem:[%s0 + $0x358] sm:$0xf]
  %v248 = vld [vmem:[%s0 + $0x35c] sm:$0xf]
  %v249 = vld [vmem:[%s0 + $0x360] sm:$0xf]
  %v250 = vld [vmem:[%s0 + $0x364] sm:$0xf]
  %v251 = vld [vmem:[%s0 + $0x368] sm:$0xf]
  %v252 = vld [vmem:[%s0 + $0x36c] sm:$0xf]
  %v253 = vld [vmem:[%s0 + $0x370] sm:$0xf]
  %v254 = vld [vmem:[%s0 + $0x374] sm:$0xf]
  %v255 = vld [vmem:[%s0 + $0x378] sm:$0xf]
  %v256 = vld [vmem:[%s0 + $0x37c] sm:$0xf]
  %v257 = vld [vmem:[%s0 + $0x380] sm:$0xf]
  %v258 = vld [vmem:[%s0 + $0x384] sm:$0xf]
  %v259 = vld [vmem:[%s0 + $0x388] sm:$0xf]
  %v260 = vld [vmem:[%s0 + $0x38c] sm:$0xf]
  %v261 = vld [vmem:[%s0 + $0x390] sm:$0xf]
  %v262 = vld [vmem:[%s0 + $0x394] sm:$0xf]
  %v263 = vld [vmem:[%s0 + $0x398] sm:$0xf]
  %v264 = vld [vmem:[%s0 + $0x39c] sm:$0xf]
  %v265 = vld [vmem:[%s0 + $0x3a0] sm:$0xf]
  %v266 = vld [vmem:[%s0 + $0x3a4] sm:$0xf]
  %v267 = vld [vmem:[%s0 + $0x3a8] sm:$0xf]
  %v268 = vld [vmem:[%s0 + $0x3ac] sm:$0xf]
  %v269 = vld [vmem:[%s0 + $0x3b0] sm:$0xf]
  %v270 = vld [vmem:[%s0 + $0x3b4] sm:$0xf]
  %v271 = vld [vmem:[%s0 + $0x3b8] sm:$0xf]
  %v272 = vld [vmem:[%s0 + $0x3bc] sm:$0xf]
  %v273 = vld [vmem:[%s0 + $0x3c0] sm:$0xf]
  %v274 = vld [vmem:[%s0 + $0x3c4] sm:$0xf]
  %v275 = vld [vmem:[%s0 + $0x3c8] sm:$0xf]
  %v276 = vld [vmem:[%s0 + $0x3cc] sm:$0xf]
  %v277 = vld [vmem:[%s0 + $0x3d0] sm:$0xf]
  %v278 = vld [vmem:[%s0 + $0x3d4] sm:$0xf]
  %v279 = vld [vmem:[%s0 + $0x3d8] sm:$0xf]
  %v280 = vld [vmem:[%s0 + $0x3dc] sm:$0xf]
  %v281 = vld [vmem:[%s0 + $0x3e0] sm:$0xf]
  %v282 = vld [vmem:[%s0 + $0x3e4] sm:$0xf]
  %v283 = vld [vmem:[%s0 + $0x3e8] sm:$0xf]
  %v284 = vld [vmem:[%s0 + $0x3ec] sm:$0xf]
  %v285 = vld [vmem:[%s0 + $0x3f0] sm:$0xf]
  %v286 = vld [vmem:[%s0 + $0x3f4] sm:$0xf]
  %v287 = vld [vmem:[%s0 + $0x3f8] sm:$0xf]
  %v288 = vld [vmem:[%s0 + $0x3fc] sm:$0xf]
  %v289 = vld [vmem:[%s0 + $0x400] sm:$0xf]
  %v290 = vld [vmem:[%s0 + $0x404] sm:$0xf]
  %v291 = vld [vmem:[%s0 + $0x408] sm:$0xf]
  %v292 = vld [vmem:[%s0 + $0x40c] sm:$0xf]
  %v293 = vld [vmem:[%s0 + $0x410] sm:$0xf]
  %v294 = vld [vmem:[%s0 + $0x414] sm:$0xf]
  %v295 = vld [vmem:[%s0 + $0x418] sm:$0xf]
  %v296 = vld [vmem:[%s0 + $0x41c] sm:$0xf]
  %v297 = vld [vmem:[%s0 + $0x420] sm:$0xf]
  %v298 = vld [vmem:[%s0 + $0x424] sm:$0xf]
  %v299 = vld [vmem:[%s0 + $0x428] sm:$0xf]
  %v300 = vld [vmem:[%s0 + $0x42c] sm:$0xf]
  %v301 = vld [vmem:[%s0 + $0x430] sm:$0xf]
  %v302 = vld [vmem:[%s0 + $0x434] sm:$0xf]
  %v303 = vld [vmem:[%s0 + $0x438] sm:$0xf]
  %v304 = vld [vmem:[%s0 + $0x43c] sm:$0xf]
  %v305 = vld [vmem:[%s0 + $0x440] sm:$0xf]
  %v306 = vld [vmem:[%s0 + $0x444] sm:$0xf]
  %v307 = vld [vmem:[%s0 + $0x448] sm:$0xf]
  %v308 = vld [vmem:[%s0 + $0x44c] sm:$0xf]
  %v309 = vld [vmem:[%s0 + $0x450] sm:$0xf]
  %v310 = vld [vmem:[%s0 + $0x454] sm:$0xf]
  %v311 = vld [vmem:[%s0 + $0x458] sm:$0xf]
  %v312 = vld [vmem:[%s0 + $0x45c] sm:$0xf]
  %v313 = vld [vmem:[%s0 + $0x460] sm:$0xf]
  %v314 = vld [vmem:[%s0 + $0x464] sm:$0xf]
  %v315 = vld [vmem:[%s0 + $0x468] sm:$0xf]
  %v316 = vld [vmem:[%s0 + $0x46c] sm:$0xf]
  %v317 = vld [vmem:[%s0 + $0x470] sm:$0xf]
  %v318 = vld [vmem:[%s0 + $0x474] sm:$0xf]
  %v319 = vld [vmem:[%s0 + $0x478] sm:$0xf]
  %v320 = vld [vmem:[%s0 + $0x47c] sm:$0xf]
  %v321 = vld [vmem:[%s1] sm:$0xf]
  %v322 = vld [vmem:[%s1 + $0x4] sm:$0xf]
  %v323 = vld [vmem:[%s1 + $0x8] sm:$0xf]
  %v324 = vld [vmem:[%s1 + $0xc] sm:$0xf]
  %v325 = vld [vmem:[%s1 + $0x10] sm:$0xf]
  %v326 = vld [vmem:[%s1 + $0x14] sm:$0xf]
  %v327 = vld [vmem:[%s1 + $0x18] sm:$0xf]
  %v328 = vld [vmem:[%s1 + $0x1c] sm:$0xf]
  %v329 = vld [vmem:[%s1 + $0x20] sm:$0xf]
  %v330 = vld [vmem:[%s1 + $0x24] sm:$0xf]
  %v331 = vld [vmem:[%s1 + $0x28] sm:$0xf]
  %v332 = vld [vmem:[%s1 + $0x2c] sm:$0xf]
  %v333 = vld [vmem:[%s1 + $0x30] sm:$0x3]
  %v622 = vunpack.c.l.b16 %v33
  %v623 = vunpack.c.l.b16 %v34
  %v624 = vunpack.c.l.b16 %v35
  %v625 = vunpack.c.l.b16 %v36
  %v626 = vunpack.c.l.b16 %v37
  %v627 = vunpack.c.l.b16 %v38
  %v628 = vunpack.c.l.b16 %v39
  %v629 = vunpack.c.l.b16 %v40
  %v630 = vunpack.c.l.b16 %v41
  %v631 = vunpack.c.l.b16 %v42
  %v632 = vunpack.c.l.b16 %v43
  %v633 = vunpack.c.l.b16 %v44
  %v634 = vunpack.c.l.b16 %v45
  %v635 = vunpack.c.l.b16 %v46
  %v636 = vunpack.c.l.b16 %v47
  %v637 = vunpack.c.l.b16 %v48
  %v638 = vunpack.c.l.b16 %v49
  %v639 = vunpack.c.l.b16 %v50
  %v640 = vunpack.c.l.b16 %v51
  %v641 = vunpack.c.l.b16 %v52
  %v642 = vunpack.c.l.b16 %v53
  %v643 = vunpack.c.l.b16 %v54
  %v644 = vunpack.c.l.b16 %v55
  %v645 = vunpack.c.l.b16 %v56
  %v646 = vunpack.c.l.b16 %v57
  %v647 = vunpack.c.l.b16 %v58
  %v648 = vunpack.c.l.b16 %v59
  %v649 = vunpack.c.l.b16 %v60
  %v650 = vunpack.c.l.b16 %v61
  %v651 = vunpack.c.l.b16 %v62
  %v652 = vunpack.c.l.b16 %v63
  %v653 = vunpack.c.l.b16 %v64
  %v654 = vunpack.c.l.b16 %v65
  %v655 = vunpack.c.l.b16 %v66
  %v656 = vunpack.c.l.b16 %v67
  %v657 = vunpack.c.l.b16 %v68
  %v658 = vunpack.c.l.b16 %v69
  %v659 = vunpack.c.l.b16 %v70
  %v660 = vunpack.c.l.b16 %v71
  %v661 = vunpack.c.l.b16 %v72
  %v662 = vunpack.c.l.b16 %v73
  %v663 = vunpack.c.l.b16 %v74
  %v664 = vunpack.c.l.b16 %v75
  %v665 = vunpack.c.l.b16 %v76
  %v666 = vunpack.c.l.b16 %v77
  %v667 = vunpack.c.l.b16 %v78
  %v668 = vunpack.c.l.b16 %v79
  %v669 = vunpack.c.l.b16 %v80
  %v670 = vunpack.c.l.b16 %v81
  %v671 = vunpack.c.l.b16 %v82
  %v672 = vunpack.c.l.b16 %v83
  %v673 = vunpack.c.l.b16 %v84
  %v674 = vunpack.c.l.b16 %v85
  %v675 = vunpack.c.l.b16 %v86
  %v676 = vunpack.c.l.b16 %v87
  %v677 = vunpack.c.l.b16 %v88
  %v678 = vunpack.c.l.b16 %v89
  %v679 = vunpack.c.l.b16 %v90
  %v680 = vunpack.c.l.b16 %v91
  %v681 = vunpack.c.l.b16 %v92
  %v682 = vunpack.c.l.b16 %v93
  %v683 = vunpack.c.l.b16 %v94
  %v684 = vunpack.c.l.b16 %v95
  %v685 = vunpack.c.l.b16 %v96
  %v686 = vunpack.c.l.b16 %v97
  %v687 = vunpack.c.l.b16 %v98
  %v688 = vunpack.c.l.b16 %v99
  %v689 = vunpack.c.l.b16 %v100
  %v690 = vunpack.c.l.b16 %v101
  %v691 = vunpack.c.l.b16 %v102
  %v692 = vunpack.c.l.b16 %v103
  %v693 = vunpack.c.l.b16 %v104
  %v694 = vunpack.c.l.b16 %v105
  %v695 = vunpack.c.l.b16 %v106
  %v696 = vunpack.c.l.b16 %v107
  %v697 = vunpack.c.l.b16 %v108
  %v698 = vunpack.c.l.b16 %v109
  %v699 = vunpack.c.l.b16 %v110
  %v700 = vunpack.c.l.b16 %v111
  %v701 = vunpack.c.l.b16 %v112
  %v702 = vunpack.c.l.b16 %v113
  %v703 = vunpack.c.l.b16 %v114
  %v704 = vunpack.c.l.b16 %v115
  %v705 = vunpack.c.l.b16 %v116
  %v706 = vunpack.c.l.b16 %v117
  %v707 = vunpack.c.l.b16 %v118
  %v708 = vunpack.c.l.b16 %v119
  %v709 = vunpack.c.l.b16 %v120
  %v710 = vunpack.c.l.b16 %v121
  %v711 = vunpack.c.l.b16 %v122
  %v712 = vunpack.c.l.b16 %v123
  %v713 = vunpack.c.l.b16 %v124
  %v714 = vunpack.c.l.b16 %v125
  %v715 = vunpack.c.l.b16 %v126
  %v716 = vunpack.c.l.b16 %v127
  %v717 = vunpack.c.l.b16 %v128
  %v718 = vunpack.c.l.b16 %v129
  %v719 = vunpack.c.l.b16 %v130
  %v720 = vunpack.c.l.b16 %v131
  %v721 = vunpack.c.l.b16 %v132
  %v722 = vunpack.c.l.b16 %v133
  %v723 = vunpack.c.l.b16 %v134
  %v724 = vunpack.c.l.b16 %v135
  %v725 = vunpack.c.l.b16 %v136
  %v726 = vunpack.c.l.b16 %v137
  %v727 = vunpack.c.l.b16 %v138
  %v728 = vunpack.c.l.b16 %v139
  %v729 = vunpack.c.l.b16 %v140
  %v730 = vunpack.c.l.b16 %v141
  %v731 = vunpack.c.l.b16 %v142
  %v732 = vunpack.c.l.b16 %v143
  %v733 = vunpack.c.l.b16 %v144
  %v734 = vunpack.c.l.b16 %v145
  %v735 = vunpack.c.l.b16 %v146
  %v736 = vunpack.c.l.b16 %v147
  %v737 = vunpack.c.l.b16 %v148
  %v738 = vunpack.c.l.b16 %v149
  %v739 = vunpack.c.l.b16 %v150
  %v740 = vunpack.c.l.b16 %v151
  %v741 = vunpack.c.l.b16 %v152
  %v742 = vunpack.c.l.b16 %v153
  %v743 = vunpack.c.l.b16 %v154
  %v744 = vunpack.c.l.b16 %v155
  %v745 = vunpack.c.l.b16 %v156
  %v746 = vunpack.c.l.b16 %v157
  %v747 = vunpack.c.l.b16 %v158
  %v748 = vunpack.c.l.b16 %v159
  %v749 = vunpack.c.l.b16 %v160
  %v750 = vunpack.c.l.b16 %v161
  %v751 = vunpack.c.l.b16 %v162
  %v752 = vunpack.c.l.b16 %v163
  %v753 = vunpack.c.l.b16 %v164
  %v754 = vunpack.c.l.b16 %v165
  %v755 = vunpack.c.l.b16 %v166
  %v756 = vunpack.c.l.b16 %v167
  %v757 = vunpack.c.l.b16 %v168
  %v758 = vunpack.c.l.b16 %v169
  %v759 = vunpack.c.l.b16 %v170
  %v760 = vunpack.c.l.b16 %v171
  %v761 = vunpack.c.l.b16 %v172
  %v762 = vunpack.c.l.b16 %v173
  %v763 = vunpack.c.l.b16 %v174
  %v764 = vunpack.c.l.b16 %v175
  %v765 = vunpack.c.l.b16 %v176
  %v766 = vunpack.c.l.b16 %v177
  %v767 = vunpack.c.l.b16 %v178
  %v768 = vunpack.c.l.b16 %v179
  %v769 = vunpack.c.l.b16 %v180
  %v770 = vunpack.c.l.b16 %v181
  %v771 = vunpack.c.l.b16 %v182
  %v772 = vunpack.c.l.b16 %v183
  %v773 = vunpack.c.l.b16 %v184
  %v774 = vunpack.c.l.b16 %v185
  %v775 = vunpack.c.l.b16 %v186
  %v776 = vunpack.c.l.b16 %v187
  %v777 = vunpack.c.l.b16 %v188
  %v778 = vunpack.c.l.b16 %v189
  %v779 = vunpack.c.l.b16 %v190
  %v780 = vunpack.c.l.b16 %v191
  %v781 = vunpack.c.l.b16 %v192
  %v782 = vunpack.c.l.b16 %v193
  %v783 = vunpack.c.l.b16 %v194
  %v784 = vunpack.c.l.b16 %v195
  %v785 = vunpack.c.l.b16 %v196
  %v786 = vunpack.c.l.b16 %v197
  %v787 = vunpack.c.l.b16 %v198
  %v788 = vunpack.c.l.b16 %v199
  %v789 = vunpack.c.l.b16 %v200
  %v790 = vunpack.c.l.b16 %v201
  %v791 = vunpack.c.l.b16 %v202
  %v792 = vunpack.c.l.b16 %v203
  %v793 = vunpack.c.l.b16 %v204
  %v794 = vunpack.c.l.b16 %v205
  %v795 = vunpack.c.l.b16 %v206
  %v796 = vunpack.c.l.b16 %v207
  %v797 = vunpack.c.l.b16 %v208
  %v798 = vunpack.c.l.b16 %v209
  %v799 = vunpack.c.l.b16 %v210
  %v800 = vunpack.c.l.b16 %v211
  %v801 = vunpack.c.l.b16 %v212
  %v802 = vunpack.c.l.b16 %v213
  %v803 = vunpack.c.l.b16 %v214
  %v804 = vunpack.c.l.b16 %v215
  %v805 = vunpack.c.l.b16 %v216
  %v806 = vunpack.c.l.b16 %v217
  %v807 = vunpack.c.l.b16 %v218
  %v808 = vunpack.c.l.b16 %v219
  %v809 = vunpack.c.l.b16 %v220
  %v810 = vunpack.c.l.b16 %v221
  %v811 = vunpack.c.l.b16 %v222
  %v812 = vunpack.c.l.b16 %v223
  %v813 = vunpack.c.l.b16 %v224
  %v814 = vunpack.c.l.b16 %v225
  %v815 = vunpack.c.l.b16 %v226
  %v816 = vunpack.c.l.b16 %v227
  %v817 = vunpack.c.l.b16 %v228
  %v818 = vunpack.c.l.b16 %v229
  %v819 = vunpack.c.l.b16 %v230
  %v820 = vunpack.c.l.b16 %v231
  %v821 = vunpack.c.l.b16 %v232
  %v822 = vunpack.c.l.b16 %v233
  %v823 = vunpack.c.l.b16 %v234
  %v824 = vunpack.c.l.b16 %v235
  %v825 = vunpack.c.l.b16 %v236
  %v826 = vunpack.c.l.b16 %v237
  %v827 = vunpack.c.l.b16 %v238
  %v828 = vunpack.c.l.b16 %v239
  %v829 = vunpack.c.l.b16 %v240
  %v830 = vunpack.c.l.b16 %v241
  %v831 = vunpack.c.l.b16 %v242
  %v832 = vunpack.c.l.b16 %v243
  %v833 = vunpack.c.l.b16 %v244
  %v834 = vunpack.c.l.b16 %v245
  %v835 = vunpack.c.l.b16 %v246
  %v836 = vunpack.c.l.b16 %v247
  %v837 = vunpack.c.l.b16 %v248
  %v838 = vunpack.c.l.b16 %v249
  %v839 = vunpack.c.l.b16 %v250
  %v840 = vunpack.c.l.b16 %v251
  %v841 = vunpack.c.l.b16 %v252
  %v842 = vunpack.c.l.b16 %v253
  %v843 = vunpack.c.l.b16 %v254
  %v844 = vunpack.c.l.b16 %v255
  %v845 = vunpack.c.l.b16 %v256
  %v846 = vunpack.c.l.b16 %v257
  %v847 = vunpack.c.l.b16 %v258
  %v848 = vunpack.c.l.b16 %v259
  %v849 = vunpack.c.l.b16 %v260
  %v850 = vunpack.c.l.b16 %v261
  %v851 = vunpack.c.l.b16 %v262
  %v852 = vunpack.c.l.b16 %v263
  %v853 = vunpack.c.l.b16 %v264
  %v854 = vunpack.c.l.b16 %v265
  %v855 = vunpack.c.l.b16 %v266
  %v856 = vunpack.c.l.b16 %v267
  %v857 = vunpack.c.l.b16 %v268
  %v858 = vunpack.c.l.b16 %v269
  %v859 = vunpack.c.l.b16 %v270
  %v860 = vunpack.c.l.b16 %v271
  %v861 = vunpack.c.l.b16 %v272
  %v862 = vunpack.c.l.b16 %v273
  %v863 = vunpack.c.l.b16 %v274
  %v864 = vunpack.c.l.b16 %v275
  %v865 = vunpack.c.l.b16 %v276
  %v866 = vunpack.c.l.b16 %v277
  %v867 = vunpack.c.l.b16 %v278
  %v868 = vunpack.c.l.b16 %v279
  %v869 = vunpack.c.l.b16 %v280
  %v870 = vunpack.c.l.b16 %v281
  %v871 = vunpack.c.l.b16 %v282
  %v872 = vunpack.c.l.b16 %v283
  %v873 = vunpack.c.l.b16 %v284
  %v874 = vunpack.c.l.b16 %v285
  %v875 = vunpack.c.l.b16 %v286
  %v876 = vunpack.c.l.b16 %v287
  %v877 = vunpack.c.l.b16 %v288
  %v878 = vunpack.c.l.b16 %v289
  %v879 = vunpack.c.l.b16 %v290
  %v880 = vunpack.c.l.b16 %v291
  %v881 = vunpack.c.l.b16 %v292
  %v882 = vunpack.c.l.b16 %v293
  %v883 = vunpack.c.l.b16 %v294
  %v884 = vunpack.c.l.b16 %v295
  %v885 = vunpack.c.l.b16 %v296
  %v886 = vunpack.c.l.b16 %v297
  %v887 = vunpack.c.l.b16 %v298
  %v888 = vunpack.c.l.b16 %v299
  %v889 = vunpack.c.l.b16 %v300
  %v890 = vunpack.c.l.b16 %v301
  %v891 = vunpack.c.l.b16 %v302
  %v892 = vunpack.c.l.b16 %v303
  %v893 = vunpack.c.l.b16 %v304
  %v894 = vunpack.c.l.b16 %v305
  %v895 = vunpack.c.l.b16 %v306
  %v896 = vunpack.c.l.b16 %v307
  %v897 = vunpack.c.l.b16 %v308
  %v898 = vunpack.c.l.b16 %v309
  %v899 = vunpack.c.l.b16 %v310
  %v900 = vunpack.c.l.b16 %v311
  %v901 = vunpack.c.l.b16 %v312
  %v902 = vunpack.c.l.b16 %v313
  %v903 = vunpack.c.l.b16 %v314
  %v904 = vunpack.c.l.b16 %v315
  %v905 = vunpack.c.l.b16 %v316
  %v906 = vunpack.c.l.b16 %v317
  %v907 = vunpack.c.l.b16 %v318
  %v908 = vunpack.c.l.b16 %v319
  %v909 = vunpack.c.l.b16 %v320
  %v910 = vpack.c.b16 %v623, %v622
  %v911 = vpack.c.b16 %v625, %v624
  %v912 = vpack.c.b16 %v627, %v626
  %v913 = vpack.c.b16 %v629, %v628
  %v914 = vpack.c.b16 %v631, %v630
  %v915 = vpack.c.b16 %v633, %v632
  %v916 = vpack.c.b16 %v635, %v634
  %v917 = vpack.c.b16 %v637, %v636
  %v918 = vpack.c.b16 %v639, %v638
  %v919 = vpack.c.b16 %v641, %v640
  %v920 = vpack.c.b16 %v643, %v642
  %v921 = vpack.c.b16 %v645, %v644
  %v922 = vpack.c.b16 %v647, %v646
  %v923 = vpack.c.b16 %v649, %v648
  %v924 = vpack.c.b16 %v651, %v650
  %v925 = vpack.c.b16 %v653, %v652
  %v926 = vpack.c.b16 %v655, %v654
  %v927 = vpack.c.b16 %v657, %v656
  %v928 = vpack.c.b16 %v659, %v658
  %v929 = vpack.c.b16 %v661, %v660
  %v930 = vpack.c.b16 %v663, %v662
  %v931 = vpack.c.b16 %v665, %v664
  %v932 = vpack.c.b16 %v667, %v666
  %v933 = vpack.c.b16 %v669, %v668
  %v934 = vpack.c.b16 %v671, %v670
  %v935 = vpack.c.b16 %v673, %v672
  %v936 = vpack.c.b16 %v675, %v674
  %v937 = vpack.c.b16 %v677, %v676
  %v938 = vpack.c.b16 %v679, %v678
  %v939 = vpack.c.b16 %v681, %v680
  %v940 = vpack.c.b16 %v683, %v682
  %v941 = vpack.c.b16 %v685, %v684
  %v942 = vpack.c.b16 %v687, %v686
  %v943 = vpack.c.b16 %v689, %v688
  %v944 = vpack.c.b16 %v691, %v690
  %v945 = vpack.c.b16 %v693, %v692
  %v946 = vpack.c.b16 %v695, %v694
  %v947 = vpack.c.b16 %v697, %v696
  %v948 = vpack.c.b16 %v699, %v698
  %v949 = vpack.c.b16 %v701, %v700
  %v950 = vpack.c.b16 %v703, %v702
  %v951 = vpack.c.b16 %v705, %v704
  %v952 = vpack.c.b16 %v707, %v706
  %v953 = vpack.c.b16 %v709, %v708
  %v954 = vpack.c.b16 %v711, %v710
  %v955 = vpack.c.b16 %v713, %v712
  %v956 = vpack.c.b16 %v715, %v714
  %v957 = vpack.c.b16 %v717, %v716
  %v958 = vpack.c.b16 %v719, %v718
  %v959 = vpack.c.b16 %v721, %v720
  %v960 = vpack.c.b16 %v723, %v722
  %v961 = vpack.c.b16 %v725, %v724
  %v962 = vpack.c.b16 %v727, %v726
  %v963 = vpack.c.b16 %v729, %v728
  %v964 = vpack.c.b16 %v731, %v730
  %v965 = vpack.c.b16 %v733, %v732
  %v966 = vpack.c.b16 %v735, %v734
  %v967 = vpack.c.b16 %v737, %v736
  %v968 = vpack.c.b16 %v739, %v738
  %v969 = vpack.c.b16 %v741, %v740
  %v970 = vpack.c.b16 %v743, %v742
  %v971 = vpack.c.b16 %v745, %v744
  %v972 = vpack.c.b16 %v747, %v746
  %v973 = vpack.c.b16 %v749, %v748
  %v974 = vpack.c.b16 %v751, %v750
  %v975 = vpack.c.b16 %v753, %v752
  %v976 = vpack.c.b16 %v755, %v754
  %v977 = vpack.c.b16 %v757, %v756
  %v978 = vpack.c.b16 %v759, %v758
  %v979 = vpack.c.b16 %v761, %v760
  %v980 = vpack.c.b16 %v763, %v762
  %v981 = vpack.c.b16 %v765, %v764
  %v982 = vpack.c.b16 %v767, %v766
  %v983 = vpack.c.b16 %v769, %v768
  %v984 = vpack.c.b16 %v771, %v770
  %v985 = vpack.c.b16 %v773, %v772
  %v986 = vpack.c.b16 %v775, %v774
  %v987 = vpack.c.b16 %v777, %v776
  %v988 = vpack.c.b16 %v779, %v778
  %v989 = vpack.c.b16 %v781, %v780
  %v990 = vpack.c.b16 %v783, %v782
  %v991 = vpack.c.b16 %v785, %v784
  %v992 = vpack.c.b16 %v787, %v786
  %v993 = vpack.c.b16 %v789, %v788
  %v994 = vpack.c.b16 %v791, %v790
  %v995 = vpack.c.b16 %v793, %v792
  %v996 = vpack.c.b16 %v795, %v794
  %v997 = vpack.c.b16 %v797, %v796
  %v998 = vpack.c.b16 %v799, %v798
  %v999 = vpack.c.b16 %v801, %v800
  %v1000 = vpack.c.b16 %v803, %v802
  %v1001 = vpack.c.b16 %v805, %v804
  %v1002 = vpack.c.b16 %v807, %v806
  %v1003 = vpack.c.b16 %v809, %v808
  %v1004 = vpack.c.b16 %v811, %v810
  %v1005 = vpack.c.b16 %v813, %v812
  %v1006 = vpack.c.b16 %v815, %v814
  %v1007 = vpack.c.b16 %v817, %v816
  %v1008 = vpack.c.b16 %v819, %v818
  %v1009 = vpack.c.b16 %v821, %v820
  %v1010 = vpack.c.b16 %v823, %v822
  %v1011 = vpack.c.b16 %v825, %v824
  %v1012 = vpack.c.b16 %v827, %v826
  %v1013 = vpack.c.b16 %v829, %v828
  %v1014 = vpack.c.b16 %v831, %v830
  %v1015 = vpack.c.b16 %v833, %v832
  %v1016 = vpack.c.b16 %v835, %v834
  %v1017 = vpack.c.b16 %v837, %v836
  %v1018 = vpack.c.b16 %v839, %v838
  %v1019 = vpack.c.b16 %v841, %v840
  %v1020 = vpack.c.b16 %v843, %v842
  %v1021 = vpack.c.b16 %v845, %v844
  %v1022 = vpack.c.b16 %v847, %v846
  %v1023 = vpack.c.b16 %v849, %v848
  %v1024 = vpack.c.b16 %v851, %v850
  %v1025 = vpack.c.b16 %v853, %v852
  %v1026 = vpack.c.b16 %v855, %v854
  %v1027 = vpack.c.b16 %v857, %v856
  %v1028 = vpack.c.b16 %v859, %v858
  %v1029 = vpack.c.b16 %v861, %v860
  %v1030 = vpack.c.b16 %v863, %v862
  %v1031 = vpack.c.b16 %v865, %v864
  %v1032 = vpack.c.b16 %v867, %v866
  %v1033 = vpack.c.b16 %v869, %v868
  %v1034 = vpack.c.b16 %v871, %v870
  %v1035 = vpack.c.b16 %v873, %v872
  %v1036 = vpack.c.b16 %v875, %v874
  %v1037 = vpack.c.b16 %v877, %v876
  %v1038 = vpack.c.b16 %v879, %v878
  %v1039 = vpack.c.b16 %v881, %v880
  %v1040 = vpack.c.b16 %v883, %v882
  %v1041 = vpack.c.b16 %v885, %v884
  %v1042 = vpack.c.b16 %v887, %v886
  %v1043 = vpack.c.b16 %v889, %v888
  %v1044 = vpack.c.b16 %v891, %v890
  %v1045 = vpack.c.b16 %v893, %v892
  %v1046 = vpack.c.b16 %v895, %v894
  %v1047 = vpack.c.b16 %v897, %v896
  %v1048 = vpack.c.b16 %v899, %v898
  %v1049 = vpack.c.b16 %v901, %v900
  %v1050 = vpack.c.b16 %v903, %v902
  %v1051 = vpack.c.b16 %v905, %v904
  %v1052 = vpack.c.b16 %v907, %v906
  %v1053 = vpack.c.b16 %v909, %v908
  %v1067 = vunpack.c.l.b16 %v321
  %v1068 = vunpack.c.l.b16 %v322
  %v1069 = vunpack.c.l.b16 %v323
  %v1070 = vunpack.c.l.b16 %v324
  %v1071 = vunpack.c.l.b16 %v325
  %v1072 = vunpack.c.l.b16 %v326
  %v1073 = vunpack.c.l.b16 %v327
  %v1074 = vunpack.c.l.b16 %v328
  %v1075 = vunpack.c.l.b16 %v329
  %v1076 = vunpack.c.l.b16 %v330
  %v1077 = vunpack.c.l.b16 %v331
  %v1078 = vunpack.c.l.b16 %v332
  %v1079 = vunpack.c.l.b16 %v333
  %v1080 = vpack.c.b16 %v1068, %v1067
  %v1081 = vpack.c.b16 %v1070, %v1069
  %v1082 = vpack.c.b16 %v1072, %v1071
  %v1083 = vpack.c.b16 %v1074, %v1073
  %v1084 = vpack.c.b16 %v1076, %v1075
  %v1085 = vpack.c.b16 %v1078, %v1077
  %v1086 = vpack.c.b16 %v1079, %v1079
  %vm1093 = vcmask 818176
  %v1095 = vsel %vm1093, %v910, 0
  %v1098 = vsel %vm1093, %v911, 0
  %v1101 = vsel %vm1093, %v912, 0
  %v1104 = vsel %vm1093, %v913, 0
  %v1107 = vsel %vm1093, %v914, 0
  %v1110 = vsel %vm1093, %v915, 0
  %v1113 = vsel %vm1093, %v916, 0
  %v1116 = vsel %vm1093, %v917, 0
  %v1119 = vsel %vm1093, %v918, 0
  %v1122 = vsel %vm1093, %v919, 0
  %v1125 = vsel %vm1093, %v920, 0
  %v1128 = vsel %vm1093, %v921, 0
  %v1131 = vsel %vm1093, %v922, 0
  %v1134 = vsel %vm1093, %v923, 0
  %v1137 = vsel %vm1093, %v924, 0
  %v1140 = vsel %vm1093, %v925, 0
  %v1143 = vsel %vm1093, %v926, 0
  %v1146 = vsel %vm1093, %v927, 0
  %v1149 = vsel %vm1093, %v928, 0
  %v1152 = vsel %vm1093, %v929, 0
  %v1155 = vsel %vm1093, %v930, 0
  %v1158 = vsel %vm1093, %v931, 0
  %v1161 = vsel %vm1093, %v932, 0
  %v1164 = vsel %vm1093, %v933, 0
  %v1167 = vsel %vm1093, %v934, 0
  %v1170 = vsel %vm1093, %v935, 0
  %v1173 = vsel %vm1093, %v936, 0
  %v1176 = vsel %vm1093, %v937, 0
  %v1179 = vsel %vm1093, %v938, 0
  %v1182 = vsel %vm1093, %v939, 0
  %v1185 = vsel %vm1093, %v940, 0
  %v1188 = vsel %vm1093, %v941, 0
  %v1191 = vsel %vm1093, %v942, 0
  %v1194 = vsel %vm1093, %v943, 0
  %v1197 = vsel %vm1093, %v944, 0
  %v1200 = vsel %vm1093, %v945, 0
  %v1203 = vsel %vm1093, %v946, 0
  %v1206 = vsel %vm1093, %v947, 0
  %v1209 = vsel %vm1093, %v948, 0
  %v1212 = vsel %vm1093, %v949, 0
  %v1215 = vsel %vm1093, %v950, 0
  %v1218 = vsel %vm1093, %v951, 0
  %v1221 = vsel %vm1093, %v952, 0
  %v1224 = vsel %vm1093, %v953, 0
  %v1227 = vsel %vm1093, %v954, 0
  %v1230 = vsel %vm1093, %v955, 0
  %v1233 = vsel %vm1093, %v956, 0
  %v1236 = vsel %vm1093, %v957, 0
  %v1239 = vsel %vm1093, %v958, 0
  %v1242 = vsel %vm1093, %v959, 0
  %v1245 = vsel %vm1093, %v960, 0
  %v1248 = vsel %vm1093, %v961, 0
  %v1251 = vsel %vm1093, %v962, 0
  %v1254 = vsel %vm1093, %v963, 0
  %v1257 = vsel %vm1093, %v964, 0
  %v1260 = vsel %vm1093, %v965, 0
  %v1263 = vsel %vm1093, %v966, 0
  %v1266 = vsel %vm1093, %v967, 0
  %v1269 = vsel %vm1093, %v968, 0
  %v1272 = vsel %vm1093, %v969, 0
  %v1275 = vsel %vm1093, %v970, 0
  %v1278 = vsel %vm1093, %v971, 0
  %v1281 = vsel %vm1093, %v972, 0
  %v1284 = vsel %vm1093, %v973, 0
  %v1287 = vsel %vm1093, %v974, 0
  %v1290 = vsel %vm1093, %v975, 0
  %v1293 = vsel %vm1093, %v976, 0
  %v1296 = vsel %vm1093, %v977, 0
  %v1299 = vsel %vm1093, %v978, 0
  %v1302 = vsel %vm1093, %v979, 0
  %v1305 = vsel %vm1093, %v980, 0
  %v1308 = vsel %vm1093, %v981, 0
  %v1311 = vsel %vm1093, %v982, 0
  %v1314 = vsel %vm1093, %v983, 0
  %v1317 = vsel %vm1093, %v984, 0
  %v1320 = vsel %vm1093, %v985, 0
  %v1323 = vsel %vm1093, %v986, 0
  %v1326 = vsel %vm1093, %v987, 0
  %v1329 = vsel %vm1093, %v988, 0
  %v1332 = vsel %vm1093, %v989, 0
  %v1335 = vsel %vm1093, %v990, 0
  %v1338 = vsel %vm1093, %v991, 0
  %v1341 = vsel %vm1093, %v992, 0
  %v1344 = vsel %vm1093, %v993, 0
  %v1347 = vsel %vm1093, %v994, 0
  %v1350 = vsel %vm1093, %v995, 0
  %v1353 = vsel %vm1093, %v996, 0
  %v1356 = vsel %vm1093, %v997, 0
  %v1359 = vsel %vm1093, %v998, 0
  %v1362 = vsel %vm1093, %v999, 0
  %v1365 = vsel %vm1093, %v1000, 0
  %v1368 = vsel %vm1093, %v1001, 0
  %v1371 = vsel %vm1093, %v1002, 0
  %v1374 = vsel %vm1093, %v1003, 0
  %v1377 = vsel %vm1093, %v1004, 0
  %v1380 = vsel %vm1093, %v1005, 0
  %v1383 = vsel %vm1093, %v1006, 0
  %v1386 = vsel %vm1093, %v1007, 0
  %v1389 = vsel %vm1093, %v1008, 0
  %v1392 = vsel %vm1093, %v1009, 0
  %v1395 = vsel %vm1093, %v1010, 0
  %v1398 = vsel %vm1093, %v1011, 0
  %v1401 = vsel %vm1093, %v1012, 0
  %v1404 = vsel %vm1093, %v1013, 0
  %v1407 = vsel %vm1093, %v1014, 0
  %v1410 = vsel %vm1093, %v1015, 0
  %v1413 = vsel %vm1093, %v1016, 0
  %v1416 = vsel %vm1093, %v1017, 0
  %v1419 = vsel %vm1093, %v1018, 0
  %v1422 = vsel %vm1093, %v1019, 0
  %v1425 = vsel %vm1093, %v1020, 0
  %v1428 = vsel %vm1093, %v1021, 0
  %v1431 = vsel %vm1093, %v1022, 0
  %v1434 = vsel %vm1093, %v1023, 0
  %v1437 = vsel %vm1093, %v1024, 0
  %v1440 = vsel %vm1093, %v1025, 0
  %v1443 = vsel %vm1093, %v1026, 0
  %v1446 = vsel %vm1093, %v1027, 0
  %v1449 = vsel %vm1093, %v1028, 0
  %v1452 = vsel %vm1093, %v1029, 0
  %v1455 = vsel %vm1093, %v1030, 0
  %v1458 = vsel %vm1093, %v1031, 0
  %v1461 = vsel %vm1093, %v1032, 0
  %v1464 = vsel %vm1093, %v1033, 0
  %v1467 = vsel %vm1093, %v1034, 0
  %v1470 = vsel %vm1093, %v1035, 0
  %v1473 = vsel %vm1093, %v1036, 0
  %v1476 = vsel %vm1093, %v1037, 0
  %v1479 = vsel %vm1093, %v1038, 0
  %v1482 = vsel %vm1093, %v1039, 0
  %v1485 = vsel %vm1093, %v1040, 0
  %v1488 = vsel %vm1093, %v1041, 0
  %v1491 = vsel %vm1093, %v1042, 0
  %v1494 = vsel %vm1093, %v1043, 0
  %v1497 = vsel %vm1093, %v1044, 0
  %v1500 = vsel %vm1093, %v1045, 0
  %v1503 = vsel %vm1093, %v1046, 0
  %v1506 = vsel %vm1093, %v1047, 0
  %v1509 = vsel %vm1093, %v1048, 0
  %v1512 = vsel %vm1093, %v1049, 0
  %v1515 = vsel %vm1093, %v1050, 0
  %v1518 = vsel %vm1093, %v1051, 0
  %v1521 = vsel %vm1093, %v1052, 0
  %v1524 = vsel %vm1093, %v1053, 0
  %vm1526 = vcmask 1041408
  %v1528 = vsel %vm1526, %v1086, 0
  %1530 = vmatprep.subr.bf16.mxu0 0
  %1531 = vmatpush1.bf16.msra.mxu0 %v1080
  %1532 = vmatprep.subr.bf16.mxu0 0
  %1533 = vmatpush1.bf16.msra.mxu0 %v1081
  %1534 = vmatprep.subr.bf16.mxu0 0
  %1535 = vmatpush1.bf16.msra.mxu0 %v1082
  %1536 = vmatprep.subr.bf16.mxu0 0
  %1537 = vmatpush1.bf16.msra.mxu0 %v1083
  %1538 = vmatprep.subr.bf16.mxu0 0
  %1539 = vmatpush1.bf16.msra.mxu0 %v1084
  %1540 = vmatprep.subr.bf16.mxu0 0
  %1541 = vmatpush1.bf16.msra.mxu0 %v1085
  %1542 = vmatprep.subr.bf16.mxu0 0
  %1543 = vmatpush1.bf16.msra.mxu0 %v1528
  %1544 = vmatprep.subr.bf16.mxu0 0
  %1545 = vmatpush1.bf16.msra.mxu0 0
  %1546 = vmatprep.subr.bf16.mxu0 0
  %1547 = vmatpush1.bf16.msra.mxu0 0
  %1548 = vmatprep.subr.bf16.mxu0 0
  %1549 = vmatpush1.bf16.msra.mxu0 0
  %1550 = vmatprep.subr.bf16.mxu0 0
  %1551 = vmatpush1.bf16.msra.mxu0 0
  %1552 = vmatprep.subr.bf16.mxu0 0
  %1553 = vmatpush1.bf16.msra.mxu0 0
  %1554 = vmatprep.subr.bf16.mxu0 0
  %1555 = vmatpush1.bf16.msra.mxu0 0
  %1556 = vmatprep.subr.bf16.mxu0 0
  %1557 = vmatpush1.bf16.msra.mxu0 0
  %1558 = vmatprep.subr.bf16.mxu0 0
  %1559 = vmatpush1.bf16.msra.mxu0 0
  %1560 = vmatprep.subr.bf16.mxu0 0
  %1561 = vmatpush1.bf16.msra.mxu0 0
  %1562 = vmatprep.mubr.bf16.mxu0 0
  %1563 = vmatmul.mubr.bf16.gmra.mrb[0].mxu0 %v1095
  %v1564 = vpop.f32.mrb[0].mxu0
  %v1565 = vadd.f32 0.0, %v1564
  %v1566 = vpop.f32.mrb[0].mxu0
  %v1567 = vpop.f32.mrb[0].mxu0
  %v1568 = vadd.f32 0.0, %v1567
  %v1569 = vpop.f32.mrb[0].mxu0
  %1570 = vmatprep.mubr.bf16.mxu0 0
  %1571 = vmatmul.mubr.bf16.gmra.mrb[0].mxu0 %v1098
  %v1572 = vpop.f32.mrb[0].mxu0
  %v1573 = vadd.f32 0.0, %v1572
  %v1574 = vpop.f32.mrb[0].mxu0
  %v1575 = vpop.f32.mrb[0].mxu0
  %v1576 = vadd.f32 0.0, %v1575
  %v1577 = vpop.f32.mrb[0].mxu0
  %1578 = vmatprep.mubr.bf16.mxu0 0
  %1579 = vmatmul.mubr.bf16.gmra.mrb[0].mxu0 %v1101
  %v1580 = vpop.f32.mrb[0].mxu0
  %v1581 = vadd.f32 0.0, %v1580
  %v1582 = vpop.f32.mrb[0].mxu0
  %v1583 = vpop.f32.mrb[0].mxu0
  %v1584 = vadd.f32 0.0, %v1583
  %v1585 = vpop.f32.mrb[0].mxu0
  %1586 = vmatprep.mubr.bf16.mxu0 0
  %1587 = vmatmul.mubr.bf16.gmra.mrb[0].mxu0 %v1104
  %v1588 = vpop.f32.mrb[0].mxu0
  %v1589 = vadd.f32 0.0, %v1588
  %v1590 = vpop.f32.mrb[0].mxu0
  %v1591 = vpop.f32.mrb[0].mxu0
  %v1592 = vadd.f32 0.0, %v1591
  %v1593 = vpop.f32.mrb[0].mxu0
  %1594 = vmatprep.mubr.bf16.mxu0 0
  %1595 = vmatmul.mubr.bf16.gmra.mrb[0].mxu0 %v1107
  %v1596 = vpop.f32.mrb[0].mxu0
  %v1597 = vadd.f32 0.0, %v1596
  %v1598 = vpop.f32.mrb[0].mxu0
  %v1599 = vpop.f32.mrb[0].mxu0
  %v1600 = vadd.f32 0.0, %v1599
  %v1601 = vpop.f32.mrb[0].mxu0
  %1602 = vmatprep.mubr.bf16.mxu0 0
  %1603 = vmatmul.mubr.bf16.gmra.mrb[0].mxu0 %v1110
  %v1604 = vpop.f32.mrb[0].mxu0
  %v1605 = vadd.f32 0.0, %v1604
  %v1606 = vpop.f32.mrb[0].mxu0
  %v1607 = vpop.f32.mrb[0].mxu0
  %v1608 = vadd.f32 0.0, %v1607
  %v1609 = vpop.f32.mrb[0].mxu0
  %1610 = vmatprep.mubr.bf16.mxu0 0
  %1611 = vmatmul.mubr.bf16.gmra.mrb[0].mxu0 %v1113
  %v1612 = vpop.f32.mrb[0].mxu0
  %v1613 = vadd.f32 0.0, %v1612
  %v1614 = vpop.f32.mrb[0].mxu0
  %v1615 = vpop.f32.mrb[0].mxu0
  %v1616 = vadd.f32 0.0, %v1615
  %v1617 = vpop.f32.mrb[0].mxu0
  %1618 = vmatprep.mubr.bf16.mxu0 0
  %1619 = vmatmul.mubr.bf16.gmra.mrb[0].mxu0 %v1116
  %v1620 = vpop.f32.mrb[0].mxu0
  %v1621 = vadd.f32 0.0, %v1620
  %v1622 = vpop.f32.mrb[0].mxu0
  %v1623 = vpop.f32.mrb[0].mxu0
  %v1624 = vadd.f32 0.0, %v1623
  %v1625 = vpop.f32.mrb[0].mxu0
  %1626 = vmatprep.mubr.bf16.mxu0 0
  %1627 = vmatmul.mubr.bf16.gmra.mrb[0].mxu0 %v1119
  %v1628 = vpop.f32.mrb[0].mxu0
  %v1629 = vadd.f32 0.0, %v1628
  %v1630 = vpop.f32.mrb[0].mxu0
  %v1631 = vpop.f32.mrb[0].mxu0
  %v1632 = vadd.f32 0.0, %v1631
  %v1633 = vpop.f32.mrb[0].mxu0
  %1634 = vmatprep.mubr.bf16.mxu0 0
  %1635 = vmatmul.mubr.bf16.gmra.mrb[0].mxu0 %v1122
  %v1636 = vpop.f32.mrb[0].mxu0
  %v1637 = vadd.f32 0.0, %v1636
  %v1638 = vpop.f32.mrb[0].mxu0
  %v1639 = vpop.f32.mrb[0].mxu0
  %v1640 = vadd.f32 0.0, %v1639
  %v1641 = vpop.f32.mrb[0].mxu0
  %1642 = vmatprep.mubr.bf16.mxu0 0
  %1643 = vmatmul.mubr.bf16.gmra.mrb[0].mxu0 %v1125
  %v1644 = vpop.f32.mrb[0].mxu0
  %v1645 = vadd.f32 0.0, %v1644
  %v1646 = vpop.f32.mrb[0].mxu0
  %v1647 = vpop.f32.mrb[0].mxu0
  %v1648 = vadd.f32 0.0, %v1647
  %v1649 = vpop.f32.mrb[0].mxu0
  %1650 = vmatprep.mubr.bf16.mxu0 0
  %1651 = vmatmul.mubr.bf16.gmra.mrb[0].mxu0 %v1128
  %v1652 = vpop.f32.mrb[0].mxu0
  %v1653 = vadd.f32 0.0, %v1652
  %v1654 = vpop.f32.mrb[0].mxu0
  %v1655 = vpop.f32.mrb[0].mxu0
  %v1656 = vadd.f32 0.0, %v1655
  %v1657 = vpop.f32.mrb[0].mxu0
  %1658 = vmatprep.mubr.bf16.mxu0 0
  %1659 = vmatmul.mubr.bf16.gmra.mrb[0].mxu0 %v1131
  %v1660 = vpop.f32.mrb[0].mxu0
  %v1661 = vadd.f32 0.0, %v1660
  %v1662 = vpop.f32.mrb[0].mxu0
  %v1663 = vpop.f32.mrb[0].mxu0
  %v1664 = vadd.f32 0.0, %v1663
  %v1665 = vpop.f32.mrb[0].mxu0
  %1666 = vmatprep.mubr.bf16.mxu0 0
  %1667 = vmatmul.mubr.bf16.gmra.mrb[0].mxu0 %v1134
  %v1668 = vpop.f32.mrb[0].mxu0
  %v1669 = vadd.f32 0.0, %v1668
  %v1670 = vpop.f32.mrb[0].mxu0
  %v1671 = vpop.f32.mrb[0].mxu0
  %v1672 = vadd.f32 0.0, %v1671
  %v1673 = vpop.f32.mrb[0].mxu0
  %1674 = vmatprep.mubr.bf16.mxu0 0
  %1675 = vmatmul.mubr.bf16.gmra.mrb[0].mxu0 %v1137
  %v1676 = vpop.f32.mrb[0].mxu0
  %v1677 = vadd.f32 0.0, %v1676
  %v1678 = vpop.f32.mrb[0].mxu0
  %v1679 = vpop.f32.mrb[0].mxu0
  %v1680 = vadd.f32 0.0, %v1679
  %v1681 = vpop.f32.mrb[0].mxu0
  %1682 = vmatprep.mubr.bf16.mxu0 0
  %1683 = vmatmul.mubr.bf16.gmra.mrb[0].mxu0 %v1140
  %v1684 = vpop.f32.mrb[0].mxu0
  %v1685 = vadd.f32 0.0, %v1684
  %v1686 = vpop.f32.mrb[0].mxu0
  %v1687 = vpop.f32.mrb[0].mxu0
  %v1688 = vadd.f32 0.0, %v1687
  %v1689 = vpop.f32.mrb[0].mxu0
  %1690 = vmatprep.mubr.bf16.mxu0 0
  %1691 = vmatmul.mubr.bf16.gmra.mrb[0].mxu0 %v1143
  %v1692 = vpop.f32.mrb[0].mxu0
  %v1693 = vadd.f32 0.0, %v1692
  %v1694 = vpop.f32.mrb[0].mxu0
  %v1695 = vpop.f32.mrb[0].mxu0
  %v1696 = vadd.f32 0.0, %v1695
  %v1697 = vpop.f32.mrb[0].mxu0
  %1698 = vmatprep.mubr.bf16.mxu0 0
  %1699 = vmatmul.mubr.bf16.gmra.mrb[0].mxu0 %v1146
  %v1700 = vpop.f32.mrb[0].mxu0
  %v1701 = vadd.f32 0.0, %v1700
  %v1702 = vpop.f32.mrb[0].mxu0
  %v1703 = vpop.f32.mrb[0].mxu0
  %v1704 = vadd.f32 0.0, %v1703
  %v1705 = vpop.f32.mrb[0].mxu0
  %1706 = vmatprep.mubr.bf16.mxu0 0
  %1707 = vmatmul.mubr.bf16.gmra.mrb[0].mxu0 %v1149
  %v1708 = vpop.f32.mrb[0].mxu0
  %v1709 = vadd.f32 0.0, %v1708
  %v1710 = vpop.f32.mrb[0].mxu0
  %v1711 = vpop.f32.mrb[0].mxu0
  %v1712 = vadd.f32 0.0, %v1711
  %v1713 = vpop.f32.mrb[0].mxu0
  %1714 = vmatprep.mubr.bf16.mxu0 0
  %1715 = vmatmul.mubr.bf16.gmra.mrb[0].mxu0 %v1152
  %v1716 = vpop.f32.mrb[0].mxu0
  %v1717 = vadd.f32 0.0, %v1716
  %v1718 = vpop.f32.mrb[0].mxu0
  %v1719 = vpop.f32.mrb[0].mxu0
  %v1720 = vadd.f32 0.0, %v1719
  %v1721 = vpop.f32.mrb[0].mxu0
  %1722 = vmatprep.mubr.bf16.mxu0 0
  %1723 = vmatmul.mubr.bf16.gmra.mrb[0].mxu0 %v1155
  %v1724 = vpop.f32.mrb[0].mxu0
  %v1725 = vadd.f32 0.0, %v1724
  %v1726 = vpop.f32.mrb[0].mxu0
  %v1727 = vpop.f32.mrb[0].mxu0
  %v1728 = vadd.f32 0.0, %v1727
  %v1729 = vpop.f32.mrb[0].mxu0
  %1730 = vmatprep.mubr.bf16.mxu0 0
  %1731 = vmatmul.mubr.bf16.gmra.mrb[0].mxu0 %v1158
  %v1732 = vpop.f32.mrb[0].mxu0
  %v1733 = vadd.f32 0.0, %v1732
  %v1734 = vpop.f32.mrb[0].mxu0
  %v1735 = vpop.f32.mrb[0].mxu0
  %v1736 = vadd.f32 0.0, %v1735
  %v1737 = vpop.f32.mrb[0].mxu0
  %1738 = vmatprep.mubr.bf16.mxu0 0
  %1739 = vmatmul.mubr.bf16.gmra.mrb[0].mxu0 %v1161
  %v1740 = vpop.f32.mrb[0].mxu0
  %v1741 = vadd.f32 0.0, %v1740
  %v1742 = vpop.f32.mrb[0].mxu0
  %v1743 = vpop.f32.mrb[0].mxu0
  %v1744 = vadd.f32 0.0, %v1743
  %v1745 = vpop.f32.mrb[0].mxu0
  %1746 = vmatprep.mubr.bf16.mxu0 0
  %1747 = vmatmul.mubr.bf16.gmra.mrb[0].mxu0 %v1164
  %v1748 = vpop.f32.mrb[0].mxu0
  %v1749 = vadd.f32 0.0, %v1748
  %v1750 = vpop.f32.mrb[0].mxu0
  %v1751 = vpop.f32.mrb[0].mxu0
  %v1752 = vadd.f32 0.0, %v1751
  %v1753 = vpop.f32.mrb[0].mxu0
  %1754 = vmatprep.mubr.bf16.mxu0 0
  %1755 = vmatmul.mubr.bf16.gmra.mrb[0].mxu0 %v1167
  %v1756 = vpop.f32.mrb[0].mxu0
  %v1757 = vadd.f32 0.0, %v1756
  %v1758 = vpop.f32.mrb[0].mxu0
  %v1759 = vpop.f32.mrb[0].mxu0
  %v1760 = vadd.f32 0.0, %v1759
  %v1761 = vpop.f32.mrb[0].mxu0
  %1762 = vmatprep.mubr.bf16.mxu0 0
  %1763 = vmatmul.mubr.bf16.gmra.mrb[0].mxu0 %v1170
  %v1764 = vpop.f32.mrb[0].mxu0
  %v1765 = vadd.f32 0.0, %v1764
  %v1766 = vpop.f32.mrb[0].mxu0
  %v1767 = vpop.f32.mrb[0].mxu0
  %v1768 = vadd.f32 0.0, %v1767
  %v1769 = vpop.f32.mrb[0].mxu0
  %1770 = vmatprep.mubr.bf16.mxu0 0
  %1771 = vmatmul.mubr.bf16.gmra.mrb[0].mxu0 %v1173
  %v1772 = vpop.f32.mrb[0].mxu0
  %v1773 = vadd.f32 0.0, %v1772
  %v1774 = vpop.f32.mrb[0].mxu0
  %v1775 = vpop.f32.mrb[0].mxu0
  %v1776 = vadd.f32 0.0, %v1775
  %v1777 = vpop.f32.mrb[0].mxu0
  %1778 = vmatprep.mubr.bf16.mxu0 0
  %1779 = vmatmul.mubr.bf16.gmra.mrb[0].mxu0 %v1176
  %v1780 = vpop.f32.mrb[0].mxu0
  %v1781 = vadd.f32 0.0, %v1780
  %v1782 = vpop.f32.mrb[0].mxu0
  %v1783 = vpop.f32.mrb[0].mxu0
  %v1784 = vadd.f32 0.0, %v1783
  %v1785 = vpop.f32.mrb[0].mxu0
  %1786 = vmatprep.mubr.bf16.mxu0 0
  %1787 = vmatmul.mubr.bf16.gmra.mrb[0].mxu0 %v1179
  %v1788 = vpop.f32.mrb[0].mxu0
  %v1789 = vadd.f32 0.0, %v1788
  %v1790 = vpop.f32.mrb[0].mxu0
  %v1791 = vpop.f32.mrb[0].mxu0
  %v1792 = vadd.f32 0.0, %v1791
  %v1793 = vpop.f32.mrb[0].mxu0
  %1794 = vmatprep.mubr.bf16.mxu0 0
  %1795 = vmatmul.mubr.bf16.gmra.mrb[0].mxu0 %v1182
  %v1796 = vpop.f32.mrb[0].mxu0
  %v1797 = vadd.f32 0.0, %v1796
  %v1798 = vpop.f32.mrb[0].mxu0
  %v1799 = vpop.f32.mrb[0].mxu0
  %v1800 = vadd.f32 0.0, %v1799
  %v1801 = vpop.f32.mrb[0].mxu0
  %1802 = vmatprep.mubr.bf16.mxu0 0
  %1803 = vmatmul.mubr.bf16.gmra.mrb[0].mxu0 %v1185
  %v1804 = vpop.f32.mrb[0].mxu0
  %v1805 = vadd.f32 0.0, %v1804
  %v1806 = vpop.f32.mrb[0].mxu0
  %v1807 = vpop.f32.mrb[0].mxu0
  %v1808 = vadd.f32 0.0, %v1807
  %v1809 = vpop.f32.mrb[0].mxu0
  %1810 = vmatprep.mubr.bf16.mxu0 0
  %1811 = vmatmul.mubr.bf16.gmra.mrb[0].mxu0 %v1188
  %v1812 = vpop.f32.mrb[0].mxu0
  %v1813 = vadd.f32 0.0, %v1812
  %v1814 = vpop.f32.mrb[0].mxu0
  %v1815 = vpop.f32.mrb[0].mxu0
  %v1816 = vadd.f32 0.0, %v1815
  %v1817 = vpop.f32.mrb[0].mxu0
  %1818 = vmatprep.mubr.bf16.mxu0 0
  %1819 = vmatmul.mubr.bf16.gmra.mrb[0].mxu0 %v1191
  %v1820 = vpop.f32.mrb[0].mxu0
  %v1821 = vadd.f32 0.0, %v1820
  %v1822 = vpop.f32.mrb[0].mxu0
  %v1823 = vpop.f32.mrb[0].mxu0
  %v1824 = vadd.f32 0.0, %v1823
  %v1825 = vpop.f32.mrb[0].mxu0
  %1826 = vmatprep.mubr.bf16.mxu0 0
  %1827 = vmatmul.mubr.bf16.gmra.mrb[0].mxu0 %v1194
  %v1828 = vpop.f32.mrb[0].mxu0
  %v1829 = vadd.f32 0.0, %v1828
  %v1830 = vpop.f32.mrb[0].mxu0
  %v1831 = vpop.f32.mrb[0].mxu0
  %v1832 = vadd.f32 0.0, %v1831
  %v1833 = vpop.f32.mrb[0].mxu0
  %1834 = vmatprep.mubr.bf16.mxu0 0
  %1835 = vmatmul.mubr.bf16.gmra.mrb[0].mxu0 %v1197
  %v1836 = vpop.f32.mrb[0].mxu0
  %v1837 = vadd.f32 0.0, %v1836
  %v1838 = vpop.f32.mrb[0].mxu0
  %v1839 = vpop.f32.mrb[0].mxu0
  %v1840 = vadd.f32 0.0, %v1839
  %v1841 = vpop.f32.mrb[0].mxu0
  %1842 = vmatprep.mubr.bf16.mxu0 0
  %1843 = vmatmul.mubr.bf16.gmra.mrb[0].mxu0 %v1200
  %v1844 = vpop.f32.mrb[0].mxu0
  %v1845 = vadd.f32 0.0, %v1844
  %v1846 = vpop.f32.mrb[0].mxu0
  %v1847 = vpop.f32.mrb[0].mxu0
  %v1848 = vadd.f32 0.0, %v1847
  %v1849 = vpop.f32.mrb[0].mxu0
  %1850 = vmatprep.mubr.bf16.mxu0 0
  %1851 = vmatmul.mubr.bf16.gmra.mrb[0].mxu0 %v1203
  %v1852 = vpop.f32.mrb[0].mxu0
  %v1853 = vadd.f32 0.0, %v1852
  %v1854 = vpop.f32.mrb[0].mxu0
  %v1855 = vpop.f32.mrb[0].mxu0
  %v1856 = vadd.f32 0.0, %v1855
  %v1857 = vpop.f32.mrb[0].mxu0
  %1858 = vmatprep.mubr.bf16.mxu0 0
  %1859 = vmatmul.mubr.bf16.gmra.mrb[0].mxu0 %v1206
  %v1860 = vpop.f32.mrb[0].mxu0
  %v1861 = vadd.f32 0.0, %v1860
  %v1862 = vpop.f32.mrb[0].mxu0
  %v1863 = vpop.f32.mrb[0].mxu0
  %v1864 = vadd.f32 0.0, %v1863
  %v1865 = vpop.f32.mrb[0].mxu0
  %1866 = vmatprep.mubr.bf16.mxu0 0
  %1867 = vmatmul.mubr.bf16.gmra.mrb[0].mxu0 %v1209
  %v1868 = vpop.f32.mrb[0].mxu0
  %v1869 = vadd.f32 0.0, %v1868
  %v1870 = vpop.f32.mrb[0].mxu0
  %v1871 = vpop.f32.mrb[0].mxu0
  %v1872 = vadd.f32 0.0, %v1871
  %v1873 = vpop.f32.mrb[0].mxu0
  %1874 = vmatprep.mubr.bf16.mxu0 0
  %1875 = vmatmul.mubr.bf16.gmra.mrb[0].mxu0 %v1212
  %v1876 = vpop.f32.mrb[0].mxu0
  %v1877 = vadd.f32 0.0, %v1876
  %v1878 = vpop.f32.mrb[0].mxu0
  %v1879 = vpop.f32.mrb[0].mxu0
  %v1880 = vadd.f32 0.0, %v1879
  %v1881 = vpop.f32.mrb[0].mxu0
  %1882 = vmatprep.mubr.bf16.mxu0 0
  %1883 = vmatmul.mubr.bf16.gmra.mrb[0].mxu0 %v1215
  %v1884 = vpop.f32.mrb[0].mxu0
  %v1885 = vadd.f32 0.0, %v1884
  %v1886 = vpop.f32.mrb[0].mxu0
  %v1887 = vpop.f32.mrb[0].mxu0
  %v1888 = vadd.f32 0.0, %v1887
  %v1889 = vpop.f32.mrb[0].mxu0
  %1890 = vmatprep.mubr.bf16.mxu0 0
  %1891 = vmatmul.mubr.bf16.gmra.mrb[0].mxu0 %v1218
  %v1892 = vpop.f32.mrb[0].mxu0
  %v1893 = vadd.f32 0.0, %v1892
  %v1894 = vpop.f32.mrb[0].mxu0
  %v1895 = vpop.f32.mrb[0].mxu0
  %v1896 = vadd.f32 0.0, %v1895
  %v1897 = vpop.f32.mrb[0].mxu0
  %1898 = vmatprep.mubr.bf16.mxu0 0
  %1899 = vmatmul.mubr.bf16.gmra.mrb[0].mxu0 %v1221
  %v1900 = vpop.f32.mrb[0].mxu0
  %v1901 = vadd.f32 0.0, %v1900
  %v1902 = vpop.f32.mrb[0].mxu0
  %v1903 = vpop.f32.mrb[0].mxu0
  %v1904 = vadd.f32 0.0, %v1903
  %v1905 = vpop.f32.mrb[0].mxu0
  %1906 = vmatprep.mubr.bf16.mxu0 0
  %1907 = vmatmul.mubr.bf16.gmra.mrb[0].mxu0 %v1224
  %v1908 = vpop.f32.mrb[0].mxu0
  %v1909 = vadd.f32 0.0, %v1908
  %v1910 = vpop.f32.mrb[0].mxu0
  %v1911 = vpop.f32.mrb[0].mxu0
  %v1912 = vadd.f32 0.0, %v1911
  %v1913 = vpop.f32.mrb[0].mxu0
  %1914 = vmatprep.mubr.bf16.mxu0 0
  %1915 = vmatmul.mubr.bf16.gmra.mrb[0].mxu0 %v1227
  %v1916 = vpop.f32.mrb[0].mxu0
  %v1917 = vadd.f32 0.0, %v1916
  %v1918 = vpop.f32.mrb[0].mxu0
  %v1919 = vpop.f32.mrb[0].mxu0
  %v1920 = vadd.f32 0.0, %v1919
  %v1921 = vpop.f32.mrb[0].mxu0
  %1922 = vmatprep.mubr.bf16.mxu0 0
  %1923 = vmatmul.mubr.bf16.gmra.mrb[0].mxu0 %v1230
  %v1924 = vpop.f32.mrb[0].mxu0
  %v1925 = vadd.f32 0.0, %v1924
  %v1926 = vpop.f32.mrb[0].mxu0
  %v1927 = vpop.f32.mrb[0].mxu0
  %v1928 = vadd.f32 0.0, %v1927
  %v1929 = vpop.f32.mrb[0].mxu0
  %1930 = vmatprep.mubr.bf16.mxu0 0
  %1931 = vmatmul.mubr.bf16.gmra.mrb[0].mxu0 %v1233
  %v1932 = vpop.f32.mrb[0].mxu0
  %v1933 = vadd.f32 0.0, %v1932
  %v1934 = vpop.f32.mrb[0].mxu0
  %v1935 = vpop.f32.mrb[0].mxu0
  %v1936 = vadd.f32 0.0, %v1935
  %v1937 = vpop.f32.mrb[0].mxu0
  %1938 = vmatprep.mubr.bf16.mxu0 0
  %1939 = vmatmul.mubr.bf16.gmra.mrb[0].mxu0 %v1236
  %v1940 = vpop.f32.mrb[0].mxu0
  %v1941 = vadd.f32 0.0, %v1940
  %v1942 = vpop.f32.mrb[0].mxu0
  %v1943 = vpop.f32.mrb[0].mxu0
  %v1944 = vadd.f32 0.0, %v1943
  %v1945 = vpop.f32.mrb[0].mxu0
  %1946 = vmatprep.mubr.bf16.mxu0 0
  %1947 = vmatmul.mubr.bf16.gmra.mrb[0].mxu0 %v1239
  %v1948 = vpop.f32.mrb[0].mxu0
  %v1949 = vadd.f32 0.0, %v1948
  %v1950 = vpop.f32.mrb[0].mxu0
  %v1951 = vpop.f32.mrb[0].mxu0
  %v1952 = vadd.f32 0.0, %v1951
  %v1953 = vpop.f32.mrb[0].mxu0
  %1954 = vmatprep.mubr.bf16.mxu0 0
  %1955 = vmatmul.mubr.bf16.gmra.mrb[0].mxu0 %v1242
  %v1956 = vpop.f32.mrb[0].mxu0
  %v1957 = vadd.f32 0.0, %v1956
  %v1958 = vpop.f32.mrb[0].mxu0
  %v1959 = vpop.f32.mrb[0].mxu0
  %v1960 = vadd.f32 0.0, %v1959
  %v1961 = vpop.f32.mrb[0].mxu0
  %1962 = vmatprep.mubr.bf16.mxu0 0
  %1963 = vmatmul.mubr.bf16.gmra.mrb[0].mxu0 %v1245
  %v1964 = vpop.f32.mrb[0].mxu0
  %v1965 = vadd.f32 0.0, %v1964
  %v1966 = vpop.f32.mrb[0].mxu0
  %v1967 = vpop.f32.mrb[0].mxu0
  %v1968 = vadd.f32 0.0, %v1967
  %v1969 = vpop.f32.mrb[0].mxu0
  %1970 = vmatprep.mubr.bf16.mxu0 0
  %1971 = vmatmul.mubr.bf16.gmra.mrb[0].mxu0 %v1248
  %v1972 = vpop.f32.mrb[0].mxu0
  %v1973 = vadd.f32 0.0, %v1972
  %v1974 = vpop.f32.mrb[0].mxu0
  %v1975 = vpop.f32.mrb[0].mxu0
  %v1976 = vadd.f32 0.0, %v1975
  %v1977 = vpop.f32.mrb[0].mxu0
  %1978 = vmatprep.mubr.bf16.mxu0 0
  %1979 = vmatmul.mubr.bf16.gmra.mrb[0].mxu0 %v1251
  %v1980 = vpop.f32.mrb[0].mxu0
  %v1981 = vadd.f32 0.0, %v1980
  %v1982 = vpop.f32.mrb[0].mxu0
  %v1983 = vpop.f32.mrb[0].mxu0
  %v1984 = vadd.f32 0.0, %v1983
  %v1985 = vpop.f32.mrb[0].mxu0
  %1986 = vmatprep.mubr.bf16.mxu0 0
  %1987 = vmatmul.mubr.bf16.gmra.mrb[0].mxu0 %v1254
  %v1988 = vpop.f32.mrb[0].mxu0
  %v1989 = vadd.f32 0.0, %v1988
  %v1990 = vpop.f32.mrb[0].mxu0
  %v1991 = vpop.f32.mrb[0].mxu0
  %v1992 = vadd.f32 0.0, %v1991
  %v1993 = vpop.f32.mrb[0].mxu0
  %1994 = vmatprep.mubr.bf16.mxu0 0
  %1995 = vmatmul.mubr.bf16.gmra.mrb[0].mxu0 %v1257
  %v1996 = vpop.f32.mrb[0].mxu0
  %v1997 = vadd.f32 0.0, %v1996
  %v1998 = vpop.f32.mrb[0].mxu0
  %v1999 = vpop.f32.mrb[0].mxu0
  %v2000 = vadd.f32 0.0, %v1999
  %v2001 = vpop.f32.mrb[0].mxu0
  %2002 = vmatprep.mubr.bf16.mxu0 0
  %2003 = vmatmul.mubr.bf16.gmra.mrb[0].mxu0 %v1260
  %v2004 = vpop.f32.mrb[0].mxu0
  %v2005 = vadd.f32 0.0, %v2004
  %v2006 = vpop.f32.mrb[0].mxu0
  %v2007 = vpop.f32.mrb[0].mxu0
  %v2008 = vadd.f32 0.0, %v2007
  %v2009 = vpop.f32.mrb[0].mxu0
  %2010 = vmatprep.mubr.bf16.mxu0 0
  %2011 = vmatmul.mubr.bf16.gmra.mrb[0].mxu0 %v1263
  %v2012 = vpop.f32.mrb[0].mxu0
  %v2013 = vadd.f32 0.0, %v2012
  %v2014 = vpop.f32.mrb[0].mxu0
  %v2015 = vpop.f32.mrb[0].mxu0
  %v2016 = vadd.f32 0.0, %v2015
  %v2017 = vpop.f32.mrb[0].mxu0
  %2018 = vmatprep.mubr.bf16.mxu0 0
  %2019 = vmatmul.mubr.bf16.gmra.mrb[0].mxu0 %v1266
  %v2020 = vpop.f32.mrb[0].mxu0
  %v2021 = vadd.f32 0.0, %v2020
  %v2022 = vpop.f32.mrb[0].mxu0
  %v2023 = vpop.f32.mrb[0].mxu0
  %v2024 = vadd.f32 0.0, %v2023
  %v2025 = vpop.f32.mrb[0].mxu0
  %2026 = vmatprep.mubr.bf16.mxu0 0
  %2027 = vmatmul.mubr.bf16.gmra.mrb[0].mxu0 %v1269
  %v2028 = vpop.f32.mrb[0].mxu0
  %v2029 = vadd.f32 0.0, %v2028
  %v2030 = vpop.f32.mrb[0].mxu0
  %v2031 = vpop.f32.mrb[0].mxu0
  %v2032 = vadd.f32 0.0, %v2031
  %v2033 = vpop.f32.mrb[0].mxu0
  %2034 = vmatprep.mubr.bf16.mxu0 0
  %2035 = vmatmul.mubr.bf16.gmra.mrb[0].mxu0 %v1272
  %v2036 = vpop.f32.mrb[0].mxu0
  %v2037 = vadd.f32 0.0, %v2036
  %v2038 = vpop.f32.mrb[0].mxu0
  %v2039 = vpop.f32.mrb[0].mxu0
  %v2040 = vadd.f32 0.0, %v2039
  %v2041 = vpop.f32.mrb[0].mxu0
  %2042 = vmatprep.mubr.bf16.mxu0 0
  %2043 = vmatmul.mubr.bf16.gmra.mrb[0].mxu0 %v1275
  %v2044 = vpop.f32.mrb[0].mxu0
  %v2045 = vadd.f32 0.0, %v2044
  %v2046 = vpop.f32.mrb[0].mxu0
  %v2047 = vpop.f32.mrb[0].mxu0
  %v2048 = vadd.f32 0.0, %v2047
  %v2049 = vpop.f32.mrb[0].mxu0
  %2050 = vmatprep.mubr.bf16.mxu0 0
  %2051 = vmatmul.mubr.bf16.gmra.mrb[0].mxu0 %v1278
  %v2052 = vpop.f32.mrb[0].mxu0
  %v2053 = vadd.f32 0.0, %v2052
  %v2054 = vpop.f32.mrb[0].mxu0
  %v2055 = vpop.f32.mrb[0].mxu0
  %v2056 = vadd.f32 0.0, %v2055
  %v2057 = vpop.f32.mrb[0].mxu0
  %2058 = vmatprep.mubr.bf16.mxu0 0
  %2059 = vmatmul.mubr.bf16.gmra.mrb[0].mxu0 %v1281
  %v2060 = vpop.f32.mrb[0].mxu0
  %v2061 = vadd.f32 0.0, %v2060
  %v2062 = vpop.f32.mrb[0].mxu0
  %v2063 = vpop.f32.mrb[0].mxu0
  %v2064 = vadd.f32 0.0, %v2063
  %v2065 = vpop.f32.mrb[0].mxu0
  %2066 = vmatprep.mubr.bf16.mxu0 0
  %2067 = vmatmul.mubr.bf16.gmra.mrb[0].mxu0 %v1284
  %v2068 = vpop.f32.mrb[0].mxu0
  %v2069 = vadd.f32 0.0, %v2068
  %v2070 = vpop.f32.mrb[0].mxu0
  %v2071 = vpop.f32.mrb[0].mxu0
  %v2072 = vadd.f32 0.0, %v2071
  %v2073 = vpop.f32.mrb[0].mxu0
  %2074 = vmatprep.mubr.bf16.mxu0 0
  %2075 = vmatmul.mubr.bf16.gmra.mrb[0].mxu0 %v1287
  %v2076 = vpop.f32.mrb[0].mxu0
  %v2077 = vadd.f32 0.0, %v2076
  %v2078 = vpop.f32.mrb[0].mxu0
  %v2079 = vpop.f32.mrb[0].mxu0
  %v2080 = vadd.f32 0.0, %v2079
  %v2081 = vpop.f32.mrb[0].mxu0
  %2082 = vmatprep.mubr.bf16.mxu0 0
  %2083 = vmatmul.mubr.bf16.gmra.mrb[0].mxu0 %v1290
  %v2084 = vpop.f32.mrb[0].mxu0
  %v2085 = vadd.f32 0.0, %v2084
  %v2086 = vpop.f32.mrb[0].mxu0
  %v2087 = vpop.f32.mrb[0].mxu0
  %v2088 = vadd.f32 0.0, %v2087
  %v2089 = vpop.f32.mrb[0].mxu0
  %2090 = vmatprep.mubr.bf16.mxu0 0
  %2091 = vmatmul.mubr.bf16.gmra.mrb[0].mxu0 %v1293
  %v2092 = vpop.f32.mrb[0].mxu0
  %v2093 = vadd.f32 0.0, %v2092
  %v2094 = vpop.f32.mrb[0].mxu0
  %v2095 = vpop.f32.mrb[0].mxu0
  %v2096 = vadd.f32 0.0, %v2095
  %v2097 = vpop.f32.mrb[0].mxu0
  %2098 = vmatprep.mubr.bf16.mxu0 0
  %2099 = vmatmul.mubr.bf16.gmra.mrb[0].mxu0 %v1296
  %v2100 = vpop.f32.mrb[0].mxu0
  %v2101 = vadd.f32 0.0, %v2100
  %v2102 = vpop.f32.mrb[0].mxu0
  %v2103 = vpop.f32.mrb[0].mxu0
  %v2104 = vadd.f32 0.0, %v2103
  %v2105 = vpop.f32.mrb[0].mxu0
  %2106 = vmatprep.mubr.bf16.mxu0 0
  %2107 = vmatmul.mubr.bf16.gmra.mrb[0].mxu0 %v1299
  %v2108 = vpop.f32.mrb[0].mxu0
  %v2109 = vadd.f32 0.0, %v2108
  %v2110 = vpop.f32.mrb[0].mxu0
  %v2111 = vpop.f32.mrb[0].mxu0
  %v2112 = vadd.f32 0.0, %v2111
  %v2113 = vpop.f32.mrb[0].mxu0
  %2114 = vmatprep.mubr.bf16.mxu0 0
  %2115 = vmatmul.mubr.bf16.gmra.mrb[0].mxu0 %v1302
  %v2116 = vpop.f32.mrb[0].mxu0
  %v2117 = vadd.f32 0.0, %v2116
  %v2118 = vpop.f32.mrb[0].mxu0
  %v2119 = vpop.f32.mrb[0].mxu0
  %v2120 = vadd.f32 0.0, %v2119
  %v2121 = vpop.f32.mrb[0].mxu0
  %2122 = vmatprep.mubr.bf16.mxu0 0
  %2123 = vmatmul.mubr.bf16.gmra.mrb[0].mxu0 %v1305
  %v2124 = vpop.f32.mrb[0].mxu0
  %v2125 = vadd.f32 0.0, %v2124
  %v2126 = vpop.f32.mrb[0].mxu0
  %v2127 = vpop.f32.mrb[0].mxu0
  %v2128 = vadd.f32 0.0, %v2127
  %v2129 = vpop.f32.mrb[0].mxu0
  %2130 = vmatprep.mubr.bf16.mxu0 0
  %2131 = vmatmul.mubr.bf16.gmra.mrb[0].mxu0 %v1308
  %v2132 = vpop.f32.mrb[0].mxu0
  %v2133 = vadd.f32 0.0, %v2132
  %v2134 = vpop.f32.mrb[0].mxu0
  %v2135 = vpop.f32.mrb[0].mxu0
  %v2136 = vadd.f32 0.0, %v2135
  %v2137 = vpop.f32.mrb[0].mxu0
  %2138 = vmatprep.mubr.bf16.mxu0 0
  %2139 = vmatmul.mubr.bf16.gmra.mrb[0].mxu0 %v1311
  %v2140 = vpop.f32.mrb[0].mxu0
  %v2141 = vadd.f32 0.0, %v2140
  %v2142 = vpop.f32.mrb[0].mxu0
  %v2143 = vpop.f32.mrb[0].mxu0
  %v2144 = vadd.f32 0.0, %v2143
  %v2145 = vpop.f32.mrb[0].mxu0
  %2146 = vmatprep.mubr.bf16.mxu0 0
  %2147 = vmatmul.mubr.bf16.gmra.mrb[0].mxu0 %v1314
  %v2148 = vpop.f32.mrb[0].mxu0
  %v2149 = vadd.f32 0.0, %v2148
  %v2150 = vpop.f32.mrb[0].mxu0
  %v2151 = vpop.f32.mrb[0].mxu0
  %v2152 = vadd.f32 0.0, %v2151
  %v2153 = vpop.f32.mrb[0].mxu0
  %2154 = vmatprep.mubr.bf16.mxu0 0
  %2155 = vmatmul.mubr.bf16.gmra.mrb[0].mxu0 %v1317
  %v2156 = vpop.f32.mrb[0].mxu0
  %v2157 = vadd.f32 0.0, %v2156
  %v2158 = vpop.f32.mrb[0].mxu0
  %v2159 = vpop.f32.mrb[0].mxu0
  %v2160 = vadd.f32 0.0, %v2159
  %v2161 = vpop.f32.mrb[0].mxu0
  %2162 = vmatprep.mubr.bf16.mxu0 0
  %2163 = vmatmul.mubr.bf16.gmra.mrb[0].mxu0 %v1320
  %v2164 = vpop.f32.mrb[0].mxu0
  %v2165 = vadd.f32 0.0, %v2164
  %v2166 = vpop.f32.mrb[0].mxu0
  %v2167 = vpop.f32.mrb[0].mxu0
  %v2168 = vadd.f32 0.0, %v2167
  %v2169 = vpop.f32.mrb[0].mxu0
  %2170 = vmatprep.mubr.bf16.mxu0 0
  %2171 = vmatmul.mubr.bf16.gmra.mrb[0].mxu0 %v1323
  %v2172 = vpop.f32.mrb[0].mxu0
  %v2173 = vadd.f32 0.0, %v2172
  %v2174 = vpop.f32.mrb[0].mxu0
  %v2175 = vpop.f32.mrb[0].mxu0
  %v2176 = vadd.f32 0.0, %v2175
  %v2177 = vpop.f32.mrb[0].mxu0
  %2178 = vmatprep.mubr.bf16.mxu0 0
  %2179 = vmatmul.mubr.bf16.gmra.mrb[0].mxu0 %v1326
  %v2180 = vpop.f32.mrb[0].mxu0
  %v2181 = vadd.f32 0.0, %v2180
  %v2182 = vpop.f32.mrb[0].mxu0
  %v2183 = vpop.f32.mrb[0].mxu0
  %v2184 = vadd.f32 0.0, %v2183
  %v2185 = vpop.f32.mrb[0].mxu0
  %2186 = vmatprep.mubr.bf16.mxu0 0
  %2187 = vmatmul.mubr.bf16.gmra.mrb[0].mxu0 %v1329
  %v2188 = vpop.f32.mrb[0].mxu0
  %v2189 = vadd.f32 0.0, %v2188
  %v2190 = vpop.f32.mrb[0].mxu0
  %v2191 = vpop.f32.mrb[0].mxu0
  %v2192 = vadd.f32 0.0, %v2191
  %v2193 = vpop.f32.mrb[0].mxu0
  %2194 = vmatprep.mubr.bf16.mxu0 0
  %2195 = vmatmul.mubr.bf16.gmra.mrb[0].mxu0 %v1332
  %v2196 = vpop.f32.mrb[0].mxu0
  %v2197 = vadd.f32 0.0, %v2196
  %v2198 = vpop.f32.mrb[0].mxu0
  %v2199 = vpop.f32.mrb[0].mxu0
  %v2200 = vadd.f32 0.0, %v2199
  %v2201 = vpop.f32.mrb[0].mxu0
  %2202 = vmatprep.mubr.bf16.mxu0 0
  %2203 = vmatmul.mubr.bf16.gmra.mrb[0].mxu0 %v1335
  %v2204 = vpop.f32.mrb[0].mxu0
  %v2205 = vadd.f32 0.0, %v2204
  %v2206 = vpop.f32.mrb[0].mxu0
  %v2207 = vpop.f32.mrb[0].mxu0
  %v2208 = vadd.f32 0.0, %v2207
  %v2209 = vpop.f32.mrb[0].mxu0
  %2210 = vmatprep.mubr.bf16.mxu0 0
  %2211 = vmatmul.mubr.bf16.gmra.mrb[0].mxu0 %v1338
  %v2212 = vpop.f32.mrb[0].mxu0
  %v2213 = vadd.f32 0.0, %v2212
  %v2214 = vpop.f32.mrb[0].mxu0
  %v2215 = vpop.f32.mrb[0].mxu0
  %v2216 = vadd.f32 0.0, %v2215
  %v2217 = vpop.f32.mrb[0].mxu0
  %2218 = vmatprep.mubr.bf16.mxu0 0
  %2219 = vmatmul.mubr.bf16.gmra.mrb[0].mxu0 %v1341
  %v2220 = vpop.f32.mrb[0].mxu0
  %v2221 = vadd.f32 0.0, %v2220
  %v2222 = vpop.f32.mrb[0].mxu0
  %v2223 = vpop.f32.mrb[0].mxu0
  %v2224 = vadd.f32 0.0, %v2223
  %v2225 = vpop.f32.mrb[0].mxu0
  %2226 = vmatprep.mubr.bf16.mxu0 0
  %2227 = vmatmul.mubr.bf16.gmra.mrb[0].mxu0 %v1344
  %v2228 = vpop.f32.mrb[0].mxu0
  %v2229 = vadd.f32 0.0, %v2228
  %v2230 = vpop.f32.mrb[0].mxu0
  %v2231 = vpop.f32.mrb[0].mxu0
  %v2232 = vadd.f32 0.0, %v2231
  %v2233 = vpop.f32.mrb[0].mxu0
  %2234 = vmatprep.mubr.bf16.mxu0 0
  %2235 = vmatmul.mubr.bf16.gmra.mrb[0].mxu0 %v1347
  %v2236 = vpop.f32.mrb[0].mxu0
  %v2237 = vadd.f32 0.0, %v2236
  %v2238 = vpop.f32.mrb[0].mxu0
  %v2239 = vpop.f32.mrb[0].mxu0
  %v2240 = vadd.f32 0.0, %v2239
  %v2241 = vpop.f32.mrb[0].mxu0
  %2242 = vmatprep.mubr.bf16.mxu0 0
  %2243 = vmatmul.mubr.bf16.gmra.mrb[0].mxu0 %v1350
  %v2244 = vpop.f32.mrb[0].mxu0
  %v2245 = vadd.f32 0.0, %v2244
  %v2246 = vpop.f32.mrb[0].mxu0
  %v2247 = vpop.f32.mrb[0].mxu0
  %v2248 = vadd.f32 0.0, %v2247
  %v2249 = vpop.f32.mrb[0].mxu0
  %2250 = vmatprep.mubr.bf16.mxu0 0
  %2251 = vmatmul.mubr.bf16.gmra.mrb[0].mxu0 %v1353
  %v2252 = vpop.f32.mrb[0].mxu0
  %v2253 = vadd.f32 0.0, %v2252
  %v2254 = vpop.f32.mrb[0].mxu0
  %v2255 = vpop.f32.mrb[0].mxu0
  %v2256 = vadd.f32 0.0, %v2255
  %v2257 = vpop.f32.mrb[0].mxu0
  %2258 = vmatprep.mubr.bf16.mxu0 0
  %2259 = vmatmul.mubr.bf16.gmra.mrb[0].mxu0 %v1356
  %v2260 = vpop.f32.mrb[0].mxu0
  %v2261 = vadd.f32 0.0, %v2260
  %v2262 = vpop.f32.mrb[0].mxu0
  %v2263 = vpop.f32.mrb[0].mxu0
  %v2264 = vadd.f32 0.0, %v2263
  %v2265 = vpop.f32.mrb[0].mxu0
  %2266 = vmatprep.mubr.bf16.mxu0 0
  %2267 = vmatmul.mubr.bf16.gmra.mrb[0].mxu0 %v1359
  %v2268 = vpop.f32.mrb[0].mxu0
  %v2269 = vadd.f32 0.0, %v2268
  %v2270 = vpop.f32.mrb[0].mxu0
  %v2271 = vpop.f32.mrb[0].mxu0
  %v2272 = vadd.f32 0.0, %v2271
  %v2273 = vpop.f32.mrb[0].mxu0
  %2274 = vmatprep.mubr.bf16.mxu0 0
  %2275 = vmatmul.mubr.bf16.gmra.mrb[0].mxu0 %v1362
  %v2276 = vpop.f32.mrb[0].mxu0
  %v2277 = vadd.f32 0.0, %v2276
  %v2278 = vpop.f32.mrb[0].mxu0
  %v2279 = vpop.f32.mrb[0].mxu0
  %v2280 = vadd.f32 0.0, %v2279
  %v2281 = vpop.f32.mrb[0].mxu0
  %2282 = vmatprep.mubr.bf16.mxu0 0
  %2283 = vmatmul.mubr.bf16.gmra.mrb[0].mxu0 %v1365
  %v2284 = vpop.f32.mrb[0].mxu0
  %v2285 = vadd.f32 0.0, %v2284
  %v2286 = vpop.f32.mrb[0].mxu0
  %v2287 = vpop.f32.mrb[0].mxu0
  %v2288 = vadd.f32 0.0, %v2287
  %v2289 = vpop.f32.mrb[0].mxu0
  %2290 = vmatprep.mubr.bf16.mxu0 0
  %2291 = vmatmul.mubr.bf16.gmra.mrb[0].mxu0 %v1368
  %v2292 = vpop.f32.mrb[0].mxu0
  %v2293 = vadd.f32 0.0, %v2292
  %v2294 = vpop.f32.mrb[0].mxu0
  %v2295 = vpop.f32.mrb[0].mxu0
  %v2296 = vadd.f32 0.0, %v2295
  %v2297 = vpop.f32.mrb[0].mxu0
  %2298 = vmatprep.mubr.bf16.mxu0 0
  %2299 = vmatmul.mubr.bf16.gmra.mrb[0].mxu0 %v1371
  %v2300 = vpop.f32.mrb[0].mxu0
  %v2301 = vadd.f32 0.0, %v2300
  %v2302 = vpop.f32.mrb[0].mxu0
  %v2303 = vpop.f32.mrb[0].mxu0
  %v2304 = vadd.f32 0.0, %v2303
  %v2305 = vpop.f32.mrb[0].mxu0
  %2306 = vmatprep.mubr.bf16.mxu0 0
  %2307 = vmatmul.mubr.bf16.gmra.mrb[0].mxu0 %v1374
  %v2308 = vpop.f32.mrb[0].mxu0
  %v2309 = vadd.f32 0.0, %v2308
  %v2310 = vpop.f32.mrb[0].mxu0
  %v2311 = vpop.f32.mrb[0].mxu0
  %v2312 = vadd.f32 0.0, %v2311
  %v2313 = vpop.f32.mrb[0].mxu0
  %2314 = vmatprep.mubr.bf16.mxu0 0
  %2315 = vmatmul.mubr.bf16.gmra.mrb[0].mxu0 %v1377
  %v2316 = vpop.f32.mrb[0].mxu0
  %v2317 = vadd.f32 0.0, %v2316
  %v2318 = vpop.f32.mrb[0].mxu0
  %v2319 = vpop.f32.mrb[0].mxu0
  %v2320 = vadd.f32 0.0, %v2319
  %v2321 = vpop.f32.mrb[0].mxu0
  %2322 = vmatprep.mubr.bf16.mxu0 0
  %2323 = vmatmul.mubr.bf16.gmra.mrb[0].mxu0 %v1380
  %v2324 = vpop.f32.mrb[0].mxu0
  %v2325 = vadd.f32 0.0, %v2324
  %v2326 = vpop.f32.mrb[0].mxu0
  %v2327 = vpop.f32.mrb[0].mxu0
  %v2328 = vadd.f32 0.0, %v2327
  %v2329 = vpop.f32.mrb[0].mxu0
  %2330 = vmatprep.mubr.bf16.mxu0 0
  %2331 = vmatmul.mubr.bf16.gmra.mrb[0].mxu0 %v1383
  %v2332 = vpop.f32.mrb[0].mxu0
  %v2333 = vadd.f32 0.0, %v2332
  %v2334 = vpop.f32.mrb[0].mxu0
  %v2335 = vpop.f32.mrb[0].mxu0
  %v2336 = vadd.f32 0.0, %v2335
  %v2337 = vpop.f32.mrb[0].mxu0
  %2338 = vmatprep.mubr.bf16.mxu0 0
  %2339 = vmatmul.mubr.bf16.gmra.mrb[0].mxu0 %v1386
  %v2340 = vpop.f32.mrb[0].mxu0
  %v2341 = vadd.f32 0.0, %v2340
  %v2342 = vpop.f32.mrb[0].mxu0
  %v2343 = vpop.f32.mrb[0].mxu0
  %v2344 = vadd.f32 0.0, %v2343
  %v2345 = vpop.f32.mrb[0].mxu0
  %2346 = vmatprep.mubr.bf16.mxu0 0
  %2347 = vmatmul.mubr.bf16.gmra.mrb[0].mxu0 %v1389
  %v2348 = vpop.f32.mrb[0].mxu0
  %v2349 = vadd.f32 0.0, %v2348
  %v2350 = vpop.f32.mrb[0].mxu0
  %v2351 = vpop.f32.mrb[0].mxu0
  %v2352 = vadd.f32 0.0, %v2351
  %v2353 = vpop.f32.mrb[0].mxu0
  %2354 = vmatprep.mubr.bf16.mxu0 0
  %2355 = vmatmul.mubr.bf16.gmra.mrb[0].mxu0 %v1392
  %v2356 = vpop.f32.mrb[0].mxu0
  %v2357 = vadd.f32 0.0, %v2356
  %v2358 = vpop.f32.mrb[0].mxu0
  %v2359 = vpop.f32.mrb[0].mxu0
  %v2360 = vadd.f32 0.0, %v2359
  %v2361 = vpop.f32.mrb[0].mxu0
  %2362 = vmatprep.mubr.bf16.mxu0 0
  %2363 = vmatmul.mubr.bf16.gmra.mrb[0].mxu0 %v1395
  %v2364 = vpop.f32.mrb[0].mxu0
  %v2365 = vadd.f32 0.0, %v2364
  %v2366 = vpop.f32.mrb[0].mxu0
  %v2367 = vpop.f32.mrb[0].mxu0
  %v2368 = vadd.f32 0.0, %v2367
  %v2369 = vpop.f32.mrb[0].mxu0
  %2370 = vmatprep.mubr.bf16.mxu0 0
  %2371 = vmatmul.mubr.bf16.gmra.mrb[0].mxu0 %v1398
  %v2372 = vpop.f32.mrb[0].mxu0
  %v2373 = vadd.f32 0.0, %v2372
  %v2374 = vpop.f32.mrb[0].mxu0
  %v2375 = vpop.f32.mrb[0].mxu0
  %v2376 = vadd.f32 0.0, %v2375
  %v2377 = vpop.f32.mrb[0].mxu0
  %2378 = vmatprep.mubr.bf16.mxu0 0
  %2379 = vmatmul.mubr.bf16.gmra.mrb[0].mxu0 %v1401
  %v2380 = vpop.f32.mrb[0].mxu0
  %v2381 = vadd.f32 0.0, %v2380
  %v2382 = vpop.f32.mrb[0].mxu0
  %v2383 = vpop.f32.mrb[0].mxu0
  %v2384 = vadd.f32 0.0, %v2383
  %v2385 = vpop.f32.mrb[0].mxu0
  %2386 = vmatprep.mubr.bf16.mxu0 0
  %2387 = vmatmul.mubr.bf16.gmra.mrb[0].mxu0 %v1404
  %v2388 = vpop.f32.mrb[0].mxu0
  %v2389 = vadd.f32 0.0, %v2388
  %v2390 = vpop.f32.mrb[0].mxu0
  %v2391 = vpop.f32.mrb[0].mxu0
  %v2392 = vadd.f32 0.0, %v2391
  %v2393 = vpop.f32.mrb[0].mxu0
  %2394 = vmatprep.mubr.bf16.mxu0 0
  %2395 = vmatmul.mubr.bf16.gmra.mrb[0].mxu0 %v1407
  %v2396 = vpop.f32.mrb[0].mxu0
  %v2397 = vadd.f32 0.0, %v2396
  %v2398 = vpop.f32.mrb[0].mxu0
  %v2399 = vpop.f32.mrb[0].mxu0
  %v2400 = vadd.f32 0.0, %v2399
  %v2401 = vpop.f32.mrb[0].mxu0
  %2402 = vmatprep.mubr.bf16.mxu0 0
  %2403 = vmatmul.mubr.bf16.gmra.mrb[0].mxu0 %v1410
  %v2404 = vpop.f32.mrb[0].mxu0
  %v2405 = vadd.f32 0.0, %v2404
  %v2406 = vpop.f32.mrb[0].mxu0
  %v2407 = vpop.f32.mrb[0].mxu0
  %v2408 = vadd.f32 0.0, %v2407
  %v2409 = vpop.f32.mrb[0].mxu0
  %2410 = vmatprep.mubr.bf16.mxu0 0
  %2411 = vmatmul.mubr.bf16.gmra.mrb[0].mxu0 %v1413
  %v2412 = vpop.f32.mrb[0].mxu0
  %v2413 = vadd.f32 0.0, %v2412
  %v2414 = vpop.f32.mrb[0].mxu0
  %v2415 = vpop.f32.mrb[0].mxu0
  %v2416 = vadd.f32 0.0, %v2415
  %v2417 = vpop.f32.mrb[0].mxu0
  %2418 = vmatprep.mubr.bf16.mxu0 0
  %2419 = vmatmul.mubr.bf16.gmra.mrb[0].mxu0 %v1416
  %v2420 = vpop.f32.mrb[0].mxu0
  %v2421 = vadd.f32 0.0, %v2420
  %v2422 = vpop.f32.mrb[0].mxu0
  %v2423 = vpop.f32.mrb[0].mxu0
  %v2424 = vadd.f32 0.0, %v2423
  %v2425 = vpop.f32.mrb[0].mxu0
  %2426 = vmatprep.mubr.bf16.mxu0 0
  %2427 = vmatmul.mubr.bf16.gmra.mrb[0].mxu0 %v1419
  %v2428 = vpop.f32.mrb[0].mxu0
  %v2429 = vadd.f32 0.0, %v2428
  %v2430 = vpop.f32.mrb[0].mxu0
  %v2431 = vpop.f32.mrb[0].mxu0
  %v2432 = vadd.f32 0.0, %v2431
  %v2433 = vpop.f32.mrb[0].mxu0
  %2434 = vmatprep.mubr.bf16.mxu0 0
  %2435 = vmatmul.mubr.bf16.gmra.mrb[0].mxu0 %v1422
  %v2436 = vpop.f32.mrb[0].mxu0
  %v2437 = vadd.f32 0.0, %v2436
  %v2438 = vpop.f32.mrb[0].mxu0
  %v2439 = vpop.f32.mrb[0].mxu0
  %v2440 = vadd.f32 0.0, %v2439
  %v2441 = vpop.f32.mrb[0].mxu0
  %2442 = vmatprep.mubr.bf16.mxu0 0
  %2443 = vmatmul.mubr.bf16.gmra.mrb[0].mxu0 %v1425
  %v2444 = vpop.f32.mrb[0].mxu0
  %v2445 = vadd.f32 0.0, %v2444
  %v2446 = vpop.f32.mrb[0].mxu0
  %v2447 = vpop.f32.mrb[0].mxu0
  %v2448 = vadd.f32 0.0, %v2447
  %v2449 = vpop.f32.mrb[0].mxu0
  %2450 = vmatprep.mubr.bf16.mxu0 0
  %2451 = vmatmul.mubr.bf16.gmra.mrb[0].mxu0 %v1428
  %v2452 = vpop.f32.mrb[0].mxu0
  %v2453 = vadd.f32 0.0, %v2452
  %v2454 = vpop.f32.mrb[0].mxu0
  %v2455 = vpop.f32.mrb[0].mxu0
  %v2456 = vadd.f32 0.0, %v2455
  %v2457 = vpop.f32.mrb[0].mxu0
  %2458 = vmatprep.mubr.bf16.mxu0 0
  %2459 = vmatmul.mubr.bf16.gmra.mrb[0].mxu0 %v1431
  %v2460 = vpop.f32.mrb[0].mxu0
  %v2461 = vadd.f32 0.0, %v2460
  %v2462 = vpop.f32.mrb[0].mxu0
  %v2463 = vpop.f32.mrb[0].mxu0
  %v2464 = vadd.f32 0.0, %v2463
  %v2465 = vpop.f32.mrb[0].mxu0
  %2466 = vmatprep.mubr.bf16.mxu0 0
  %2467 = vmatmul.mubr.bf16.gmra.mrb[0].mxu0 %v1434
  %v2468 = vpop.f32.mrb[0].mxu0
  %v2469 = vadd.f32 0.0, %v2468
  %v2470 = vpop.f32.mrb[0].mxu0
  %v2471 = vpop.f32.mrb[0].mxu0
  %v2472 = vadd.f32 0.0, %v2471
  %v2473 = vpop.f32.mrb[0].mxu0
  %2474 = vmatprep.mubr.bf16.mxu0 0
  %2475 = vmatmul.mubr.bf16.gmra.mrb[0].mxu0 %v1437
  %v2476 = vpop.f32.mrb[0].mxu0
  %v2477 = vadd.f32 0.0, %v2476
  %v2478 = vpop.f32.mrb[0].mxu0
  %v2479 = vpop.f32.mrb[0].mxu0
  %v2480 = vadd.f32 0.0, %v2479
  %v2481 = vpop.f32.mrb[0].mxu0
  %2482 = vmatprep.mubr.bf16.mxu0 0
  %2483 = vmatmul.mubr.bf16.gmra.mrb[0].mxu0 %v1440
  %v2484 = vpop.f32.mrb[0].mxu0
  %v2485 = vadd.f32 0.0, %v2484
  %v2486 = vpop.f32.mrb[0].mxu0
  %v2487 = vpop.f32.mrb[0].mxu0
  %v2488 = vadd.f32 0.0, %v2487
  %v2489 = vpop.f32.mrb[0].mxu0
  %2490 = vmatprep.mubr.bf16.mxu0 0
  %2491 = vmatmul.mubr.bf16.gmra.mrb[0].mxu0 %v1443
  %v2492 = vpop.f32.mrb[0].mxu0
  %v2493 = vadd.f32 0.0, %v2492
  %v2494 = vpop.f32.mrb[0].mxu0
  %v2495 = vpop.f32.mrb[0].mxu0
  %v2496 = vadd.f32 0.0, %v2495
  %v2497 = vpop.f32.mrb[0].mxu0
  %2498 = vmatprep.mubr.bf16.mxu0 0
  %2499 = vmatmul.mubr.bf16.gmra.mrb[0].mxu0 %v1446
  %v2500 = vpop.f32.mrb[0].mxu0
  %v2501 = vadd.f32 0.0, %v2500
  %v2502 = vpop.f32.mrb[0].mxu0
  %v2503 = vpop.f32.mrb[0].mxu0
  %v2504 = vadd.f32 0.0, %v2503
  %v2505 = vpop.f32.mrb[0].mxu0
  %2506 = vmatprep.mubr.bf16.mxu0 0
  %2507 = vmatmul.mubr.bf16.gmra.mrb[0].mxu0 %v1449
  %v2508 = vpop.f32.mrb[0].mxu0
  %v2509 = vadd.f32 0.0, %v2508
  %v2510 = vpop.f32.mrb[0].mxu0
  %v2511 = vpop.f32.mrb[0].mxu0
  %v2512 = vadd.f32 0.0, %v2511
  %v2513 = vpop.f32.mrb[0].mxu0
  %2514 = vmatprep.mubr.bf16.mxu0 0
  %2515 = vmatmul.mubr.bf16.gmra.mrb[0].mxu0 %v1452
  %v2516 = vpop.f32.mrb[0].mxu0
  %v2517 = vadd.f32 0.0, %v2516
  %v2518 = vpop.f32.mrb[0].mxu0
  %v2519 = vpop.f32.mrb[0].mxu0
  %v2520 = vadd.f32 0.0, %v2519
  %v2521 = vpop.f32.mrb[0].mxu0
  %2522 = vmatprep.mubr.bf16.mxu0 0
  %2523 = vmatmul.mubr.bf16.gmra.mrb[0].mxu0 %v1455
  %v2524 = vpop.f32.mrb[0].mxu0
  %v2525 = vadd.f32 0.0, %v2524
  %v2526 = vpop.f32.mrb[0].mxu0
  %v2527 = vpop.f32.mrb[0].mxu0
  %v2528 = vadd.f32 0.0, %v2527
  %v2529 = vpop.f32.mrb[0].mxu0
  %2530 = vmatprep.mubr.bf16.mxu0 0
  %2531 = vmatmul.mubr.bf16.gmra.mrb[0].mxu0 %v1458
  %v2532 = vpop.f32.mrb[0].mxu0
  %v2533 = vadd.f32 0.0, %v2532
  %v2534 = vpop.f32.mrb[0].mxu0
  %v2535 = vpop.f32.mrb[0].mxu0
  %v2536 = vadd.f32 0.0, %v2535
  %v2537 = vpop.f32.mrb[0].mxu0
  %2538 = vmatprep.mubr.bf16.mxu0 0
  %2539 = vmatmul.mubr.bf16.gmra.mrb[0].mxu0 %v1461
  %v2540 = vpop.f32.mrb[0].mxu0
  %v2541 = vadd.f32 0.0, %v2540
  %v2542 = vpop.f32.mrb[0].mxu0
  %v2543 = vpop.f32.mrb[0].mxu0
  %v2544 = vadd.f32 0.0, %v2543
  %v2545 = vpop.f32.mrb[0].mxu0
  %2546 = vmatprep.mubr.bf16.mxu0 0
  %2547 = vmatmul.mubr.bf16.gmra.mrb[0].mxu0 %v1464
  %v2548 = vpop.f32.mrb[0].mxu0
  %v2549 = vadd.f32 0.0, %v2548
  %v2550 = vpop.f32.mrb[0].mxu0
  %v2551 = vpop.f32.mrb[0].mxu0
  %v2552 = vadd.f32 0.0, %v2551
  %v2553 = vpop.f32.mrb[0].mxu0
  %2554 = vmatprep.mubr.bf16.mxu0 0
  %2555 = vmatmul.mubr.bf16.gmra.mrb[0].mxu0 %v1467
  %v2556 = vpop.f32.mrb[0].mxu0
  %v2557 = vadd.f32 0.0, %v2556
  %v2558 = vpop.f32.mrb[0].mxu0
  %v2559 = vpop.f32.mrb[0].mxu0
  %v2560 = vadd.f32 0.0, %v2559
  %v2561 = vpop.f32.mrb[0].mxu0
  %2562 = vmatprep.mubr.bf16.mxu0 0
  %2563 = vmatmul.mubr.bf16.gmra.mrb[0].mxu0 %v1470
  %v2564 = vpop.f32.mrb[0].mxu0
  %v2565 = vadd.f32 0.0, %v2564
  %v2566 = vpop.f32.mrb[0].mxu0
  %v2567 = vpop.f32.mrb[0].mxu0
  %v2568 = vadd.f32 0.0, %v2567
  %v2569 = vpop.f32.mrb[0].mxu0
  %2570 = vmatprep.mubr.bf16.mxu0 0
  %2571 = vmatmul.mubr.bf16.gmra.mrb[0].mxu0 %v1473
  %v2572 = vpop.f32.mrb[0].mxu0
  %v2573 = vadd.f32 0.0, %v2572
  %v2574 = vpop.f32.mrb[0].mxu0
  %v2575 = vpop.f32.mrb[0].mxu0
  %v2576 = vadd.f32 0.0, %v2575
  %v2577 = vpop.f32.mrb[0].mxu0
  %2578 = vmatprep.mubr.bf16.mxu0 0
  %2579 = vmatmul.mubr.bf16.gmra.mrb[0].mxu0 %v1476
  %v2580 = vpop.f32.mrb[0].mxu0
  %v2581 = vadd.f32 0.0, %v2580
  %v2582 = vpop.f32.mrb[0].mxu0
  %v2583 = vpop.f32.mrb[0].mxu0
  %v2584 = vadd.f32 0.0, %v2583
  %v2585 = vpop.f32.mrb[0].mxu0
  %2586 = vmatprep.mubr.bf16.mxu0 0
  %2587 = vmatmul.mubr.bf16.gmra.mrb[0].mxu0 %v1479
  %v2588 = vpop.f32.mrb[0].mxu0
  %v2589 = vadd.f32 0.0, %v2588
  %v2590 = vpop.f32.mrb[0].mxu0
  %v2591 = vpop.f32.mrb[0].mxu0
  %v2592 = vadd.f32 0.0, %v2591
  %v2593 = vpop.f32.mrb[0].mxu0
  %2594 = vmatprep.mubr.bf16.mxu0 0
  %2595 = vmatmul.mubr.bf16.gmra.mrb[0].mxu0 %v1482
  %v2596 = vpop.f32.mrb[0].mxu0
  %v2597 = vadd.f32 0.0, %v2596
  %v2598 = vpop.f32.mrb[0].mxu0
  %v2599 = vpop.f32.mrb[0].mxu0
  %v2600 = vadd.f32 0.0, %v2599
  %v2601 = vpop.f32.mrb[0].mxu0
  %2602 = vmatprep.mubr.bf16.mxu0 0
  %2603 = vmatmul.mubr.bf16.gmra.mrb[0].mxu0 %v1485
  %v2604 = vpop.f32.mrb[0].mxu0
  %v2605 = vadd.f32 0.0, %v2604
  %v2606 = vpop.f32.mrb[0].mxu0
  %v2607 = vpop.f32.mrb[0].mxu0
  %v2608 = vadd.f32 0.0, %v2607
  %v2609 = vpop.f32.mrb[0].mxu0
  %2610 = vmatprep.mubr.bf16.mxu0 0
  %2611 = vmatmul.mubr.bf16.gmra.mrb[0].mxu0 %v1488
  %v2612 = vpop.f32.mrb[0].mxu0
  %v2613 = vadd.f32 0.0, %v2612
  %v2614 = vpop.f32.mrb[0].mxu0
  %v2615 = vpop.f32.mrb[0].mxu0
  %v2616 = vadd.f32 0.0, %v2615
  %v2617 = vpop.f32.mrb[0].mxu0
  %2618 = vmatprep.mubr.bf16.mxu0 0
  %2619 = vmatmul.mubr.bf16.gmra.mrb[0].mxu0 %v1491
  %v2620 = vpop.f32.mrb[0].mxu0
  %v2621 = vadd.f32 0.0, %v2620
  %v2622 = vpop.f32.mrb[0].mxu0
  %v2623 = vpop.f32.mrb[0].mxu0
  %v2624 = vadd.f32 0.0, %v2623
  %v2625 = vpop.f32.mrb[0].mxu0
  %2626 = vmatprep.mubr.bf16.mxu0 0
  %2627 = vmatmul.mubr.bf16.gmra.mrb[0].mxu0 %v1494
  %v2628 = vpop.f32.mrb[0].mxu0
  %v2629 = vadd.f32 0.0, %v2628
  %v2630 = vpop.f32.mrb[0].mxu0
  %v2631 = vpop.f32.mrb[0].mxu0
  %v2632 = vadd.f32 0.0, %v2631
  %v2633 = vpop.f32.mrb[0].mxu0
  %2634 = vmatprep.mubr.bf16.mxu0 0
  %2635 = vmatmul.mubr.bf16.gmra.mrb[0].mxu0 %v1497
  %v2636 = vpop.f32.mrb[0].mxu0
  %v2637 = vadd.f32 0.0, %v2636
  %v2638 = vpop.f32.mrb[0].mxu0
  %v2639 = vpop.f32.mrb[0].mxu0
  %v2640 = vadd.f32 0.0, %v2639
  %v2641 = vpop.f32.mrb[0].mxu0
  %2642 = vmatprep.mubr.bf16.mxu0 0
  %2643 = vmatmul.mubr.bf16.gmra.mrb[0].mxu0 %v1500
  %v2644 = vpop.f32.mrb[0].mxu0
  %v2645 = vadd.f32 0.0, %v2644
  %v2646 = vpop.f32.mrb[0].mxu0
  %v2647 = vpop.f32.mrb[0].mxu0
  %v2648 = vadd.f32 0.0, %v2647
  %v2649 = vpop.f32.mrb[0].mxu0
  %2650 = vmatprep.mubr.bf16.mxu0 0
  %2651 = vmatmul.mubr.bf16.gmra.mrb[0].mxu0 %v1503
  %v2652 = vpop.f32.mrb[0].mxu0
  %v2653 = vadd.f32 0.0, %v2652
  %v2654 = vpop.f32.mrb[0].mxu0
  %v2655 = vpop.f32.mrb[0].mxu0
  %v2656 = vadd.f32 0.0, %v2655
  %v2657 = vpop.f32.mrb[0].mxu0
  %2658 = vmatprep.mubr.bf16.mxu0 0
  %2659 = vmatmul.mubr.bf16.gmra.mrb[0].mxu0 %v1506
  %v2660 = vpop.f32.mrb[0].mxu0
  %v2661 = vadd.f32 0.0, %v2660
  %v2662 = vpop.f32.mrb[0].mxu0
  %v2663 = vpop.f32.mrb[0].mxu0
  %v2664 = vadd.f32 0.0, %v2663
  %v2665 = vpop.f32.mrb[0].mxu0
  %2666 = vmatprep.mubr.bf16.mxu0 0
  %2667 = vmatmul.mubr.bf16.gmra.mrb[0].mxu0 %v1509
  %v2668 = vpop.f32.mrb[0].mxu0
  %v2669 = vadd.f32 0.0, %v2668
  %v2670 = vpop.f32.mrb[0].mxu0
  %v2671 = vpop.f32.mrb[0].mxu0
  %v2672 = vadd.f32 0.0, %v2671
  %v2673 = vpop.f32.mrb[0].mxu0
  %2674 = vmatprep.mubr.bf16.mxu0 0
  %2675 = vmatmul.mubr.bf16.gmra.mrb[0].mxu0 %v1512
  %v2676 = vpop.f32.mrb[0].mxu0
  %v2677 = vadd.f32 0.0, %v2676
  %v2678 = vpop.f32.mrb[0].mxu0
  %v2679 = vpop.f32.mrb[0].mxu0
  %v2680 = vadd.f32 0.0, %v2679
  %v2681 = vpop.f32.mrb[0].mxu0
  %2682 = vmatprep.mubr.bf16.mxu0 0
  %2683 = vmatmul.mubr.bf16.gmra.mrb[0].mxu0 %v1515
  %v2684 = vpop.f32.mrb[0].mxu0
  %v2685 = vadd.f32 0.0, %v2684
  %v2686 = vpop.f32.mrb[0].mxu0
  %v2687 = vpop.f32.mrb[0].mxu0
  %v2688 = vadd.f32 0.0, %v2687
  %v2689 = vpop.f32.mrb[0].mxu0
  %2690 = vmatprep.mubr.bf16.mxu0 0
  %2691 = vmatmul.mubr.bf16.gmra.mrb[0].mxu0 %v1518
  %v2692 = vpop.f32.mrb[0].mxu0
  %v2693 = vadd.f32 0.0, %v2692
  %v2694 = vpop.f32.mrb[0].mxu0
  %v2695 = vpop.f32.mrb[0].mxu0
  %v2696 = vadd.f32 0.0, %v2695
  %v2697 = vpop.f32.mrb[0].mxu0
  %2698 = vmatprep.mubr.bf16.mxu0 0
  %2699 = vmatmul.mubr.bf16.gmra.mrb[0].mxu0 %v1521
  %v2700 = vpop.f32.mrb[0].mxu0
  %v2701 = vadd.f32 0.0, %v2700
  %v2702 = vpop.f32.mrb[0].mxu0
  %v2703 = vpop.f32.mrb[0].mxu0
  %v2704 = vadd.f32 0.0, %v2703
  %v2705 = vpop.f32.mrb[0].mxu0
  %2706 = vmatprep.mubr.bf16.mxu0 0
  %2707 = vmatmul.mubr.bf16.gmra.mrb[0].mxu0 %v1524
  %v2708 = vpop.f32.mrb[0].mxu0
  %v2709 = vadd.f32 0.0, %v2708
  %v2710 = vpop.f32.mrb[0].mxu0
  %v2711 = vpop.f32.mrb[0].mxu0
  %v2712 = vadd.f32 0.0, %v2711
  %v2713 = vpop.f32.mrb[0].mxu0
  %2714 = vdwg.mxu0
  %3003 = vrot.lane.b32.xlu0 %v1565, 108
  %v3004 = vpop.permute.xlu0 %3003
  %3005 = vrot.lane.b32.xlu0 %v1568, 108
  %v3006 = vpop.permute.xlu0 %3005
  %3007 = vrot.lane.b32.xlu0 %v1573, 108
  %v3008 = vpop.permute.xlu0 %3007
  %3009 = vrot.lane.b32.xlu0 %v1576, 108
  %v3010 = vpop.permute.xlu0 %3009
  %3011 = vrot.lane.b32.xlu0 %v1581, 108
  %v3012 = vpop.permute.xlu0 %3011
  %3013 = vrot.lane.b32.xlu0 %v1584, 108
  %v3014 = vpop.permute.xlu0 %3013
  %3015 = vrot.lane.b32.xlu0 %v1589, 108
  %v3016 = vpop.permute.xlu0 %3015
  %3017 = vrot.lane.b32.xlu0 %v1592, 108
  %v3018 = vpop.permute.xlu0 %3017
  %3019 = vrot.lane.b32.xlu0 %v1597, 108
  %v3020 = vpop.permute.xlu0 %3019
  %3021 = vrot.lane.b32.xlu0 %v1600, 108
  %v3022 = vpop.permute.xlu0 %3021
  %3023 = vrot.lane.b32.xlu0 %v1605, 108
  %v3024 = vpop.permute.xlu0 %3023
  %3025 = vrot.lane.b32.xlu0 %v1608, 108
  %v3026 = vpop.permute.xlu0 %3025
  %3027 = vrot.lane.b32.xlu0 %v1613, 108
  %v3028 = vpop.permute.xlu0 %3027
  %3029 = vrot.lane.b32.xlu0 %v1616, 108
  %v3030 = vpop.permute.xlu0 %3029
  %3031 = vrot.lane.b32.xlu0 %v1621, 108
  %v3032 = vpop.permute.xlu0 %3031
  %3033 = vrot.lane.b32.xlu0 %v1624, 108
  %v3034 = vpop.permute.xlu0 %3033
  %3035 = vrot.lane.b32.xlu0 %v1629, 108
  %v3036 = vpop.permute.xlu0 %3035
  %3037 = vrot.lane.b32.xlu0 %v1632, 108
  %v3038 = vpop.permute.xlu0 %3037
  %3039 = vrot.lane.b32.xlu0 %v1637, 108
  %v3040 = vpop.permute.xlu0 %3039
  %3041 = vrot.lane.b32.xlu0 %v1640, 108
  %v3042 = vpop.permute.xlu0 %3041
  %3043 = vrot.lane.b32.xlu0 %v1645, 108
  %v3044 = vpop.permute.xlu0 %3043
  %3045 = vrot.lane.b32.xlu0 %v1648, 108
  %v3046 = vpop.permute.xlu0 %3045
  %3047 = vrot.lane.b32.xlu0 %v1653, 108
  %v3048 = vpop.permute.xlu0 %3047
  %3049 = vrot.lane.b32.xlu0 %v1656, 108
  %v3050 = vpop.permute.xlu0 %3049
  %3051 = vrot.lane.b32.xlu0 %v1661, 108
  %v3052 = vpop.permute.xlu0 %3051
  %3053 = vrot.lane.b32.xlu0 %v1664, 108
  %v3054 = vpop.permute.xlu0 %3053
  %3055 = vrot.lane.b32.xlu0 %v1669, 108
  %v3056 = vpop.permute.xlu0 %3055
  %3057 = vrot.lane.b32.xlu0 %v1672, 108
  %v3058 = vpop.permute.xlu0 %3057
  %3059 = vrot.lane.b32.xlu0 %v1677, 108
  %v3060 = vpop.permute.xlu0 %3059
  %3061 = vrot.lane.b32.xlu0 %v1680, 108
  %v3062 = vpop.permute.xlu0 %3061
  %3063 = vrot.lane.b32.xlu0 %v1685, 108
  %v3064 = vpop.permute.xlu0 %3063
  %3065 = vrot.lane.b32.xlu0 %v1688, 108
  %v3066 = vpop.permute.xlu0 %3065
  %3067 = vrot.lane.b32.xlu0 %v1693, 108
  %v3068 = vpop.permute.xlu0 %3067
  %3069 = vrot.lane.b32.xlu0 %v1696, 108
  %v3070 = vpop.permute.xlu0 %3069
  %3071 = vrot.lane.b32.xlu0 %v1701, 108
  %v3072 = vpop.permute.xlu0 %3071
  %3073 = vrot.lane.b32.xlu0 %v1704, 108
  %v3074 = vpop.permute.xlu0 %3073
  %3075 = vrot.lane.b32.xlu0 %v1709, 108
  %v3076 = vpop.permute.xlu0 %3075
  %3077 = vrot.lane.b32.xlu0 %v1712, 108
  %v3078 = vpop.permute.xlu0 %3077
  %3079 = vrot.lane.b32.xlu0 %v1717, 108
  %v3080 = vpop.permute.xlu0 %3079
  %3081 = vrot.lane.b32.xlu0 %v1720, 108
  %v3082 = vpop.permute.xlu0 %3081
  %3083 = vrot.lane.b32.xlu0 %v1725, 108
  %v3084 = vpop.permute.xlu0 %3083
  %3085 = vrot.lane.b32.xlu0 %v1728, 108
  %v3086 = vpop.permute.xlu0 %3085
  %3087 = vrot.lane.b32.xlu0 %v1733, 108
  %v3088 = vpop.permute.xlu0 %3087
  %3089 = vrot.lane.b32.xlu0 %v1736, 108
  %v3090 = vpop.permute.xlu0 %3089
  %3091 = vrot.lane.b32.xlu0 %v1741, 108
  %v3092 = vpop.permute.xlu0 %3091
  %3093 = vrot.lane.b32.xlu0 %v1744, 108
  %v3094 = vpop.permute.xlu0 %3093
  %3095 = vrot.lane.b32.xlu0 %v1749, 108
  %v3096 = vpop.permute.xlu0 %3095
  %3097 = vrot.lane.b32.xlu0 %v1752, 108
  %v3098 = vpop.permute.xlu0 %3097
  %3099 = vrot.lane.b32.xlu0 %v1757, 108
  %v3100 = vpop.permute.xlu0 %3099
  %3101 = vrot.lane.b32.xlu0 %v1760, 108
  %v3102 = vpop.permute.xlu0 %3101
  %3103 = vrot.lane.b32.xlu0 %v1765, 108
  %v3104 = vpop.permute.xlu0 %3103
  %3105 = vrot.lane.b32.xlu0 %v1768, 108
  %v3106 = vpop.permute.xlu0 %3105
  %3107 = vrot.lane.b32.xlu0 %v1773, 108
  %v3108 = vpop.permute.xlu0 %3107
  %3109 = vrot.lane.b32.xlu0 %v1776, 108
  %v3110 = vpop.permute.xlu0 %3109
  %3111 = vrot.lane.b32.xlu0 %v1781, 108
  %v3112 = vpop.permute.xlu0 %3111
  %3113 = vrot.lane.b32.xlu0 %v1784, 108
  %v3114 = vpop.permute.xlu0 %3113
  %3115 = vrot.lane.b32.xlu0 %v1789, 108
  %v3116 = vpop.permute.xlu0 %3115
  %3117 = vrot.lane.b32.xlu0 %v1792, 108
  %v3118 = vpop.permute.xlu0 %3117
  %3119 = vrot.lane.b32.xlu0 %v1797, 108
  %v3120 = vpop.permute.xlu0 %3119
  %3121 = vrot.lane.b32.xlu0 %v1800, 108
  %v3122 = vpop.permute.xlu0 %3121
  %3123 = vrot.lane.b32.xlu0 %v1805, 108
  %v3124 = vpop.permute.xlu0 %3123
  %3125 = vrot.lane.b32.xlu0 %v1808, 108
  %v3126 = vpop.permute.xlu0 %3125
  %3127 = vrot.lane.b32.xlu0 %v1813, 108
  %v3128 = vpop.permute.xlu0 %3127
  %3129 = vrot.lane.b32.xlu0 %v1816, 108
  %v3130 = vpop.permute.xlu0 %3129
  %3131 = vrot.lane.b32.xlu0 %v1821, 108
  %v3132 = vpop.permute.xlu0 %3131
  %3133 = vrot.lane.b32.xlu0 %v1824, 108
  %v3134 = vpop.permute.xlu0 %3133
  %3135 = vrot.lane.b32.xlu0 %v1829, 108
  %v3136 = vpop.permute.xlu0 %3135
  %3137 = vrot.lane.b32.xlu0 %v1832, 108
  %v3138 = vpop.permute.xlu0 %3137
  %3139 = vrot.lane.b32.xlu0 %v1837, 108
  %v3140 = vpop.permute.xlu0 %3139
  %3141 = vrot.lane.b32.xlu0 %v1840, 108
  %v3142 = vpop.permute.xlu0 %3141
  %3143 = vrot.lane.b32.xlu0 %v1845, 108
  %v3144 = vpop.permute.xlu0 %3143
  %3145 = vrot.lane.b32.xlu0 %v1848, 108
  %v3146 = vpop.permute.xlu0 %3145
  %3147 = vrot.lane.b32.xlu0 %v1853, 108
  %v3148 = vpop.permute.xlu0 %3147
  %3149 = vrot.lane.b32.xlu0 %v1856, 108
  %v3150 = vpop.permute.xlu0 %3149
  %3151 = vrot.lane.b32.xlu0 %v1861, 108
  %v3152 = vpop.permute.xlu0 %3151
  %3153 = vrot.lane.b32.xlu0 %v1864, 108
  %v3154 = vpop.permute.xlu0 %3153
  %3155 = vrot.lane.b32.xlu0 %v1869, 108
  %v3156 = vpop.permute.xlu0 %3155
  %3157 = vrot.lane.b32.xlu0 %v1872, 108
  %v3158 = vpop.permute.xlu0 %3157
  %3159 = vrot.lane.b32.xlu0 %v1877, 108
  %v3160 = vpop.permute.xlu0 %3159
  %3161 = vrot.lane.b32.xlu0 %v1880, 108
  %v3162 = vpop.permute.xlu0 %3161
  %3163 = vrot.lane.b32.xlu0 %v1885, 108
  %v3164 = vpop.permute.xlu0 %3163
  %3165 = vrot.lane.b32.xlu0 %v1888, 108
  %v3166 = vpop.permute.xlu0 %3165
  %3167 = vrot.lane.b32.xlu0 %v1893, 108
  %v3168 = vpop.permute.xlu0 %3167
  %3169 = vrot.lane.b32.xlu0 %v1896, 108
  %v3170 = vpop.permute.xlu0 %3169
  %3171 = vrot.lane.b32.xlu0 %v1901, 108
  %v3172 = vpop.permute.xlu0 %3171
  %3173 = vrot.lane.b32.xlu0 %v1904, 108
  %v3174 = vpop.permute.xlu0 %3173
  %3175 = vrot.lane.b32.xlu0 %v1909, 108
  %v3176 = vpop.permute.xlu0 %3175
  %3177 = vrot.lane.b32.xlu0 %v1912, 108
  %v3178 = vpop.permute.xlu0 %3177
  %3179 = vrot.lane.b32.xlu0 %v1917, 108
  %v3180 = vpop.permute.xlu0 %3179
  %3181 = vrot.lane.b32.xlu0 %v1920, 108
  %v3182 = vpop.permute.xlu0 %3181
  %3183 = vrot.lane.b32.xlu0 %v1925, 108
  %v3184 = vpop.permute.xlu0 %3183
  %3185 = vrot.lane.b32.xlu0 %v1928, 108
  %v3186 = vpop.permute.xlu0 %3185
  %3187 = vrot.lane.b32.xlu0 %v1933, 108
  %v3188 = vpop.permute.xlu0 %3187
  %3189 = vrot.lane.b32.xlu0 %v1936, 108
  %v3190 = vpop.permute.xlu0 %3189
  %3191 = vrot.lane.b32.xlu0 %v1941, 108
  %v3192 = vpop.permute.xlu0 %3191
  %3193 = vrot.lane.b32.xlu0 %v1944, 108
  %v3194 = vpop.permute.xlu0 %3193
  %3195 = vrot.lane.b32.xlu0 %v1949, 108
  %v3196 = vpop.permute.xlu0 %3195
  %3197 = vrot.lane.b32.xlu0 %v1952, 108
  %v3198 = vpop.permute.xlu0 %3197
  %3199 = vrot.lane.b32.xlu0 %v1957, 108
  %v3200 = vpop.permute.xlu0 %3199
  %3201 = vrot.lane.b32.xlu0 %v1960, 108
  %v3202 = vpop.permute.xlu0 %3201
  %3203 = vrot.lane.b32.xlu0 %v1965, 108
  %v3204 = vpop.permute.xlu0 %3203
  %3205 = vrot.lane.b32.xlu0 %v1968, 108
  %v3206 = vpop.permute.xlu0 %3205
  %3207 = vrot.lane.b32.xlu0 %v1973, 108
  %v3208 = vpop.permute.xlu0 %3207
  %3209 = vrot.lane.b32.xlu0 %v1976, 108
  %v3210 = vpop.permute.xlu0 %3209
  %3211 = vrot.lane.b32.xlu0 %v1981, 108
  %v3212 = vpop.permute.xlu0 %3211
  %3213 = vrot.lane.b32.xlu0 %v1984, 108
  %v3214 = vpop.permute.xlu0 %3213
  %3215 = vrot.lane.b32.xlu0 %v1989, 108
  %v3216 = vpop.permute.xlu0 %3215
  %3217 = vrot.lane.b32.xlu0 %v1992, 108
  %v3218 = vpop.permute.xlu0 %3217
  %3219 = vrot.lane.b32.xlu0 %v1997, 108
  %v3220 = vpop.permute.xlu0 %3219
  %3221 = vrot.lane.b32.xlu0 %v2000, 108
  %v3222 = vpop.permute.xlu0 %3221
  %3223 = vrot.lane.b32.xlu0 %v2005, 108
  %v3224 = vpop.permute.xlu0 %3223
  %3225 = vrot.lane.b32.xlu0 %v2008, 108
  %v3226 = vpop.permute.xlu0 %3225
  %3227 = vrot.lane.b32.xlu0 %v2013, 108
  %v3228 = vpop.permute.xlu0 %3227
  %3229 = vrot.lane.b32.xlu0 %v2016, 108
  %v3230 = vpop.permute.xlu0 %3229
  %3231 = vrot.lane.b32.xlu0 %v2021, 108
  %v3232 = vpop.permute.xlu0 %3231
  %3233 = vrot.lane.b32.xlu0 %v2024, 108
  %v3234 = vpop.permute.xlu0 %3233
  %3235 = vrot.lane.b32.xlu0 %v2029, 108
  %v3236 = vpop.permute.xlu0 %3235
  %3237 = vrot.lane.b32.xlu0 %v2032, 108
  %v3238 = vpop.permute.xlu0 %3237
  %3239 = vrot.lane.b32.xlu0 %v2037, 108
  %v3240 = vpop.permute.xlu0 %3239
  %3241 = vrot.lane.b32.xlu0 %v2040, 108
  %v3242 = vpop.permute.xlu0 %3241
  %3243 = vrot.lane.b32.xlu0 %v2045, 108
  %v3244 = vpop.permute.xlu0 %3243
  %3245 = vrot.lane.b32.xlu0 %v2048, 108
  %v3246 = vpop.permute.xlu0 %3245
  %3247 = vrot.lane.b32.xlu0 %v2053, 108
  %v3248 = vpop.permute.xlu0 %3247
  %3249 = vrot.lane.b32.xlu0 %v2056, 108
  %v3250 = vpop.permute.xlu0 %3249
  %3251 = vrot.lane.b32.xlu0 %v2061, 108
  %v3252 = vpop.permute.xlu0 %3251
  %3253 = vrot.lane.b32.xlu0 %v2064, 108
  %v3254 = vpop.permute.xlu0 %3253
  %3255 = vrot.lane.b32.xlu0 %v2069, 108
  %v3256 = vpop.permute.xlu0 %3255
  %3257 = vrot.lane.b32.xlu0 %v2072, 108
  %v3258 = vpop.permute.xlu0 %3257
  %3259 = vrot.lane.b32.xlu0 %v2077, 108
  %v3260 = vpop.permute.xlu0 %3259
  %3261 = vrot.lane.b32.xlu0 %v2080, 108
  %v3262 = vpop.permute.xlu0 %3261
  %3263 = vrot.lane.b32.xlu0 %v2085, 108
  %v3264 = vpop.permute.xlu0 %3263
  %3265 = vrot.lane.b32.xlu0 %v2088, 108
  %v3266 = vpop.permute.xlu0 %3265
  %3267 = vrot.lane.b32.xlu0 %v2093, 108
  %v3268 = vpop.permute.xlu0 %3267
  %3269 = vrot.lane.b32.xlu0 %v2096, 108
  %v3270 = vpop.permute.xlu0 %3269
  %3271 = vrot.lane.b32.xlu0 %v2101, 108
  %v3272 = vpop.permute.xlu0 %3271
  %3273 = vrot.lane.b32.xlu0 %v2104, 108
  %v3274 = vpop.permute.xlu0 %3273
  %3275 = vrot.lane.b32.xlu0 %v2109, 108
  %v3276 = vpop.permute.xlu0 %3275
  %3277 = vrot.lane.b32.xlu0 %v2112, 108
  %v3278 = vpop.permute.xlu0 %3277
  %3279 = vrot.lane.b32.xlu0 %v2117, 108
  %v3280 = vpop.permute.xlu0 %3279
  %3281 = vrot.lane.b32.xlu0 %v2120, 108
  %v3282 = vpop.permute.xlu0 %3281
  %3283 = vrot.lane.b32.xlu0 %v2125, 108
  %v3284 = vpop.permute.xlu0 %3283
  %3285 = vrot.lane.b32.xlu0 %v2128, 108
  %v3286 = vpop.permute.xlu0 %3285
  %3287 = vrot.lane.b32.xlu0 %v2133, 108
  %v3288 = vpop.permute.xlu0 %3287
  %3289 = vrot.lane.b32.xlu0 %v2136, 108
  %v3290 = vpop.permute.xlu0 %3289
  %3291 = vrot.lane.b32.xlu0 %v2141, 108
  %v3292 = vpop.permute.xlu0 %3291
  %3293 = vrot.lane.b32.xlu0 %v2144, 108
  %v3294 = vpop.permute.xlu0 %3293
  %3295 = vrot.lane.b32.xlu0 %v2149, 108
  %v3296 = vpop.permute.xlu0 %3295
  %3297 = vrot.lane.b32.xlu0 %v2152, 108
  %v3298 = vpop.permute.xlu0 %3297
  %3299 = vrot.lane.b32.xlu0 %v2157, 108
  %v3300 = vpop.permute.xlu0 %3299
  %3301 = vrot.lane.b32.xlu0 %v2160, 108
  %v3302 = vpop.permute.xlu0 %3301
  %3303 = vrot.lane.b32.xlu0 %v2165, 108
  %v3304 = vpop.permute.xlu0 %3303
  %3305 = vrot.lane.b32.xlu0 %v2168, 108
  %v3306 = vpop.permute.xlu0 %3305
  %3307 = vrot.lane.b32.xlu0 %v2173, 108
  %v3308 = vpop.permute.xlu0 %3307
  %3309 = vrot.lane.b32.xlu0 %v2176, 108
  %v3310 = vpop.permute.xlu0 %3309
  %3311 = vrot.lane.b32.xlu0 %v2181, 108
  %v3312 = vpop.permute.xlu0 %3311
  %3313 = vrot.lane.b32.xlu0 %v2184, 108
  %v3314 = vpop.permute.xlu0 %3313
  %3315 = vrot.lane.b32.xlu0 %v2189, 108
  %v3316 = vpop.permute.xlu0 %3315
  %3317 = vrot.lane.b32.xlu0 %v2192, 108
  %v3318 = vpop.permute.xlu0 %3317
  %3319 = vrot.lane.b32.xlu0 %v2197, 108
  %v3320 = vpop.permute.xlu0 %3319
  %3321 = vrot.lane.b32.xlu0 %v2200, 108
  %v3322 = vpop.permute.xlu0 %3321
  %3323 = vrot.lane.b32.xlu0 %v2205, 108
  %v3324 = vpop.permute.xlu0 %3323
  %3325 = vrot.lane.b32.xlu0 %v2208, 108
  %v3326 = vpop.permute.xlu0 %3325
  %3327 = vrot.lane.b32.xlu0 %v2213, 108
  %v3328 = vpop.permute.xlu0 %3327
  %3329 = vrot.lane.b32.xlu0 %v2216, 108
  %v3330 = vpop.permute.xlu0 %3329
  %3331 = vrot.lane.b32.xlu0 %v2221, 108
  %v3332 = vpop.permute.xlu0 %3331
  %3333 = vrot.lane.b32.xlu0 %v2224, 108
  %v3334 = vpop.permute.xlu0 %3333
  %3335 = vrot.lane.b32.xlu0 %v2229, 108
  %v3336 = vpop.permute.xlu0 %3335
  %3337 = vrot.lane.b32.xlu0 %v2232, 108
  %v3338 = vpop.permute.xlu0 %3337
  %3339 = vrot.lane.b32.xlu0 %v2237, 108
  %v3340 = vpop.permute.xlu0 %3339
  %3341 = vrot.lane.b32.xlu0 %v2240, 108
  %v3342 = vpop.permute.xlu0 %3341
  %3343 = vrot.lane.b32.xlu0 %v2245, 108
  %v3344 = vpop.permute.xlu0 %3343
  %3345 = vrot.lane.b32.xlu0 %v2248, 108
  %v3346 = vpop.permute.xlu0 %3345
  %3347 = vrot.lane.b32.xlu0 %v2253, 108
  %v3348 = vpop.permute.xlu0 %3347
  %3349 = vrot.lane.b32.xlu0 %v2256, 108
  %v3350 = vpop.permute.xlu0 %3349
  %3351 = vrot.lane.b32.xlu0 %v2261, 108
  %v3352 = vpop.permute.xlu0 %3351
  %3353 = vrot.lane.b32.xlu0 %v2264, 108
  %v3354 = vpop.permute.xlu0 %3353
  %3355 = vrot.lane.b32.xlu0 %v2269, 108
  %v3356 = vpop.permute.xlu0 %3355
  %3357 = vrot.lane.b32.xlu0 %v2272, 108
  %v3358 = vpop.permute.xlu0 %3357
  %3359 = vrot.lane.b32.xlu0 %v2277, 108
  %v3360 = vpop.permute.xlu0 %3359
  %3361 = vrot.lane.b32.xlu0 %v2280, 108
  %v3362 = vpop.permute.xlu0 %3361
  %3363 = vrot.lane.b32.xlu0 %v2285, 108
  %v3364 = vpop.permute.xlu0 %3363
  %3365 = vrot.lane.b32.xlu0 %v2288, 108
  %v3366 = vpop.permute.xlu0 %3365
  %3367 = vrot.lane.b32.xlu0 %v2293, 108
  %v3368 = vpop.permute.xlu0 %3367
  %3369 = vrot.lane.b32.xlu0 %v2296, 108
  %v3370 = vpop.permute.xlu0 %3369
  %3371 = vrot.lane.b32.xlu0 %v2301, 108
  %v3372 = vpop.permute.xlu0 %3371
  %3373 = vrot.lane.b32.xlu0 %v2304, 108
  %v3374 = vpop.permute.xlu0 %3373
  %3375 = vrot.lane.b32.xlu0 %v2309, 108
  %v3376 = vpop.permute.xlu0 %3375
  %3377 = vrot.lane.b32.xlu0 %v2312, 108
  %v3378 = vpop.permute.xlu0 %3377
  %3379 = vrot.lane.b32.xlu0 %v2317, 108
  %v3380 = vpop.permute.xlu0 %3379
  %3381 = vrot.lane.b32.xlu0 %v2320, 108
  %v3382 = vpop.permute.xlu0 %3381
  %3383 = vrot.lane.b32.xlu0 %v2325, 108
  %v3384 = vpop.permute.xlu0 %3383
  %3385 = vrot.lane.b32.xlu0 %v2328, 108
  %v3386 = vpop.permute.xlu0 %3385
  %3387 = vrot.lane.b32.xlu0 %v2333, 108
  %v3388 = vpop.permute.xlu0 %3387
  %3389 = vrot.lane.b32.xlu0 %v2336, 108
  %v3390 = vpop.permute.xlu0 %3389
  %3391 = vrot.lane.b32.xlu0 %v2341, 108
  %v3392 = vpop.permute.xlu0 %3391
  %3393 = vrot.lane.b32.xlu0 %v2344, 108
  %v3394 = vpop.permute.xlu0 %3393
  %3395 = vrot.lane.b32.xlu0 %v2349, 108
  %v3396 = vpop.permute.xlu0 %3395
  %3397 = vrot.lane.b32.xlu0 %v2352, 108
  %v3398 = vpop.permute.xlu0 %3397
  %3399 = vrot.lane.b32.xlu0 %v2357, 108
  %v3400 = vpop.permute.xlu0 %3399
  %3401 = vrot.lane.b32.xlu0 %v2360, 108
  %v3402 = vpop.permute.xlu0 %3401
  %3403 = vrot.lane.b32.xlu0 %v2365, 108
  %v3404 = vpop.permute.xlu0 %3403
  %3405 = vrot.lane.b32.xlu0 %v2368, 108
  %v3406 = vpop.permute.xlu0 %3405
  %3407 = vrot.lane.b32.xlu0 %v2373, 108
  %v3408 = vpop.permute.xlu0 %3407
  %3409 = vrot.lane.b32.xlu0 %v2376, 108
  %v3410 = vpop.permute.xlu0 %3409
  %3411 = vrot.lane.b32.xlu0 %v2381, 108
  %v3412 = vpop.permute.xlu0 %3411
  %3413 = vrot.lane.b32.xlu0 %v2384, 108
  %v3414 = vpop.permute.xlu0 %3413
  %3415 = vrot.lane.b32.xlu0 %v2389, 108
  %v3416 = vpop.permute.xlu0 %3415
  %3417 = vrot.lane.b32.xlu0 %v2392, 108
  %v3418 = vpop.permute.xlu0 %3417
  %3419 = vrot.lane.b32.xlu0 %v2397, 108
  %v3420 = vpop.permute.xlu0 %3419
  %3421 = vrot.lane.b32.xlu0 %v2400, 108
  %v3422 = vpop.permute.xlu0 %3421
  %3423 = vrot.lane.b32.xlu0 %v2405, 108
  %v3424 = vpop.permute.xlu0 %3423
  %3425 = vrot.lane.b32.xlu0 %v2408, 108
  %v3426 = vpop.permute.xlu0 %3425
  %3427 = vrot.lane.b32.xlu0 %v2413, 108
  %v3428 = vpop.permute.xlu0 %3427
  %3429 = vrot.lane.b32.xlu0 %v2416, 108
  %v3430 = vpop.permute.xlu0 %3429
  %3431 = vrot.lane.b32.xlu0 %v2421, 108
  %v3432 = vpop.permute.xlu0 %3431
  %3433 = vrot.lane.b32.xlu0 %v2424, 108
  %v3434 = vpop.permute.xlu0 %3433
  %3435 = vrot.lane.b32.xlu0 %v2429, 108
  %v3436 = vpop.permute.xlu0 %3435
  %3437 = vrot.lane.b32.xlu0 %v2432, 108
  %v3438 = vpop.permute.xlu0 %3437
  %3439 = vrot.lane.b32.xlu0 %v2437, 108
  %v3440 = vpop.permute.xlu0 %3439
  %3441 = vrot.lane.b32.xlu0 %v2440, 108
  %v3442 = vpop.permute.xlu0 %3441
  %3443 = vrot.lane.b32.xlu0 %v2445, 108
  %v3444 = vpop.permute.xlu0 %3443
  %3445 = vrot.lane.b32.xlu0 %v2448, 108
  %v3446 = vpop.permute.xlu0 %3445
  %3447 = vrot.lane.b32.xlu0 %v2453, 108
  %v3448 = vpop.permute.xlu0 %3447
  %3449 = vrot.lane.b32.xlu0 %v2456, 108
  %v3450 = vpop.permute.xlu0 %3449
  %3451 = vrot.lane.b32.xlu0 %v2461, 108
  %v3452 = vpop.permute.xlu0 %3451
  %3453 = vrot.lane.b32.xlu0 %v2464, 108
  %v3454 = vpop.permute.xlu0 %3453
  %3455 = vrot.lane.b32.xlu0 %v2469, 108
  %v3456 = vpop.permute.xlu0 %3455
  %3457 = vrot.lane.b32.xlu0 %v2472, 108
  %v3458 = vpop.permute.xlu0 %3457
  %3459 = vrot.lane.b32.xlu0 %v2477, 108
  %v3460 = vpop.permute.xlu0 %3459
  %3461 = vrot.lane.b32.xlu0 %v2480, 108
  %v3462 = vpop.permute.xlu0 %3461
  %3463 = vrot.lane.b32.xlu0 %v2485, 108
  %v3464 = vpop.permute.xlu0 %3463
  %3465 = vrot.lane.b32.xlu0 %v2488, 108
  %v3466 = vpop.permute.xlu0 %3465
  %3467 = vrot.lane.b32.xlu0 %v2493, 108
  %v3468 = vpop.permute.xlu0 %3467
  %3469 = vrot.lane.b32.xlu0 %v2496, 108
  %v3470 = vpop.permute.xlu0 %3469
  %3471 = vrot.lane.b32.xlu0 %v2501, 108
  %v3472 = vpop.permute.xlu0 %3471
  %3473 = vrot.lane.b32.xlu0 %v2504, 108
  %v3474 = vpop.permute.xlu0 %3473
  %3475 = vrot.lane.b32.xlu0 %v2509, 108
  %v3476 = vpop.permute.xlu0 %3475
  %3477 = vrot.lane.b32.xlu0 %v2512, 108
  %v3478 = vpop.permute.xlu0 %3477
  %3479 = vrot.lane.b32.xlu0 %v2517, 108
  %v3480 = vpop.permute.xlu0 %3479
  %3481 = vrot.lane.b32.xlu0 %v2520, 108
  %v3482 = vpop.permute.xlu0 %3481
  %3483 = vrot.lane.b32.xlu0 %v2525, 108
  %v3484 = vpop.permute.xlu0 %3483
  %3485 = vrot.lane.b32.xlu0 %v2528, 108
  %v3486 = vpop.permute.xlu0 %3485
  %3487 = vrot.lane.b32.xlu0 %v2533, 108
  %v3488 = vpop.permute.xlu0 %3487
  %3489 = vrot.lane.b32.xlu0 %v2536, 108
  %v3490 = vpop.permute.xlu0 %3489
  %3491 = vrot.lane.b32.xlu0 %v2541, 108
  %v3492 = vpop.permute.xlu0 %3491
  %3493 = vrot.lane.b32.xlu0 %v2544, 108
  %v3494 = vpop.permute.xlu0 %3493
  %3495 = vrot.lane.b32.xlu0 %v2549, 108
  %v3496 = vpop.permute.xlu0 %3495
  %3497 = vrot.lane.b32.xlu0 %v2552, 108
  %v3498 = vpop.permute.xlu0 %3497
  %3499 = vrot.lane.b32.xlu0 %v2557, 108
  %v3500 = vpop.permute.xlu0 %3499
  %3501 = vrot.lane.b32.xlu0 %v2560, 108
  %v3502 = vpop.permute.xlu0 %3501
  %3503 = vrot.lane.b32.xlu0 %v2565, 108
  %v3504 = vpop.permute.xlu0 %3503
  %3505 = vrot.lane.b32.xlu0 %v2568, 108
  %v3506 = vpop.permute.xlu0 %3505
  %3507 = vrot.lane.b32.xlu0 %v2573, 108
  %v3508 = vpop.permute.xlu0 %3507
  %3509 = vrot.lane.b32.xlu0 %v2576, 108
  %v3510 = vpop.permute.xlu0 %3509
  %3511 = vrot.lane.b32.xlu0 %v2581, 108
  %v3512 = vpop.permute.xlu0 %3511
  %3513 = vrot.lane.b32.xlu0 %v2584, 108
  %v3514 = vpop.permute.xlu0 %3513
  %3515 = vrot.lane.b32.xlu0 %v2589, 108
  %v3516 = vpop.permute.xlu0 %3515
  %3517 = vrot.lane.b32.xlu0 %v2592, 108
  %v3518 = vpop.permute.xlu0 %3517
  %3519 = vrot.lane.b32.xlu0 %v2597, 108
  %v3520 = vpop.permute.xlu0 %3519
  %3521 = vrot.lane.b32.xlu0 %v2600, 108
  %v3522 = vpop.permute.xlu0 %3521
  %3523 = vrot.lane.b32.xlu0 %v2605, 108
  %v3524 = vpop.permute.xlu0 %3523
  %3525 = vrot.lane.b32.xlu0 %v2608, 108
  %v3526 = vpop.permute.xlu0 %3525
  %3527 = vrot.lane.b32.xlu0 %v2613, 108
  %v3528 = vpop.permute.xlu0 %3527
  %3529 = vrot.lane.b32.xlu0 %v2616, 108
  %v3530 = vpop.permute.xlu0 %3529
  %3531 = vrot.lane.b32.xlu0 %v2621, 108
  %v3532 = vpop.permute.xlu0 %3531
  %3533 = vrot.lane.b32.xlu0 %v2624, 108
  %v3534 = vpop.permute.xlu0 %3533
  %3535 = vrot.lane.b32.xlu0 %v2629, 108
  %v3536 = vpop.permute.xlu0 %3535
  %3537 = vrot.lane.b32.xlu0 %v2632, 108
  %v3538 = vpop.permute.xlu0 %3537
  %3539 = vrot.lane.b32.xlu0 %v2637, 108
  %v3540 = vpop.permute.xlu0 %3539
  %3541 = vrot.lane.b32.xlu0 %v2640, 108
  %v3542 = vpop.permute.xlu0 %3541
  %3543 = vrot.lane.b32.xlu0 %v2645, 108
  %v3544 = vpop.permute.xlu0 %3543
  %3545 = vrot.lane.b32.xlu0 %v2648, 108
  %v3546 = vpop.permute.xlu0 %3545
  %3547 = vrot.lane.b32.xlu0 %v2653, 108
  %v3548 = vpop.permute.xlu0 %3547
  %3549 = vrot.lane.b32.xlu0 %v2656, 108
  %v3550 = vpop.permute.xlu0 %3549
  %3551 = vrot.lane.b32.xlu0 %v2661, 108
  %v3552 = vpop.permute.xlu0 %3551
  %3553 = vrot.lane.b32.xlu0 %v2664, 108
  %v3554 = vpop.permute.xlu0 %3553
  %3555 = vrot.lane.b32.xlu0 %v2669, 108
  %v3556 = vpop.permute.xlu0 %3555
  %3557 = vrot.lane.b32.xlu0 %v2672, 108
  %v3558 = vpop.permute.xlu0 %3557
  %3559 = vrot.lane.b32.xlu0 %v2677, 108
  %v3560 = vpop.permute.xlu0 %3559
  %3561 = vrot.lane.b32.xlu0 %v2680, 108
  %v3562 = vpop.permute.xlu0 %3561
  %3563 = vrot.lane.b32.xlu0 %v2685, 108
  %v3564 = vpop.permute.xlu0 %3563
  %3565 = vrot.lane.b32.xlu0 %v2688, 108
  %v3566 = vpop.permute.xlu0 %3565
  %3567 = vrot.lane.b32.xlu0 %v2693, 108
  %v3568 = vpop.permute.xlu0 %3567
  %3569 = vrot.lane.b32.xlu0 %v2696, 108
  %v3570 = vpop.permute.xlu0 %3569
  %3571 = vrot.lane.b32.xlu0 %v2701, 108
  %v3572 = vpop.permute.xlu0 %3571
  %3573 = vrot.lane.b32.xlu0 %v2704, 108
  %v3574 = vpop.permute.xlu0 %3573
  %3575 = vrot.lane.b32.xlu0 %v2709, 108
  %v3576 = vpop.permute.xlu0 %3575
  %3577 = vrot.lane.b32.xlu0 %v2712, 108
  %v3578 = vpop.permute.xlu0 %3577
  %v3867 = vmax.f32 %v1565, %v3004
  %v3868 = vmax.f32 %v1568, %v3006
  %v3869 = vmax.f32 %v1573, %v3008
  %v3870 = vmax.f32 %v1576, %v3010
  %v3871 = vmax.f32 %v1581, %v3012
  %v3872 = vmax.f32 %v1584, %v3014
  %v3873 = vmax.f32 %v1589, %v3016
  %v3874 = vmax.f32 %v1592, %v3018
  %v3875 = vmax.f32 %v1597, %v3020
  %v3876 = vmax.f32 %v1600, %v3022
  %v3877 = vmax.f32 %v1605, %v3024
  %v3878 = vmax.f32 %v1608, %v3026
  %v3879 = vmax.f32 %v1613, %v3028
  %v3880 = vmax.f32 %v1616, %v3030
  %v3881 = vmax.f32 %v1621, %v3032
  %v3882 = vmax.f32 %v1624, %v3034
  %v3883 = vmax.f32 %v1629, %v3036
  %v3884 = vmax.f32 %v1632, %v3038
  %v3885 = vmax.f32 %v1637, %v3040
  %v3886 = vmax.f32 %v1640, %v3042
  %v3887 = vmax.f32 %v1645, %v3044
  %v3888 = vmax.f32 %v1648, %v3046
  %v3889 = vmax.f32 %v1653, %v3048
  %v3890 = vmax.f32 %v1656, %v3050
  %v3891 = vmax.f32 %v1661, %v3052
  %v3892 = vmax.f32 %v1664, %v3054
  %v3893 = vmax.f32 %v1669, %v3056
  %v3894 = vmax.f32 %v1672, %v3058
  %v3895 = vmax.f32 %v1677, %v3060
  %v3896 = vmax.f32 %v1680, %v3062
  %v3897 = vmax.f32 %v1685, %v3064
  %v3898 = vmax.f32 %v1688, %v3066
  %v3899 = vmax.f32 %v1693, %v3068
  %v3900 = vmax.f32 %v1696, %v3070
  %v3901 = vmax.f32 %v1701, %v3072
  %v3902 = vmax.f32 %v1704, %v3074
  %v3903 = vmax.f32 %v1709, %v3076
  %v3904 = vmax.f32 %v1712, %v3078
  %v3905 = vmax.f32 %v1717, %v3080
  %v3906 = vmax.f32 %v1720, %v3082
  %v3907 = vmax.f32 %v1725, %v3084
  %v3908 = vmax.f32 %v1728, %v3086
  %v3909 = vmax.f32 %v1733, %v3088
  %v3910 = vmax.f32 %v1736, %v3090
  %v3911 = vmax.f32 %v1741, %v3092
  %v3912 = vmax.f32 %v1744, %v3094
  %v3913 = vmax.f32 %v1749, %v3096
  %v3914 = vmax.f32 %v1752, %v3098
  %v3915 = vmax.f32 %v1757, %v3100
  %v3916 = vmax.f32 %v1760, %v3102
  %v3917 = vmax.f32 %v1765, %v3104
  %v3918 = vmax.f32 %v1768, %v3106
  %v3919 = vmax.f32 %v1773, %v3108
  %v3920 = vmax.f32 %v1776, %v3110
  %v3921 = vmax.f32 %v1781, %v3112
  %v3922 = vmax.f32 %v1784, %v3114
  %v3923 = vmax.f32 %v1789, %v3116
  %v3924 = vmax.f32 %v1792, %v3118
  %v3925 = vmax.f32 %v1797, %v3120
  %v3926 = vmax.f32 %v1800, %v3122
  %v3927 = vmax.f32 %v1805, %v3124
  %v3928 = vmax.f32 %v1808, %v3126
  %v3929 = vmax.f32 %v1813, %v3128
  %v3930 = vmax.f32 %v1816, %v3130
  %v3931 = vmax.f32 %v1821, %v3132
  %v3932 = vmax.f32 %v1824, %v3134
  %v3933 = vmax.f32 %v1829, %v3136
  %v3934 = vmax.f32 %v1832, %v3138
  %v3935 = vmax.f32 %v1837, %v3140
  %v3936 = vmax.f32 %v1840, %v3142
  %v3937 = vmax.f32 %v1845, %v3144
  %v3938 = vmax.f32 %v1848, %v3146
  %v3939 = vmax.f32 %v1853, %v3148
  %v3940 = vmax.f32 %v1856, %v3150
  %v3941 = vmax.f32 %v1861, %v3152
  %v3942 = vmax.f32 %v1864, %v3154
  %v3943 = vmax.f32 %v1869, %v3156
  %v3944 = vmax.f32 %v1872, %v3158
  %v3945 = vmax.f32 %v1877, %v3160
  %v3946 = vmax.f32 %v1880, %v3162
  %v3947 = vmax.f32 %v1885, %v3164
  %v3948 = vmax.f32 %v1888, %v3166
  %v3949 = vmax.f32 %v1893, %v3168
  %v3950 = vmax.f32 %v1896, %v3170
  %v3951 = vmax.f32 %v1901, %v3172
  %v3952 = vmax.f32 %v1904, %v3174
  %v3953 = vmax.f32 %v1909, %v3176
  %v3954 = vmax.f32 %v1912, %v3178
  %v3955 = vmax.f32 %v1917, %v3180
  %v3956 = vmax.f32 %v1920, %v3182
  %v3957 = vmax.f32 %v1925, %v3184
  %v3958 = vmax.f32 %v1928, %v3186
  %v3959 = vmax.f32 %v1933, %v3188
  %v3960 = vmax.f32 %v1936, %v3190
  %v3961 = vmax.f32 %v1941, %v3192
  %v3962 = vmax.f32 %v1944, %v3194
  %v3963 = vmax.f32 %v1949, %v3196
  %v3964 = vmax.f32 %v1952, %v3198
  %v3965 = vmax.f32 %v1957, %v3200
  %v3966 = vmax.f32 %v1960, %v3202
  %v3967 = vmax.f32 %v1965, %v3204
  %v3968 = vmax.f32 %v1968, %v3206
  %v3969 = vmax.f32 %v1973, %v3208
  %v3970 = vmax.f32 %v1976, %v3210
  %v3971 = vmax.f32 %v1981, %v3212
  %v3972 = vmax.f32 %v1984, %v3214
  %v3973 = vmax.f32 %v1989, %v3216
  %v3974 = vmax.f32 %v1992, %v3218
  %v3975 = vmax.f32 %v1997, %v3220
  %v3976 = vmax.f32 %v2000, %v3222
  %v3977 = vmax.f32 %v2005, %v3224
  %v3978 = vmax.f32 %v2008, %v3226
  %v3979 = vmax.f32 %v2013, %v3228
  %v3980 = vmax.f32 %v2016, %v3230
  %v3981 = vmax.f32 %v2021, %v3232
  %v3982 = vmax.f32 %v2024, %v3234
  %v3983 = vmax.f32 %v2029, %v3236
  %v3984 = vmax.f32 %v2032, %v3238
  %v3985 = vmax.f32 %v2037, %v3240
  %v3986 = vmax.f32 %v2040, %v3242
  %v3987 = vmax.f32 %v2045, %v3244
  %v3988 = vmax.f32 %v2048, %v3246
  %v3989 = vmax.f32 %v2053, %v3248
  %v3990 = vmax.f32 %v2056, %v3250
  %v3991 = vmax.f32 %v2061, %v3252
  %v3992 = vmax.f32 %v2064, %v3254
  %v3993 = vmax.f32 %v2069, %v3256
  %v3994 = vmax.f32 %v2072, %v3258
  %v3995 = vmax.f32 %v2077, %v3260
  %v3996 = vmax.f32 %v2080, %v3262
  %v3997 = vmax.f32 %v2085, %v3264
  %v3998 = vmax.f32 %v2088, %v3266
  %v3999 = vmax.f32 %v2093, %v3268
  %v4000 = vmax.f32 %v2096, %v3270
  %v4001 = vmax.f32 %v2101, %v3272
  %v4002 = vmax.f32 %v2104, %v3274
  %v4003 = vmax.f32 %v2109, %v3276
  %v4004 = vmax.f32 %v2112, %v3278
  %v4005 = vmax.f32 %v2117, %v3280
  %v4006 = vmax.f32 %v2120, %v3282
  %v4007 = vmax.f32 %v2125, %v3284
  %v4008 = vmax.f32 %v2128, %v3286
  %v4009 = vmax.f32 %v2133, %v3288
  %v4010 = vmax.f32 %v2136, %v3290
  %v4011 = vmax.f32 %v2141, %v3292
  %v4012 = vmax.f32 %v2144, %v3294
  %v4013 = vmax.f32 %v2149, %v3296
  %v4014 = vmax.f32 %v2152, %v3298
  %v4015 = vmax.f32 %v2157, %v3300
  %v4016 = vmax.f32 %v2160, %v3302
  %v4017 = vmax.f32 %v2165, %v3304
  %v4018 = vmax.f32 %v2168, %v3306
  %v4019 = vmax.f32 %v2173, %v3308
  %v4020 = vmax.f32 %v2176, %v3310
  %v4021 = vmax.f32 %v2181, %v3312
  %v4022 = vmax.f32 %v2184, %v3314
  %v4023 = vmax.f32 %v2189, %v3316
  %v4024 = vmax.f32 %v2192, %v3318
  %v4025 = vmax.f32 %v2197, %v3320
  %v4026 = vmax.f32 %v2200, %v3322
  %v4027 = vmax.f32 %v2205, %v3324
  %v4028 = vmax.f32 %v2208, %v3326
  %v4029 = vmax.f32 %v2213, %v3328
  %v4030 = vmax.f32 %v2216, %v3330
  %v4031 = vmax.f32 %v2221, %v3332
  %v4032 = vmax.f32 %v2224, %v3334
  %v4033 = vmax.f32 %v2229, %v3336
  %v4034 = vmax.f32 %v2232, %v3338
  %v4035 = vmax.f32 %v2237, %v3340
  %v4036 = vmax.f32 %v2240, %v3342
  %v4037 = vmax.f32 %v2245, %v3344
  %v4038 = vmax.f32 %v2248, %v3346
  %v4039 = vmax.f32 %v2253, %v3348
  %v4040 = vmax.f32 %v2256, %v3350
  %v4041 = vmax.f32 %v2261, %v3352
  %v4042 = vmax.f32 %v2264, %v3354
  %v4043 = vmax.f32 %v2269, %v3356
  %v4044 = vmax.f32 %v2272, %v3358
  %v4045 = vmax.f32 %v2277, %v3360
  %v4046 = vmax.f32 %v2280, %v3362
  %v4047 = vmax.f32 %v2285, %v3364
  %v4048 = vmax.f32 %v2288, %v3366
  %v4049 = vmax.f32 %v2293, %v3368
  %v4050 = vmax.f32 %v2296, %v3370
  %v4051 = vmax.f32 %v2301, %v3372
  %v4052 = vmax.f32 %v2304, %v3374
  %v4053 = vmax.f32 %v2309, %v3376
  %v4054 = vmax.f32 %v2312, %v3378
  %v4055 = vmax.f32 %v2317, %v3380
  %v4056 = vmax.f32 %v2320, %v3382
  %v4057 = vmax.f32 %v2325, %v3384
  %v4058 = vmax.f32 %v2328, %v3386
  %v4059 = vmax.f32 %v2333, %v3388
  %v4060 = vmax.f32 %v2336, %v3390
  %v4061 = vmax.f32 %v2341, %v3392
  %v4062 = vmax.f32 %v2344, %v3394
  %v4063 = vmax.f32 %v2349, %v3396
  %v4064 = vmax.f32 %v2352, %v3398
  %v4065 = vmax.f32 %v2357, %v3400
  %v4066 = vmax.f32 %v2360, %v3402
  %v4067 = vmax.f32 %v2365, %v3404
  %v4068 = vmax.f32 %v2368, %v3406
  %v4069 = vmax.f32 %v2373, %v3408
  %v4070 = vmax.f32 %v2376, %v3410
  %v4071 = vmax.f32 %v2381, %v3412
  %v4072 = vmax.f32 %v2384, %v3414
  %v4073 = vmax.f32 %v2389, %v3416
  %v4074 = vmax.f32 %v2392, %v3418
  %v4075 = vmax.f32 %v2397, %v3420
  %v4076 = vmax.f32 %v2400, %v3422
  %v4077 = vmax.f32 %v2405, %v3424
  %v4078 = vmax.f32 %v2408, %v3426
  %v4079 = vmax.f32 %v2413, %v3428
  %v4080 = vmax.f32 %v2416, %v3430
  %v4081 = vmax.f32 %v2421, %v3432
  %v4082 = vmax.f32 %v2424, %v3434
  %v4083 = vmax.f32 %v2429, %v3436
  %v4084 = vmax.f32 %v2432, %v3438
  %v4085 = vmax.f32 %v2437, %v3440
  %v4086 = vmax.f32 %v2440, %v3442
  %v4087 = vmax.f32 %v2445, %v3444
  %v4088 = vmax.f32 %v2448, %v3446
  %v4089 = vmax.f32 %v2453, %v3448
  %v4090 = vmax.f32 %v2456, %v3450
  %v4091 = vmax.f32 %v2461, %v3452
  %v4092 = vmax.f32 %v2464, %v3454
  %v4093 = vmax.f32 %v2469, %v3456
  %v4094 = vmax.f32 %v2472, %v3458
  %v4095 = vmax.f32 %v2477, %v3460
  %v4096 = vmax.f32 %v2480, %v3462
  %v4097 = vmax.f32 %v2485, %v3464
  %v4098 = vmax.f32 %v2488, %v3466
  %v4099 = vmax.f32 %v2493, %v3468
  %v4100 = vmax.f32 %v2496, %v3470
  %v4101 = vmax.f32 %v2501, %v3472
  %v4102 = vmax.f32 %v2504, %v3474
  %v4103 = vmax.f32 %v2509, %v3476
  %v4104 = vmax.f32 %v2512, %v3478
  %v4105 = vmax.f32 %v2517, %v3480
  %v4106 = vmax.f32 %v2520, %v3482
  %v4107 = vmax.f32 %v2525, %v3484
  %v4108 = vmax.f32 %v2528, %v3486
  %v4109 = vmax.f32 %v2533, %v3488
  %v4110 = vmax.f32 %v2536, %v3490
  %v4111 = vmax.f32 %v2541, %v3492
  %v4112 = vmax.f32 %v2544, %v3494
  %v4113 = vmax.f32 %v2549, %v3496
  %v4114 = vmax.f32 %v2552, %v3498
  %v4115 = vmax.f32 %v2557, %v3500
  %v4116 = vmax.f32 %v2560, %v3502
  %v4117 = vmax.f32 %v2565, %v3504
  %v4118 = vmax.f32 %v2568, %v3506
  %v4119 = vmax.f32 %v2573, %v3508
  %v4120 = vmax.f32 %v2576, %v3510
  %v4121 = vmax.f32 %v2581, %v3512
  %v4122 = vmax.f32 %v2584, %v3514
  %v4123 = vmax.f32 %v2589, %v3516
  %v4124 = vmax.f32 %v2592, %v3518
  %v4125 = vmax.f32 %v2597, %v3520
  %v4126 = vmax.f32 %v2600, %v3522
  %v4127 = vmax.f32 %v2605, %v3524
  %v4128 = vmax.f32 %v2608, %v3526
  %v4129 = vmax.f32 %v2613, %v3528
  %v4130 = vmax.f32 %v2616, %v3530
  %v4131 = vmax.f32 %v2621, %v3532
  %v4132 = vmax.f32 %v2624, %v3534
  %v4133 = vmax.f32 %v2629, %v3536
  %v4134 = vmax.f32 %v2632, %v3538
  %v4135 = vmax.f32 %v2637, %v3540
  %v4136 = vmax.f32 %v2640, %v3542
  %v4137 = vmax.f32 %v2645, %v3544
  %v4138 = vmax.f32 %v2648, %v3546
  %v4139 = vmax.f32 %v2653, %v3548
  %v4140 = vmax.f32 %v2656, %v3550
  %v4141 = vmax.f32 %v2661, %v3552
  %v4142 = vmax.f32 %v2664, %v3554
  %v4143 = vmax.f32 %v2669, %v3556
  %v4144 = vmax.f32 %v2672, %v3558
  %v4145 = vmax.f32 %v2677, %v3560
  %v4146 = vmax.f32 %v2680, %v3562
  %v4147 = vmax.f32 %v2685, %v3564
  %v4148 = vmax.f32 %v2688, %v3566
  %v4149 = vmax.f32 %v2693, %v3568
  %v4150 = vmax.f32 %v2696, %v3570
  %v4151 = vmax.f32 %v2701, %v3572
  %v4152 = vmax.f32 %v2704, %v3574
  %v4153 = vmax.f32 %v2709, %v3576
  %v4154 = vmax.f32 %v2712, %v3578
  %4443 = vrot.lane.b32.xlu0 %v3867, 88
  %v4444 = vpop.permute.xlu0 %4443
  %4445 = vrot.lane.b32.xlu0 %v3868, 88
  %v4446 = vpop.permute.xlu0 %4445
  %4447 = vrot.lane.b32.xlu0 %v3869, 88
  %v4448 = vpop.permute.xlu0 %4447
  %4449 = vrot.lane.b32.xlu0 %v3870, 88
  %v4450 = vpop.permute.xlu0 %4449
  %4451 = vrot.lane.b32.xlu0 %v3871, 88
  %v4452 = vpop.permute.xlu0 %4451
  %4453 = vrot.lane.b32.xlu0 %v3872, 88
  %v4454 = vpop.permute.xlu0 %4453
  %4455 = vrot.lane.b32.xlu0 %v3873, 88
  %v4456 = vpop.permute.xlu0 %4455
  %4457 = vrot.lane.b32.xlu0 %v3874, 88
  %v4458 = vpop.permute.xlu0 %4457
  %4459 = vrot.lane.b32.xlu0 %v3875, 88
  %v4460 = vpop.permute.xlu0 %4459
  %4461 = vrot.lane.b32.xlu0 %v3876, 88
  %v4462 = vpop.permute.xlu0 %4461
  %4463 = vrot.lane.b32.xlu0 %v3877, 88
  %v4464 = vpop.permute.xlu0 %4463
  %4465 = vrot.lane.b32.xlu0 %v3878, 88
  %v4466 = vpop.permute.xlu0 %4465
  %4467 = vrot.lane.b32.xlu0 %v3879, 88
  %v4468 = vpop.permute.xlu0 %4467
  %4469 = vrot.lane.b32.xlu0 %v3880, 88
  %v4470 = vpop.permute.xlu0 %4469
  %4471 = vrot.lane.b32.xlu0 %v3881, 88
  %v4472 = vpop.permute.xlu0 %4471
  %4473 = vrot.lane.b32.xlu0 %v3882, 88
  %v4474 = vpop.permute.xlu0 %4473
  %4475 = vrot.lane.b32.xlu0 %v3883, 88
  %v4476 = vpop.permute.xlu0 %4475
  %4477 = vrot.lane.b32.xlu0 %v3884, 88
  %v4478 = vpop.permute.xlu0 %4477
  %4479 = vrot.lane.b32.xlu0 %v3885, 88
  %v4480 = vpop.permute.xlu0 %4479
  %4481 = vrot.lane.b32.xlu0 %v3886, 88
  %v4482 = vpop.permute.xlu0 %4481
  %4483 = vrot.lane.b32.xlu0 %v3887, 88
  %v4484 = vpop.permute.xlu0 %4483
  %4485 = vrot.lane.b32.xlu0 %v3888, 88
  %v4486 = vpop.permute.xlu0 %4485
  %4487 = vrot.lane.b32.xlu0 %v3889, 88
  %v4488 = vpop.permute.xlu0 %4487
  %4489 = vrot.lane.b32.xlu0 %v3890, 88
  %v4490 = vpop.permute.xlu0 %4489
  %4491 = vrot.lane.b32.xlu0 %v3891, 88
  %v4492 = vpop.permute.xlu0 %4491
  %4493 = vrot.lane.b32.xlu0 %v3892, 88
  %v4494 = vpop.permute.xlu0 %4493
  %4495 = vrot.lane.b32.xlu0 %v3893, 88
  %v4496 = vpop.permute.xlu0 %4495
  %4497 = vrot.lane.b32.xlu0 %v3894, 88
  %v4498 = vpop.permute.xlu0 %4497
  %4499 = vrot.lane.b32.xlu0 %v3895, 88
  %v4500 = vpop.permute.xlu0 %4499
  %4501 = vrot.lane.b32.xlu0 %v3896, 88
  %v4502 = vpop.permute.xlu0 %4501
  %4503 = vrot.lane.b32.xlu0 %v3897, 88
  %v4504 = vpop.permute.xlu0 %4503
  %4505 = vrot.lane.b32.xlu0 %v3898, 88
  %v4506 = vpop.permute.xlu0 %4505
  %4507 = vrot.lane.b32.xlu0 %v3899, 88
  %v4508 = vpop.permute.xlu0 %4507
  %4509 = vrot.lane.b32.xlu0 %v3900, 88
  %v4510 = vpop.permute.xlu0 %4509
  %4511 = vrot.lane.b32.xlu0 %v3901, 88
  %v4512 = vpop.permute.xlu0 %4511
  %4513 = vrot.lane.b32.xlu0 %v3902, 88
  %v4514 = vpop.permute.xlu0 %4513
  %4515 = vrot.lane.b32.xlu0 %v3903, 88
  %v4516 = vpop.permute.xlu0 %4515
  %4517 = vrot.lane.b32.xlu0 %v3904, 88
  %v4518 = vpop.permute.xlu0 %4517
  %4519 = vrot.lane.b32.xlu0 %v3905, 88
  %v4520 = vpop.permute.xlu0 %4519
  %4521 = vrot.lane.b32.xlu0 %v3906, 88
  %v4522 = vpop.permute.xlu0 %4521
  %4523 = vrot.lane.b32.xlu0 %v3907, 88
  %v4524 = vpop.permute.xlu0 %4523
  %4525 = vrot.lane.b32.xlu0 %v3908, 88
  %v4526 = vpop.permute.xlu0 %4525
  %4527 = vrot.lane.b32.xlu0 %v3909, 88
  %v4528 = vpop.permute.xlu0 %4527
  %4529 = vrot.lane.b32.xlu0 %v3910, 88
  %v4530 = vpop.permute.xlu0 %4529
  %4531 = vrot.lane.b32.xlu0 %v3911, 88
  %v4532 = vpop.permute.xlu0 %4531
  %4533 = vrot.lane.b32.xlu0 %v3912, 88
  %v4534 = vpop.permute.xlu0 %4533
  %4535 = vrot.lane.b32.xlu0 %v3913, 88
  %v4536 = vpop.permute.xlu0 %4535
  %4537 = vrot.lane.b32.xlu0 %v3914, 88
  %v4538 = vpop.permute.xlu0 %4537
  %4539 = vrot.lane.b32.xlu0 %v3915, 88
  %v4540 = vpop.permute.xlu0 %4539
  %4541 = vrot.lane.b32.xlu0 %v3916, 88
  %v4542 = vpop.permute.xlu0 %4541
  %4543 = vrot.lane.b32.xlu0 %v3917, 88
  %v4544 = vpop.permute.xlu0 %4543
  %4545 = vrot.lane.b32.xlu0 %v3918, 88
  %v4546 = vpop.permute.xlu0 %4545
  %4547 = vrot.lane.b32.xlu0 %v3919, 88
  %v4548 = vpop.permute.xlu0 %4547
  %4549 = vrot.lane.b32.xlu0 %v3920, 88
  %v4550 = vpop.permute.xlu0 %4549
  %4551 = vrot.lane.b32.xlu0 %v3921, 88
  %v4552 = vpop.permute.xlu0 %4551
  %4553 = vrot.lane.b32.xlu0 %v3922, 88
  %v4554 = vpop.permute.xlu0 %4553
  %4555 = vrot.lane.b32.xlu0 %v3923, 88
  %v4556 = vpop.permute.xlu0 %4555
  %4557 = vrot.lane.b32.xlu0 %v3924, 88
  %v4558 = vpop.permute.xlu0 %4557
  %4559 = vrot.lane.b32.xlu0 %v3925, 88
  %v4560 = vpop.permute.xlu0 %4559
  %4561 = vrot.lane.b32.xlu0 %v3926, 88
  %v4562 = vpop.permute.xlu0 %4561
  %4563 = vrot.lane.b32.xlu0 %v3927, 88
  %v4564 = vpop.permute.xlu0 %4563
  %4565 = vrot.lane.b32.xlu0 %v3928, 88
  %v4566 = vpop.permute.xlu0 %4565
  %4567 = vrot.lane.b32.xlu0 %v3929, 88
  %v4568 = vpop.permute.xlu0 %4567
  %4569 = vrot.lane.b32.xlu0 %v3930, 88
  %v4570 = vpop.permute.xlu0 %4569
  %4571 = vrot.lane.b32.xlu0 %v3931, 88
  %v4572 = vpop.permute.xlu0 %4571
  %4573 = vrot.lane.b32.xlu0 %v3932, 88
  %v4574 = vpop.permute.xlu0 %4573
  %4575 = vrot.lane.b32.xlu0 %v3933, 88
  %v4576 = vpop.permute.xlu0 %4575
  %4577 = vrot.lane.b32.xlu0 %v3934, 88
  %v4578 = vpop.permute.xlu0 %4577
  %4579 = vrot.lane.b32.xlu0 %v3935, 88
  %v4580 = vpop.permute.xlu0 %4579
  %4581 = vrot.lane.b32.xlu0 %v3936, 88
  %v4582 = vpop.permute.xlu0 %4581
  %4583 = vrot.lane.b32.xlu0 %v3937, 88
  %v4584 = vpop.permute.xlu0 %4583
  %4585 = vrot.lane.b32.xlu0 %v3938, 88
  %v4586 = vpop.permute.xlu0 %4585
  %4587 = vrot.lane.b32.xlu0 %v3939, 88
  %v4588 = vpop.permute.xlu0 %4587
  %4589 = vrot.lane.b32.xlu0 %v3940, 88
  %v4590 = vpop.permute.xlu0 %4589
  %4591 = vrot.lane.b32.xlu0 %v3941, 88
  %v4592 = vpop.permute.xlu0 %4591
  %4593 = vrot.lane.b32.xlu0 %v3942, 88
  %v4594 = vpop.permute.xlu0 %4593
  %4595 = vrot.lane.b32.xlu0 %v3943, 88
  %v4596 = vpop.permute.xlu0 %4595
  %4597 = vrot.lane.b32.xlu0 %v3944, 88
  %v4598 = vpop.permute.xlu0 %4597
  %4599 = vrot.lane.b32.xlu0 %v3945, 88
  %v4600 = vpop.permute.xlu0 %4599
  %4601 = vrot.lane.b32.xlu0 %v3946, 88
  %v4602 = vpop.permute.xlu0 %4601
  %4603 = vrot.lane.b32.xlu0 %v3947, 88
  %v4604 = vpop.permute.xlu0 %4603
  %4605 = vrot.lane.b32.xlu0 %v3948, 88
  %v4606 = vpop.permute.xlu0 %4605
  %4607 = vrot.lane.b32.xlu0 %v3949, 88
  %v4608 = vpop.permute.xlu0 %4607
  %4609 = vrot.lane.b32.xlu0 %v3950, 88
  %v4610 = vpop.permute.xlu0 %4609
  %4611 = vrot.lane.b32.xlu0 %v3951, 88
  %v4612 = vpop.permute.xlu0 %4611
  %4613 = vrot.lane.b32.xlu0 %v3952, 88
  %v4614 = vpop.permute.xlu0 %4613
  %4615 = vrot.lane.b32.xlu0 %v3953, 88
  %v4616 = vpop.permute.xlu0 %4615
  %4617 = vrot.lane.b32.xlu0 %v3954, 88
  %v4618 = vpop.permute.xlu0 %4617
  %4619 = vrot.lane.b32.xlu0 %v3955, 88
  %v4620 = vpop.permute.xlu0 %4619
  %4621 = vrot.lane.b32.xlu0 %v3956, 88
  %v4622 = vpop.permute.xlu0 %4621
  %4623 = vrot.lane.b32.xlu0 %v3957, 88
  %v4624 = vpop.permute.xlu0 %4623
  %4625 = vrot.lane.b32.xlu0 %v3958, 88
  %v4626 = vpop.permute.xlu0 %4625
  %4627 = vrot.lane.b32.xlu0 %v3959, 88
  %v4628 = vpop.permute.xlu0 %4627
  %4629 = vrot.lane.b32.xlu0 %v3960, 88
  %v4630 = vpop.permute.xlu0 %4629
  %4631 = vrot.lane.b32.xlu0 %v3961, 88
  %v4632 = vpop.permute.xlu0 %4631
  %4633 = vrot.lane.b32.xlu0 %v3962, 88
  %v4634 = vpop.permute.xlu0 %4633
  %4635 = vrot.lane.b32.xlu0 %v3963, 88
  %v4636 = vpop.permute.xlu0 %4635
  %4637 = vrot.lane.b32.xlu0 %v3964, 88
  %v4638 = vpop.permute.xlu0 %4637
  %4639 = vrot.lane.b32.xlu0 %v3965, 88
  %v4640 = vpop.permute.xlu0 %4639
  %4641 = vrot.lane.b32.xlu0 %v3966, 88
  %v4642 = vpop.permute.xlu0 %4641
  %4643 = vrot.lane.b32.xlu0 %v3967, 88
  %v4644 = vpop.permute.xlu0 %4643
  %4645 = vrot.lane.b32.xlu0 %v3968, 88
  %v4646 = vpop.permute.xlu0 %4645
  %4647 = vrot.lane.b32.xlu0 %v3969, 88
  %v4648 = vpop.permute.xlu0 %4647
  %4649 = vrot.lane.b32.xlu0 %v3970, 88
  %v4650 = vpop.permute.xlu0 %4649
  %4651 = vrot.lane.b32.xlu0 %v3971, 88
  %v4652 = vpop.permute.xlu0 %4651
  %4653 = vrot.lane.b32.xlu0 %v3972, 88
  %v4654 = vpop.permute.xlu0 %4653
  %4655 = vrot.lane.b32.xlu0 %v3973, 88
  %v4656 = vpop.permute.xlu0 %4655
  %4657 = vrot.lane.b32.xlu0 %v3974, 88
  %v4658 = vpop.permute.xlu0 %4657
  %4659 = vrot.lane.b32.xlu0 %v3975, 88
  %v4660 = vpop.permute.xlu0 %4659
  %4661 = vrot.lane.b32.xlu0 %v3976, 88
  %v4662 = vpop.permute.xlu0 %4661
  %4663 = vrot.lane.b32.xlu0 %v3977, 88
  %v4664 = vpop.permute.xlu0 %4663
  %4665 = vrot.lane.b32.xlu0 %v3978, 88
  %v4666 = vpop.permute.xlu0 %4665
  %4667 = vrot.lane.b32.xlu0 %v3979, 88
  %v4668 = vpop.permute.xlu0 %4667
  %4669 = vrot.lane.b32.xlu0 %v3980, 88
  %v4670 = vpop.permute.xlu0 %4669
  %4671 = vrot.lane.b32.xlu0 %v3981, 88
  %v4672 = vpop.permute.xlu0 %4671
  %4673 = vrot.lane.b32.xlu0 %v3982, 88
  %v4674 = vpop.permute.xlu0 %4673
  %4675 = vrot.lane.b32.xlu0 %v3983, 88
  %v4676 = vpop.permute.xlu0 %4675
  %4677 = vrot.lane.b32.xlu0 %v3984, 88
  %v4678 = vpop.permute.xlu0 %4677
  %4679 = vrot.lane.b32.xlu0 %v3985, 88
  %v4680 = vpop.permute.xlu0 %4679
  %4681 = vrot.lane.b32.xlu0 %v3986, 88
  %v4682 = vpop.permute.xlu0 %4681
  %4683 = vrot.lane.b32.xlu0 %v3987, 88
  %v4684 = vpop.permute.xlu0 %4683
  %4685 = vrot.lane.b32.xlu0 %v3988, 88
  %v4686 = vpop.permute.xlu0 %4685
  %4687 = vrot.lane.b32.xlu0 %v3989, 88
  %v4688 = vpop.permute.xlu0 %4687
  %4689 = vrot.lane.b32.xlu0 %v3990, 88
  %v4690 = vpop.permute.xlu0 %4689
  %4691 = vrot.lane.b32.xlu0 %v3991, 88
  %v4692 = vpop.permute.xlu0 %4691
  %4693 = vrot.lane.b32.xlu0 %v3992, 88
  %v4694 = vpop.permute.xlu0 %4693
  %4695 = vrot.lane.b32.xlu0 %v3993, 88
  %v4696 = vpop.permute.xlu0 %4695
  %4697 = vrot.lane.b32.xlu0 %v3994, 88
  %v4698 = vpop.permute.xlu0 %4697
  %4699 = vrot.lane.b32.xlu0 %v3995, 88
  %v4700 = vpop.permute.xlu0 %4699
  %4701 = vrot.lane.b32.xlu0 %v3996, 88
  %v4702 = vpop.permute.xlu0 %4701
  %4703 = vrot.lane.b32.xlu0 %v3997, 88
  %v4704 = vpop.permute.xlu0 %4703
  %4705 = vrot.lane.b32.xlu0 %v3998, 88
  %v4706 = vpop.permute.xlu0 %4705
  %4707 = vrot.lane.b32.xlu0 %v3999, 88
  %v4708 = vpop.permute.xlu0 %4707
  %4709 = vrot.lane.b32.xlu0 %v4000, 88
  %v4710 = vpop.permute.xlu0 %4709
  %4711 = vrot.lane.b32.xlu0 %v4001, 88
  %v4712 = vpop.permute.xlu0 %4711
  %4713 = vrot.lane.b32.xlu0 %v4002, 88
  %v4714 = vpop.permute.xlu0 %4713
  %4715 = vrot.lane.b32.xlu0 %v4003, 88
  %v4716 = vpop.permute.xlu0 %4715
  %4717 = vrot.lane.b32.xlu0 %v4004, 88
  %v4718 = vpop.permute.xlu0 %4717
  %4719 = vrot.lane.b32.xlu0 %v4005, 88
  %v4720 = vpop.permute.xlu0 %4719
  %4721 = vrot.lane.b32.xlu0 %v4006, 88
  %v4722 = vpop.permute.xlu0 %4721
  %4723 = vrot.lane.b32.xlu0 %v4007, 88
  %v4724 = vpop.permute.xlu0 %4723
  %4725 = vrot.lane.b32.xlu0 %v4008, 88
  %v4726 = vpop.permute.xlu0 %4725
  %4727 = vrot.lane.b32.xlu0 %v4009, 88
  %v4728 = vpop.permute.xlu0 %4727
  %4729 = vrot.lane.b32.xlu0 %v4010, 88
  %v4730 = vpop.permute.xlu0 %4729
  %4731 = vrot.lane.b32.xlu0 %v4011, 88
  %v4732 = vpop.permute.xlu0 %4731
  %4733 = vrot.lane.b32.xlu0 %v4012, 88
  %v4734 = vpop.permute.xlu0 %4733
  %4735 = vrot.lane.b32.xlu0 %v4013, 88
  %v4736 = vpop.permute.xlu0 %4735
  %4737 = vrot.lane.b32.xlu0 %v4014, 88
  %v4738 = vpop.permute.xlu0 %4737
  %4739 = vrot.lane.b32.xlu0 %v4015, 88
  %v4740 = vpop.permute.xlu0 %4739
  %4741 = vrot.lane.b32.xlu0 %v4016, 88
  %v4742 = vpop.permute.xlu0 %4741
  %4743 = vrot.lane.b32.xlu0 %v4017, 88
  %v4744 = vpop.permute.xlu0 %4743
  %4745 = vrot.lane.b32.xlu0 %v4018, 88
  %v4746 = vpop.permute.xlu0 %4745
  %4747 = vrot.lane.b32.xlu0 %v4019, 88
  %v4748 = vpop.permute.xlu0 %4747
  %4749 = vrot.lane.b32.xlu0 %v4020, 88
  %v4750 = vpop.permute.xlu0 %4749
  %4751 = vrot.lane.b32.xlu0 %v4021, 88
  %v4752 = vpop.permute.xlu0 %4751
  %4753 = vrot.lane.b32.xlu0 %v4022, 88
  %v4754 = vpop.permute.xlu0 %4753
  %4755 = vrot.lane.b32.xlu0 %v4023, 88
  %v4756 = vpop.permute.xlu0 %4755
  %4757 = vrot.lane.b32.xlu0 %v4024, 88
  %v4758 = vpop.permute.xlu0 %4757
  %4759 = vrot.lane.b32.xlu0 %v4025, 88
  %v4760 = vpop.permute.xlu0 %4759
  %4761 = vrot.lane.b32.xlu0 %v4026, 88
  %v4762 = vpop.permute.xlu0 %4761
  %4763 = vrot.lane.b32.xlu0 %v4027, 88
  %v4764 = vpop.permute.xlu0 %4763
  %4765 = vrot.lane.b32.xlu0 %v4028, 88
  %v4766 = vpop.permute.xlu0 %4765
  %4767 = vrot.lane.b32.xlu0 %v4029, 88
  %v4768 = vpop.permute.xlu0 %4767
  %4769 = vrot.lane.b32.xlu0 %v4030, 88
  %v4770 = vpop.permute.xlu0 %4769
  %4771 = vrot.lane.b32.xlu0 %v4031, 88
  %v4772 = vpop.permute.xlu0 %4771
  %4773 = vrot.lane.b32.xlu0 %v4032, 88
  %v4774 = vpop.permute.xlu0 %4773
  %4775 = vrot.lane.b32.xlu0 %v4033, 88
  %v4776 = vpop.permute.xlu0 %4775
  %4777 = vrot.lane.b32.xlu0 %v4034, 88
  %v4778 = vpop.permute.xlu0 %4777
  %4779 = vrot.lane.b32.xlu0 %v4035, 88
  %v4780 = vpop.permute.xlu0 %4779
  %4781 = vrot.lane.b32.xlu0 %v4036, 88
  %v4782 = vpop.permute.xlu0 %4781
  %4783 = vrot.lane.b32.xlu0 %v4037, 88
  %v4784 = vpop.permute.xlu0 %4783
  %4785 = vrot.lane.b32.xlu0 %v4038, 88
  %v4786 = vpop.permute.xlu0 %4785
  %4787 = vrot.lane.b32.xlu0 %v4039, 88
  %v4788 = vpop.permute.xlu0 %4787
  %4789 = vrot.lane.b32.xlu0 %v4040, 88
  %v4790 = vpop.permute.xlu0 %4789
  %4791 = vrot.lane.b32.xlu0 %v4041, 88
  %v4792 = vpop.permute.xlu0 %4791
  %4793 = vrot.lane.b32.xlu0 %v4042, 88
  %v4794 = vpop.permute.xlu0 %4793
  %4795 = vrot.lane.b32.xlu0 %v4043, 88
  %v4796 = vpop.permute.xlu0 %4795
  %4797 = vrot.lane.b32.xlu0 %v4044, 88
  %v4798 = vpop.permute.xlu0 %4797
  %4799 = vrot.lane.b32.xlu0 %v4045, 88
  %v4800 = vpop.permute.xlu0 %4799
  %4801 = vrot.lane.b32.xlu0 %v4046, 88
  %v4802 = vpop.permute.xlu0 %4801
  %4803 = vrot.lane.b32.xlu0 %v4047, 88
  %v4804 = vpop.permute.xlu0 %4803
  %4805 = vrot.lane.b32.xlu0 %v4048, 88
  %v4806 = vpop.permute.xlu0 %4805
  %4807 = vrot.lane.b32.xlu0 %v4049, 88
  %v4808 = vpop.permute.xlu0 %4807
  %4809 = vrot.lane.b32.xlu0 %v4050, 88
  %v4810 = vpop.permute.xlu0 %4809
  %4811 = vrot.lane.b32.xlu0 %v4051, 88
  %v4812 = vpop.permute.xlu0 %4811
  %4813 = vrot.lane.b32.xlu0 %v4052, 88
  %v4814 = vpop.permute.xlu0 %4813
  %4815 = vrot.lane.b32.xlu0 %v4053, 88
  %v4816 = vpop.permute.xlu0 %4815
  %4817 = vrot.lane.b32.xlu0 %v4054, 88
  %v4818 = vpop.permute.xlu0 %4817
  %4819 = vrot.lane.b32.xlu0 %v4055, 88
  %v4820 = vpop.permute.xlu0 %4819
  %4821 = vrot.lane.b32.xlu0 %v4056, 88
  %v4822 = vpop.permute.xlu0 %4821
  %4823 = vrot.lane.b32.xlu0 %v4057, 88
  %v4824 = vpop.permute.xlu0 %4823
  %4825 = vrot.lane.b32.xlu0 %v4058, 88
  %v4826 = vpop.permute.xlu0 %4825
  %4827 = vrot.lane.b32.xlu0 %v4059, 88
  %v4828 = vpop.permute.xlu0 %4827
  %4829 = vrot.lane.b32.xlu0 %v4060, 88
  %v4830 = vpop.permute.xlu0 %4829
  %4831 = vrot.lane.b32.xlu0 %v4061, 88
  %v4832 = vpop.permute.xlu0 %4831
  %4833 = vrot.lane.b32.xlu0 %v4062, 88
  %v4834 = vpop.permute.xlu0 %4833
  %4835 = vrot.lane.b32.xlu0 %v4063, 88
  %v4836 = vpop.permute.xlu0 %4835
  %4837 = vrot.lane.b32.xlu0 %v4064, 88
  %v4838 = vpop.permute.xlu0 %4837
  %4839 = vrot.lane.b32.xlu0 %v4065, 88
  %v4840 = vpop.permute.xlu0 %4839
  %4841 = vrot.lane.b32.xlu0 %v4066, 88
  %v4842 = vpop.permute.xlu0 %4841
  %4843 = vrot.lane.b32.xlu0 %v4067, 88
  %v4844 = vpop.permute.xlu0 %4843
  %4845 = vrot.lane.b32.xlu0 %v4068, 88
  %v4846 = vpop.permute.xlu0 %4845
  %4847 = vrot.lane.b32.xlu0 %v4069, 88
  %v4848 = vpop.permute.xlu0 %4847
  %4849 = vrot.lane.b32.xlu0 %v4070, 88
  %v4850 = vpop.permute.xlu0 %4849
  %4851 = vrot.lane.b32.xlu0 %v4071, 88
  %v4852 = vpop.permute.xlu0 %4851
  %4853 = vrot.lane.b32.xlu0 %v4072, 88
  %v4854 = vpop.permute.xlu0 %4853
  %4855 = vrot.lane.b32.xlu0 %v4073, 88
  %v4856 = vpop.permute.xlu0 %4855
  %4857 = vrot.lane.b32.xlu0 %v4074, 88
  %v4858 = vpop.permute.xlu0 %4857
  %4859 = vrot.lane.b32.xlu0 %v4075, 88
  %v4860 = vpop.permute.xlu0 %4859
  %4861 = vrot.lane.b32.xlu0 %v4076, 88
  %v4862 = vpop.permute.xlu0 %4861
  %4863 = vrot.lane.b32.xlu0 %v4077, 88
  %v4864 = vpop.permute.xlu0 %4863
  %4865 = vrot.lane.b32.xlu0 %v4078, 88
  %v4866 = vpop.permute.xlu0 %4865
  %4867 = vrot.lane.b32.xlu0 %v4079, 88
  %v4868 = vpop.permute.xlu0 %4867
  %4869 = vrot.lane.b32.xlu0 %v4080, 88
  %v4870 = vpop.permute.xlu0 %4869
  %4871 = vrot.lane.b32.xlu0 %v4081, 88
  %v4872 = vpop.permute.xlu0 %4871
  %4873 = vrot.lane.b32.xlu0 %v4082, 88
  %v4874 = vpop.permute.xlu0 %4873
  %4875 = vrot.lane.b32.xlu0 %v4083, 88
  %v4876 = vpop.permute.xlu0 %4875
  %4877 = vrot.lane.b32.xlu0 %v4084, 88
  %v4878 = vpop.permute.xlu0 %4877
  %4879 = vrot.lane.b32.xlu0 %v4085, 88
  %v4880 = vpop.permute.xlu0 %4879
  %4881 = vrot.lane.b32.xlu0 %v4086, 88
  %v4882 = vpop.permute.xlu0 %4881
  %4883 = vrot.lane.b32.xlu0 %v4087, 88
  %v4884 = vpop.permute.xlu0 %4883
  %4885 = vrot.lane.b32.xlu0 %v4088, 88
  %v4886 = vpop.permute.xlu0 %4885
  %4887 = vrot.lane.b32.xlu0 %v4089, 88
  %v4888 = vpop.permute.xlu0 %4887
  %4889 = vrot.lane.b32.xlu0 %v4090, 88
  %v4890 = vpop.permute.xlu0 %4889
  %4891 = vrot.lane.b32.xlu0 %v4091, 88
  %v4892 = vpop.permute.xlu0 %4891
  %4893 = vrot.lane.b32.xlu0 %v4092, 88
  %v4894 = vpop.permute.xlu0 %4893
  %4895 = vrot.lane.b32.xlu0 %v4093, 88
  %v4896 = vpop.permute.xlu0 %4895
  %4897 = vrot.lane.b32.xlu0 %v4094, 88
  %v4898 = vpop.permute.xlu0 %4897
  %4899 = vrot.lane.b32.xlu0 %v4095, 88
  %v4900 = vpop.permute.xlu0 %4899
  %4901 = vrot.lane.b32.xlu0 %v4096, 88
  %v4902 = vpop.permute.xlu0 %4901
  %4903 = vrot.lane.b32.xlu0 %v4097, 88
  %v4904 = vpop.permute.xlu0 %4903
  %4905 = vrot.lane.b32.xlu0 %v4098, 88
  %v4906 = vpop.permute.xlu0 %4905
  %4907 = vrot.lane.b32.xlu0 %v4099, 88
  %v4908 = vpop.permute.xlu0 %4907
  %4909 = vrot.lane.b32.xlu0 %v4100, 88
  %v4910 = vpop.permute.xlu0 %4909
  %4911 = vrot.lane.b32.xlu0 %v4101, 88
  %v4912 = vpop.permute.xlu0 %4911
  %4913 = vrot.lane.b32.xlu0 %v4102, 88
  %v4914 = vpop.permute.xlu0 %4913
  %4915 = vrot.lane.b32.xlu0 %v4103, 88
  %v4916 = vpop.permute.xlu0 %4915
  %4917 = vrot.lane.b32.xlu0 %v4104, 88
  %v4918 = vpop.permute.xlu0 %4917
  %4919 = vrot.lane.b32.xlu0 %v4105, 88
  %v4920 = vpop.permute.xlu0 %4919
  %4921 = vrot.lane.b32.xlu0 %v4106, 88
  %v4922 = vpop.permute.xlu0 %4921
  %4923 = vrot.lane.b32.xlu0 %v4107, 88
  %v4924 = vpop.permute.xlu0 %4923
  %4925 = vrot.lane.b32.xlu0 %v4108, 88
  %v4926 = vpop.permute.xlu0 %4925
  %4927 = vrot.lane.b32.xlu0 %v4109, 88
  %v4928 = vpop.permute.xlu0 %4927
  %4929 = vrot.lane.b32.xlu0 %v4110, 88
  %v4930 = vpop.permute.xlu0 %4929
  %4931 = vrot.lane.b32.xlu0 %v4111, 88
  %v4932 = vpop.permute.xlu0 %4931
  %4933 = vrot.lane.b32.xlu0 %v4112, 88
  %v4934 = vpop.permute.xlu0 %4933
  %4935 = vrot.lane.b32.xlu0 %v4113, 88
  %v4936 = vpop.permute.xlu0 %4935
  %4937 = vrot.lane.b32.xlu0 %v4114, 88
  %v4938 = vpop.permute.xlu0 %4937
  %4939 = vrot.lane.b32.xlu0 %v4115, 88
  %v4940 = vpop.permute.xlu0 %4939
  %4941 = vrot.lane.b32.xlu0 %v4116, 88
  %v4942 = vpop.permute.xlu0 %4941
  %4943 = vrot.lane.b32.xlu0 %v4117, 88
  %v4944 = vpop.permute.xlu0 %4943
  %4945 = vrot.lane.b32.xlu0 %v4118, 88
  %v4946 = vpop.permute.xlu0 %4945
  %4947 = vrot.lane.b32.xlu0 %v4119, 88
  %v4948 = vpop.permute.xlu0 %4947
  %4949 = vrot.lane.b32.xlu0 %v4120, 88
  %v4950 = vpop.permute.xlu0 %4949
  %4951 = vrot.lane.b32.xlu0 %v4121, 88
  %v4952 = vpop.permute.xlu0 %4951
  %4953 = vrot.lane.b32.xlu0 %v4122, 88
  %v4954 = vpop.permute.xlu0 %4953
  %4955 = vrot.lane.b32.xlu0 %v4123, 88
  %v4956 = vpop.permute.xlu0 %4955
  %4957 = vrot.lane.b32.xlu0 %v4124, 88
  %v4958 = vpop.permute.xlu0 %4957
  %4959 = vrot.lane.b32.xlu0 %v4125, 88
  %v4960 = vpop.permute.xlu0 %4959
  %4961 = vrot.lane.b32.xlu0 %v4126, 88
  %v4962 = vpop.permute.xlu0 %4961
  %4963 = vrot.lane.b32.xlu0 %v4127, 88
  %v4964 = vpop.permute.xlu0 %4963
  %4965 = vrot.lane.b32.xlu0 %v4128, 88
  %v4966 = vpop.permute.xlu0 %4965
  %4967 = vrot.lane.b32.xlu0 %v4129, 88
  %v4968 = vpop.permute.xlu0 %4967
  %4969 = vrot.lane.b32.xlu0 %v4130, 88
  %v4970 = vpop.permute.xlu0 %4969
  %4971 = vrot.lane.b32.xlu0 %v4131, 88
  %v4972 = vpop.permute.xlu0 %4971
  %4973 = vrot.lane.b32.xlu0 %v4132, 88
  %v4974 = vpop.permute.xlu0 %4973
  %4975 = vrot.lane.b32.xlu0 %v4133, 88
  %v4976 = vpop.permute.xlu0 %4975
  %4977 = vrot.lane.b32.xlu0 %v4134, 88
  %v4978 = vpop.permute.xlu0 %4977
  %4979 = vrot.lane.b32.xlu0 %v4135, 88
  %v4980 = vpop.permute.xlu0 %4979
  %4981 = vrot.lane.b32.xlu0 %v4136, 88
  %v4982 = vpop.permute.xlu0 %4981
  %4983 = vrot.lane.b32.xlu0 %v4137, 88
  %v4984 = vpop.permute.xlu0 %4983
  %4985 = vrot.lane.b32.xlu0 %v4138, 88
  %v4986 = vpop.permute.xlu0 %4985
  %4987 = vrot.lane.b32.xlu0 %v4139, 88
  %v4988 = vpop.permute.xlu0 %4987
  %4989 = vrot.lane.b32.xlu0 %v4140, 88
  %v4990 = vpop.permute.xlu0 %4989
  %4991 = vrot.lane.b32.xlu0 %v4141, 88
  %v4992 = vpop.permute.xlu0 %4991
  %4993 = vrot.lane.b32.xlu0 %v4142, 88
  %v4994 = vpop.permute.xlu0 %4993
  %4995 = vrot.lane.b32.xlu0 %v4143, 88
  %v4996 = vpop.permute.xlu0 %4995
  %4997 = vrot.lane.b32.xlu0 %v4144, 88
  %v4998 = vpop.permute.xlu0 %4997
  %4999 = vrot.lane.b32.xlu0 %v4145, 88
  %v5000 = vpop.permute.xlu0 %4999
  %5001 = vrot.lane.b32.xlu0 %v4146, 88
  %v5002 = vpop.permute.xlu0 %5001
  %5003 = vrot.lane.b32.xlu0 %v4147, 88
  %v5004 = vpop.permute.xlu0 %5003
  %5005 = vrot.lane.b32.xlu0 %v4148, 88
  %v5006 = vpop.permute.xlu0 %5005
  %5007 = vrot.lane.b32.xlu0 %v4149, 88
  %v5008 = vpop.permute.xlu0 %5007
  %5009 = vrot.lane.b32.xlu0 %v4150, 88
  %v5010 = vpop.permute.xlu0 %5009
  %5011 = vrot.lane.b32.xlu0 %v4151, 88
  %v5012 = vpop.permute.xlu0 %5011
  %5013 = vrot.lane.b32.xlu0 %v4152, 88
  %v5014 = vpop.permute.xlu0 %5013
  %5015 = vrot.lane.b32.xlu0 %v4153, 88
  %v5016 = vpop.permute.xlu0 %5015
  %5017 = vrot.lane.b32.xlu0 %v4154, 88
  %v5018 = vpop.permute.xlu0 %5017
  %v5307 = vmax.f32 %v3867, %v4444
  %v5308 = vmax.f32 %v3868, %v4446
  %v5309 = vmax.f32 %v3869, %v4448
  %v5310 = vmax.f32 %v3870, %v4450
  %v5311 = vmax.f32 %v3871, %v4452
  %v5312 = vmax.f32 %v3872, %v4454
  %v5313 = vmax.f32 %v3873, %v4456
  %v5314 = vmax.f32 %v3874, %v4458
  %v5315 = vmax.f32 %v3875, %v4460
  %v5316 = vmax.f32 %v3876, %v4462
  %v5317 = vmax.f32 %v3877, %v4464
  %v5318 = vmax.f32 %v3878, %v4466
  %v5319 = vmax.f32 %v3879, %v4468
  %v5320 = vmax.f32 %v3880, %v4470
  %v5321 = vmax.f32 %v3881, %v4472
  %v5322 = vmax.f32 %v3882, %v4474
  %v5323 = vmax.f32 %v3883, %v4476
  %v5324 = vmax.f32 %v3884, %v4478
  %v5325 = vmax.f32 %v3885, %v4480
  %v5326 = vmax.f32 %v3886, %v4482
  %v5327 = vmax.f32 %v3887, %v4484
  %v5328 = vmax.f32 %v3888, %v4486
  %v5329 = vmax.f32 %v3889, %v4488
  %v5330 = vmax.f32 %v3890, %v4490
  %v5331 = vmax.f32 %v3891, %v4492
  %v5332 = vmax.f32 %v3892, %v4494
  %v5333 = vmax.f32 %v3893, %v4496
  %v5334 = vmax.f32 %v3894, %v4498
  %v5335 = vmax.f32 %v3895, %v4500
  %v5336 = vmax.f32 %v3896, %v4502
  %v5337 = vmax.f32 %v3897, %v4504
  %v5338 = vmax.f32 %v3898, %v4506
  %v5339 = vmax.f32 %v3899, %v4508
  %v5340 = vmax.f32 %v3900, %v4510
  %v5341 = vmax.f32 %v3901, %v4512
  %v5342 = vmax.f32 %v3902, %v4514
  %v5343 = vmax.f32 %v3903, %v4516
  %v5344 = vmax.f32 %v3904, %v4518
  %v5345 = vmax.f32 %v3905, %v4520
  %v5346 = vmax.f32 %v3906, %v4522
  %v5347 = vmax.f32 %v3907, %v4524
  %v5348 = vmax.f32 %v3908, %v4526
  %v5349 = vmax.f32 %v3909, %v4528
  %v5350 = vmax.f32 %v3910, %v4530
  %v5351 = vmax.f32 %v3911, %v4532
  %v5352 = vmax.f32 %v3912, %v4534
  %v5353 = vmax.f32 %v3913, %v4536
  %v5354 = vmax.f32 %v3914, %v4538
  %v5355 = vmax.f32 %v3915, %v4540
  %v5356 = vmax.f32 %v3916, %v4542
  %v5357 = vmax.f32 %v3917, %v4544
  %v5358 = vmax.f32 %v3918, %v4546
  %v5359 = vmax.f32 %v3919, %v4548
  %v5360 = vmax.f32 %v3920, %v4550
  %v5361 = vmax.f32 %v3921, %v4552
  %v5362 = vmax.f32 %v3922, %v4554
  %v5363 = vmax.f32 %v3923, %v4556
  %v5364 = vmax.f32 %v3924, %v4558
  %v5365 = vmax.f32 %v3925, %v4560
  %v5366 = vmax.f32 %v3926, %v4562
  %v5367 = vmax.f32 %v3927, %v4564
  %v5368 = vmax.f32 %v3928, %v4566
  %v5369 = vmax.f32 %v3929, %v4568
  %v5370 = vmax.f32 %v3930, %v4570
  %v5371 = vmax.f32 %v3931, %v4572
  %v5372 = vmax.f32 %v3932, %v4574
  %v5373 = vmax.f32 %v3933, %v4576
  %v5374 = vmax.f32 %v3934, %v4578
  %v5375 = vmax.f32 %v3935, %v4580
  %v5376 = vmax.f32 %v3936, %v4582
  %v5377 = vmax.f32 %v3937, %v4584
  %v5378 = vmax.f32 %v3938, %v4586
  %v5379 = vmax.f32 %v3939, %v4588
  %v5380 = vmax.f32 %v3940, %v4590
  %v5381 = vmax.f32 %v3941, %v4592
  %v5382 = vmax.f32 %v3942, %v4594
  %v5383 = vmax.f32 %v3943, %v4596
  %v5384 = vmax.f32 %v3944, %v4598
  %v5385 = vmax.f32 %v3945, %v4600
  %v5386 = vmax.f32 %v3946, %v4602
  %v5387 = vmax.f32 %v3947, %v4604
  %v5388 = vmax.f32 %v3948, %v4606
  %v5389 = vmax.f32 %v3949, %v4608
  %v5390 = vmax.f32 %v3950, %v4610
  %v5391 = vmax.f32 %v3951, %v4612
  %v5392 = vmax.f32 %v3952, %v4614
  %v5393 = vmax.f32 %v3953, %v4616
  %v5394 = vmax.f32 %v3954, %v4618
  %v5395 = vmax.f32 %v3955, %v4620
  %v5396 = vmax.f32 %v3956, %v4622
  %v5397 = vmax.f32 %v3957, %v4624
  %v5398 = vmax.f32 %v3958, %v4626
  %v5399 = vmax.f32 %v3959, %v4628
  %v5400 = vmax.f32 %v3960, %v4630
  %v5401 = vmax.f32 %v3961, %v4632
  %v5402 = vmax.f32 %v3962, %v4634
  %v5403 = vmax.f32 %v3963, %v4636
  %v5404 = vmax.f32 %v3964, %v4638
  %v5405 = vmax.f32 %v3965, %v4640
  %v5406 = vmax.f32 %v3966, %v4642
  %v5407 = vmax.f32 %v3967, %v4644
  %v5408 = vmax.f32 %v3968, %v4646
  %v5409 = vmax.f32 %v3969, %v4648
  %v5410 = vmax.f32 %v3970, %v4650
  %v5411 = vmax.f32 %v3971, %v4652
  %v5412 = vmax.f32 %v3972, %v4654
  %v5413 = vmax.f32 %v3973, %v4656
  %v5414 = vmax.f32 %v3974, %v4658
  %v5415 = vmax.f32 %v3975, %v4660
  %v5416 = vmax.f32 %v3976, %v4662
  %v5417 = vmax.f32 %v3977, %v4664
  %v5418 = vmax.f32 %v3978, %v4666
  %v5419 = vmax.f32 %v3979, %v4668
  %v5420 = vmax.f32 %v3980, %v4670
  %v5421 = vmax.f32 %v3981, %v4672
  %v5422 = vmax.f32 %v3982, %v4674
  %v5423 = vmax.f32 %v3983, %v4676
  %v5424 = vmax.f32 %v3984, %v4678
  %v5425 = vmax.f32 %v3985, %v4680
  %v5426 = vmax.f32 %v3986, %v4682
  %v5427 = vmax.f32 %v3987, %v4684
  %v5428 = vmax.f32 %v3988, %v4686
  %v5429 = vmax.f32 %v3989, %v4688
  %v5430 = vmax.f32 %v3990, %v4690
  %v5431 = vmax.f32 %v3991, %v4692
  %v5432 = vmax.f32 %v3992, %v4694
  %v5433 = vmax.f32 %v3993, %v4696
  %v5434 = vmax.f32 %v3994, %v4698
  %v5435 = vmax.f32 %v3995, %v4700
  %v5436 = vmax.f32 %v3996, %v4702
  %v5437 = vmax.f32 %v3997, %v4704
  %v5438 = vmax.f32 %v3998, %v4706
  %v5439 = vmax.f32 %v3999, %v4708
  %v5440 = vmax.f32 %v4000, %v4710
  %v5441 = vmax.f32 %v4001, %v4712
  %v5442 = vmax.f32 %v4002, %v4714
  %v5443 = vmax.f32 %v4003, %v4716
  %v5444 = vmax.f32 %v4004, %v4718
  %v5445 = vmax.f32 %v4005, %v4720
  %v5446 = vmax.f32 %v4006, %v4722
  %v5447 = vmax.f32 %v4007, %v4724
  %v5448 = vmax.f32 %v4008, %v4726
  %v5449 = vmax.f32 %v4009, %v4728
  %v5450 = vmax.f32 %v4010, %v4730
  %v5451 = vmax.f32 %v4011, %v4732
  %v5452 = vmax.f32 %v4012, %v4734
  %v5453 = vmax.f32 %v4013, %v4736
  %v5454 = vmax.f32 %v4014, %v4738
  %v5455 = vmax.f32 %v4015, %v4740
  %v5456 = vmax.f32 %v4016, %v4742
  %v5457 = vmax.f32 %v4017, %v4744
  %v5458 = vmax.f32 %v4018, %v4746
  %v5459 = vmax.f32 %v4019, %v4748
  %v5460 = vmax.f32 %v4020, %v4750
  %v5461 = vmax.f32 %v4021, %v4752
  %v5462 = vmax.f32 %v4022, %v4754
  %v5463 = vmax.f32 %v4023, %v4756
  %v5464 = vmax.f32 %v4024, %v4758
  %v5465 = vmax.f32 %v4025, %v4760
  %v5466 = vmax.f32 %v4026, %v4762
  %v5467 = vmax.f32 %v4027, %v4764
  %v5468 = vmax.f32 %v4028, %v4766
  %v5469 = vmax.f32 %v4029, %v4768
  %v5470 = vmax.f32 %v4030, %v4770
  %v5471 = vmax.f32 %v4031, %v4772
  %v5472 = vmax.f32 %v4032, %v4774
  %v5473 = vmax.f32 %v4033, %v4776
  %v5474 = vmax.f32 %v4034, %v4778
  %v5475 = vmax.f32 %v4035, %v4780
  %v5476 = vmax.f32 %v4036, %v4782
  %v5477 = vmax.f32 %v4037, %v4784
  %v5478 = vmax.f32 %v4038, %v4786
  %v5479 = vmax.f32 %v4039, %v4788
  %v5480 = vmax.f32 %v4040, %v4790
  %v5481 = vmax.f32 %v4041, %v4792
  %v5482 = vmax.f32 %v4042, %v4794
  %v5483 = vmax.f32 %v4043, %v4796
  %v5484 = vmax.f32 %v4044, %v4798
  %v5485 = vmax.f32 %v4045, %v4800
  %v5486 = vmax.f32 %v4046, %v4802
  %v5487 = vmax.f32 %v4047, %v4804
  %v5488 = vmax.f32 %v4048, %v4806
  %v5489 = vmax.f32 %v4049, %v4808
  %v5490 = vmax.f32 %v4050, %v4810
  %v5491 = vmax.f32 %v4051, %v4812
  %v5492 = vmax.f32 %v4052, %v4814
  %v5493 = vmax.f32 %v4053, %v4816
  %v5494 = vmax.f32 %v4054, %v4818
  %v5495 = vmax.f32 %v4055, %v4820
  %v5496 = vmax.f32 %v4056, %v4822
  %v5497 = vmax.f32 %v4057, %v4824
  %v5498 = vmax.f32 %v4058, %v4826
  %v5499 = vmax.f32 %v4059, %v4828
  %v5500 = vmax.f32 %v4060, %v4830
  %v5501 = vmax.f32 %v4061, %v4832
  %v5502 = vmax.f32 %v4062, %v4834
  %v5503 = vmax.f32 %v4063, %v4836
  %v5504 = vmax.f32 %v4064, %v4838
  %v5505 = vmax.f32 %v4065, %v4840
  %v5506 = vmax.f32 %v4066, %v4842
  %v5507 = vmax.f32 %v4067, %v4844
  %v5508 = vmax.f32 %v4068, %v4846
  %v5509 = vmax.f32 %v4069, %v4848
  %v5510 = vmax.f32 %v4070, %v4850
  %v5511 = vmax.f32 %v4071, %v4852
  %v5512 = vmax.f32 %v4072, %v4854
  %v5513 = vmax.f32 %v4073, %v4856
  %v5514 = vmax.f32 %v4074, %v4858
  %v5515 = vmax.f32 %v4075, %v4860
  %v5516 = vmax.f32 %v4076, %v4862
  %v5517 = vmax.f32 %v4077, %v4864
  %v5518 = vmax.f32 %v4078, %v4866
  %v5519 = vmax.f32 %v4079, %v4868
  %v5520 = vmax.f32 %v4080, %v4870
  %v5521 = vmax.f32 %v4081, %v4872
  %v5522 = vmax.f32 %v4082, %v4874
  %v5523 = vmax.f32 %v4083, %v4876
  %v5524 = vmax.f32 %v4084, %v4878
  %v5525 = vmax.f32 %v4085, %v4880
  %v5526 = vmax.f32 %v4086, %v4882
  %v5527 = vmax.f32 %v4087, %v4884
  %v5528 = vmax.f32 %v4088, %v4886
  %v5529 = vmax.f32 %v4089, %v4888
  %v5530 = vmax.f32 %v4090, %v4890
  %v5531 = vmax.f32 %v4091, %v4892
  %v5532 = vmax.f32 %v4092, %v4894
  %v5533 = vmax.f32 %v4093, %v4896
  %v5534 = vmax.f32 %v4094, %v4898
  %v5535 = vmax.f32 %v4095, %v4900
  %v5536 = vmax.f32 %v4096, %v4902
  %v5537 = vmax.f32 %v4097, %v4904
  %v5538 = vmax.f32 %v4098, %v4906
  %v5539 = vmax.f32 %v4099, %v4908
  %v5540 = vmax.f32 %v4100, %v4910
  %v5541 = vmax.f32 %v4101, %v4912
  %v5542 = vmax.f32 %v4102, %v4914
  %v5543 = vmax.f32 %v4103, %v4916
  %v5544 = vmax.f32 %v4104, %v4918
  %v5545 = vmax.f32 %v4105, %v4920
  %v5546 = vmax.f32 %v4106, %v4922
  %v5547 = vmax.f32 %v4107, %v4924
  %v5548 = vmax.f32 %v4108, %v4926
  %v5549 = vmax.f32 %v4109, %v4928
  %v5550 = vmax.f32 %v4110, %v4930
  %v5551 = vmax.f32 %v4111, %v4932
  %v5552 = vmax.f32 %v4112, %v4934
  %v5553 = vmax.f32 %v4113, %v4936
  %v5554 = vmax.f32 %v4114, %v4938
  %v5555 = vmax.f32 %v4115, %v4940
  %v5556 = vmax.f32 %v4116, %v4942
  %v5557 = vmax.f32 %v4117, %v4944
  %v5558 = vmax.f32 %v4118, %v4946
  %v5559 = vmax.f32 %v4119, %v4948
  %v5560 = vmax.f32 %v4120, %v4950
  %v5561 = vmax.f32 %v4121, %v4952
  %v5562 = vmax.f32 %v4122, %v4954
  %v5563 = vmax.f32 %v4123, %v4956
  %v5564 = vmax.f32 %v4124, %v4958
  %v5565 = vmax.f32 %v4125, %v4960
  %v5566 = vmax.f32 %v4126, %v4962
  %v5567 = vmax.f32 %v4127, %v4964
  %v5568 = vmax.f32 %v4128, %v4966
  %v5569 = vmax.f32 %v4129, %v4968
  %v5570 = vmax.f32 %v4130, %v4970
  %v5571 = vmax.f32 %v4131, %v4972
  %v5572 = vmax.f32 %v4132, %v4974
  %v5573 = vmax.f32 %v4133, %v4976
  %v5574 = vmax.f32 %v4134, %v4978
  %v5575 = vmax.f32 %v4135, %v4980
  %v5576 = vmax.f32 %v4136, %v4982
  %v5577 = vmax.f32 %v4137, %v4984
  %v5578 = vmax.f32 %v4138, %v4986
  %v5579 = vmax.f32 %v4139, %v4988
  %v5580 = vmax.f32 %v4140, %v4990
  %v5581 = vmax.f32 %v4141, %v4992
  %v5582 = vmax.f32 %v4142, %v4994
  %v5583 = vmax.f32 %v4143, %v4996
  %v5584 = vmax.f32 %v4144, %v4998
  %v5585 = vmax.f32 %v4145, %v5000
  %v5586 = vmax.f32 %v4146, %v5002
  %v5587 = vmax.f32 %v4147, %v5004
  %v5588 = vmax.f32 %v4148, %v5006
  %v5589 = vmax.f32 %v4149, %v5008
  %v5590 = vmax.f32 %v4150, %v5010
  %v5591 = vmax.f32 %v4151, %v5012
  %v5592 = vmax.f32 %v4152, %v5014
  %v5593 = vmax.f32 %v4153, %v5016
  %v5594 = vmax.f32 %v4154, %v5018
  %v5595 = vld [vmem:[%s2] sm:$0x1]
  %v5597 = vlaneseq
  %v5598 = vshrl.u32 %v5597, 7
  %v5599 = vsub.s32 0, %v5598
  %v5600 = vrot.slane %v5595, %v5599
  %v5602 = vadd.f32 %v5307, %v5600
  %v5603 = vadd.f32 %v5308, %v5600
  %v5604 = vadd.f32 %v5309, %v5600
  %v5605 = vadd.f32 %v5310, %v5600
  %v5606 = vadd.f32 %v5311, %v5600
  %v5607 = vadd.f32 %v5312, %v5600
  %v5608 = vadd.f32 %v5313, %v5600
  %v5609 = vadd.f32 %v5314, %v5600
  %v5610 = vadd.f32 %v5315, %v5600
  %v5611 = vadd.f32 %v5316, %v5600
  %v5612 = vadd.f32 %v5317, %v5600
  %v5613 = vadd.f32 %v5318, %v5600
  %v5614 = vadd.f32 %v5319, %v5600
  %v5615 = vadd.f32 %v5320, %v5600
  %v5616 = vadd.f32 %v5321, %v5600
  %v5617 = vadd.f32 %v5322, %v5600
  %v5618 = vadd.f32 %v5323, %v5600
  %v5619 = vadd.f32 %v5324, %v5600
  %v5620 = vadd.f32 %v5325, %v5600
  %v5621 = vadd.f32 %v5326, %v5600
  %v5622 = vadd.f32 %v5327, %v5600
  %v5623 = vadd.f32 %v5328, %v5600
  %v5624 = vadd.f32 %v5329, %v5600
  %v5625 = vadd.f32 %v5330, %v5600
  %v5626 = vadd.f32 %v5331, %v5600
  %v5627 = vadd.f32 %v5332, %v5600
  %v5628 = vadd.f32 %v5333, %v5600
  %v5629 = vadd.f32 %v5334, %v5600
  %v5630 = vadd.f32 %v5335, %v5600
  %v5631 = vadd.f32 %v5336, %v5600
  %v5632 = vadd.f32 %v5337, %v5600
  %v5633 = vadd.f32 %v5338, %v5600
  %v5634 = vadd.f32 %v5339, %v5600
  %v5635 = vadd.f32 %v5340, %v5600
  %v5636 = vadd.f32 %v5341, %v5600
  %v5637 = vadd.f32 %v5342, %v5600
  %v5638 = vadd.f32 %v5343, %v5600
  %v5639 = vadd.f32 %v5344, %v5600
  %v5640 = vadd.f32 %v5345, %v5600
  %v5641 = vadd.f32 %v5346, %v5600
  %v5642 = vadd.f32 %v5347, %v5600
  %v5643 = vadd.f32 %v5348, %v5600
  %v5644 = vadd.f32 %v5349, %v5600
  %v5645 = vadd.f32 %v5350, %v5600
  %v5646 = vadd.f32 %v5351, %v5600
  %v5647 = vadd.f32 %v5352, %v5600
  %v5648 = vadd.f32 %v5353, %v5600
  %v5649 = vadd.f32 %v5354, %v5600
  %v5650 = vadd.f32 %v5355, %v5600
  %v5651 = vadd.f32 %v5356, %v5600
  %v5652 = vadd.f32 %v5357, %v5600
  %v5653 = vadd.f32 %v5358, %v5600
  %v5654 = vadd.f32 %v5359, %v5600
  %v5655 = vadd.f32 %v5360, %v5600
  %v5656 = vadd.f32 %v5361, %v5600
  %v5657 = vadd.f32 %v5362, %v5600
  %v5658 = vadd.f32 %v5363, %v5600
  %v5659 = vadd.f32 %v5364, %v5600
  %v5660 = vadd.f32 %v5365, %v5600
  %v5661 = vadd.f32 %v5366, %v5600
  %v5662 = vadd.f32 %v5367, %v5600
  %v5663 = vadd.f32 %v5368, %v5600
  %v5664 = vadd.f32 %v5369, %v5600
  %v5665 = vadd.f32 %v5370, %v5600
  %v5666 = vadd.f32 %v5371, %v5600
  %v5667 = vadd.f32 %v5372, %v5600
  %v5668 = vadd.f32 %v5373, %v5600
  %v5669 = vadd.f32 %v5374, %v5600
  %v5670 = vadd.f32 %v5375, %v5600
  %v5671 = vadd.f32 %v5376, %v5600
  %v5672 = vadd.f32 %v5377, %v5600
  %v5673 = vadd.f32 %v5378, %v5600
  %v5674 = vadd.f32 %v5379, %v5600
  %v5675 = vadd.f32 %v5380, %v5600
  %v5676 = vadd.f32 %v5381, %v5600
  %v5677 = vadd.f32 %v5382, %v5600
  %v5678 = vadd.f32 %v5383, %v5600
  %v5679 = vadd.f32 %v5384, %v5600
  %v5680 = vadd.f32 %v5385, %v5600
  %v5681 = vadd.f32 %v5386, %v5600
  %v5682 = vadd.f32 %v5387, %v5600
  %v5683 = vadd.f32 %v5388, %v5600
  %v5684 = vadd.f32 %v5389, %v5600
  %v5685 = vadd.f32 %v5390, %v5600
  %v5686 = vadd.f32 %v5391, %v5600
  %v5687 = vadd.f32 %v5392, %v5600
  %v5688 = vadd.f32 %v5393, %v5600
  %v5689 = vadd.f32 %v5394, %v5600
  %v5690 = vadd.f32 %v5395, %v5600
  %v5691 = vadd.f32 %v5396, %v5600
  %v5692 = vadd.f32 %v5397, %v5600
  %v5693 = vadd.f32 %v5398, %v5600
  %v5694 = vadd.f32 %v5399, %v5600
  %v5695 = vadd.f32 %v5400, %v5600
  %v5696 = vadd.f32 %v5401, %v5600
  %v5697 = vadd.f32 %v5402, %v5600
  %v5698 = vadd.f32 %v5403, %v5600
  %v5699 = vadd.f32 %v5404, %v5600
  %v5700 = vadd.f32 %v5405, %v5600
  %v5701 = vadd.f32 %v5406, %v5600
  %v5702 = vadd.f32 %v5407, %v5600
  %v5703 = vadd.f32 %v5408, %v5600
  %v5704 = vadd.f32 %v5409, %v5600
  %v5705 = vadd.f32 %v5410, %v5600
  %v5706 = vadd.f32 %v5411, %v5600
  %v5707 = vadd.f32 %v5412, %v5600
  %v5708 = vadd.f32 %v5413, %v5600
  %v5709 = vadd.f32 %v5414, %v5600
  %v5710 = vadd.f32 %v5415, %v5600
  %v5711 = vadd.f32 %v5416, %v5600
  %v5712 = vadd.f32 %v5417, %v5600
  %v5713 = vadd.f32 %v5418, %v5600
  %v5714 = vadd.f32 %v5419, %v5600
  %v5715 = vadd.f32 %v5420, %v5600
  %v5716 = vadd.f32 %v5421, %v5600
  %v5717 = vadd.f32 %v5422, %v5600
  %v5718 = vadd.f32 %v5423, %v5600
  %v5719 = vadd.f32 %v5424, %v5600
  %v5720 = vadd.f32 %v5425, %v5600
  %v5721 = vadd.f32 %v5426, %v5600
  %v5722 = vadd.f32 %v5427, %v5600
  %v5723 = vadd.f32 %v5428, %v5600
  %v5724 = vadd.f32 %v5429, %v5600
  %v5725 = vadd.f32 %v5430, %v5600
  %v5726 = vadd.f32 %v5431, %v5600
  %v5727 = vadd.f32 %v5432, %v5600
  %v5728 = vadd.f32 %v5433, %v5600
  %v5729 = vadd.f32 %v5434, %v5600
  %v5730 = vadd.f32 %v5435, %v5600
  %v5731 = vadd.f32 %v5436, %v5600
  %v5732 = vadd.f32 %v5437, %v5600
  %v5733 = vadd.f32 %v5438, %v5600
  %v5734 = vadd.f32 %v5439, %v5600
  %v5735 = vadd.f32 %v5440, %v5600
  %v5736 = vadd.f32 %v5441, %v5600
  %v5737 = vadd.f32 %v5442, %v5600
  %v5738 = vadd.f32 %v5443, %v5600
  %v5739 = vadd.f32 %v5444, %v5600
  %v5740 = vadd.f32 %v5445, %v5600
  %v5741 = vadd.f32 %v5446, %v5600
  %v5742 = vadd.f32 %v5447, %v5600
  %v5743 = vadd.f32 %v5448, %v5600
  %v5744 = vadd.f32 %v5449, %v5600
  %v5745 = vadd.f32 %v5450, %v5600
  %v5746 = vadd.f32 %v5451, %v5600
  %v5747 = vadd.f32 %v5452, %v5600
  %v5748 = vadd.f32 %v5453, %v5600
  %v5749 = vadd.f32 %v5454, %v5600
  %v5750 = vadd.f32 %v5455, %v5600
  %v5751 = vadd.f32 %v5456, %v5600
  %v5752 = vadd.f32 %v5457, %v5600
  %v5753 = vadd.f32 %v5458, %v5600
  %v5754 = vadd.f32 %v5459, %v5600
  %v5755 = vadd.f32 %v5460, %v5600
  %v5756 = vadd.f32 %v5461, %v5600
  %v5757 = vadd.f32 %v5462, %v5600
  %v5758 = vadd.f32 %v5463, %v5600
  %v5759 = vadd.f32 %v5464, %v5600
  %v5760 = vadd.f32 %v5465, %v5600
  %v5761 = vadd.f32 %v5466, %v5600
  %v5762 = vadd.f32 %v5467, %v5600
  %v5763 = vadd.f32 %v5468, %v5600
  %v5764 = vadd.f32 %v5469, %v5600
  %v5765 = vadd.f32 %v5470, %v5600
  %v5766 = vadd.f32 %v5471, %v5600
  %v5767 = vadd.f32 %v5472, %v5600
  %v5768 = vadd.f32 %v5473, %v5600
  %v5769 = vadd.f32 %v5474, %v5600
  %v5770 = vadd.f32 %v5475, %v5600
  %v5771 = vadd.f32 %v5476, %v5600
  %v5772 = vadd.f32 %v5477, %v5600
  %v5773 = vadd.f32 %v5478, %v5600
  %v5774 = vadd.f32 %v5479, %v5600
  %v5775 = vadd.f32 %v5480, %v5600
  %v5776 = vadd.f32 %v5481, %v5600
  %v5777 = vadd.f32 %v5482, %v5600
  %v5778 = vadd.f32 %v5483, %v5600
  %v5779 = vadd.f32 %v5484, %v5600
  %v5780 = vadd.f32 %v5485, %v5600
  %v5781 = vadd.f32 %v5486, %v5600
  %v5782 = vadd.f32 %v5487, %v5600
  %v5783 = vadd.f32 %v5488, %v5600
  %v5784 = vadd.f32 %v5489, %v5600
  %v5785 = vadd.f32 %v5490, %v5600
  %v5786 = vadd.f32 %v5491, %v5600
  %v5787 = vadd.f32 %v5492, %v5600
  %v5788 = vadd.f32 %v5493, %v5600
  %v5789 = vadd.f32 %v5494, %v5600
  %v5790 = vadd.f32 %v5495, %v5600
  %v5791 = vadd.f32 %v5496, %v5600
  %v5792 = vadd.f32 %v5497, %v5600
  %v5793 = vadd.f32 %v5498, %v5600
  %v5794 = vadd.f32 %v5499, %v5600
  %v5795 = vadd.f32 %v5500, %v5600
  %v5796 = vadd.f32 %v5501, %v5600
  %v5797 = vadd.f32 %v5502, %v5600
  %v5798 = vadd.f32 %v5503, %v5600
  %v5799 = vadd.f32 %v5504, %v5600
  %v5800 = vadd.f32 %v5505, %v5600
  %v5801 = vadd.f32 %v5506, %v5600
  %v5802 = vadd.f32 %v5507, %v5600
  %v5803 = vadd.f32 %v5508, %v5600
  %v5804 = vadd.f32 %v5509, %v5600
  %v5805 = vadd.f32 %v5510, %v5600
  %v5806 = vadd.f32 %v5511, %v5600
  %v5807 = vadd.f32 %v5512, %v5600
  %v5808 = vadd.f32 %v5513, %v5600
  %v5809 = vadd.f32 %v5514, %v5600
  %v5810 = vadd.f32 %v5515, %v5600
  %v5811 = vadd.f32 %v5516, %v5600
  %v5812 = vadd.f32 %v5517, %v5600
  %v5813 = vadd.f32 %v5518, %v5600
  %v5814 = vadd.f32 %v5519, %v5600
  %v5815 = vadd.f32 %v5520, %v5600
  %v5816 = vadd.f32 %v5521, %v5600
  %v5817 = vadd.f32 %v5522, %v5600
  %v5818 = vadd.f32 %v5523, %v5600
  %v5819 = vadd.f32 %v5524, %v5600
  %v5820 = vadd.f32 %v5525, %v5600
  %v5821 = vadd.f32 %v5526, %v5600
  %v5822 = vadd.f32 %v5527, %v5600
  %v5823 = vadd.f32 %v5528, %v5600
  %v5824 = vadd.f32 %v5529, %v5600
  %v5825 = vadd.f32 %v5530, %v5600
  %v5826 = vadd.f32 %v5531, %v5600
  %v5827 = vadd.f32 %v5532, %v5600
  %v5828 = vadd.f32 %v5533, %v5600
  %v5829 = vadd.f32 %v5534, %v5600
  %v5830 = vadd.f32 %v5535, %v5600
  %v5831 = vadd.f32 %v5536, %v5600
  %v5832 = vadd.f32 %v5537, %v5600
  %v5833 = vadd.f32 %v5538, %v5600
  %v5834 = vadd.f32 %v5539, %v5600
  %v5835 = vadd.f32 %v5540, %v5600
  %v5836 = vadd.f32 %v5541, %v5600
  %v5837 = vadd.f32 %v5542, %v5600
  %v5838 = vadd.f32 %v5543, %v5600
  %v5839 = vadd.f32 %v5544, %v5600
  %v5840 = vadd.f32 %v5545, %v5600
  %v5841 = vadd.f32 %v5546, %v5600
  %v5842 = vadd.f32 %v5547, %v5600
  %v5843 = vadd.f32 %v5548, %v5600
  %v5844 = vadd.f32 %v5549, %v5600
  %v5845 = vadd.f32 %v5550, %v5600
  %v5846 = vadd.f32 %v5551, %v5600
  %v5847 = vadd.f32 %v5552, %v5600
  %v5848 = vadd.f32 %v5553, %v5600
  %v5849 = vadd.f32 %v5554, %v5600
  %v5850 = vadd.f32 %v5555, %v5600
  %v5851 = vadd.f32 %v5556, %v5600
  %v5852 = vadd.f32 %v5557, %v5600
  %v5853 = vadd.f32 %v5558, %v5600
  %v5854 = vadd.f32 %v5559, %v5600
  %v5855 = vadd.f32 %v5560, %v5600
  %v5856 = vadd.f32 %v5561, %v5600
  %v5857 = vadd.f32 %v5562, %v5600
  %v5858 = vadd.f32 %v5563, %v5600
  %v5859 = vadd.f32 %v5564, %v5600
  %v5860 = vadd.f32 %v5565, %v5600
  %v5861 = vadd.f32 %v5566, %v5600
  %v5862 = vadd.f32 %v5567, %v5600
  %v5863 = vadd.f32 %v5568, %v5600
  %v5864 = vadd.f32 %v5569, %v5600
  %v5865 = vadd.f32 %v5570, %v5600
  %v5866 = vadd.f32 %v5571, %v5600
  %v5867 = vadd.f32 %v5572, %v5600
  %v5868 = vadd.f32 %v5573, %v5600
  %v5869 = vadd.f32 %v5574, %v5600
  %v5870 = vadd.f32 %v5575, %v5600
  %v5871 = vadd.f32 %v5576, %v5600
  %v5872 = vadd.f32 %v5577, %v5600
  %v5873 = vadd.f32 %v5578, %v5600
  %v5874 = vadd.f32 %v5579, %v5600
  %v5875 = vadd.f32 %v5580, %v5600
  %v5876 = vadd.f32 %v5581, %v5600
  %v5877 = vadd.f32 %v5582, %v5600
  %v5878 = vadd.f32 %v5583, %v5600
  %v5879 = vadd.f32 %v5584, %v5600
  %v5880 = vadd.f32 %v5585, %v5600
  %v5881 = vadd.f32 %v5586, %v5600
  %v5882 = vadd.f32 %v5587, %v5600
  %v5883 = vadd.f32 %v5588, %v5600
  %v5884 = vadd.f32 %v5589, %v5600
  %v5885 = vadd.f32 %v5590, %v5600
  %v5886 = vadd.f32 %v5591, %v5600
  %v5887 = vadd.f32 %v5592, %v5600
  %v5888 = vadd.f32 %v5593, %v5600
  %v5889 = vadd.f32 %v5594, %v5600
  %v5890 = vmax.f32 %v5602, 0.0
  %v5891 = vmax.f32 %v5603, 0.0
  %v5892 = vmax.f32 %v5604, 0.0
  %v5893 = vmax.f32 %v5605, 0.0
  %v5894 = vmax.f32 %v5606, 0.0
  %v5895 = vmax.f32 %v5607, 0.0
  %v5896 = vmax.f32 %v5608, 0.0
  %v5897 = vmax.f32 %v5609, 0.0
  %v5898 = vmax.f32 %v5610, 0.0
  %v5899 = vmax.f32 %v5611, 0.0
  %v5900 = vmax.f32 %v5612, 0.0
  %v5901 = vmax.f32 %v5613, 0.0
  %v5902 = vmax.f32 %v5614, 0.0
  %v5903 = vmax.f32 %v5615, 0.0
  %v5904 = vmax.f32 %v5616, 0.0
  %v5905 = vmax.f32 %v5617, 0.0
  %v5906 = vmax.f32 %v5618, 0.0
  %v5907 = vmax.f32 %v5619, 0.0
  %v5908 = vmax.f32 %v5620, 0.0
  %v5909 = vmax.f32 %v5621, 0.0
  %v5910 = vmax.f32 %v5622, 0.0
  %v5911 = vmax.f32 %v5623, 0.0
  %v5912 = vmax.f32 %v5624, 0.0
  %v5913 = vmax.f32 %v5625, 0.0
  %v5914 = vmax.f32 %v5626, 0.0
  %v5915 = vmax.f32 %v5627, 0.0
  %v5916 = vmax.f32 %v5628, 0.0
  %v5917 = vmax.f32 %v5629, 0.0
  %v5918 = vmax.f32 %v5630, 0.0
  %v5919 = vmax.f32 %v5631, 0.0
  %v5920 = vmax.f32 %v5632, 0.0
  %v5921 = vmax.f32 %v5633, 0.0
  %v5922 = vmax.f32 %v5634, 0.0
  %v5923 = vmax.f32 %v5635, 0.0
  %v5924 = vmax.f32 %v5636, 0.0
  %v5925 = vmax.f32 %v5637, 0.0
  %v5926 = vmax.f32 %v5638, 0.0
  %v5927 = vmax.f32 %v5639, 0.0
  %v5928 = vmax.f32 %v5640, 0.0
  %v5929 = vmax.f32 %v5641, 0.0
  %v5930 = vmax.f32 %v5642, 0.0
  %v5931 = vmax.f32 %v5643, 0.0
  %v5932 = vmax.f32 %v5644, 0.0
  %v5933 = vmax.f32 %v5645, 0.0
  %v5934 = vmax.f32 %v5646, 0.0
  %v5935 = vmax.f32 %v5647, 0.0
  %v5936 = vmax.f32 %v5648, 0.0
  %v5937 = vmax.f32 %v5649, 0.0
  %v5938 = vmax.f32 %v5650, 0.0
  %v5939 = vmax.f32 %v5651, 0.0
  %v5940 = vmax.f32 %v5652, 0.0
  %v5941 = vmax.f32 %v5653, 0.0
  %v5942 = vmax.f32 %v5654, 0.0
  %v5943 = vmax.f32 %v5655, 0.0
  %v5944 = vmax.f32 %v5656, 0.0
  %v5945 = vmax.f32 %v5657, 0.0
  %v5946 = vmax.f32 %v5658, 0.0
  %v5947 = vmax.f32 %v5659, 0.0
  %v5948 = vmax.f32 %v5660, 0.0
  %v5949 = vmax.f32 %v5661, 0.0
  %v5950 = vmax.f32 %v5662, 0.0
  %v5951 = vmax.f32 %v5663, 0.0
  %v5952 = vmax.f32 %v5664, 0.0
  %v5953 = vmax.f32 %v5665, 0.0
  %v5954 = vmax.f32 %v5666, 0.0
  %v5955 = vmax.f32 %v5667, 0.0
  %v5956 = vmax.f32 %v5668, 0.0
  %v5957 = vmax.f32 %v5669, 0.0
  %v5958 = vmax.f32 %v5670, 0.0
  %v5959 = vmax.f32 %v5671, 0.0
  %v5960 = vmax.f32 %v5672, 0.0
  %v5961 = vmax.f32 %v5673, 0.0
  %v5962 = vmax.f32 %v5674, 0.0
  %v5963 = vmax.f32 %v5675, 0.0
  %v5964 = vmax.f32 %v5676, 0.0
  %v5965 = vmax.f32 %v5677, 0.0
  %v5966 = vmax.f32 %v5678, 0.0
  %v5967 = vmax.f32 %v5679, 0.0
  %v5968 = vmax.f32 %v5680, 0.0
  %v5969 = vmax.f32 %v5681, 0.0
  %v5970 = vmax.f32 %v5682, 0.0
  %v5971 = vmax.f32 %v5683, 0.0
  %v5972 = vmax.f32 %v5684, 0.0
  %v5973 = vmax.f32 %v5685, 0.0
  %v5974 = vmax.f32 %v5686, 0.0
  %v5975 = vmax.f32 %v5687, 0.0
  %v5976 = vmax.f32 %v5688, 0.0
  %v5977 = vmax.f32 %v5689, 0.0
  %v5978 = vmax.f32 %v5690, 0.0
  %v5979 = vmax.f32 %v5691, 0.0
  %v5980 = vmax.f32 %v5692, 0.0
  %v5981 = vmax.f32 %v5693, 0.0
  %v5982 = vmax.f32 %v5694, 0.0
  %v5983 = vmax.f32 %v5695, 0.0
  %v5984 = vmax.f32 %v5696, 0.0
  %v5985 = vmax.f32 %v5697, 0.0
  %v5986 = vmax.f32 %v5698, 0.0
  %v5987 = vmax.f32 %v5699, 0.0
  %v5988 = vmax.f32 %v5700, 0.0
  %v5989 = vmax.f32 %v5701, 0.0
  %v5990 = vmax.f32 %v5702, 0.0
  %v5991 = vmax.f32 %v5703, 0.0
  %v5992 = vmax.f32 %v5704, 0.0
  %v5993 = vmax.f32 %v5705, 0.0
  %v5994 = vmax.f32 %v5706, 0.0
  %v5995 = vmax.f32 %v5707, 0.0
  %v5996 = vmax.f32 %v5708, 0.0
  %v5997 = vmax.f32 %v5709, 0.0
  %v5998 = vmax.f32 %v5710, 0.0
  %v5999 = vmax.f32 %v5711, 0.0
  %v6000 = vmax.f32 %v5712, 0.0
  %v6001 = vmax.f32 %v5713, 0.0
  %v6002 = vmax.f32 %v5714, 0.0
  %v6003 = vmax.f32 %v5715, 0.0
  %v6004 = vmax.f32 %v5716, 0.0
  %v6005 = vmax.f32 %v5717, 0.0
  %v6006 = vmax.f32 %v5718, 0.0
  %v6007 = vmax.f32 %v5719, 0.0
  %v6008 = vmax.f32 %v5720, 0.0
  %v6009 = vmax.f32 %v5721, 0.0
  %v6010 = vmax.f32 %v5722, 0.0
  %v6011 = vmax.f32 %v5723, 0.0
  %v6012 = vmax.f32 %v5724, 0.0
  %v6013 = vmax.f32 %v5725, 0.0
  %v6014 = vmax.f32 %v5726, 0.0
  %v6015 = vmax.f32 %v5727, 0.0
  %v6016 = vmax.f32 %v5728, 0.0
  %v6017 = vmax.f32 %v5729, 0.0
  %v6018 = vmax.f32 %v5730, 0.0
  %v6019 = vmax.f32 %v5731, 0.0
  %v6020 = vmax.f32 %v5732, 0.0
  %v6021 = vmax.f32 %v5733, 0.0
  %v6022 = vmax.f32 %v5734, 0.0
  %v6023 = vmax.f32 %v5735, 0.0
  %v6024 = vmax.f32 %v5736, 0.0
  %v6025 = vmax.f32 %v5737, 0.0
  %v6026 = vmax.f32 %v5738, 0.0
  %v6027 = vmax.f32 %v5739, 0.0
  %v6028 = vmax.f32 %v5740, 0.0
  %v6029 = vmax.f32 %v5741, 0.0
  %v6030 = vmax.f32 %v5742, 0.0
  %v6031 = vmax.f32 %v5743, 0.0
  %v6032 = vmax.f32 %v5744, 0.0
  %v6033 = vmax.f32 %v5745, 0.0
  %v6034 = vmax.f32 %v5746, 0.0
  %v6035 = vmax.f32 %v5747, 0.0
  %v6036 = vmax.f32 %v5748, 0.0
  %v6037 = vmax.f32 %v5749, 0.0
  %v6038 = vmax.f32 %v5750, 0.0
  %v6039 = vmax.f32 %v5751, 0.0
  %v6040 = vmax.f32 %v5752, 0.0
  %v6041 = vmax.f32 %v5753, 0.0
  %v6042 = vmax.f32 %v5754, 0.0
  %v6043 = vmax.f32 %v5755, 0.0
  %v6044 = vmax.f32 %v5756, 0.0
  %v6045 = vmax.f32 %v5757, 0.0
  %v6046 = vmax.f32 %v5758, 0.0
  %v6047 = vmax.f32 %v5759, 0.0
  %v6048 = vmax.f32 %v5760, 0.0
  %v6049 = vmax.f32 %v5761, 0.0
  %v6050 = vmax.f32 %v5762, 0.0
  %v6051 = vmax.f32 %v5763, 0.0
  %v6052 = vmax.f32 %v5764, 0.0
  %v6053 = vmax.f32 %v5765, 0.0
  %v6054 = vmax.f32 %v5766, 0.0
  %v6055 = vmax.f32 %v5767, 0.0
  %v6056 = vmax.f32 %v5768, 0.0
  %v6057 = vmax.f32 %v5769, 0.0
  %v6058 = vmax.f32 %v5770, 0.0
  %v6059 = vmax.f32 %v5771, 0.0
  %v6060 = vmax.f32 %v5772, 0.0
  %v6061 = vmax.f32 %v5773, 0.0
  %v6062 = vmax.f32 %v5774, 0.0
  %v6063 = vmax.f32 %v5775, 0.0
  %v6064 = vmax.f32 %v5776, 0.0
  %v6065 = vmax.f32 %v5777, 0.0
  %v6066 = vmax.f32 %v5778, 0.0
  %v6067 = vmax.f32 %v5779, 0.0
  %v6068 = vmax.f32 %v5780, 0.0
  %v6069 = vmax.f32 %v5781, 0.0
  %v6070 = vmax.f32 %v5782, 0.0
  %v6071 = vmax.f32 %v5783, 0.0
  %v6072 = vmax.f32 %v5784, 0.0
  %v6073 = vmax.f32 %v5785, 0.0
  %v6074 = vmax.f32 %v5786, 0.0
  %v6075 = vmax.f32 %v5787, 0.0
  %v6076 = vmax.f32 %v5788, 0.0
  %v6077 = vmax.f32 %v5789, 0.0
  %v6078 = vmax.f32 %v5790, 0.0
  %v6079 = vmax.f32 %v5791, 0.0
  %v6080 = vmax.f32 %v5792, 0.0
  %v6081 = vmax.f32 %v5793, 0.0
  %v6082 = vmax.f32 %v5794, 0.0
  %v6083 = vmax.f32 %v5795, 0.0
  %v6084 = vmax.f32 %v5796, 0.0
  %v6085 = vmax.f32 %v5797, 0.0
  %v6086 = vmax.f32 %v5798, 0.0
  %v6087 = vmax.f32 %v5799, 0.0
  %v6088 = vmax.f32 %v5800, 0.0
  %v6089 = vmax.f32 %v5801, 0.0
  %v6090 = vmax.f32 %v5802, 0.0
  %v6091 = vmax.f32 %v5803, 0.0
  %v6092 = vmax.f32 %v5804, 0.0
  %v6093 = vmax.f32 %v5805, 0.0
  %v6094 = vmax.f32 %v5806, 0.0
  %v6095 = vmax.f32 %v5807, 0.0
  %v6096 = vmax.f32 %v5808, 0.0
  %v6097 = vmax.f32 %v5809, 0.0
  %v6098 = vmax.f32 %v5810, 0.0
  %v6099 = vmax.f32 %v5811, 0.0
  %v6100 = vmax.f32 %v5812, 0.0
  %v6101 = vmax.f32 %v5813, 0.0
  %v6102 = vmax.f32 %v5814, 0.0
  %v6103 = vmax.f32 %v5815, 0.0
  %v6104 = vmax.f32 %v5816, 0.0
  %v6105 = vmax.f32 %v5817, 0.0
  %v6106 = vmax.f32 %v5818, 0.0
  %v6107 = vmax.f32 %v5819, 0.0
  %v6108 = vmax.f32 %v5820, 0.0
  %v6109 = vmax.f32 %v5821, 0.0
  %v6110 = vmax.f32 %v5822, 0.0
  %v6111 = vmax.f32 %v5823, 0.0
  %v6112 = vmax.f32 %v5824, 0.0
  %v6113 = vmax.f32 %v5825, 0.0
  %v6114 = vmax.f32 %v5826, 0.0
  %v6115 = vmax.f32 %v5827, 0.0
  %v6116 = vmax.f32 %v5828, 0.0
  %v6117 = vmax.f32 %v5829, 0.0
  %v6118 = vmax.f32 %v5830, 0.0
  %v6119 = vmax.f32 %v5831, 0.0
  %v6120 = vmax.f32 %v5832, 0.0
  %v6121 = vmax.f32 %v5833, 0.0
  %v6122 = vmax.f32 %v5834, 0.0
  %v6123 = vmax.f32 %v5835, 0.0
  %v6124 = vmax.f32 %v5836, 0.0
  %v6125 = vmax.f32 %v5837, 0.0
  %v6126 = vmax.f32 %v5838, 0.0
  %v6127 = vmax.f32 %v5839, 0.0
  %v6128 = vmax.f32 %v5840, 0.0
  %v6129 = vmax.f32 %v5841, 0.0
  %v6130 = vmax.f32 %v5842, 0.0
  %v6131 = vmax.f32 %v5843, 0.0
  %v6132 = vmax.f32 %v5844, 0.0
  %v6133 = vmax.f32 %v5845, 0.0
  %v6134 = vmax.f32 %v5846, 0.0
  %v6135 = vmax.f32 %v5847, 0.0
  %v6136 = vmax.f32 %v5848, 0.0
  %v6137 = vmax.f32 %v5849, 0.0
  %v6138 = vmax.f32 %v5850, 0.0
  %v6139 = vmax.f32 %v5851, 0.0
  %v6140 = vmax.f32 %v5852, 0.0
  %v6141 = vmax.f32 %v5853, 0.0
  %v6142 = vmax.f32 %v5854, 0.0
  %v6143 = vmax.f32 %v5855, 0.0
  %v6144 = vmax.f32 %v5856, 0.0
  %v6145 = vmax.f32 %v5857, 0.0
  %v6146 = vmax.f32 %v5858, 0.0
  %v6147 = vmax.f32 %v5859, 0.0
  %v6148 = vmax.f32 %v5860, 0.0
  %v6149 = vmax.f32 %v5861, 0.0
  %v6150 = vmax.f32 %v5862, 0.0
  %v6151 = vmax.f32 %v5863, 0.0
  %v6152 = vmax.f32 %v5864, 0.0
  %v6153 = vmax.f32 %v5865, 0.0
  %v6154 = vmax.f32 %v5866, 0.0
  %v6155 = vmax.f32 %v5867, 0.0
  %v6156 = vmax.f32 %v5868, 0.0
  %v6157 = vmax.f32 %v5869, 0.0
  %v6158 = vmax.f32 %v5870, 0.0
  %v6159 = vmax.f32 %v5871, 0.0
  %v6160 = vmax.f32 %v5872, 0.0
  %v6161 = vmax.f32 %v5873, 0.0
  %v6162 = vmax.f32 %v5874, 0.0
  %v6163 = vmax.f32 %v5875, 0.0
  %v6164 = vmax.f32 %v5876, 0.0
  %v6165 = vmax.f32 %v5877, 0.0
  %v6166 = vmax.f32 %v5878, 0.0
  %v6167 = vmax.f32 %v5879, 0.0
  %v6168 = vmax.f32 %v5880, 0.0
  %v6169 = vmax.f32 %v5881, 0.0
  %v6170 = vmax.f32 %v5882, 0.0
  %v6171 = vmax.f32 %v5883, 0.0
  %v6172 = vmax.f32 %v5884, 0.0
  %v6173 = vmax.f32 %v5885, 0.0
  %v6174 = vmax.f32 %v5886, 0.0
  %v6175 = vmax.f32 %v5887, 0.0
  %v6176 = vmax.f32 %v5888, 0.0
  %v6177 = vmax.f32 %v5889, 0.0
  %v6178 = vpack.c.bf16 %v5891, %v5890
  %v6179 = vpack.c.bf16 %v5893, %v5892
  %v6180 = vpack.c.bf16 %v5895, %v5894
  %v6181 = vpack.c.bf16 %v5897, %v5896
  %v6182 = vpack.c.bf16 %v5899, %v5898
  %v6183 = vpack.c.bf16 %v5901, %v5900
  %v6184 = vpack.c.bf16 %v5903, %v5902
  %v6185 = vpack.c.bf16 %v5905, %v5904
  %v6186 = vpack.c.bf16 %v5907, %v5906
  %v6187 = vpack.c.bf16 %v5909, %v5908
  %v6188 = vpack.c.bf16 %v5911, %v5910
  %v6189 = vpack.c.bf16 %v5913, %v5912
  %v6190 = vpack.c.bf16 %v5915, %v5914
  %v6191 = vpack.c.bf16 %v5917, %v5916
  %v6192 = vpack.c.bf16 %v5919, %v5918
  %v6193 = vpack.c.bf16 %v5921, %v5920
  %v6194 = vpack.c.bf16 %v5923, %v5922
  %v6195 = vpack.c.bf16 %v5925, %v5924
  %v6196 = vpack.c.bf16 %v5927, %v5926
  %v6197 = vpack.c.bf16 %v5929, %v5928
  %v6198 = vpack.c.bf16 %v5931, %v5930
  %v6199 = vpack.c.bf16 %v5933, %v5932
  %v6200 = vpack.c.bf16 %v5935, %v5934
  %v6201 = vpack.c.bf16 %v5937, %v5936
  %v6202 = vpack.c.bf16 %v5939, %v5938
  %v6203 = vpack.c.bf16 %v5941, %v5940
  %v6204 = vpack.c.bf16 %v5943, %v5942
  %v6205 = vpack.c.bf16 %v5945, %v5944
  %v6206 = vpack.c.bf16 %v5947, %v5946
  %v6207 = vpack.c.bf16 %v5949, %v5948
  %v6208 = vpack.c.bf16 %v5951, %v5950
  %v6209 = vpack.c.bf16 %v5953, %v5952
  %v6210 = vpack.c.bf16 %v5955, %v5954
  %v6211 = vpack.c.bf16 %v5957, %v5956
  %v6212 = vpack.c.bf16 %v5959, %v5958
  %v6213 = vpack.c.bf16 %v5961, %v5960
  %v6214 = vpack.c.bf16 %v5963, %v5962
  %v6215 = vpack.c.bf16 %v5965, %v5964
  %v6216 = vpack.c.bf16 %v5967, %v5966
  %v6217 = vpack.c.bf16 %v5969, %v5968
  %v6218 = vpack.c.bf16 %v5971, %v5970
  %v6219 = vpack.c.bf16 %v5973, %v5972
  %v6220 = vpack.c.bf16 %v5975, %v5974
  %v6221 = vpack.c.bf16 %v5977, %v5976
  %v6222 = vpack.c.bf16 %v5979, %v5978
  %v6223 = vpack.c.bf16 %v5981, %v5980
  %v6224 = vpack.c.bf16 %v5983, %v5982
  %v6225 = vpack.c.bf16 %v5985, %v5984
  %v6226 = vpack.c.bf16 %v5987, %v5986
  %v6227 = vpack.c.bf16 %v5989, %v5988
  %v6228 = vpack.c.bf16 %v5991, %v5990
  %v6229 = vpack.c.bf16 %v5993, %v5992
  %v6230 = vpack.c.bf16 %v5995, %v5994
  %v6231 = vpack.c.bf16 %v5997, %v5996
  %v6232 = vpack.c.bf16 %v5999, %v5998
  %v6233 = vpack.c.bf16 %v6001, %v6000
  %v6234 = vpack.c.bf16 %v6003, %v6002
  %v6235 = vpack.c.bf16 %v6005, %v6004
  %v6236 = vpack.c.bf16 %v6007, %v6006
  %v6237 = vpack.c.bf16 %v6009, %v6008
  %v6238 = vpack.c.bf16 %v6011, %v6010
  %v6239 = vpack.c.bf16 %v6013, %v6012
  %v6240 = vpack.c.bf16 %v6015, %v6014
  %v6241 = vpack.c.bf16 %v6017, %v6016
  %v6242 = vpack.c.bf16 %v6019, %v6018
  %v6243 = vpack.c.bf16 %v6021, %v6020
  %v6244 = vpack.c.bf16 %v6023, %v6022
  %v6245 = vpack.c.bf16 %v6025, %v6024
  %v6246 = vpack.c.bf16 %v6027, %v6026
  %v6247 = vpack.c.bf16 %v6029, %v6028
  %v6248 = vpack.c.bf16 %v6031, %v6030
  %v6249 = vpack.c.bf16 %v6033, %v6032
  %v6250 = vpack.c.bf16 %v6035, %v6034
  %v6251 = vpack.c.bf16 %v6037, %v6036
  %v6252 = vpack.c.bf16 %v6039, %v6038
  %v6253 = vpack.c.bf16 %v6041, %v6040
  %v6254 = vpack.c.bf16 %v6043, %v6042
  %v6255 = vpack.c.bf16 %v6045, %v6044
  %v6256 = vpack.c.bf16 %v6047, %v6046
  %v6257 = vpack.c.bf16 %v6049, %v6048
  %v6258 = vpack.c.bf16 %v6051, %v6050
  %v6259 = vpack.c.bf16 %v6053, %v6052
  %v6260 = vpack.c.bf16 %v6055, %v6054
  %v6261 = vpack.c.bf16 %v6057, %v6056
  %v6262 = vpack.c.bf16 %v6059, %v6058
  %v6263 = vpack.c.bf16 %v6061, %v6060
  %v6264 = vpack.c.bf16 %v6063, %v6062
  %v6265 = vpack.c.bf16 %v6065, %v6064
  %v6266 = vpack.c.bf16 %v6067, %v6066
  %v6267 = vpack.c.bf16 %v6069, %v6068
  %v6268 = vpack.c.bf16 %v6071, %v6070
  %v6269 = vpack.c.bf16 %v6073, %v6072
  %v6270 = vpack.c.bf16 %v6075, %v6074
  %v6271 = vpack.c.bf16 %v6077, %v6076
  %v6272 = vpack.c.bf16 %v6079, %v6078
  %v6273 = vpack.c.bf16 %v6081, %v6080
  %v6274 = vpack.c.bf16 %v6083, %v6082
  %v6275 = vpack.c.bf16 %v6085, %v6084
  %v6276 = vpack.c.bf16 %v6087, %v6086
  %v6277 = vpack.c.bf16 %v6089, %v6088
  %v6278 = vpack.c.bf16 %v6091, %v6090
  %v6279 = vpack.c.bf16 %v6093, %v6092
  %v6280 = vpack.c.bf16 %v6095, %v6094
  %v6281 = vpack.c.bf16 %v6097, %v6096
  %v6282 = vpack.c.bf16 %v6099, %v6098
  %v6283 = vpack.c.bf16 %v6101, %v6100
  %v6284 = vpack.c.bf16 %v6103, %v6102
  %v6285 = vpack.c.bf16 %v6105, %v6104
  %v6286 = vpack.c.bf16 %v6107, %v6106
  %v6287 = vpack.c.bf16 %v6109, %v6108
  %v6288 = vpack.c.bf16 %v6111, %v6110
  %v6289 = vpack.c.bf16 %v6113, %v6112
  %v6290 = vpack.c.bf16 %v6115, %v6114
  %v6291 = vpack.c.bf16 %v6117, %v6116
  %v6292 = vpack.c.bf16 %v6119, %v6118
  %v6293 = vpack.c.bf16 %v6121, %v6120
  %v6294 = vpack.c.bf16 %v6123, %v6122
  %v6295 = vpack.c.bf16 %v6125, %v6124
  %v6296 = vpack.c.bf16 %v6127, %v6126
  %v6297 = vpack.c.bf16 %v6129, %v6128
  %v6298 = vpack.c.bf16 %v6131, %v6130
  %v6299 = vpack.c.bf16 %v6133, %v6132
  %v6300 = vpack.c.bf16 %v6135, %v6134
  %v6301 = vpack.c.bf16 %v6137, %v6136
  %v6302 = vpack.c.bf16 %v6139, %v6138
  %v6303 = vpack.c.bf16 %v6141, %v6140
  %v6304 = vpack.c.bf16 %v6143, %v6142
  %v6305 = vpack.c.bf16 %v6145, %v6144
  %v6306 = vpack.c.bf16 %v6147, %v6146
  %v6307 = vpack.c.bf16 %v6149, %v6148
  %v6308 = vpack.c.bf16 %v6151, %v6150
  %v6309 = vpack.c.bf16 %v6153, %v6152
  %v6310 = vpack.c.bf16 %v6155, %v6154
  %v6311 = vpack.c.bf16 %v6157, %v6156
  %v6312 = vpack.c.bf16 %v6159, %v6158
  %v6313 = vpack.c.bf16 %v6161, %v6160
  %v6314 = vpack.c.bf16 %v6163, %v6162
  %v6315 = vpack.c.bf16 %v6165, %v6164
  %v6316 = vpack.c.bf16 %v6167, %v6166
  %v6317 = vpack.c.bf16 %v6169, %v6168
  %v6318 = vpack.c.bf16 %v6171, %v6170
  %v6319 = vpack.c.bf16 %v6173, %v6172
  %v6320 = vpack.c.bf16 %v6175, %v6174
  %v6321 = vpack.c.bf16 %v6177, %v6176
  %6386 = vrot.lane.b32.xlu0 %v6179, 20
  %v6387 = vpop.permute.xlu0 %6386
  %6388 = vrot.lane.b32.xlu0 %v6180, 20
  %v6389 = vpop.permute.xlu0 %6388
  %6390 = vrot.lane.b32.xlu0 %v6181, 20
  %v6391 = vpop.permute.xlu0 %6390
  %6392 = vrot.lane.b32.xlu0 %v6182, 20
  %v6393 = vpop.permute.xlu0 %6392
  %6394 = vrot.lane.b32.xlu0 %v6183, 20
  %v6395 = vpop.permute.xlu0 %6394
  %6396 = vrot.lane.b32.xlu0 %v6184, 20
  %v6397 = vpop.permute.xlu0 %6396
  %6398 = vrot.lane.b32.xlu0 %v6185, 20
  %v6399 = vpop.permute.xlu0 %6398
  %6400 = vrot.lane.b32.xlu0 %v6186, 20
  %v6401 = vpop.permute.xlu0 %6400
  %6402 = vrot.lane.b32.xlu0 %v6191, 20
  %v6403 = vpop.permute.xlu0 %6402
  %6404 = vrot.lane.b32.xlu0 %v6192, 20
  %v6405 = vpop.permute.xlu0 %6404
  %6406 = vrot.lane.b32.xlu0 %v6193, 20
  %v6407 = vpop.permute.xlu0 %6406
  %6408 = vrot.lane.b32.xlu0 %v6194, 20
  %v6409 = vpop.permute.xlu0 %6408
  %6410 = vrot.lane.b32.xlu0 %v6195, 20
  %v6411 = vpop.permute.xlu0 %6410
  %6412 = vrot.lane.b32.xlu0 %v6196, 20
  %v6413 = vpop.permute.xlu0 %6412
  %6414 = vrot.lane.b32.xlu0 %v6197, 20
  %v6415 = vpop.permute.xlu0 %6414
  %6416 = vrot.lane.b32.xlu0 %v6198, 20
  %v6417 = vpop.permute.xlu0 %6416
  %6418 = vrot.lane.b32.xlu0 %v6203, 20
  %v6419 = vpop.permute.xlu0 %6418
  %6420 = vrot.lane.b32.xlu0 %v6204, 20
  %v6421 = vpop.permute.xlu0 %6420
  %6422 = vrot.lane.b32.xlu0 %v6205, 20
  %v6423 = vpop.permute.xlu0 %6422
  %6424 = vrot.lane.b32.xlu0 %v6206, 20
  %v6425 = vpop.permute.xlu0 %6424
  %6426 = vrot.lane.b32.xlu0 %v6207, 20
  %v6427 = vpop.permute.xlu0 %6426
  %6428 = vrot.lane.b32.xlu0 %v6208, 20
  %v6429 = vpop.permute.xlu0 %6428
  %6430 = vrot.lane.b32.xlu0 %v6209, 20
  %v6431 = vpop.permute.xlu0 %6430
  %6432 = vrot.lane.b32.xlu0 %v6210, 20
  %v6433 = vpop.permute.xlu0 %6432
  %6434 = vrot.lane.b32.xlu0 %v6215, 20
  %v6435 = vpop.permute.xlu0 %6434
  %6436 = vrot.lane.b32.xlu0 %v6216, 20
  %v6437 = vpop.permute.xlu0 %6436
  %6438 = vrot.lane.b32.xlu0 %v6217, 20
  %v6439 = vpop.permute.xlu0 %6438
  %6440 = vrot.lane.b32.xlu0 %v6218, 20
  %v6441 = vpop.permute.xlu0 %6440
  %6442 = vrot.lane.b32.xlu0 %v6219, 20
  %v6443 = vpop.permute.xlu0 %6442
  %6444 = vrot.lane.b32.xlu0 %v6220, 20
  %v6445 = vpop.permute.xlu0 %6444
  %6446 = vrot.lane.b32.xlu0 %v6221, 20
  %v6447 = vpop.permute.xlu0 %6446
  %6448 = vrot.lane.b32.xlu0 %v6222, 20
  %v6449 = vpop.permute.xlu0 %6448
  %6450 = vrot.lane.b32.xlu0 %v6227, 20
  %v6451 = vpop.permute.xlu0 %6450
  %6452 = vrot.lane.b32.xlu0 %v6228, 20
  %v6453 = vpop.permute.xlu0 %6452
  %6454 = vrot.lane.b32.xlu0 %v6229, 20
  %v6455 = vpop.permute.xlu0 %6454
  %6456 = vrot.lane.b32.xlu0 %v6230, 20
  %v6457 = vpop.permute.xlu0 %6456
  %6458 = vrot.lane.b32.xlu0 %v6231, 20
  %v6459 = vpop.permute.xlu0 %6458
  %6460 = vrot.lane.b32.xlu0 %v6232, 20
  %v6461 = vpop.permute.xlu0 %6460
  %6462 = vrot.lane.b32.xlu0 %v6233, 20
  %v6463 = vpop.permute.xlu0 %6462
  %6464 = vrot.lane.b32.xlu0 %v6234, 20
  %v6465 = vpop.permute.xlu0 %6464
  %6466 = vrot.lane.b32.xlu0 %v6239, 20
  %v6467 = vpop.permute.xlu0 %6466
  %6468 = vrot.lane.b32.xlu0 %v6240, 20
  %v6469 = vpop.permute.xlu0 %6468
  %6470 = vrot.lane.b32.xlu0 %v6241, 20
  %v6471 = vpop.permute.xlu0 %6470
  %6472 = vrot.lane.b32.xlu0 %v6242, 20
  %v6473 = vpop.permute.xlu0 %6472
  %6474 = vrot.lane.b32.xlu0 %v6243, 20
  %v6475 = vpop.permute.xlu0 %6474
  %6476 = vrot.lane.b32.xlu0 %v6244, 20
  %v6477 = vpop.permute.xlu0 %6476
  %6478 = vrot.lane.b32.xlu0 %v6245, 20
  %v6479 = vpop.permute.xlu0 %6478
  %6480 = vrot.lane.b32.xlu0 %v6246, 20
  %v6481 = vpop.permute.xlu0 %6480
  %6482 = vrot.lane.b32.xlu0 %v6251, 20
  %v6483 = vpop.permute.xlu0 %6482
  %6484 = vrot.lane.b32.xlu0 %v6252, 20
  %v6485 = vpop.permute.xlu0 %6484
  %6486 = vrot.lane.b32.xlu0 %v6253, 20
  %v6487 = vpop.permute.xlu0 %6486
  %6488 = vrot.lane.b32.xlu0 %v6254, 20
  %v6489 = vpop.permute.xlu0 %6488
  %6490 = vrot.lane.b32.xlu0 %v6255, 20
  %v6491 = vpop.permute.xlu0 %6490
  %6492 = vrot.lane.b32.xlu0 %v6256, 20
  %v6493 = vpop.permute.xlu0 %6492
  %6494 = vrot.lane.b32.xlu0 %v6257, 20
  %v6495 = vpop.permute.xlu0 %6494
  %6496 = vrot.lane.b32.xlu0 %v6258, 20
  %v6497 = vpop.permute.xlu0 %6496
  %6498 = vrot.lane.b32.xlu0 %v6263, 20
  %v6499 = vpop.permute.xlu0 %6498
  %6500 = vrot.lane.b32.xlu0 %v6264, 20
  %v6501 = vpop.permute.xlu0 %6500
  %6502 = vrot.lane.b32.xlu0 %v6265, 20
  %v6503 = vpop.permute.xlu0 %6502
  %6504 = vrot.lane.b32.xlu0 %v6266, 20
  %v6505 = vpop.permute.xlu0 %6504
  %6506 = vrot.lane.b32.xlu0 %v6267, 20
  %v6507 = vpop.permute.xlu0 %6506
  %6508 = vrot.lane.b32.xlu0 %v6268, 20
  %v6509 = vpop.permute.xlu0 %6508
  %6510 = vrot.lane.b32.xlu0 %v6269, 20
  %v6511 = vpop.permute.xlu0 %6510
  %6512 = vrot.lane.b32.xlu0 %v6270, 20
  %v6513 = vpop.permute.xlu0 %6512
  %6522 = vrot.lane.b32.xlu0 %v6180, 40
  %v6523 = vpop.permute.xlu0 %6522
  %6524 = vrot.lane.b32.xlu0 %v6181, 40
  %v6525 = vpop.permute.xlu0 %6524
  %6526 = vrot.lane.b32.xlu0 %v6182, 40
  %v6527 = vpop.permute.xlu0 %6526
  %6528 = vrot.lane.b32.xlu0 %v6183, 40
  %v6529 = vpop.permute.xlu0 %6528
  %6530 = vrot.lane.b32.xlu0 %v6184, 40
  %v6531 = vpop.permute.xlu0 %6530
  %6532 = vrot.lane.b32.xlu0 %v6185, 40
  %v6533 = vpop.permute.xlu0 %6532
  %6534 = vrot.lane.b32.xlu0 %v6186, 40
  %v6535 = vpop.permute.xlu0 %6534
  %6536 = vrot.lane.b32.xlu0 %v6187, 40
  %v6537 = vpop.permute.xlu0 %6536
  %6538 = vrot.lane.b32.xlu0 %v6192, 40
  %v6539 = vpop.permute.xlu0 %6538
  %6540 = vrot.lane.b32.xlu0 %v6193, 40
  %v6541 = vpop.permute.xlu0 %6540
  %6542 = vrot.lane.b32.xlu0 %v6194, 40
  %v6543 = vpop.permute.xlu0 %6542
  %6544 = vrot.lane.b32.xlu0 %v6195, 40
  %v6545 = vpop.permute.xlu0 %6544
  %6546 = vrot.lane.b32.xlu0 %v6196, 40
  %v6547 = vpop.permute.xlu0 %6546
  %6548 = vrot.lane.b32.xlu0 %v6197, 40
  %v6549 = vpop.permute.xlu0 %6548
  %6550 = vrot.lane.b32.xlu0 %v6198, 40
  %v6551 = vpop.permute.xlu0 %6550
  %6552 = vrot.lane.b32.xlu0 %v6199, 40
  %v6553 = vpop.permute.xlu0 %6552
  %6554 = vrot.lane.b32.xlu0 %v6204, 40
  %v6555 = vpop.permute.xlu0 %6554
  %6556 = vrot.lane.b32.xlu0 %v6205, 40
  %v6557 = vpop.permute.xlu0 %6556
  %6558 = vrot.lane.b32.xlu0 %v6206, 40
  %v6559 = vpop.permute.xlu0 %6558
  %6560 = vrot.lane.b32.xlu0 %v6207, 40
  %v6561 = vpop.permute.xlu0 %6560
  %6562 = vrot.lane.b32.xlu0 %v6208, 40
  %v6563 = vpop.permute.xlu0 %6562
  %6564 = vrot.lane.b32.xlu0 %v6209, 40
  %v6565 = vpop.permute.xlu0 %6564
  %6566 = vrot.lane.b32.xlu0 %v6210, 40
  %v6567 = vpop.permute.xlu0 %6566
  %6568 = vrot.lane.b32.xlu0 %v6211, 40
  %v6569 = vpop.permute.xlu0 %6568
  %6570 = vrot.lane.b32.xlu0 %v6216, 40
  %v6571 = vpop.permute.xlu0 %6570
  %6572 = vrot.lane.b32.xlu0 %v6217, 40
  %v6573 = vpop.permute.xlu0 %6572
  %6574 = vrot.lane.b32.xlu0 %v6218, 40
  %v6575 = vpop.permute.xlu0 %6574
  %6576 = vrot.lane.b32.xlu0 %v6219, 40
  %v6577 = vpop.permute.xlu0 %6576
  %6578 = vrot.lane.b32.xlu0 %v6220, 40
  %v6579 = vpop.permute.xlu0 %6578
  %6580 = vrot.lane.b32.xlu0 %v6221, 40
  %v6581 = vpop.permute.xlu0 %6580
  %6582 = vrot.lane.b32.xlu0 %v6222, 40
  %v6583 = vpop.permute.xlu0 %6582
  %6584 = vrot.lane.b32.xlu0 %v6223, 40
  %v6585 = vpop.permute.xlu0 %6584
  %6586 = vrot.lane.b32.xlu0 %v6228, 40
  %v6587 = vpop.permute.xlu0 %6586
  %6588 = vrot.lane.b32.xlu0 %v6229, 40
  %v6589 = vpop.permute.xlu0 %6588
  %6590 = vrot.lane.b32.xlu0 %v6230, 40
  %v6591 = vpop.permute.xlu0 %6590
  %6592 = vrot.lane.b32.xlu0 %v6231, 40
  %v6593 = vpop.permute.xlu0 %6592
  %6594 = vrot.lane.b32.xlu0 %v6232, 40
  %v6595 = vpop.permute.xlu0 %6594
  %6596 = vrot.lane.b32.xlu0 %v6233, 40
  %v6597 = vpop.permute.xlu0 %6596
  %6598 = vrot.lane.b32.xlu0 %v6234, 40
  %v6599 = vpop.permute.xlu0 %6598
  %6600 = vrot.lane.b32.xlu0 %v6235, 40
  %v6601 = vpop.permute.xlu0 %6600
  %6602 = vrot.lane.b32.xlu0 %v6240, 40
  %v6603 = vpop.permute.xlu0 %6602
  %6604 = vrot.lane.b32.xlu0 %v6241, 40
  %v6605 = vpop.permute.xlu0 %6604
  %6606 = vrot.lane.b32.xlu0 %v6242, 40
  %v6607 = vpop.permute.xlu0 %6606
  %6608 = vrot.lane.b32.xlu0 %v6243, 40
  %v6609 = vpop.permute.xlu0 %6608
  %6610 = vrot.lane.b32.xlu0 %v6244, 40
  %v6611 = vpop.permute.xlu0 %6610
  %6612 = vrot.lane.b32.xlu0 %v6245, 40
  %v6613 = vpop.permute.xlu0 %6612
  %6614 = vrot.lane.b32.xlu0 %v6246, 40
  %v6615 = vpop.permute.xlu0 %6614
  %6616 = vrot.lane.b32.xlu0 %v6247, 40
  %v6617 = vpop.permute.xlu0 %6616
  %6618 = vrot.lane.b32.xlu0 %v6252, 40
  %v6619 = vpop.permute.xlu0 %6618
  %6620 = vrot.lane.b32.xlu0 %v6253, 40
  %v6621 = vpop.permute.xlu0 %6620
  %6622 = vrot.lane.b32.xlu0 %v6254, 40
  %v6623 = vpop.permute.xlu0 %6622
  %6624 = vrot.lane.b32.xlu0 %v6255, 40
  %v6625 = vpop.permute.xlu0 %6624
  %6626 = vrot.lane.b32.xlu0 %v6256, 40
  %v6627 = vpop.permute.xlu0 %6626
  %6628 = vrot.lane.b32.xlu0 %v6257, 40
  %v6629 = vpop.permute.xlu0 %6628
  %6630 = vrot.lane.b32.xlu0 %v6258, 40
  %v6631 = vpop.permute.xlu0 %6630
  %6632 = vrot.lane.b32.xlu0 %v6259, 40
  %v6633 = vpop.permute.xlu0 %6632
  %6634 = vrot.lane.b32.xlu0 %v6264, 40
  %v6635 = vpop.permute.xlu0 %6634
  %6636 = vrot.lane.b32.xlu0 %v6265, 40
  %v6637 = vpop.permute.xlu0 %6636
  %6638 = vrot.lane.b32.xlu0 %v6266, 40
  %v6639 = vpop.permute.xlu0 %6638
  %6640 = vrot.lane.b32.xlu0 %v6267, 40
  %v6641 = vpop.permute.xlu0 %6640
  %6642 = vrot.lane.b32.xlu0 %v6268, 40
  %v6643 = vpop.permute.xlu0 %6642
  %6644 = vrot.lane.b32.xlu0 %v6269, 40
  %v6645 = vpop.permute.xlu0 %6644
  %6646 = vrot.lane.b32.xlu0 %v6270, 40
  %v6647 = vpop.permute.xlu0 %6646
  %6648 = vrot.lane.b32.xlu0 %v6271, 40
  %v6649 = vpop.permute.xlu0 %6648
  %6658 = vrot.lane.b32.xlu0 %v6181, 60
  %v6659 = vpop.permute.xlu0 %6658
  %6660 = vrot.lane.b32.xlu0 %v6182, 60
  %v6661 = vpop.permute.xlu0 %6660
  %6662 = vrot.lane.b32.xlu0 %v6183, 60
  %v6663 = vpop.permute.xlu0 %6662
  %6664 = vrot.lane.b32.xlu0 %v6184, 60
  %v6665 = vpop.permute.xlu0 %6664
  %6666 = vrot.lane.b32.xlu0 %v6185, 60
  %v6667 = vpop.permute.xlu0 %6666
  %6668 = vrot.lane.b32.xlu0 %v6186, 60
  %v6669 = vpop.permute.xlu0 %6668
  %6670 = vrot.lane.b32.xlu0 %v6187, 60
  %v6671 = vpop.permute.xlu0 %6670
  %6672 = vrot.lane.b32.xlu0 %v6188, 60
  %v6673 = vpop.permute.xlu0 %6672
  %6674 = vrot.lane.b32.xlu0 %v6193, 60
  %v6675 = vpop.permute.xlu0 %6674
  %6676 = vrot.lane.b32.xlu0 %v6194, 60
  %v6677 = vpop.permute.xlu0 %6676
  %6678 = vrot.lane.b32.xlu0 %v6195, 60
  %v6679 = vpop.permute.xlu0 %6678
  %6680 = vrot.lane.b32.xlu0 %v6196, 60
  %v6681 = vpop.permute.xlu0 %6680
  %6682 = vrot.lane.b32.xlu0 %v6197, 60
  %v6683 = vpop.permute.xlu0 %6682
  %6684 = vrot.lane.b32.xlu0 %v6198, 60
  %v6685 = vpop.permute.xlu0 %6684
  %6686 = vrot.lane.b32.xlu0 %v6199, 60
  %v6687 = vpop.permute.xlu0 %6686
  %6688 = vrot.lane.b32.xlu0 %v6200, 60
  %v6689 = vpop.permute.xlu0 %6688
  %6690 = vrot.lane.b32.xlu0 %v6205, 60
  %v6691 = vpop.permute.xlu0 %6690
  %6692 = vrot.lane.b32.xlu0 %v6206, 60
  %v6693 = vpop.permute.xlu0 %6692
  %6694 = vrot.lane.b32.xlu0 %v6207, 60
  %v6695 = vpop.permute.xlu0 %6694
  %6696 = vrot.lane.b32.xlu0 %v6208, 60
  %v6697 = vpop.permute.xlu0 %6696
  %6698 = vrot.lane.b32.xlu0 %v6209, 60
  %v6699 = vpop.permute.xlu0 %6698
  %6700 = vrot.lane.b32.xlu0 %v6210, 60
  %v6701 = vpop.permute.xlu0 %6700
  %6702 = vrot.lane.b32.xlu0 %v6211, 60
  %v6703 = vpop.permute.xlu0 %6702
  %6704 = vrot.lane.b32.xlu0 %v6212, 60
  %v6705 = vpop.permute.xlu0 %6704
  %6706 = vrot.lane.b32.xlu0 %v6217, 60
  %v6707 = vpop.permute.xlu0 %6706
  %6708 = vrot.lane.b32.xlu0 %v6218, 60
  %v6709 = vpop.permute.xlu0 %6708
  %6710 = vrot.lane.b32.xlu0 %v6219, 60
  %v6711 = vpop.permute.xlu0 %6710
  %6712 = vrot.lane.b32.xlu0 %v6220, 60
  %v6713 = vpop.permute.xlu0 %6712
  %6714 = vrot.lane.b32.xlu0 %v6221, 60
  %v6715 = vpop.permute.xlu0 %6714
  %6716 = vrot.lane.b32.xlu0 %v6222, 60
  %v6717 = vpop.permute.xlu0 %6716
  %6718 = vrot.lane.b32.xlu0 %v6223, 60
  %v6719 = vpop.permute.xlu0 %6718
  %6720 = vrot.lane.b32.xlu0 %v6224, 60
  %v6721 = vpop.permute.xlu0 %6720
  %6722 = vrot.lane.b32.xlu0 %v6229, 60
  %v6723 = vpop.permute.xlu0 %6722
  %6724 = vrot.lane.b32.xlu0 %v6230, 60
  %v6725 = vpop.permute.xlu0 %6724
  %6726 = vrot.lane.b32.xlu0 %v6231, 60
  %v6727 = vpop.permute.xlu0 %6726
  %6728 = vrot.lane.b32.xlu0 %v6232, 60
  %v6729 = vpop.permute.xlu0 %6728
  %6730 = vrot.lane.b32.xlu0 %v6233, 60
  %v6731 = vpop.permute.xlu0 %6730
  %6732 = vrot.lane.b32.xlu0 %v6234, 60
  %v6733 = vpop.permute.xlu0 %6732
  %6734 = vrot.lane.b32.xlu0 %v6235, 60
  %v6735 = vpop.permute.xlu0 %6734
  %6736 = vrot.lane.b32.xlu0 %v6236, 60
  %v6737 = vpop.permute.xlu0 %6736
  %6738 = vrot.lane.b32.xlu0 %v6241, 60
  %v6739 = vpop.permute.xlu0 %6738
  %6740 = vrot.lane.b32.xlu0 %v6242, 60
  %v6741 = vpop.permute.xlu0 %6740
  %6742 = vrot.lane.b32.xlu0 %v6243, 60
  %v6743 = vpop.permute.xlu0 %6742
  %6744 = vrot.lane.b32.xlu0 %v6244, 60
  %v6745 = vpop.permute.xlu0 %6744
  %6746 = vrot.lane.b32.xlu0 %v6245, 60
  %v6747 = vpop.permute.xlu0 %6746
  %6748 = vrot.lane.b32.xlu0 %v6246, 60
  %v6749 = vpop.permute.xlu0 %6748
  %6750 = vrot.lane.b32.xlu0 %v6247, 60
  %v6751 = vpop.permute.xlu0 %6750
  %6752 = vrot.lane.b32.xlu0 %v6248, 60
  %v6753 = vpop.permute.xlu0 %6752
  %6754 = vrot.lane.b32.xlu0 %v6253, 60
  %v6755 = vpop.permute.xlu0 %6754
  %6756 = vrot.lane.b32.xlu0 %v6254, 60
  %v6757 = vpop.permute.xlu0 %6756
  %6758 = vrot.lane.b32.xlu0 %v6255, 60
  %v6759 = vpop.permute.xlu0 %6758
  %6760 = vrot.lane.b32.xlu0 %v6256, 60
  %v6761 = vpop.permute.xlu0 %6760
  %6762 = vrot.lane.b32.xlu0 %v6257, 60
  %v6763 = vpop.permute.xlu0 %6762
  %6764 = vrot.lane.b32.xlu0 %v6258, 60
  %v6765 = vpop.permute.xlu0 %6764
  %6766 = vrot.lane.b32.xlu0 %v6259, 60
  %v6767 = vpop.permute.xlu0 %6766
  %6768 = vrot.lane.b32.xlu0 %v6260, 60
  %v6769 = vpop.permute.xlu0 %6768
  %6770 = vrot.lane.b32.xlu0 %v6265, 60
  %v6771 = vpop.permute.xlu0 %6770
  %6772 = vrot.lane.b32.xlu0 %v6266, 60
  %v6773 = vpop.permute.xlu0 %6772
  %6774 = vrot.lane.b32.xlu0 %v6267, 60
  %v6775 = vpop.permute.xlu0 %6774
  %6776 = vrot.lane.b32.xlu0 %v6268, 60
  %v6777 = vpop.permute.xlu0 %6776
  %6778 = vrot.lane.b32.xlu0 %v6269, 60
  %v6779 = vpop.permute.xlu0 %6778
  %6780 = vrot.lane.b32.xlu0 %v6270, 60
  %v6781 = vpop.permute.xlu0 %6780
  %6782 = vrot.lane.b32.xlu0 %v6271, 60
  %v6783 = vpop.permute.xlu0 %6782
  %6784 = vrot.lane.b32.xlu0 %v6272, 60
  %v6785 = vpop.permute.xlu0 %6784
  %6794 = vrot.lane.b32.xlu0 %v6182, 80
  %v6795 = vpop.permute.xlu0 %6794
  %6796 = vrot.lane.b32.xlu0 %v6183, 80
  %v6797 = vpop.permute.xlu0 %6796
  %6798 = vrot.lane.b32.xlu0 %v6184, 80
  %v6799 = vpop.permute.xlu0 %6798
  %6800 = vrot.lane.b32.xlu0 %v6185, 80
  %v6801 = vpop.permute.xlu0 %6800
  %6802 = vrot.lane.b32.xlu0 %v6186, 80
  %v6803 = vpop.permute.xlu0 %6802
  %6804 = vrot.lane.b32.xlu0 %v6187, 80
  %v6805 = vpop.permute.xlu0 %6804
  %6806 = vrot.lane.b32.xlu0 %v6188, 80
  %v6807 = vpop.permute.xlu0 %6806
  %6808 = vrot.lane.b32.xlu0 %v6189, 80
  %v6809 = vpop.permute.xlu0 %6808
  %6810 = vrot.lane.b32.xlu0 %v6194, 80
  %v6811 = vpop.permute.xlu0 %6810
  %6812 = vrot.lane.b32.xlu0 %v6195, 80
  %v6813 = vpop.permute.xlu0 %6812
  %6814 = vrot.lane.b32.xlu0 %v6196, 80
  %v6815 = vpop.permute.xlu0 %6814
  %6816 = vrot.lane.b32.xlu0 %v6197, 80
  %v6817 = vpop.permute.xlu0 %6816
  %6818 = vrot.lane.b32.xlu0 %v6198, 80
  %v6819 = vpop.permute.xlu0 %6818
  %6820 = vrot.lane.b32.xlu0 %v6199, 80
  %v6821 = vpop.permute.xlu0 %6820
  %6822 = vrot.lane.b32.xlu0 %v6200, 80
  %v6823 = vpop.permute.xlu0 %6822
  %6824 = vrot.lane.b32.xlu0 %v6201, 80
  %v6825 = vpop.permute.xlu0 %6824
  %6826 = vrot.lane.b32.xlu0 %v6206, 80
  %v6827 = vpop.permute.xlu0 %6826
  %6828 = vrot.lane.b32.xlu0 %v6207, 80
  %v6829 = vpop.permute.xlu0 %6828
  %6830 = vrot.lane.b32.xlu0 %v6208, 80
  %v6831 = vpop.permute.xlu0 %6830
  %6832 = vrot.lane.b32.xlu0 %v6209, 80
  %v6833 = vpop.permute.xlu0 %6832
  %6834 = vrot.lane.b32.xlu0 %v6210, 80
  %v6835 = vpop.permute.xlu0 %6834
  %6836 = vrot.lane.b32.xlu0 %v6211, 80
  %v6837 = vpop.permute.xlu0 %6836
  %6838 = vrot.lane.b32.xlu0 %v6212, 80
  %v6839 = vpop.permute.xlu0 %6838
  %6840 = vrot.lane.b32.xlu0 %v6213, 80
  %v6841 = vpop.permute.xlu0 %6840
  %6842 = vrot.lane.b32.xlu0 %v6218, 80
  %v6843 = vpop.permute.xlu0 %6842
  %6844 = vrot.lane.b32.xlu0 %v6219, 80
  %v6845 = vpop.permute.xlu0 %6844
  %6846 = vrot.lane.b32.xlu0 %v6220, 80
  %v6847 = vpop.permute.xlu0 %6846
  %6848 = vrot.lane.b32.xlu0 %v6221, 80
  %v6849 = vpop.permute.xlu0 %6848
  %6850 = vrot.lane.b32.xlu0 %v6222, 80
  %v6851 = vpop.permute.xlu0 %6850
  %6852 = vrot.lane.b32.xlu0 %v6223, 80
  %v6853 = vpop.permute.xlu0 %6852
  %6854 = vrot.lane.b32.xlu0 %v6224, 80
  %v6855 = vpop.permute.xlu0 %6854
  %6856 = vrot.lane.b32.xlu0 %v6225, 80
  %v6857 = vpop.permute.xlu0 %6856
  %6858 = vrot.lane.b32.xlu0 %v6230, 80
  %v6859 = vpop.permute.xlu0 %6858
  %6860 = vrot.lane.b32.xlu0 %v6231, 80
  %v6861 = vpop.permute.xlu0 %6860
  %6862 = vrot.lane.b32.xlu0 %v6232, 80
  %v6863 = vpop.permute.xlu0 %6862
  %6864 = vrot.lane.b32.xlu0 %v6233, 80
  %v6865 = vpop.permute.xlu0 %6864
  %6866 = vrot.lane.b32.xlu0 %v6234, 80
  %v6867 = vpop.permute.xlu0 %6866
  %6868 = vrot.lane.b32.xlu0 %v6235, 80
  %v6869 = vpop.permute.xlu0 %6868
  %6870 = vrot.lane.b32.xlu0 %v6236, 80
  %v6871 = vpop.permute.xlu0 %6870
  %6872 = vrot.lane.b32.xlu0 %v6237, 80
  %v6873 = vpop.permute.xlu0 %6872
  %6874 = vrot.lane.b32.xlu0 %v6242, 80
  %v6875 = vpop.permute.xlu0 %6874
  %6876 = vrot.lane.b32.xlu0 %v6243, 80
  %v6877 = vpop.permute.xlu0 %6876
  %6878 = vrot.lane.b32.xlu0 %v6244, 80
  %v6879 = vpop.permute.xlu0 %6878
  %6880 = vrot.lane.b32.xlu0 %v6245, 80
  %v6881 = vpop.permute.xlu0 %6880
  %6882 = vrot.lane.b32.xlu0 %v6246, 80
  %v6883 = vpop.permute.xlu0 %6882
  %6884 = vrot.lane.b32.xlu0 %v6247, 80
  %v6885 = vpop.permute.xlu0 %6884
  %6886 = vrot.lane.b32.xlu0 %v6248, 80
  %v6887 = vpop.permute.xlu0 %6886
  %6888 = vrot.lane.b32.xlu0 %v6249, 80
  %v6889 = vpop.permute.xlu0 %6888
  %6890 = vrot.lane.b32.xlu0 %v6254, 80
  %v6891 = vpop.permute.xlu0 %6890
  %6892 = vrot.lane.b32.xlu0 %v6255, 80
  %v6893 = vpop.permute.xlu0 %6892
  %6894 = vrot.lane.b32.xlu0 %v6256, 80
  %v6895 = vpop.permute.xlu0 %6894
  %6896 = vrot.lane.b32.xlu0 %v6257, 80
  %v6897 = vpop.permute.xlu0 %6896
  %6898 = vrot.lane.b32.xlu0 %v6258, 80
  %v6899 = vpop.permute.xlu0 %6898
  %6900 = vrot.lane.b32.xlu0 %v6259, 80
  %v6901 = vpop.permute.xlu0 %6900
  %6902 = vrot.lane.b32.xlu0 %v6260, 80
  %v6903 = vpop.permute.xlu0 %6902
  %6904 = vrot.lane.b32.xlu0 %v6261, 80
  %v6905 = vpop.permute.xlu0 %6904
  %6906 = vrot.lane.b32.xlu0 %v6266, 80
  %v6907 = vpop.permute.xlu0 %6906
  %6908 = vrot.lane.b32.xlu0 %v6267, 80
  %v6909 = vpop.permute.xlu0 %6908
  %6910 = vrot.lane.b32.xlu0 %v6268, 80
  %v6911 = vpop.permute.xlu0 %6910
  %6912 = vrot.lane.b32.xlu0 %v6269, 80
  %v6913 = vpop.permute.xlu0 %6912
  %6914 = vrot.lane.b32.xlu0 %v6270, 80
  %v6915 = vpop.permute.xlu0 %6914
  %6916 = vrot.lane.b32.xlu0 %v6271, 80
  %v6917 = vpop.permute.xlu0 %6916
  %6918 = vrot.lane.b32.xlu0 %v6272, 80
  %v6919 = vpop.permute.xlu0 %6918
  %6920 = vrot.lane.b32.xlu0 %v6273, 80
  %v6921 = vpop.permute.xlu0 %6920
  %6937 = vrot.lane.b32.xlu0 %v6190, 100
  %v6938 = vpop.permute.xlu0 %6937
  %6939 = vrot.lane.b32.xlu0 %v6191, 100
  %v6940 = vpop.permute.xlu0 %6939
  %6941 = vrot.lane.b32.xlu0 %v6192, 100
  %v6942 = vpop.permute.xlu0 %6941
  %6943 = vrot.lane.b32.xlu0 %v6193, 100
  %v6944 = vpop.permute.xlu0 %6943
  %6945 = vrot.lane.b32.xlu0 %v6194, 100
  %v6946 = vpop.permute.xlu0 %6945
  %6947 = vrot.lane.b32.xlu0 %v6195, 100
  %v6948 = vpop.permute.xlu0 %6947
  %6949 = vrot.lane.b32.xlu0 %v6196, 100
  %v6950 = vpop.permute.xlu0 %6949
  %6951 = vrot.lane.b32.xlu0 %v6197, 100
  %v6952 = vpop.permute.xlu0 %6951
  %6953 = vrot.lane.b32.xlu0 %v6202, 100
  %v6954 = vpop.permute.xlu0 %6953
  %6955 = vrot.lane.b32.xlu0 %v6203, 100
  %v6956 = vpop.permute.xlu0 %6955
  %6957 = vrot.lane.b32.xlu0 %v6204, 100
  %v6958 = vpop.permute.xlu0 %6957
  %6959 = vrot.lane.b32.xlu0 %v6205, 100
  %v6960 = vpop.permute.xlu0 %6959
  %6961 = vrot.lane.b32.xlu0 %v6206, 100
  %v6962 = vpop.permute.xlu0 %6961
  %6963 = vrot.lane.b32.xlu0 %v6207, 100
  %v6964 = vpop.permute.xlu0 %6963
  %6965 = vrot.lane.b32.xlu0 %v6208, 100
  %v6966 = vpop.permute.xlu0 %6965
  %6967 = vrot.lane.b32.xlu0 %v6209, 100
  %v6968 = vpop.permute.xlu0 %6967
  %6969 = vrot.lane.b32.xlu0 %v6214, 100
  %v6970 = vpop.permute.xlu0 %6969
  %6971 = vrot.lane.b32.xlu0 %v6215, 100
  %v6972 = vpop.permute.xlu0 %6971
  %6973 = vrot.lane.b32.xlu0 %v6216, 100
  %v6974 = vpop.permute.xlu0 %6973
  %6975 = vrot.lane.b32.xlu0 %v6217, 100
  %v6976 = vpop.permute.xlu0 %6975
  %6977 = vrot.lane.b32.xlu0 %v6218, 100
  %v6978 = vpop.permute.xlu0 %6977
  %6979 = vrot.lane.b32.xlu0 %v6219, 100
  %v6980 = vpop.permute.xlu0 %6979
  %6981 = vrot.lane.b32.xlu0 %v6220, 100
  %v6982 = vpop.permute.xlu0 %6981
  %6983 = vrot.lane.b32.xlu0 %v6221, 100
  %v6984 = vpop.permute.xlu0 %6983
  %6985 = vrot.lane.b32.xlu0 %v6226, 100
  %v6986 = vpop.permute.xlu0 %6985
  %6987 = vrot.lane.b32.xlu0 %v6227, 100
  %v6988 = vpop.permute.xlu0 %6987
  %6989 = vrot.lane.b32.xlu0 %v6228, 100
  %v6990 = vpop.permute.xlu0 %6989
  %6991 = vrot.lane.b32.xlu0 %v6229, 100
  %v6992 = vpop.permute.xlu0 %6991
  %6993 = vrot.lane.b32.xlu0 %v6230, 100
  %v6994 = vpop.permute.xlu0 %6993
  %6995 = vrot.lane.b32.xlu0 %v6231, 100
  %v6996 = vpop.permute.xlu0 %6995
  %6997 = vrot.lane.b32.xlu0 %v6232, 100
  %v6998 = vpop.permute.xlu0 %6997
  %6999 = vrot.lane.b32.xlu0 %v6233, 100
  %v7000 = vpop.permute.xlu0 %6999
  %7001 = vrot.lane.b32.xlu0 %v6238, 100
  %v7002 = vpop.permute.xlu0 %7001
  %7003 = vrot.lane.b32.xlu0 %v6239, 100
  %v7004 = vpop.permute.xlu0 %7003
  %7005 = vrot.lane.b32.xlu0 %v6240, 100
  %v7006 = vpop.permute.xlu0 %7005
  %7007 = vrot.lane.b32.xlu0 %v6241, 100
  %v7008 = vpop.permute.xlu0 %7007
  %7009 = vrot.lane.b32.xlu0 %v6242, 100
  %v7010 = vpop.permute.xlu0 %7009
  %7011 = vrot.lane.b32.xlu0 %v6243, 100
  %v7012 = vpop.permute.xlu0 %7011
  %7013 = vrot.lane.b32.xlu0 %v6244, 100
  %v7014 = vpop.permute.xlu0 %7013
  %7015 = vrot.lane.b32.xlu0 %v6245, 100
  %v7016 = vpop.permute.xlu0 %7015
  %7017 = vrot.lane.b32.xlu0 %v6250, 100
  %v7018 = vpop.permute.xlu0 %7017
  %7019 = vrot.lane.b32.xlu0 %v6251, 100
  %v7020 = vpop.permute.xlu0 %7019
  %7021 = vrot.lane.b32.xlu0 %v6252, 100
  %v7022 = vpop.permute.xlu0 %7021
  %7023 = vrot.lane.b32.xlu0 %v6253, 100
  %v7024 = vpop.permute.xlu0 %7023
  %7025 = vrot.lane.b32.xlu0 %v6254, 100
  %v7026 = vpop.permute.xlu0 %7025
  %7027 = vrot.lane.b32.xlu0 %v6255, 100
  %v7028 = vpop.permute.xlu0 %7027
  %7029 = vrot.lane.b32.xlu0 %v6256, 100
  %v7030 = vpop.permute.xlu0 %7029
  %7031 = vrot.lane.b32.xlu0 %v6257, 100
  %v7032 = vpop.permute.xlu0 %7031
  %7033 = vrot.lane.b32.xlu0 %v6262, 100
  %v7034 = vpop.permute.xlu0 %7033
  %7035 = vrot.lane.b32.xlu0 %v6263, 100
  %v7036 = vpop.permute.xlu0 %7035
  %7037 = vrot.lane.b32.xlu0 %v6264, 100
  %v7038 = vpop.permute.xlu0 %7037
  %7039 = vrot.lane.b32.xlu0 %v6265, 100
  %v7040 = vpop.permute.xlu0 %7039
  %7041 = vrot.lane.b32.xlu0 %v6266, 100
  %v7042 = vpop.permute.xlu0 %7041
  %7043 = vrot.lane.b32.xlu0 %v6267, 100
  %v7044 = vpop.permute.xlu0 %7043
  %7045 = vrot.lane.b32.xlu0 %v6268, 100
  %v7046 = vpop.permute.xlu0 %7045
  %7047 = vrot.lane.b32.xlu0 %v6269, 100
  %v7048 = vpop.permute.xlu0 %7047
  %7049 = vrot.lane.b32.xlu0 %v6274, 100
  %v7050 = vpop.permute.xlu0 %7049
  %7051 = vrot.lane.b32.xlu0 %v6275, 100
  %v7052 = vpop.permute.xlu0 %7051
  %7053 = vrot.lane.b32.xlu0 %v6276, 100
  %v7054 = vpop.permute.xlu0 %7053
  %7055 = vrot.lane.b32.xlu0 %v6277, 100
  %v7056 = vpop.permute.xlu0 %7055
  %7057 = vrot.lane.b32.xlu0 %v6278, 100
  %v7058 = vpop.permute.xlu0 %7057
  %7059 = vrot.lane.b32.xlu0 %v6279, 100
  %v7060 = vpop.permute.xlu0 %7059
  %7061 = vrot.lane.b32.xlu0 %v6280, 100
  %v7062 = vpop.permute.xlu0 %7061
  %7063 = vrot.lane.b32.xlu0 %v6281, 100
  %v7064 = vpop.permute.xlu0 %7063
  %7066 = vrot.lane.b32.xlu0 %v6191, 120
  %v7067 = vpop.permute.xlu0 %7066
  %7068 = vrot.lane.b32.xlu0 %v6192, 120
  %v7069 = vpop.permute.xlu0 %7068
  %7070 = vrot.lane.b32.xlu0 %v6193, 120
  %v7071 = vpop.permute.xlu0 %7070
  %7072 = vrot.lane.b32.xlu0 %v6194, 120
  %v7073 = vpop.permute.xlu0 %7072
  %7074 = vrot.lane.b32.xlu0 %v6195, 120
  %v7075 = vpop.permute.xlu0 %7074
  %7076 = vrot.lane.b32.xlu0 %v6196, 120
  %v7077 = vpop.permute.xlu0 %7076
  %7078 = vrot.lane.b32.xlu0 %v6197, 120
  %v7079 = vpop.permute.xlu0 %7078
  %7080 = vrot.lane.b32.xlu0 %v6198, 120
  %v7081 = vpop.permute.xlu0 %7080
  %7082 = vrot.lane.b32.xlu0 %v6203, 120
  %v7083 = vpop.permute.xlu0 %7082
  %7084 = vrot.lane.b32.xlu0 %v6204, 120
  %v7085 = vpop.permute.xlu0 %7084
  %7086 = vrot.lane.b32.xlu0 %v6205, 120
  %v7087 = vpop.permute.xlu0 %7086
  %7088 = vrot.lane.b32.xlu0 %v6206, 120
  %v7089 = vpop.permute.xlu0 %7088
  %7090 = vrot.lane.b32.xlu0 %v6207, 120
  %v7091 = vpop.permute.xlu0 %7090
  %7092 = vrot.lane.b32.xlu0 %v6208, 120
  %v7093 = vpop.permute.xlu0 %7092
  %7094 = vrot.lane.b32.xlu0 %v6209, 120
  %v7095 = vpop.permute.xlu0 %7094
  %7096 = vrot.lane.b32.xlu0 %v6210, 120
  %v7097 = vpop.permute.xlu0 %7096
  %7098 = vrot.lane.b32.xlu0 %v6215, 120
  %v7099 = vpop.permute.xlu0 %7098
  %7100 = vrot.lane.b32.xlu0 %v6216, 120
  %v7101 = vpop.permute.xlu0 %7100
  %7102 = vrot.lane.b32.xlu0 %v6217, 120
  %v7103 = vpop.permute.xlu0 %7102
  %7104 = vrot.lane.b32.xlu0 %v6218, 120
  %v7105 = vpop.permute.xlu0 %7104
  %7106 = vrot.lane.b32.xlu0 %v6219, 120
  %v7107 = vpop.permute.xlu0 %7106
  %7108 = vrot.lane.b32.xlu0 %v6220, 120
  %v7109 = vpop.permute.xlu0 %7108
  %7110 = vrot.lane.b32.xlu0 %v6221, 120
  %v7111 = vpop.permute.xlu0 %7110
  %7112 = vrot.lane.b32.xlu0 %v6222, 120
  %v7113 = vpop.permute.xlu0 %7112
  %7114 = vrot.lane.b32.xlu0 %v6227, 120
  %v7115 = vpop.permute.xlu0 %7114
  %7116 = vrot.lane.b32.xlu0 %v6228, 120
  %v7117 = vpop.permute.xlu0 %7116
  %7118 = vrot.lane.b32.xlu0 %v6229, 120
  %v7119 = vpop.permute.xlu0 %7118
  %7120 = vrot.lane.b32.xlu0 %v6230, 120
  %v7121 = vpop.permute.xlu0 %7120
  %7122 = vrot.lane.b32.xlu0 %v6231, 120
  %v7123 = vpop.permute.xlu0 %7122
  %7124 = vrot.lane.b32.xlu0 %v6232, 120
  %v7125 = vpop.permute.xlu0 %7124
  %7126 = vrot.lane.b32.xlu0 %v6233, 120
  %v7127 = vpop.permute.xlu0 %7126
  %7128 = vrot.lane.b32.xlu0 %v6234, 120
  %v7129 = vpop.permute.xlu0 %7128
  %7130 = vrot.lane.b32.xlu0 %v6239, 120
  %v7131 = vpop.permute.xlu0 %7130
  %7132 = vrot.lane.b32.xlu0 %v6240, 120
  %v7133 = vpop.permute.xlu0 %7132
  %7134 = vrot.lane.b32.xlu0 %v6241, 120
  %v7135 = vpop.permute.xlu0 %7134
  %7136 = vrot.lane.b32.xlu0 %v6242, 120
  %v7137 = vpop.permute.xlu0 %7136
  %7138 = vrot.lane.b32.xlu0 %v6243, 120
  %v7139 = vpop.permute.xlu0 %7138
  %7140 = vrot.lane.b32.xlu0 %v6244, 120
  %v7141 = vpop.permute.xlu0 %7140
  %7142 = vrot.lane.b32.xlu0 %v6245, 120
  %v7143 = vpop.permute.xlu0 %7142
  %7144 = vrot.lane.b32.xlu0 %v6246, 120
  %v7145 = vpop.permute.xlu0 %7144
  %7146 = vrot.lane.b32.xlu0 %v6251, 120
  %v7147 = vpop.permute.xlu0 %7146
  %7148 = vrot.lane.b32.xlu0 %v6252, 120
  %v7149 = vpop.permute.xlu0 %7148
  %7150 = vrot.lane.b32.xlu0 %v6253, 120
  %v7151 = vpop.permute.xlu0 %7150
  %7152 = vrot.lane.b32.xlu0 %v6254, 120
  %v7153 = vpop.permute.xlu0 %7152
  %7154 = vrot.lane.b32.xlu0 %v6255, 120
  %v7155 = vpop.permute.xlu0 %7154
  %7156 = vrot.lane.b32.xlu0 %v6256, 120
  %v7157 = vpop.permute.xlu0 %7156
  %7158 = vrot.lane.b32.xlu0 %v6257, 120
  %v7159 = vpop.permute.xlu0 %7158
  %7160 = vrot.lane.b32.xlu0 %v6258, 120
  %v7161 = vpop.permute.xlu0 %7160
  %7162 = vrot.lane.b32.xlu0 %v6263, 120
  %v7163 = vpop.permute.xlu0 %7162
  %7164 = vrot.lane.b32.xlu0 %v6264, 120
  %v7165 = vpop.permute.xlu0 %7164
  %7166 = vrot.lane.b32.xlu0 %v6265, 120
  %v7167 = vpop.permute.xlu0 %7166
  %7168 = vrot.lane.b32.xlu0 %v6266, 120
  %v7169 = vpop.permute.xlu0 %7168
  %7170 = vrot.lane.b32.xlu0 %v6267, 120
  %v7171 = vpop.permute.xlu0 %7170
  %7172 = vrot.lane.b32.xlu0 %v6268, 120
  %v7173 = vpop.permute.xlu0 %7172
  %7174 = vrot.lane.b32.xlu0 %v6269, 120
  %v7175 = vpop.permute.xlu0 %7174
  %7176 = vrot.lane.b32.xlu0 %v6270, 120
  %v7177 = vpop.permute.xlu0 %7176
  %7178 = vrot.lane.b32.xlu0 %v6275, 120
  %v7179 = vpop.permute.xlu0 %7178
  %7180 = vrot.lane.b32.xlu0 %v6276, 120
  %v7181 = vpop.permute.xlu0 %7180
  %7182 = vrot.lane.b32.xlu0 %v6277, 120
  %v7183 = vpop.permute.xlu0 %7182
  %7184 = vrot.lane.b32.xlu0 %v6278, 120
  %v7185 = vpop.permute.xlu0 %7184
  %7186 = vrot.lane.b32.xlu0 %v6279, 120
  %v7187 = vpop.permute.xlu0 %7186
  %7188 = vrot.lane.b32.xlu0 %v6280, 120
  %v7189 = vpop.permute.xlu0 %7188
  %7190 = vrot.lane.b32.xlu0 %v6281, 120
  %v7191 = vpop.permute.xlu0 %7190
  %7192 = vrot.lane.b32.xlu0 %v6282, 120
  %v7193 = vpop.permute.xlu0 %7192
  %7195 = vrot.lane.b32.xlu0 %v6192, 12
  %v7196 = vpop.permute.xlu0 %7195
  %7197 = vrot.lane.b32.xlu0 %v6193, 12
  %v7198 = vpop.permute.xlu0 %7197
  %7199 = vrot.lane.b32.xlu0 %v6194, 12
  %v7200 = vpop.permute.xlu0 %7199
  %7201 = vrot.lane.b32.xlu0 %v6195, 12
  %v7202 = vpop.permute.xlu0 %7201
  %7203 = vrot.lane.b32.xlu0 %v6196, 12
  %v7204 = vpop.permute.xlu0 %7203
  %7205 = vrot.lane.b32.xlu0 %v6197, 12
  %v7206 = vpop.permute.xlu0 %7205
  %7207 = vrot.lane.b32.xlu0 %v6198, 12
  %v7208 = vpop.permute.xlu0 %7207
  %7209 = vrot.lane.b32.xlu0 %v6199, 12
  %v7210 = vpop.permute.xlu0 %7209
  %7211 = vrot.lane.b32.xlu0 %v6204, 12
  %v7212 = vpop.permute.xlu0 %7211
  %7213 = vrot.lane.b32.xlu0 %v6205, 12
  %v7214 = vpop.permute.xlu0 %7213
  %7215 = vrot.lane.b32.xlu0 %v6206, 12
  %v7216 = vpop.permute.xlu0 %7215
  %7217 = vrot.lane.b32.xlu0 %v6207, 12
  %v7218 = vpop.permute.xlu0 %7217
  %7219 = vrot.lane.b32.xlu0 %v6208, 12
  %v7220 = vpop.permute.xlu0 %7219
  %7221 = vrot.lane.b32.xlu0 %v6209, 12
  %v7222 = vpop.permute.xlu0 %7221
  %7223 = vrot.lane.b32.xlu0 %v6210, 12
  %v7224 = vpop.permute.xlu0 %7223
  %7225 = vrot.lane.b32.xlu0 %v6211, 12
  %v7226 = vpop.permute.xlu0 %7225
  %7227 = vrot.lane.b32.xlu0 %v6216, 12
  %v7228 = vpop.permute.xlu0 %7227
  %7229 = vrot.lane.b32.xlu0 %v6217, 12
  %v7230 = vpop.permute.xlu0 %7229
  %7231 = vrot.lane.b32.xlu0 %v6218, 12
  %v7232 = vpop.permute.xlu0 %7231
  %7233 = vrot.lane.b32.xlu0 %v6219, 12
  %v7234 = vpop.permute.xlu0 %7233
  %7235 = vrot.lane.b32.xlu0 %v6220, 12
  %v7236 = vpop.permute.xlu0 %7235
  %7237 = vrot.lane.b32.xlu0 %v6221, 12
  %v7238 = vpop.permute.xlu0 %7237
  %7239 = vrot.lane.b32.xlu0 %v6222, 12
  %v7240 = vpop.permute.xlu0 %7239
  %7241 = vrot.lane.b32.xlu0 %v6223, 12
  %v7242 = vpop.permute.xlu0 %7241
  %7243 = vrot.lane.b32.xlu0 %v6228, 12
  %v7244 = vpop.permute.xlu0 %7243
  %7245 = vrot.lane.b32.xlu0 %v6229, 12
  %v7246 = vpop.permute.xlu0 %7245
  %7247 = vrot.lane.b32.xlu0 %v6230, 12
  %v7248 = vpop.permute.xlu0 %7247
  %7249 = vrot.lane.b32.xlu0 %v6231, 12
  %v7250 = vpop.permute.xlu0 %7249
  %7251 = vrot.lane.b32.xlu0 %v6232, 12
  %v7252 = vpop.permute.xlu0 %7251
  %7253 = vrot.lane.b32.xlu0 %v6233, 12
  %v7254 = vpop.permute.xlu0 %7253
  %7255 = vrot.lane.b32.xlu0 %v6234, 12
  %v7256 = vpop.permute.xlu0 %7255
  %7257 = vrot.lane.b32.xlu0 %v6235, 12
  %v7258 = vpop.permute.xlu0 %7257
  %7259 = vrot.lane.b32.xlu0 %v6240, 12
  %v7260 = vpop.permute.xlu0 %7259
  %7261 = vrot.lane.b32.xlu0 %v6241, 12
  %v7262 = vpop.permute.xlu0 %7261
  %7263 = vrot.lane.b32.xlu0 %v6242, 12
  %v7264 = vpop.permute.xlu0 %7263
  %7265 = vrot.lane.b32.xlu0 %v6243, 12
  %v7266 = vpop.permute.xlu0 %7265
  %7267 = vrot.lane.b32.xlu0 %v6244, 12
  %v7268 = vpop.permute.xlu0 %7267
  %7269 = vrot.lane.b32.xlu0 %v6245, 12
  %v7270 = vpop.permute.xlu0 %7269
  %7271 = vrot.lane.b32.xlu0 %v6246, 12
  %v7272 = vpop.permute.xlu0 %7271
  %7273 = vrot.lane.b32.xlu0 %v6247, 12
  %v7274 = vpop.permute.xlu0 %7273
  %7275 = vrot.lane.b32.xlu0 %v6252, 12
  %v7276 = vpop.permute.xlu0 %7275
  %7277 = vrot.lane.b32.xlu0 %v6253, 12
  %v7278 = vpop.permute.xlu0 %7277
  %7279 = vrot.lane.b32.xlu0 %v6254, 12
  %v7280 = vpop.permute.xlu0 %7279
  %7281 = vrot.lane.b32.xlu0 %v6255, 12
  %v7282 = vpop.permute.xlu0 %7281
  %7283 = vrot.lane.b32.xlu0 %v6256, 12
  %v7284 = vpop.permute.xlu0 %7283
  %7285 = vrot.lane.b32.xlu0 %v6257, 12
  %v7286 = vpop.permute.xlu0 %7285
  %7287 = vrot.lane.b32.xlu0 %v6258, 12
  %v7288 = vpop.permute.xlu0 %7287
  %7289 = vrot.lane.b32.xlu0 %v6259, 12
  %v7290 = vpop.permute.xlu0 %7289
  %7291 = vrot.lane.b32.xlu0 %v6264, 12
  %v7292 = vpop.permute.xlu0 %7291
  %7293 = vrot.lane.b32.xlu0 %v6265, 12
  %v7294 = vpop.permute.xlu0 %7293
  %7295 = vrot.lane.b32.xlu0 %v6266, 12
  %v7296 = vpop.permute.xlu0 %7295
  %7297 = vrot.lane.b32.xlu0 %v6267, 12
  %v7298 = vpop.permute.xlu0 %7297
  %7299 = vrot.lane.b32.xlu0 %v6268, 12
  %v7300 = vpop.permute.xlu0 %7299
  %7301 = vrot.lane.b32.xlu0 %v6269, 12
  %v7302 = vpop.permute.xlu0 %7301
  %7303 = vrot.lane.b32.xlu0 %v6270, 12
  %v7304 = vpop.permute.xlu0 %7303
  %7305 = vrot.lane.b32.xlu0 %v6271, 12
  %v7306 = vpop.permute.xlu0 %7305
  %7307 = vrot.lane.b32.xlu0 %v6276, 12
  %v7308 = vpop.permute.xlu0 %7307
  %7309 = vrot.lane.b32.xlu0 %v6277, 12
  %v7310 = vpop.permute.xlu0 %7309
  %7311 = vrot.lane.b32.xlu0 %v6278, 12
  %v7312 = vpop.permute.xlu0 %7311
  %7313 = vrot.lane.b32.xlu0 %v6279, 12
  %v7314 = vpop.permute.xlu0 %7313
  %7315 = vrot.lane.b32.xlu0 %v6280, 12
  %v7316 = vpop.permute.xlu0 %7315
  %7317 = vrot.lane.b32.xlu0 %v6281, 12
  %v7318 = vpop.permute.xlu0 %7317
  %7319 = vrot.lane.b32.xlu0 %v6282, 12
  %v7320 = vpop.permute.xlu0 %7319
  %7321 = vrot.lane.b32.xlu0 %v6283, 12
  %v7322 = vpop.permute.xlu0 %7321
  %7324 = vrot.lane.b32.xlu0 %v6193, 32
  %v7325 = vpop.permute.xlu0 %7324
  %7326 = vrot.lane.b32.xlu0 %v6194, 32
  %v7327 = vpop.permute.xlu0 %7326
  %7328 = vrot.lane.b32.xlu0 %v6195, 32
  %v7329 = vpop.permute.xlu0 %7328
  %7330 = vrot.lane.b32.xlu0 %v6196, 32
  %v7331 = vpop.permute.xlu0 %7330
  %7332 = vrot.lane.b32.xlu0 %v6197, 32
  %v7333 = vpop.permute.xlu0 %7332
  %7334 = vrot.lane.b32.xlu0 %v6198, 32
  %v7335 = vpop.permute.xlu0 %7334
  %7336 = vrot.lane.b32.xlu0 %v6199, 32
  %v7337 = vpop.permute.xlu0 %7336
  %7338 = vrot.lane.b32.xlu0 %v6200, 32
  %v7339 = vpop.permute.xlu0 %7338
  %7340 = vrot.lane.b32.xlu0 %v6205, 32
  %v7341 = vpop.permute.xlu0 %7340
  %7342 = vrot.lane.b32.xlu0 %v6206, 32
  %v7343 = vpop.permute.xlu0 %7342
  %7344 = vrot.lane.b32.xlu0 %v6207, 32
  %v7345 = vpop.permute.xlu0 %7344
  %7346 = vrot.lane.b32.xlu0 %v6208, 32
  %v7347 = vpop.permute.xlu0 %7346
  %7348 = vrot.lane.b32.xlu0 %v6209, 32
  %v7349 = vpop.permute.xlu0 %7348
  %7350 = vrot.lane.b32.xlu0 %v6210, 32
  %v7351 = vpop.permute.xlu0 %7350
  %7352 = vrot.lane.b32.xlu0 %v6211, 32
  %v7353 = vpop.permute.xlu0 %7352
  %7354 = vrot.lane.b32.xlu0 %v6212, 32
  %v7355 = vpop.permute.xlu0 %7354
  %7356 = vrot.lane.b32.xlu0 %v6217, 32
  %v7357 = vpop.permute.xlu0 %7356
  %7358 = vrot.lane.b32.xlu0 %v6218, 32
  %v7359 = vpop.permute.xlu0 %7358
  %7360 = vrot.lane.b32.xlu0 %v6219, 32
  %v7361 = vpop.permute.xlu0 %7360
  %7362 = vrot.lane.b32.xlu0 %v6220, 32
  %v7363 = vpop.permute.xlu0 %7362
  %7364 = vrot.lane.b32.xlu0 %v6221, 32
  %v7365 = vpop.permute.xlu0 %7364
  %7366 = vrot.lane.b32.xlu0 %v6222, 32
  %v7367 = vpop.permute.xlu0 %7366
  %7368 = vrot.lane.b32.xlu0 %v6223, 32
  %v7369 = vpop.permute.xlu0 %7368
  %7370 = vrot.lane.b32.xlu0 %v6224, 32
  %v7371 = vpop.permute.xlu0 %7370
  %7372 = vrot.lane.b32.xlu0 %v6229, 32
  %v7373 = vpop.permute.xlu0 %7372
  %7374 = vrot.lane.b32.xlu0 %v6230, 32
  %v7375 = vpop.permute.xlu0 %7374
  %7376 = vrot.lane.b32.xlu0 %v6231, 32
  %v7377 = vpop.permute.xlu0 %7376
  %7378 = vrot.lane.b32.xlu0 %v6232, 32
  %v7379 = vpop.permute.xlu0 %7378
  %7380 = vrot.lane.b32.xlu0 %v6233, 32
  %v7381 = vpop.permute.xlu0 %7380
  %7382 = vrot.lane.b32.xlu0 %v6234, 32
  %v7383 = vpop.permute.xlu0 %7382
  %7384 = vrot.lane.b32.xlu0 %v6235, 32
  %v7385 = vpop.permute.xlu0 %7384
  %7386 = vrot.lane.b32.xlu0 %v6236, 32
  %v7387 = vpop.permute.xlu0 %7386
  %7388 = vrot.lane.b32.xlu0 %v6241, 32
  %v7389 = vpop.permute.xlu0 %7388
  %7390 = vrot.lane.b32.xlu0 %v6242, 32
  %v7391 = vpop.permute.xlu0 %7390
  %7392 = vrot.lane.b32.xlu0 %v6243, 32
  %v7393 = vpop.permute.xlu0 %7392
  %7394 = vrot.lane.b32.xlu0 %v6244, 32
  %v7395 = vpop.permute.xlu0 %7394
  %7396 = vrot.lane.b32.xlu0 %v6245, 32
  %v7397 = vpop.permute.xlu0 %7396
  %7398 = vrot.lane.b32.xlu0 %v6246, 32
  %v7399 = vpop.permute.xlu0 %7398
  %7400 = vrot.lane.b32.xlu0 %v6247, 32
  %v7401 = vpop.permute.xlu0 %7400
  %7402 = vrot.lane.b32.xlu0 %v6248, 32
  %v7403 = vpop.permute.xlu0 %7402
  %7404 = vrot.lane.b32.xlu0 %v6253, 32
  %v7405 = vpop.permute.xlu0 %7404
  %7406 = vrot.lane.b32.xlu0 %v6254, 32
  %v7407 = vpop.permute.xlu0 %7406
  %7408 = vrot.lane.b32.xlu0 %v6255, 32
  %v7409 = vpop.permute.xlu0 %7408
  %7410 = vrot.lane.b32.xlu0 %v6256, 32
  %v7411 = vpop.permute.xlu0 %7410
  %7412 = vrot.lane.b32.xlu0 %v6257, 32
  %v7413 = vpop.permute.xlu0 %7412
  %7414 = vrot.lane.b32.xlu0 %v6258, 32
  %v7415 = vpop.permute.xlu0 %7414
  %7416 = vrot.lane.b32.xlu0 %v6259, 32
  %v7417 = vpop.permute.xlu0 %7416
  %7418 = vrot.lane.b32.xlu0 %v6260, 32
  %v7419 = vpop.permute.xlu0 %7418
  %7420 = vrot.lane.b32.xlu0 %v6265, 32
  %v7421 = vpop.permute.xlu0 %7420
  %7422 = vrot.lane.b32.xlu0 %v6266, 32
  %v7423 = vpop.permute.xlu0 %7422
  %7424 = vrot.lane.b32.xlu0 %v6267, 32
  %v7425 = vpop.permute.xlu0 %7424
  %7426 = vrot.lane.b32.xlu0 %v6268, 32
  %v7427 = vpop.permute.xlu0 %7426
  %7428 = vrot.lane.b32.xlu0 %v6269, 32
  %v7429 = vpop.permute.xlu0 %7428
  %7430 = vrot.lane.b32.xlu0 %v6270, 32
  %v7431 = vpop.permute.xlu0 %7430
  %7432 = vrot.lane.b32.xlu0 %v6271, 32
  %v7433 = vpop.permute.xlu0 %7432
  %7434 = vrot.lane.b32.xlu0 %v6272, 32
  %v7435 = vpop.permute.xlu0 %7434
  %7436 = vrot.lane.b32.xlu0 %v6277, 32
  %v7437 = vpop.permute.xlu0 %7436
  %7438 = vrot.lane.b32.xlu0 %v6278, 32
  %v7439 = vpop.permute.xlu0 %7438
  %7440 = vrot.lane.b32.xlu0 %v6279, 32
  %v7441 = vpop.permute.xlu0 %7440
  %7442 = vrot.lane.b32.xlu0 %v6280, 32
  %v7443 = vpop.permute.xlu0 %7442
  %7444 = vrot.lane.b32.xlu0 %v6281, 32
  %v7445 = vpop.permute.xlu0 %7444
  %7446 = vrot.lane.b32.xlu0 %v6282, 32
  %v7447 = vpop.permute.xlu0 %7446
  %7448 = vrot.lane.b32.xlu0 %v6283, 32
  %v7449 = vpop.permute.xlu0 %7448
  %7450 = vrot.lane.b32.xlu0 %v6284, 32
  %v7451 = vpop.permute.xlu0 %7450
  %7453 = vrot.lane.b32.xlu0 %v6194, 52
  %v7454 = vpop.permute.xlu0 %7453
  %7455 = vrot.lane.b32.xlu0 %v6195, 52
  %v7456 = vpop.permute.xlu0 %7455
  %7457 = vrot.lane.b32.xlu0 %v6196, 52
  %v7458 = vpop.permute.xlu0 %7457
  %7459 = vrot.lane.b32.xlu0 %v6197, 52
  %v7460 = vpop.permute.xlu0 %7459
  %7461 = vrot.lane.b32.xlu0 %v6198, 52
  %v7462 = vpop.permute.xlu0 %7461
  %7463 = vrot.lane.b32.xlu0 %v6199, 52
  %v7464 = vpop.permute.xlu0 %7463
  %7465 = vrot.lane.b32.xlu0 %v6200, 52
  %v7466 = vpop.permute.xlu0 %7465
  %7467 = vrot.lane.b32.xlu0 %v6201, 52
  %v7468 = vpop.permute.xlu0 %7467
  %7469 = vrot.lane.b32.xlu0 %v6206, 52
  %v7470 = vpop.permute.xlu0 %7469
  %7471 = vrot.lane.b32.xlu0 %v6207, 52
  %v7472 = vpop.permute.xlu0 %7471
  %7473 = vrot.lane.b32.xlu0 %v6208, 52
  %v7474 = vpop.permute.xlu0 %7473
  %7475 = vrot.lane.b32.xlu0 %v6209, 52
  %v7476 = vpop.permute.xlu0 %7475
  %7477 = vrot.lane.b32.xlu0 %v6210, 52
  %v7478 = vpop.permute.xlu0 %7477
  %7479 = vrot.lane.b32.xlu0 %v6211, 52
  %v7480 = vpop.permute.xlu0 %7479
  %7481 = vrot.lane.b32.xlu0 %v6212, 52
  %v7482 = vpop.permute.xlu0 %7481
  %7483 = vrot.lane.b32.xlu0 %v6213, 52
  %v7484 = vpop.permute.xlu0 %7483
  %7485 = vrot.lane.b32.xlu0 %v6218, 52
  %v7486 = vpop.permute.xlu0 %7485
  %7487 = vrot.lane.b32.xlu0 %v6219, 52
  %v7488 = vpop.permute.xlu0 %7487
  %7489 = vrot.lane.b32.xlu0 %v6220, 52
  %v7490 = vpop.permute.xlu0 %7489
  %7491 = vrot.lane.b32.xlu0 %v6221, 52
  %v7492 = vpop.permute.xlu0 %7491
  %7493 = vrot.lane.b32.xlu0 %v6222, 52
  %v7494 = vpop.permute.xlu0 %7493
  %7495 = vrot.lane.b32.xlu0 %v6223, 52
  %v7496 = vpop.permute.xlu0 %7495
  %7497 = vrot.lane.b32.xlu0 %v6224, 52
  %v7498 = vpop.permute.xlu0 %7497
  %7499 = vrot.lane.b32.xlu0 %v6225, 52
  %v7500 = vpop.permute.xlu0 %7499
  %7501 = vrot.lane.b32.xlu0 %v6230, 52
  %v7502 = vpop.permute.xlu0 %7501
  %7503 = vrot.lane.b32.xlu0 %v6231, 52
  %v7504 = vpop.permute.xlu0 %7503
  %7505 = vrot.lane.b32.xlu0 %v6232, 52
  %v7506 = vpop.permute.xlu0 %7505
  %7507 = vrot.lane.b32.xlu0 %v6233, 52
  %v7508 = vpop.permute.xlu0 %7507
  %7509 = vrot.lane.b32.xlu0 %v6234, 52
  %v7510 = vpop.permute.xlu0 %7509
  %7511 = vrot.lane.b32.xlu0 %v6235, 52
  %v7512 = vpop.permute.xlu0 %7511
  %7513 = vrot.lane.b32.xlu0 %v6236, 52
  %v7514 = vpop.permute.xlu0 %7513
  %7515 = vrot.lane.b32.xlu0 %v6237, 52
  %v7516 = vpop.permute.xlu0 %7515
  %7517 = vrot.lane.b32.xlu0 %v6242, 52
  %v7518 = vpop.permute.xlu0 %7517
  %7519 = vrot.lane.b32.xlu0 %v6243, 52
  %v7520 = vpop.permute.xlu0 %7519
  %7521 = vrot.lane.b32.xlu0 %v6244, 52
  %v7522 = vpop.permute.xlu0 %7521
  %7523 = vrot.lane.b32.xlu0 %v6245, 52
  %v7524 = vpop.permute.xlu0 %7523
  %7525 = vrot.lane.b32.xlu0 %v6246, 52
  %v7526 = vpop.permute.xlu0 %7525
  %7527 = vrot.lane.b32.xlu0 %v6247, 52
  %v7528 = vpop.permute.xlu0 %7527
  %7529 = vrot.lane.b32.xlu0 %v6248, 52
  %v7530 = vpop.permute.xlu0 %7529
  %7531 = vrot.lane.b32.xlu0 %v6249, 52
  %v7532 = vpop.permute.xlu0 %7531
  %7533 = vrot.lane.b32.xlu0 %v6254, 52
  %v7534 = vpop.permute.xlu0 %7533
  %7535 = vrot.lane.b32.xlu0 %v6255, 52
  %v7536 = vpop.permute.xlu0 %7535
  %7537 = vrot.lane.b32.xlu0 %v6256, 52
  %v7538 = vpop.permute.xlu0 %7537
  %7539 = vrot.lane.b32.xlu0 %v6257, 52
  %v7540 = vpop.permute.xlu0 %7539
  %7541 = vrot.lane.b32.xlu0 %v6258, 52
  %v7542 = vpop.permute.xlu0 %7541
  %7543 = vrot.lane.b32.xlu0 %v6259, 52
  %v7544 = vpop.permute.xlu0 %7543
  %7545 = vrot.lane.b32.xlu0 %v6260, 52
  %v7546 = vpop.permute.xlu0 %7545
  %7547 = vrot.lane.b32.xlu0 %v6261, 52
  %v7548 = vpop.permute.xlu0 %7547
  %7549 = vrot.lane.b32.xlu0 %v6266, 52
  %v7550 = vpop.permute.xlu0 %7549
  %7551 = vrot.lane.b32.xlu0 %v6267, 52
  %v7552 = vpop.permute.xlu0 %7551
  %7553 = vrot.lane.b32.xlu0 %v6268, 52
  %v7554 = vpop.permute.xlu0 %7553
  %7555 = vrot.lane.b32.xlu0 %v6269, 52
  %v7556 = vpop.permute.xlu0 %7555
  %7557 = vrot.lane.b32.xlu0 %v6270, 52
  %v7558 = vpop.permute.xlu0 %7557
  %7559 = vrot.lane.b32.xlu0 %v6271, 52
  %v7560 = vpop.permute.xlu0 %7559
  %7561 = vrot.lane.b32.xlu0 %v6272, 52
  %v7562 = vpop.permute.xlu0 %7561
  %7563 = vrot.lane.b32.xlu0 %v6273, 52
  %v7564 = vpop.permute.xlu0 %7563
  %7565 = vrot.lane.b32.xlu0 %v6278, 52
  %v7566 = vpop.permute.xlu0 %7565
  %7567 = vrot.lane.b32.xlu0 %v6279, 52
  %v7568 = vpop.permute.xlu0 %7567
  %7569 = vrot.lane.b32.xlu0 %v6280, 52
  %v7570 = vpop.permute.xlu0 %7569
  %7571 = vrot.lane.b32.xlu0 %v6281, 52
  %v7572 = vpop.permute.xlu0 %7571
  %7573 = vrot.lane.b32.xlu0 %v6282, 52
  %v7574 = vpop.permute.xlu0 %7573
  %7575 = vrot.lane.b32.xlu0 %v6283, 52
  %v7576 = vpop.permute.xlu0 %7575
  %7577 = vrot.lane.b32.xlu0 %v6284, 52
  %v7578 = vpop.permute.xlu0 %7577
  %7579 = vrot.lane.b32.xlu0 %v6285, 52
  %v7580 = vpop.permute.xlu0 %7579
  %7589 = vrot.lane.b32.xlu0 %v6202, 72
  %v7590 = vpop.permute.xlu0 %7589
  %7591 = vrot.lane.b32.xlu0 %v6203, 72
  %v7592 = vpop.permute.xlu0 %7591
  %7593 = vrot.lane.b32.xlu0 %v6204, 72
  %v7594 = vpop.permute.xlu0 %7593
  %7595 = vrot.lane.b32.xlu0 %v6205, 72
  %v7596 = vpop.permute.xlu0 %7595
  %7597 = vrot.lane.b32.xlu0 %v6206, 72
  %v7598 = vpop.permute.xlu0 %7597
  %7599 = vrot.lane.b32.xlu0 %v6207, 72
  %v7600 = vpop.permute.xlu0 %7599
  %7601 = vrot.lane.b32.xlu0 %v6208, 72
  %v7602 = vpop.permute.xlu0 %7601
  %7603 = vrot.lane.b32.xlu0 %v6209, 72
  %v7604 = vpop.permute.xlu0 %7603
  %7605 = vrot.lane.b32.xlu0 %v6214, 72
  %v7606 = vpop.permute.xlu0 %7605
  %7607 = vrot.lane.b32.xlu0 %v6215, 72
  %v7608 = vpop.permute.xlu0 %7607
  %7609 = vrot.lane.b32.xlu0 %v6216, 72
  %v7610 = vpop.permute.xlu0 %7609
  %7611 = vrot.lane.b32.xlu0 %v6217, 72
  %v7612 = vpop.permute.xlu0 %7611
  %7613 = vrot.lane.b32.xlu0 %v6218, 72
  %v7614 = vpop.permute.xlu0 %7613
  %7615 = vrot.lane.b32.xlu0 %v6219, 72
  %v7616 = vpop.permute.xlu0 %7615
  %7617 = vrot.lane.b32.xlu0 %v6220, 72
  %v7618 = vpop.permute.xlu0 %7617
  %7619 = vrot.lane.b32.xlu0 %v6221, 72
  %v7620 = vpop.permute.xlu0 %7619
  %7621 = vrot.lane.b32.xlu0 %v6226, 72
  %v7622 = vpop.permute.xlu0 %7621
  %7623 = vrot.lane.b32.xlu0 %v6227, 72
  %v7624 = vpop.permute.xlu0 %7623
  %7625 = vrot.lane.b32.xlu0 %v6228, 72
  %v7626 = vpop.permute.xlu0 %7625
  %7627 = vrot.lane.b32.xlu0 %v6229, 72
  %v7628 = vpop.permute.xlu0 %7627
  %7629 = vrot.lane.b32.xlu0 %v6230, 72
  %v7630 = vpop.permute.xlu0 %7629
  %7631 = vrot.lane.b32.xlu0 %v6231, 72
  %v7632 = vpop.permute.xlu0 %7631
  %7633 = vrot.lane.b32.xlu0 %v6232, 72
  %v7634 = vpop.permute.xlu0 %7633
  %7635 = vrot.lane.b32.xlu0 %v6233, 72
  %v7636 = vpop.permute.xlu0 %7635
  %7637 = vrot.lane.b32.xlu0 %v6238, 72
  %v7638 = vpop.permute.xlu0 %7637
  %7639 = vrot.lane.b32.xlu0 %v6239, 72
  %v7640 = vpop.permute.xlu0 %7639
  %7641 = vrot.lane.b32.xlu0 %v6240, 72
  %v7642 = vpop.permute.xlu0 %7641
  %7643 = vrot.lane.b32.xlu0 %v6241, 72
  %v7644 = vpop.permute.xlu0 %7643
  %7645 = vrot.lane.b32.xlu0 %v6242, 72
  %v7646 = vpop.permute.xlu0 %7645
  %7647 = vrot.lane.b32.xlu0 %v6243, 72
  %v7648 = vpop.permute.xlu0 %7647
  %7649 = vrot.lane.b32.xlu0 %v6244, 72
  %v7650 = vpop.permute.xlu0 %7649
  %7651 = vrot.lane.b32.xlu0 %v6245, 72
  %v7652 = vpop.permute.xlu0 %7651
  %7653 = vrot.lane.b32.xlu0 %v6250, 72
  %v7654 = vpop.permute.xlu0 %7653
  %7655 = vrot.lane.b32.xlu0 %v6251, 72
  %v7656 = vpop.permute.xlu0 %7655
  %7657 = vrot.lane.b32.xlu0 %v6252, 72
  %v7658 = vpop.permute.xlu0 %7657
  %7659 = vrot.lane.b32.xlu0 %v6253, 72
  %v7660 = vpop.permute.xlu0 %7659
  %7661 = vrot.lane.b32.xlu0 %v6254, 72
  %v7662 = vpop.permute.xlu0 %7661
  %7663 = vrot.lane.b32.xlu0 %v6255, 72
  %v7664 = vpop.permute.xlu0 %7663
  %7665 = vrot.lane.b32.xlu0 %v6256, 72
  %v7666 = vpop.permute.xlu0 %7665
  %7667 = vrot.lane.b32.xlu0 %v6257, 72
  %v7668 = vpop.permute.xlu0 %7667
  %7669 = vrot.lane.b32.xlu0 %v6262, 72
  %v7670 = vpop.permute.xlu0 %7669
  %7671 = vrot.lane.b32.xlu0 %v6263, 72
  %v7672 = vpop.permute.xlu0 %7671
  %7673 = vrot.lane.b32.xlu0 %v6264, 72
  %v7674 = vpop.permute.xlu0 %7673
  %7675 = vrot.lane.b32.xlu0 %v6265, 72
  %v7676 = vpop.permute.xlu0 %7675
  %7677 = vrot.lane.b32.xlu0 %v6266, 72
  %v7678 = vpop.permute.xlu0 %7677
  %7679 = vrot.lane.b32.xlu0 %v6267, 72
  %v7680 = vpop.permute.xlu0 %7679
  %7681 = vrot.lane.b32.xlu0 %v6268, 72
  %v7682 = vpop.permute.xlu0 %7681
  %7683 = vrot.lane.b32.xlu0 %v6269, 72
  %v7684 = vpop.permute.xlu0 %7683
  %7685 = vrot.lane.b32.xlu0 %v6274, 72
  %v7686 = vpop.permute.xlu0 %7685
  %7687 = vrot.lane.b32.xlu0 %v6275, 72
  %v7688 = vpop.permute.xlu0 %7687
  %7689 = vrot.lane.b32.xlu0 %v6276, 72
  %v7690 = vpop.permute.xlu0 %7689
  %7691 = vrot.lane.b32.xlu0 %v6277, 72
  %v7692 = vpop.permute.xlu0 %7691
  %7693 = vrot.lane.b32.xlu0 %v6278, 72
  %v7694 = vpop.permute.xlu0 %7693
  %7695 = vrot.lane.b32.xlu0 %v6279, 72
  %v7696 = vpop.permute.xlu0 %7695
  %7697 = vrot.lane.b32.xlu0 %v6280, 72
  %v7698 = vpop.permute.xlu0 %7697
  %7699 = vrot.lane.b32.xlu0 %v6281, 72
  %v7700 = vpop.permute.xlu0 %7699
  %7701 = vrot.lane.b32.xlu0 %v6286, 72
  %v7702 = vpop.permute.xlu0 %7701
  %7703 = vrot.lane.b32.xlu0 %v6287, 72
  %v7704 = vpop.permute.xlu0 %7703
  %7705 = vrot.lane.b32.xlu0 %v6288, 72
  %v7706 = vpop.permute.xlu0 %7705
  %7707 = vrot.lane.b32.xlu0 %v6289, 72
  %v7708 = vpop.permute.xlu0 %7707
  %7709 = vrot.lane.b32.xlu0 %v6290, 72
  %v7710 = vpop.permute.xlu0 %7709
  %7711 = vrot.lane.b32.xlu0 %v6291, 72
  %v7712 = vpop.permute.xlu0 %7711
  %7713 = vrot.lane.b32.xlu0 %v6292, 72
  %v7714 = vpop.permute.xlu0 %7713
  %7715 = vrot.lane.b32.xlu0 %v6293, 72
  %v7716 = vpop.permute.xlu0 %7715
  %7718 = vrot.lane.b32.xlu0 %v6203, 92
  %v7719 = vpop.permute.xlu0 %7718
  %7720 = vrot.lane.b32.xlu0 %v6204, 92
  %v7721 = vpop.permute.xlu0 %7720
  %7722 = vrot.lane.b32.xlu0 %v6205, 92
  %v7723 = vpop.permute.xlu0 %7722
  %7724 = vrot.lane.b32.xlu0 %v6206, 92
  %v7725 = vpop.permute.xlu0 %7724
  %7726 = vrot.lane.b32.xlu0 %v6207, 92
  %v7727 = vpop.permute.xlu0 %7726
  %7728 = vrot.lane.b32.xlu0 %v6208, 92
  %v7729 = vpop.permute.xlu0 %7728
  %7730 = vrot.lane.b32.xlu0 %v6209, 92
  %v7731 = vpop.permute.xlu0 %7730
  %7732 = vrot.lane.b32.xlu0 %v6210, 92
  %v7733 = vpop.permute.xlu0 %7732
  %7734 = vrot.lane.b32.xlu0 %v6215, 92
  %v7735 = vpop.permute.xlu0 %7734
  %7736 = vrot.lane.b32.xlu0 %v6216, 92
  %v7737 = vpop.permute.xlu0 %7736
  %7738 = vrot.lane.b32.xlu0 %v6217, 92
  %v7739 = vpop.permute.xlu0 %7738
  %7740 = vrot.lane.b32.xlu0 %v6218, 92
  %v7741 = vpop.permute.xlu0 %7740
  %7742 = vrot.lane.b32.xlu0 %v6219, 92
  %v7743 = vpop.permute.xlu0 %7742
  %7744 = vrot.lane.b32.xlu0 %v6220, 92
  %v7745 = vpop.permute.xlu0 %7744
  %7746 = vrot.lane.b32.xlu0 %v6221, 92
  %v7747 = vpop.permute.xlu0 %7746
  %7748 = vrot.lane.b32.xlu0 %v6222, 92
  %v7749 = vpop.permute.xlu0 %7748
  %7750 = vrot.lane.b32.xlu0 %v6227, 92
  %v7751 = vpop.permute.xlu0 %7750
  %7752 = vrot.lane.b32.xlu0 %v6228, 92
  %v7753 = vpop.permute.xlu0 %7752
  %7754 = vrot.lane.b32.xlu0 %v6229, 92
  %v7755 = vpop.permute.xlu0 %7754
  %7756 = vrot.lane.b32.xlu0 %v6230, 92
  %v7757 = vpop.permute.xlu0 %7756
  %7758 = vrot.lane.b32.xlu0 %v6231, 92
  %v7759 = vpop.permute.xlu0 %7758
  %7760 = vrot.lane.b32.xlu0 %v6232, 92
  %v7761 = vpop.permute.xlu0 %7760
  %7762 = vrot.lane.b32.xlu0 %v6233, 92
  %v7763 = vpop.permute.xlu0 %7762
  %7764 = vrot.lane.b32.xlu0 %v6234, 92
  %v7765 = vpop.permute.xlu0 %7764
  %7766 = vrot.lane.b32.xlu0 %v6239, 92
  %v7767 = vpop.permute.xlu0 %7766
  %7768 = vrot.lane.b32.xlu0 %v6240, 92
  %v7769 = vpop.permute.xlu0 %7768
  %7770 = vrot.lane.b32.xlu0 %v6241, 92
  %v7771 = vpop.permute.xlu0 %7770
  %7772 = vrot.lane.b32.xlu0 %v6242, 92
  %v7773 = vpop.permute.xlu0 %7772
  %7774 = vrot.lane.b32.xlu0 %v6243, 92
  %v7775 = vpop.permute.xlu0 %7774
  %7776 = vrot.lane.b32.xlu0 %v6244, 92
  %v7777 = vpop.permute.xlu0 %7776
  %7778 = vrot.lane.b32.xlu0 %v6245, 92
  %v7779 = vpop.permute.xlu0 %7778
  %7780 = vrot.lane.b32.xlu0 %v6246, 92
  %v7781 = vpop.permute.xlu0 %7780
  %7782 = vrot.lane.b32.xlu0 %v6251, 92
  %v7783 = vpop.permute.xlu0 %7782
  %7784 = vrot.lane.b32.xlu0 %v6252, 92
  %v7785 = vpop.permute.xlu0 %7784
  %7786 = vrot.lane.b32.xlu0 %v6253, 92
  %v7787 = vpop.permute.xlu0 %7786
  %7788 = vrot.lane.b32.xlu0 %v6254, 92
  %v7789 = vpop.permute.xlu0 %7788
  %7790 = vrot.lane.b32.xlu0 %v6255, 92
  %v7791 = vpop.permute.xlu0 %7790
  %7792 = vrot.lane.b32.xlu0 %v6256, 92
  %v7793 = vpop.permute.xlu0 %7792
  %7794 = vrot.lane.b32.xlu0 %v6257, 92
  %v7795 = vpop.permute.xlu0 %7794
  %7796 = vrot.lane.b32.xlu0 %v6258, 92
  %v7797 = vpop.permute.xlu0 %7796
  %7798 = vrot.lane.b32.xlu0 %v6263, 92
  %v7799 = vpop.permute.xlu0 %7798
  %7800 = vrot.lane.b32.xlu0 %v6264, 92
  %v7801 = vpop.permute.xlu0 %7800
  %7802 = vrot.lane.b32.xlu0 %v6265, 92
  %v7803 = vpop.permute.xlu0 %7802
  %7804 = vrot.lane.b32.xlu0 %v6266, 92
  %v7805 = vpop.permute.xlu0 %7804
  %7806 = vrot.lane.b32.xlu0 %v6267, 92
  %v7807 = vpop.permute.xlu0 %7806
  %7808 = vrot.lane.b32.xlu0 %v6268, 92
  %v7809 = vpop.permute.xlu0 %7808
  %7810 = vrot.lane.b32.xlu0 %v6269, 92
  %v7811 = vpop.permute.xlu0 %7810
  %7812 = vrot.lane.b32.xlu0 %v6270, 92
  %v7813 = vpop.permute.xlu0 %7812
  %7814 = vrot.lane.b32.xlu0 %v6275, 92
  %v7815 = vpop.permute.xlu0 %7814
  %7816 = vrot.lane.b32.xlu0 %v6276, 92
  %v7817 = vpop.permute.xlu0 %7816
  %7818 = vrot.lane.b32.xlu0 %v6277, 92
  %v7819 = vpop.permute.xlu0 %7818
  %7820 = vrot.lane.b32.xlu0 %v6278, 92
  %v7821 = vpop.permute.xlu0 %7820
  %7822 = vrot.lane.b32.xlu0 %v6279, 92
  %v7823 = vpop.permute.xlu0 %7822
  %7824 = vrot.lane.b32.xlu0 %v6280, 92
  %v7825 = vpop.permute.xlu0 %7824
  %7826 = vrot.lane.b32.xlu0 %v6281, 92
  %v7827 = vpop.permute.xlu0 %7826
  %7828 = vrot.lane.b32.xlu0 %v6282, 92
  %v7829 = vpop.permute.xlu0 %7828
  %7830 = vrot.lane.b32.xlu0 %v6287, 92
  %v7831 = vpop.permute.xlu0 %7830
  %7832 = vrot.lane.b32.xlu0 %v6288, 92
  %v7833 = vpop.permute.xlu0 %7832
  %7834 = vrot.lane.b32.xlu0 %v6289, 92
  %v7835 = vpop.permute.xlu0 %7834
  %7836 = vrot.lane.b32.xlu0 %v6290, 92
  %v7837 = vpop.permute.xlu0 %7836
  %7838 = vrot.lane.b32.xlu0 %v6291, 92
  %v7839 = vpop.permute.xlu0 %7838
  %7840 = vrot.lane.b32.xlu0 %v6292, 92
  %v7841 = vpop.permute.xlu0 %7840
  %7842 = vrot.lane.b32.xlu0 %v6293, 92
  %v7843 = vpop.permute.xlu0 %7842
  %7844 = vrot.lane.b32.xlu0 %v6294, 92
  %v7845 = vpop.permute.xlu0 %7844
  %7847 = vrot.lane.b32.xlu0 %v6204, 112
  %v7848 = vpop.permute.xlu0 %7847
  %7849 = vrot.lane.b32.xlu0 %v6205, 112
  %v7850 = vpop.permute.xlu0 %7849
  %7851 = vrot.lane.b32.xlu0 %v6206, 112
  %v7852 = vpop.permute.xlu0 %7851
  %7853 = vrot.lane.b32.xlu0 %v6207, 112
  %v7854 = vpop.permute.xlu0 %7853
  %7855 = vrot.lane.b32.xlu0 %v6208, 112
  %v7856 = vpop.permute.xlu0 %7855
  %7857 = vrot.lane.b32.xlu0 %v6209, 112
  %v7858 = vpop.permute.xlu0 %7857
  %7859 = vrot.lane.b32.xlu0 %v6210, 112
  %v7860 = vpop.permute.xlu0 %7859
  %7861 = vrot.lane.b32.xlu0 %v6211, 112
  %v7862 = vpop.permute.xlu0 %7861
  %7863 = vrot.lane.b32.xlu0 %v6216, 112
  %v7864 = vpop.permute.xlu0 %7863
  %7865 = vrot.lane.b32.xlu0 %v6217, 112
  %v7866 = vpop.permute.xlu0 %7865
  %7867 = vrot.lane.b32.xlu0 %v6218, 112
  %v7868 = vpop.permute.xlu0 %7867
  %7869 = vrot.lane.b32.xlu0 %v6219, 112
  %v7870 = vpop.permute.xlu0 %7869
  %7871 = vrot.lane.b32.xlu0 %v6220, 112
  %v7872 = vpop.permute.xlu0 %7871
  %7873 = vrot.lane.b32.xlu0 %v6221, 112
  %v7874 = vpop.permute.xlu0 %7873
  %7875 = vrot.lane.b32.xlu0 %v6222, 112
  %v7876 = vpop.permute.xlu0 %7875
  %7877 = vrot.lane.b32.xlu0 %v6223, 112
  %v7878 = vpop.permute.xlu0 %7877
  %7879 = vrot.lane.b32.xlu0 %v6228, 112
  %v7880 = vpop.permute.xlu0 %7879
  %7881 = vrot.lane.b32.xlu0 %v6229, 112
  %v7882 = vpop.permute.xlu0 %7881
  %7883 = vrot.lane.b32.xlu0 %v6230, 112
  %v7884 = vpop.permute.xlu0 %7883
  %7885 = vrot.lane.b32.xlu0 %v6231, 112
  %v7886 = vpop.permute.xlu0 %7885
  %7887 = vrot.lane.b32.xlu0 %v6232, 112
  %v7888 = vpop.permute.xlu0 %7887
  %7889 = vrot.lane.b32.xlu0 %v6233, 112
  %v7890 = vpop.permute.xlu0 %7889
  %7891 = vrot.lane.b32.xlu0 %v6234, 112
  %v7892 = vpop.permute.xlu0 %7891
  %7893 = vrot.lane.b32.xlu0 %v6235, 112
  %v7894 = vpop.permute.xlu0 %7893
  %7895 = vrot.lane.b32.xlu0 %v6240, 112
  %v7896 = vpop.permute.xlu0 %7895
  %7897 = vrot.lane.b32.xlu0 %v6241, 112
  %v7898 = vpop.permute.xlu0 %7897
  %7899 = vrot.lane.b32.xlu0 %v6242, 112
  %v7900 = vpop.permute.xlu0 %7899
  %7901 = vrot.lane.b32.xlu0 %v6243, 112
  %v7902 = vpop.permute.xlu0 %7901
  %7903 = vrot.lane.b32.xlu0 %v6244, 112
  %v7904 = vpop.permute.xlu0 %7903
  %7905 = vrot.lane.b32.xlu0 %v6245, 112
  %v7906 = vpop.permute.xlu0 %7905
  %7907 = vrot.lane.b32.xlu0 %v6246, 112
  %v7908 = vpop.permute.xlu0 %7907
  %7909 = vrot.lane.b32.xlu0 %v6247, 112
  %v7910 = vpop.permute.xlu0 %7909
  %7911 = vrot.lane.b32.xlu0 %v6252, 112
  %v7912 = vpop.permute.xlu0 %7911
  %7913 = vrot.lane.b32.xlu0 %v6253, 112
  %v7914 = vpop.permute.xlu0 %7913
  %7915 = vrot.lane.b32.xlu0 %v6254, 112
  %v7916 = vpop.permute.xlu0 %7915
  %7917 = vrot.lane.b32.xlu0 %v6255, 112
  %v7918 = vpop.permute.xlu0 %7917
  %7919 = vrot.lane.b32.xlu0 %v6256, 112
  %v7920 = vpop.permute.xlu0 %7919
  %7921 = vrot.lane.b32.xlu0 %v6257, 112
  %v7922 = vpop.permute.xlu0 %7921
  %7923 = vrot.lane.b32.xlu0 %v6258, 112
  %v7924 = vpop.permute.xlu0 %7923
  %7925 = vrot.lane.b32.xlu0 %v6259, 112
  %v7926 = vpop.permute.xlu0 %7925
  %7927 = vrot.lane.b32.xlu0 %v6264, 112
  %v7928 = vpop.permute.xlu0 %7927
  %7929 = vrot.lane.b32.xlu0 %v6265, 112
  %v7930 = vpop.permute.xlu0 %7929
  %7931 = vrot.lane.b32.xlu0 %v6266, 112
  %v7932 = vpop.permute.xlu0 %7931
  %7933 = vrot.lane.b32.xlu0 %v6267, 112
  %v7934 = vpop.permute.xlu0 %7933
  %7935 = vrot.lane.b32.xlu0 %v6268, 112
  %v7936 = vpop.permute.xlu0 %7935
  %7937 = vrot.lane.b32.xlu0 %v6269, 112
  %v7938 = vpop.permute.xlu0 %7937
  %7939 = vrot.lane.b32.xlu0 %v6270, 112
  %v7940 = vpop.permute.xlu0 %7939
  %7941 = vrot.lane.b32.xlu0 %v6271, 112
  %v7942 = vpop.permute.xlu0 %7941
  %7943 = vrot.lane.b32.xlu0 %v6276, 112
  %v7944 = vpop.permute.xlu0 %7943
  %7945 = vrot.lane.b32.xlu0 %v6277, 112
  %v7946 = vpop.permute.xlu0 %7945
  %7947 = vrot.lane.b32.xlu0 %v6278, 112
  %v7948 = vpop.permute.xlu0 %7947
  %7949 = vrot.lane.b32.xlu0 %v6279, 112
  %v7950 = vpop.permute.xlu0 %7949
  %7951 = vrot.lane.b32.xlu0 %v6280, 112
  %v7952 = vpop.permute.xlu0 %7951
  %7953 = vrot.lane.b32.xlu0 %v6281, 112
  %v7954 = vpop.permute.xlu0 %7953
  %7955 = vrot.lane.b32.xlu0 %v6282, 112
  %v7956 = vpop.permute.xlu0 %7955
  %7957 = vrot.lane.b32.xlu0 %v6283, 112
  %v7958 = vpop.permute.xlu0 %7957
  %7959 = vrot.lane.b32.xlu0 %v6288, 112
  %v7960 = vpop.permute.xlu0 %7959
  %7961 = vrot.lane.b32.xlu0 %v6289, 112
  %v7962 = vpop.permute.xlu0 %7961
  %7963 = vrot.lane.b32.xlu0 %v6290, 112
  %v7964 = vpop.permute.xlu0 %7963
  %7965 = vrot.lane.b32.xlu0 %v6291, 112
  %v7966 = vpop.permute.xlu0 %7965
  %7967 = vrot.lane.b32.xlu0 %v6292, 112
  %v7968 = vpop.permute.xlu0 %7967
  %7969 = vrot.lane.b32.xlu0 %v6293, 112
  %v7970 = vpop.permute.xlu0 %7969
  %7971 = vrot.lane.b32.xlu0 %v6294, 112
  %v7972 = vpop.permute.xlu0 %7971
  %7973 = vrot.lane.b32.xlu0 %v6295, 112
  %v7974 = vpop.permute.xlu0 %7973
  %7976 = vrot.lane.b32.xlu0 %v6205, 4
  %v7977 = vpop.permute.xlu0 %7976
  %7978 = vrot.lane.b32.xlu0 %v6206, 4
  %v7979 = vpop.permute.xlu0 %7978
  %7980 = vrot.lane.b32.xlu0 %v6207, 4
  %v7981 = vpop.permute.xlu0 %7980
  %7982 = vrot.lane.b32.xlu0 %v6208, 4
  %v7983 = vpop.permute.xlu0 %7982
  %7984 = vrot.lane.b32.xlu0 %v6209, 4
  %v7985 = vpop.permute.xlu0 %7984
  %7986 = vrot.lane.b32.xlu0 %v6210, 4
  %v7987 = vpop.permute.xlu0 %7986
  %7988 = vrot.lane.b32.xlu0 %v6211, 4
  %v7989 = vpop.permute.xlu0 %7988
  %7990 = vrot.lane.b32.xlu0 %v6212, 4
  %v7991 = vpop.permute.xlu0 %7990
  %7992 = vrot.lane.b32.xlu0 %v6217, 4
  %v7993 = vpop.permute.xlu0 %7992
  %7994 = vrot.lane.b32.xlu0 %v6218, 4
  %v7995 = vpop.permute.xlu0 %7994
  %7996 = vrot.lane.b32.xlu0 %v6219, 4
  %v7997 = vpop.permute.xlu0 %7996
  %7998 = vrot.lane.b32.xlu0 %v6220, 4
  %v7999 = vpop.permute.xlu0 %7998
  %8000 = vrot.lane.b32.xlu0 %v6221, 4
  %v8001 = vpop.permute.xlu0 %8000
  %8002 = vrot.lane.b32.xlu0 %v6222, 4
  %v8003 = vpop.permute.xlu0 %8002
  %8004 = vrot.lane.b32.xlu0 %v6223, 4
  %v8005 = vpop.permute.xlu0 %8004
  %8006 = vrot.lane.b32.xlu0 %v6224, 4
  %v8007 = vpop.permute.xlu0 %8006
  %8008 = vrot.lane.b32.xlu0 %v6229, 4
  %v8009 = vpop.permute.xlu0 %8008
  %8010 = vrot.lane.b32.xlu0 %v6230, 4
  %v8011 = vpop.permute.xlu0 %8010
  %8012 = vrot.lane.b32.xlu0 %v6231, 4
  %v8013 = vpop.permute.xlu0 %8012
  %8014 = vrot.lane.b32.xlu0 %v6232, 4
  %v8015 = vpop.permute.xlu0 %8014
  %8016 = vrot.lane.b32.xlu0 %v6233, 4
  %v8017 = vpop.permute.xlu0 %8016
  %8018 = vrot.lane.b32.xlu0 %v6234, 4
  %v8019 = vpop.permute.xlu0 %8018
  %8020 = vrot.lane.b32.xlu0 %v6235, 4
  %v8021 = vpop.permute.xlu0 %8020
  %8022 = vrot.lane.b32.xlu0 %v6236, 4
  %v8023 = vpop.permute.xlu0 %8022
  %8024 = vrot.lane.b32.xlu0 %v6241, 4
  %v8025 = vpop.permute.xlu0 %8024
  %8026 = vrot.lane.b32.xlu0 %v6242, 4
  %v8027 = vpop.permute.xlu0 %8026
  %8028 = vrot.lane.b32.xlu0 %v6243, 4
  %v8029 = vpop.permute.xlu0 %8028
  %8030 = vrot.lane.b32.xlu0 %v6244, 4
  %v8031 = vpop.permute.xlu0 %8030
  %8032 = vrot.lane.b32.xlu0 %v6245, 4
  %v8033 = vpop.permute.xlu0 %8032
  %8034 = vrot.lane.b32.xlu0 %v6246, 4
  %v8035 = vpop.permute.xlu0 %8034
  %8036 = vrot.lane.b32.xlu0 %v6247, 4
  %v8037 = vpop.permute.xlu0 %8036
  %8038 = vrot.lane.b32.xlu0 %v6248, 4
  %v8039 = vpop.permute.xlu0 %8038
  %8040 = vrot.lane.b32.xlu0 %v6253, 4
  %v8041 = vpop.permute.xlu0 %8040
  %8042 = vrot.lane.b32.xlu0 %v6254, 4
  %v8043 = vpop.permute.xlu0 %8042
  %8044 = vrot.lane.b32.xlu0 %v6255, 4
  %v8045 = vpop.permute.xlu0 %8044
  %8046 = vrot.lane.b32.xlu0 %v6256, 4
  %v8047 = vpop.permute.xlu0 %8046
  %8048 = vrot.lane.b32.xlu0 %v6257, 4
  %v8049 = vpop.permute.xlu0 %8048
  %8050 = vrot.lane.b32.xlu0 %v6258, 4
  %v8051 = vpop.permute.xlu0 %8050
  %8052 = vrot.lane.b32.xlu0 %v6259, 4
  %v8053 = vpop.permute.xlu0 %8052
  %8054 = vrot.lane.b32.xlu0 %v6260, 4
  %v8055 = vpop.permute.xlu0 %8054
  %8056 = vrot.lane.b32.xlu0 %v6265, 4
  %v8057 = vpop.permute.xlu0 %8056
  %8058 = vrot.lane.b32.xlu0 %v6266, 4
  %v8059 = vpop.permute.xlu0 %8058
  %8060 = vrot.lane.b32.xlu0 %v6267, 4
  %v8061 = vpop.permute.xlu0 %8060
  %8062 = vrot.lane.b32.xlu0 %v6268, 4
  %v8063 = vpop.permute.xlu0 %8062
  %8064 = vrot.lane.b32.xlu0 %v6269, 4
  %v8065 = vpop.permute.xlu0 %8064
  %8066 = vrot.lane.b32.xlu0 %v6270, 4
  %v8067 = vpop.permute.xlu0 %8066
  %8068 = vrot.lane.b32.xlu0 %v6271, 4
  %v8069 = vpop.permute.xlu0 %8068
  %8070 = vrot.lane.b32.xlu0 %v6272, 4
  %v8071 = vpop.permute.xlu0 %8070
  %8072 = vrot.lane.b32.xlu0 %v6277, 4
  %v8073 = vpop.permute.xlu0 %8072
  %8074 = vrot.lane.b32.xlu0 %v6278, 4
  %v8075 = vpop.permute.xlu0 %8074
  %8076 = vrot.lane.b32.xlu0 %v6279, 4
  %v8077 = vpop.permute.xlu0 %8076
  %8078 = vrot.lane.b32.xlu0 %v6280, 4
  %v8079 = vpop.permute.xlu0 %8078
  %8080 = vrot.lane.b32.xlu0 %v6281, 4
  %v8081 = vpop.permute.xlu0 %8080
  %8082 = vrot.lane.b32.xlu0 %v6282, 4
  %v8083 = vpop.permute.xlu0 %8082
  %8084 = vrot.lane.b32.xlu0 %v6283, 4
  %v8085 = vpop.permute.xlu0 %8084
  %8086 = vrot.lane.b32.xlu0 %v6284, 4
  %v8087 = vpop.permute.xlu0 %8086
  %8088 = vrot.lane.b32.xlu0 %v6289, 4
  %v8089 = vpop.permute.xlu0 %8088
  %8090 = vrot.lane.b32.xlu0 %v6290, 4
  %v8091 = vpop.permute.xlu0 %8090
  %8092 = vrot.lane.b32.xlu0 %v6291, 4
  %v8093 = vpop.permute.xlu0 %8092
  %8094 = vrot.lane.b32.xlu0 %v6292, 4
  %v8095 = vpop.permute.xlu0 %8094
  %8096 = vrot.lane.b32.xlu0 %v6293, 4
  %v8097 = vpop.permute.xlu0 %8096
  %8098 = vrot.lane.b32.xlu0 %v6294, 4
  %v8099 = vpop.permute.xlu0 %8098
  %8100 = vrot.lane.b32.xlu0 %v6295, 4
  %v8101 = vpop.permute.xlu0 %8100
  %8102 = vrot.lane.b32.xlu0 %v6296, 4
  %v8103 = vpop.permute.xlu0 %8102
  %8105 = vrot.lane.b32.xlu0 %v6206, 24
  %v8106 = vpop.permute.xlu0 %8105
  %8107 = vrot.lane.b32.xlu0 %v6207, 24
  %v8108 = vpop.permute.xlu0 %8107
  %8109 = vrot.lane.b32.xlu0 %v6208, 24
  %v8110 = vpop.permute.xlu0 %8109
  %8111 = vrot.lane.b32.xlu0 %v6209, 24
  %v8112 = vpop.permute.xlu0 %8111
  %8113 = vrot.lane.b32.xlu0 %v6210, 24
  %v8114 = vpop.permute.xlu0 %8113
  %8115 = vrot.lane.b32.xlu0 %v6211, 24
  %v8116 = vpop.permute.xlu0 %8115
  %8117 = vrot.lane.b32.xlu0 %v6212, 24
  %v8118 = vpop.permute.xlu0 %8117
  %8119 = vrot.lane.b32.xlu0 %v6213, 24
  %v8120 = vpop.permute.xlu0 %8119
  %8121 = vrot.lane.b32.xlu0 %v6218, 24
  %v8122 = vpop.permute.xlu0 %8121
  %8123 = vrot.lane.b32.xlu0 %v6219, 24
  %v8124 = vpop.permute.xlu0 %8123
  %8125 = vrot.lane.b32.xlu0 %v6220, 24
  %v8126 = vpop.permute.xlu0 %8125
  %8127 = vrot.lane.b32.xlu0 %v6221, 24
  %v8128 = vpop.permute.xlu0 %8127
  %8129 = vrot.lane.b32.xlu0 %v6222, 24
  %v8130 = vpop.permute.xlu0 %8129
  %8131 = vrot.lane.b32.xlu0 %v6223, 24
  %v8132 = vpop.permute.xlu0 %8131
  %8133 = vrot.lane.b32.xlu0 %v6224, 24
  %v8134 = vpop.permute.xlu0 %8133
  %8135 = vrot.lane.b32.xlu0 %v6225, 24
  %v8136 = vpop.permute.xlu0 %8135
  %8137 = vrot.lane.b32.xlu0 %v6230, 24
  %v8138 = vpop.permute.xlu0 %8137
  %8139 = vrot.lane.b32.xlu0 %v6231, 24
  %v8140 = vpop.permute.xlu0 %8139
  %8141 = vrot.lane.b32.xlu0 %v6232, 24
  %v8142 = vpop.permute.xlu0 %8141
  %8143 = vrot.lane.b32.xlu0 %v6233, 24
  %v8144 = vpop.permute.xlu0 %8143
  %8145 = vrot.lane.b32.xlu0 %v6234, 24
  %v8146 = vpop.permute.xlu0 %8145
  %8147 = vrot.lane.b32.xlu0 %v6235, 24
  %v8148 = vpop.permute.xlu0 %8147
  %8149 = vrot.lane.b32.xlu0 %v6236, 24
  %v8150 = vpop.permute.xlu0 %8149
  %8151 = vrot.lane.b32.xlu0 %v6237, 24
  %v8152 = vpop.permute.xlu0 %8151
  %8153 = vrot.lane.b32.xlu0 %v6242, 24
  %v8154 = vpop.permute.xlu0 %8153
  %8155 = vrot.lane.b32.xlu0 %v6243, 24
  %v8156 = vpop.permute.xlu0 %8155
  %8157 = vrot.lane.b32.xlu0 %v6244, 24
  %v8158 = vpop.permute.xlu0 %8157
  %8159 = vrot.lane.b32.xlu0 %v6245, 24
  %v8160 = vpop.permute.xlu0 %8159
  %8161 = vrot.lane.b32.xlu0 %v6246, 24
  %v8162 = vpop.permute.xlu0 %8161
  %8163 = vrot.lane.b32.xlu0 %v6247, 24
  %v8164 = vpop.permute.xlu0 %8163
  %8165 = vrot.lane.b32.xlu0 %v6248, 24
  %v8166 = vpop.permute.xlu0 %8165
  %8167 = vrot.lane.b32.xlu0 %v6249, 24
  %v8168 = vpop.permute.xlu0 %8167
  %8169 = vrot.lane.b32.xlu0 %v6254, 24
  %v8170 = vpop.permute.xlu0 %8169
  %8171 = vrot.lane.b32.xlu0 %v6255, 24
  %v8172 = vpop.permute.xlu0 %8171
  %8173 = vrot.lane.b32.xlu0 %v6256, 24
  %v8174 = vpop.permute.xlu0 %8173
  %8175 = vrot.lane.b32.xlu0 %v6257, 24
  %v8176 = vpop.permute.xlu0 %8175
  %8177 = vrot.lane.b32.xlu0 %v6258, 24
  %v8178 = vpop.permute.xlu0 %8177
  %8179 = vrot.lane.b32.xlu0 %v6259, 24
  %v8180 = vpop.permute.xlu0 %8179
  %8181 = vrot.lane.b32.xlu0 %v6260, 24
  %v8182 = vpop.permute.xlu0 %8181
  %8183 = vrot.lane.b32.xlu0 %v6261, 24
  %v8184 = vpop.permute.xlu0 %8183
  %8185 = vrot.lane.b32.xlu0 %v6266, 24
  %v8186 = vpop.permute.xlu0 %8185
  %8187 = vrot.lane.b32.xlu0 %v6267, 24
  %v8188 = vpop.permute.xlu0 %8187
  %8189 = vrot.lane.b32.xlu0 %v6268, 24
  %v8190 = vpop.permute.xlu0 %8189
  %8191 = vrot.lane.b32.xlu0 %v6269, 24
  %v8192 = vpop.permute.xlu0 %8191
  %8193 = vrot.lane.b32.xlu0 %v6270, 24
  %v8194 = vpop.permute.xlu0 %8193
  %8195 = vrot.lane.b32.xlu0 %v6271, 24
  %v8196 = vpop.permute.xlu0 %8195
  %8197 = vrot.lane.b32.xlu0 %v6272, 24
  %v8198 = vpop.permute.xlu0 %8197
  %8199 = vrot.lane.b32.xlu0 %v6273, 24
  %v8200 = vpop.permute.xlu0 %8199
  %8201 = vrot.lane.b32.xlu0 %v6278, 24
  %v8202 = vpop.permute.xlu0 %8201
  %8203 = vrot.lane.b32.xlu0 %v6279, 24
  %v8204 = vpop.permute.xlu0 %8203
  %8205 = vrot.lane.b32.xlu0 %v6280, 24
  %v8206 = vpop.permute.xlu0 %8205
  %8207 = vrot.lane.b32.xlu0 %v6281, 24
  %v8208 = vpop.permute.xlu0 %8207
  %8209 = vrot.lane.b32.xlu0 %v6282, 24
  %v8210 = vpop.permute.xlu0 %8209
  %8211 = vrot.lane.b32.xlu0 %v6283, 24
  %v8212 = vpop.permute.xlu0 %8211
  %8213 = vrot.lane.b32.xlu0 %v6284, 24
  %v8214 = vpop.permute.xlu0 %8213
  %8215 = vrot.lane.b32.xlu0 %v6285, 24
  %v8216 = vpop.permute.xlu0 %8215
  %8217 = vrot.lane.b32.xlu0 %v6290, 24
  %v8218 = vpop.permute.xlu0 %8217
  %8219 = vrot.lane.b32.xlu0 %v6291, 24
  %v8220 = vpop.permute.xlu0 %8219
  %8221 = vrot.lane.b32.xlu0 %v6292, 24
  %v8222 = vpop.permute.xlu0 %8221
  %8223 = vrot.lane.b32.xlu0 %v6293, 24
  %v8224 = vpop.permute.xlu0 %8223
  %8225 = vrot.lane.b32.xlu0 %v6294, 24
  %v8226 = vpop.permute.xlu0 %8225
  %8227 = vrot.lane.b32.xlu0 %v6295, 24
  %v8228 = vpop.permute.xlu0 %8227
  %8229 = vrot.lane.b32.xlu0 %v6296, 24
  %v8230 = vpop.permute.xlu0 %8229
  %8231 = vrot.lane.b32.xlu0 %v6297, 24
  %v8232 = vpop.permute.xlu0 %8231
  %8241 = vrot.lane.b32.xlu0 %v6214, 44
  %v8242 = vpop.permute.xlu0 %8241
  %8243 = vrot.lane.b32.xlu0 %v6215, 44
  %v8244 = vpop.permute.xlu0 %8243
  %8245 = vrot.lane.b32.xlu0 %v6216, 44
  %v8246 = vpop.permute.xlu0 %8245
  %8247 = vrot.lane.b32.xlu0 %v6217, 44
  %v8248 = vpop.permute.xlu0 %8247
  %8249 = vrot.lane.b32.xlu0 %v6218, 44
  %v8250 = vpop.permute.xlu0 %8249
  %8251 = vrot.lane.b32.xlu0 %v6219, 44
  %v8252 = vpop.permute.xlu0 %8251
  %8253 = vrot.lane.b32.xlu0 %v6220, 44
  %v8254 = vpop.permute.xlu0 %8253
  %8255 = vrot.lane.b32.xlu0 %v6221, 44
  %v8256 = vpop.permute.xlu0 %8255
  %8257 = vrot.lane.b32.xlu0 %v6226, 44
  %v8258 = vpop.permute.xlu0 %8257
  %8259 = vrot.lane.b32.xlu0 %v6227, 44
  %v8260 = vpop.permute.xlu0 %8259
  %8261 = vrot.lane.b32.xlu0 %v6228, 44
  %v8262 = vpop.permute.xlu0 %8261
  %8263 = vrot.lane.b32.xlu0 %v6229, 44
  %v8264 = vpop.permute.xlu0 %8263
  %8265 = vrot.lane.b32.xlu0 %v6230, 44
  %v8266 = vpop.permute.xlu0 %8265
  %8267 = vrot.lane.b32.xlu0 %v6231, 44
  %v8268 = vpop.permute.xlu0 %8267
  %8269 = vrot.lane.b32.xlu0 %v6232, 44
  %v8270 = vpop.permute.xlu0 %8269
  %8271 = vrot.lane.b32.xlu0 %v6233, 44
  %v8272 = vpop.permute.xlu0 %8271
  %8273 = vrot.lane.b32.xlu0 %v6238, 44
  %v8274 = vpop.permute.xlu0 %8273
  %8275 = vrot.lane.b32.xlu0 %v6239, 44
  %v8276 = vpop.permute.xlu0 %8275
  %8277 = vrot.lane.b32.xlu0 %v6240, 44
  %v8278 = vpop.permute.xlu0 %8277
  %8279 = vrot.lane.b32.xlu0 %v6241, 44
  %v8280 = vpop.permute.xlu0 %8279
  %8281 = vrot.lane.b32.xlu0 %v6242, 44
  %v8282 = vpop.permute.xlu0 %8281
  %8283 = vrot.lane.b32.xlu0 %v6243, 44
  %v8284 = vpop.permute.xlu0 %8283
  %8285 = vrot.lane.b32.xlu0 %v6244, 44
  %v8286 = vpop.permute.xlu0 %8285
  %8287 = vrot.lane.b32.xlu0 %v6245, 44
  %v8288 = vpop.permute.xlu0 %8287
  %8289 = vrot.lane.b32.xlu0 %v6250, 44
  %v8290 = vpop.permute.xlu0 %8289
  %8291 = vrot.lane.b32.xlu0 %v6251, 44
  %v8292 = vpop.permute.xlu0 %8291
  %8293 = vrot.lane.b32.xlu0 %v6252, 44
  %v8294 = vpop.permute.xlu0 %8293
  %8295 = vrot.lane.b32.xlu0 %v6253, 44
  %v8296 = vpop.permute.xlu0 %8295
  %8297 = vrot.lane.b32.xlu0 %v6254, 44
  %v8298 = vpop.permute.xlu0 %8297
  %8299 = vrot.lane.b32.xlu0 %v6255, 44
  %v8300 = vpop.permute.xlu0 %8299
  %8301 = vrot.lane.b32.xlu0 %v6256, 44
  %v8302 = vpop.permute.xlu0 %8301
  %8303 = vrot.lane.b32.xlu0 %v6257, 44
  %v8304 = vpop.permute.xlu0 %8303
  %8305 = vrot.lane.b32.xlu0 %v6262, 44
  %v8306 = vpop.permute.xlu0 %8305
  %8307 = vrot.lane.b32.xlu0 %v6263, 44
  %v8308 = vpop.permute.xlu0 %8307
  %8309 = vrot.lane.b32.xlu0 %v6264, 44
  %v8310 = vpop.permute.xlu0 %8309
  %8311 = vrot.lane.b32.xlu0 %v6265, 44
  %v8312 = vpop.permute.xlu0 %8311
  %8313 = vrot.lane.b32.xlu0 %v6266, 44
  %v8314 = vpop.permute.xlu0 %8313
  %8315 = vrot.lane.b32.xlu0 %v6267, 44
  %v8316 = vpop.permute.xlu0 %8315
  %8317 = vrot.lane.b32.xlu0 %v6268, 44
  %v8318 = vpop.permute.xlu0 %8317
  %8319 = vrot.lane.b32.xlu0 %v6269, 44
  %v8320 = vpop.permute.xlu0 %8319
  %8321 = vrot.lane.b32.xlu0 %v6274, 44
  %v8322 = vpop.permute.xlu0 %8321
  %8323 = vrot.lane.b32.xlu0 %v6275, 44
  %v8324 = vpop.permute.xlu0 %8323
  %8325 = vrot.lane.b32.xlu0 %v6276, 44
  %v8326 = vpop.permute.xlu0 %8325
  %8327 = vrot.lane.b32.xlu0 %v6277, 44
  %v8328 = vpop.permute.xlu0 %8327
  %8329 = vrot.lane.b32.xlu0 %v6278, 44
  %v8330 = vpop.permute.xlu0 %8329
  %8331 = vrot.lane.b32.xlu0 %v6279, 44
  %v8332 = vpop.permute.xlu0 %8331
  %8333 = vrot.lane.b32.xlu0 %v6280, 44
  %v8334 = vpop.permute.xlu0 %8333
  %8335 = vrot.lane.b32.xlu0 %v6281, 44
  %v8336 = vpop.permute.xlu0 %8335
  %8337 = vrot.lane.b32.xlu0 %v6286, 44
  %v8338 = vpop.permute.xlu0 %8337
  %8339 = vrot.lane.b32.xlu0 %v6287, 44
  %v8340 = vpop.permute.xlu0 %8339
  %8341 = vrot.lane.b32.xlu0 %v6288, 44
  %v8342 = vpop.permute.xlu0 %8341
  %8343 = vrot.lane.b32.xlu0 %v6289, 44
  %v8344 = vpop.permute.xlu0 %8343
  %8345 = vrot.lane.b32.xlu0 %v6290, 44
  %v8346 = vpop.permute.xlu0 %8345
  %8347 = vrot.lane.b32.xlu0 %v6291, 44
  %v8348 = vpop.permute.xlu0 %8347
  %8349 = vrot.lane.b32.xlu0 %v6292, 44
  %v8350 = vpop.permute.xlu0 %8349
  %8351 = vrot.lane.b32.xlu0 %v6293, 44
  %v8352 = vpop.permute.xlu0 %8351
  %8353 = vrot.lane.b32.xlu0 %v6298, 44
  %v8354 = vpop.permute.xlu0 %8353
  %8355 = vrot.lane.b32.xlu0 %v6299, 44
  %v8356 = vpop.permute.xlu0 %8355
  %8357 = vrot.lane.b32.xlu0 %v6300, 44
  %v8358 = vpop.permute.xlu0 %8357
  %8359 = vrot.lane.b32.xlu0 %v6301, 44
  %v8360 = vpop.permute.xlu0 %8359
  %8361 = vrot.lane.b32.xlu0 %v6302, 44
  %v8362 = vpop.permute.xlu0 %8361
  %8363 = vrot.lane.b32.xlu0 %v6303, 44
  %v8364 = vpop.permute.xlu0 %8363
  %8365 = vrot.lane.b32.xlu0 %v6304, 44
  %v8366 = vpop.permute.xlu0 %8365
  %8367 = vrot.lane.b32.xlu0 %v6305, 44
  %v8368 = vpop.permute.xlu0 %8367
  %vm8369 = vcmask 162816
  %v8372 = vsel %vm8369, %v6178, %v6387
  %v8375 = vsel %vm8369, %v6179, %v6389
  %v8378 = vsel %vm8369, %v6180, %v6391
  %v8381 = vsel %vm8369, %v6181, %v6393
  %v8384 = vsel %vm8369, %v6182, %v6395
  %v8387 = vsel %vm8369, %v6183, %v6397
  %v8390 = vsel %vm8369, %v6184, %v6399
  %v8393 = vsel %vm8369, %v6185, %v6401
  %v8396 = vsel %vm8369, %v6190, %v6403
  %v8399 = vsel %vm8369, %v6191, %v6405
  %v8402 = vsel %vm8369, %v6192, %v6407
  %v8405 = vsel %vm8369, %v6193, %v6409
  %v8408 = vsel %vm8369, %v6194, %v6411
  %v8411 = vsel %vm8369, %v6195, %v6413
  %v8414 = vsel %vm8369, %v6196, %v6415
  %v8417 = vsel %vm8369, %v6197, %v6417
  %v8420 = vsel %vm8369, %v6202, %v6419
  %v8423 = vsel %vm8369, %v6203, %v6421
  %v8426 = vsel %vm8369, %v6204, %v6423
  %v8429 = vsel %vm8369, %v6205, %v6425
  %v8432 = vsel %vm8369, %v6206, %v6427
  %v8435 = vsel %vm8369, %v6207, %v6429
  %v8438 = vsel %vm8369, %v6208, %v6431
  %v8441 = vsel %vm8369, %v6209, %v6433
  %v8444 = vsel %vm8369, %v6214, %v6435
  %v8447 = vsel %vm8369, %v6215, %v6437
  %v8450 = vsel %vm8369, %v6216, %v6439
  %v8453 = vsel %vm8369, %v6217, %v6441
  %v8456 = vsel %vm8369, %v6218, %v6443
  %v8459 = vsel %vm8369, %v6219, %v6445
  %v8462 = vsel %vm8369, %v6220, %v6447
  %v8465 = vsel %vm8369, %v6221, %v6449
  %v8468 = vsel %vm8369, %v6226, %v6451
  %v8471 = vsel %vm8369, %v6227, %v6453
  %v8474 = vsel %vm8369, %v6228, %v6455
  %v8477 = vsel %vm8369, %v6229, %v6457
  %v8480 = vsel %vm8369, %v6230, %v6459
  %v8483 = vsel %vm8369, %v6231, %v6461
  %v8486 = vsel %vm8369, %v6232, %v6463
  %v8489 = vsel %vm8369, %v6233, %v6465
  %v8492 = vsel %vm8369, %v6238, %v6467
  %v8495 = vsel %vm8369, %v6239, %v6469
  %v8498 = vsel %vm8369, %v6240, %v6471
  %v8501 = vsel %vm8369, %v6241, %v6473
  %v8504 = vsel %vm8369, %v6242, %v6475
  %v8507 = vsel %vm8369, %v6243, %v6477
  %v8510 = vsel %vm8369, %v6244, %v6479
  %v8513 = vsel %vm8369, %v6245, %v6481
  %v8516 = vsel %vm8369, %v6250, %v6483
  %v8519 = vsel %vm8369, %v6251, %v6485
  %v8522 = vsel %vm8369, %v6252, %v6487
  %v8525 = vsel %vm8369, %v6253, %v6489
  %v8528 = vsel %vm8369, %v6254, %v6491
  %v8531 = vsel %vm8369, %v6255, %v6493
  %v8534 = vsel %vm8369, %v6256, %v6495
  %v8537 = vsel %vm8369, %v6257, %v6497
  %v8540 = vsel %vm8369, %v6262, %v6499
  %v8543 = vsel %vm8369, %v6263, %v6501
  %v8546 = vsel %vm8369, %v6264, %v6503
  %v8549 = vsel %vm8369, %v6265, %v6505
  %v8552 = vsel %vm8369, %v6266, %v6507
  %v8555 = vsel %vm8369, %v6267, %v6509
  %v8558 = vsel %vm8369, %v6268, %v6511
  %v8561 = vsel %vm8369, %v6269, %v6513
  %vm8562 = vcmask 326656
  %v8564 = vsel %vm8562, %v8372, %v6523
  %v8566 = vsel %vm8562, %v8375, %v6525
  %v8568 = vsel %vm8562, %v8378, %v6527
  %v8570 = vsel %vm8562, %v8381, %v6529
  %v8572 = vsel %vm8562, %v8384, %v6531
  %v8574 = vsel %vm8562, %v8387, %v6533
  %v8576 = vsel %vm8562, %v8390, %v6535
  %v8578 = vsel %vm8562, %v8393, %v6537
  %v8580 = vsel %vm8562, %v8396, %v6539
  %v8582 = vsel %vm8562, %v8399, %v6541
  %v8584 = vsel %vm8562, %v8402, %v6543
  %v8586 = vsel %vm8562, %v8405, %v6545
  %v8588 = vsel %vm8562, %v8408, %v6547
  %v8590 = vsel %vm8562, %v8411, %v6549
  %v8592 = vsel %vm8562, %v8414, %v6551
  %v8594 = vsel %vm8562, %v8417, %v6553
  %v8596 = vsel %vm8562, %v8420, %v6555
  %v8598 = vsel %vm8562, %v8423, %v6557
  %v8600 = vsel %vm8562, %v8426, %v6559
  %v8602 = vsel %vm8562, %v8429, %v6561
  %v8604 = vsel %vm8562, %v8432, %v6563
  %v8606 = vsel %vm8562, %v8435, %v6565
  %v8608 = vsel %vm8562, %v8438, %v6567
  %v8610 = vsel %vm8562, %v8441, %v6569
  %v8612 = vsel %vm8562, %v8444, %v6571
  %v8614 = vsel %vm8562, %v8447, %v6573
  %v8616 = vsel %vm8562, %v8450, %v6575
  %v8618 = vsel %vm8562, %v8453, %v6577
  %v8620 = vsel %vm8562, %v8456, %v6579
  %v8622 = vsel %vm8562, %v8459, %v6581
  %v8624 = vsel %vm8562, %v8462, %v6583
  %v8626 = vsel %vm8562, %v8465, %v6585
  %v8628 = vsel %vm8562, %v8468, %v6587
  %v8630 = vsel %vm8562, %v8471, %v6589
  %v8632 = vsel %vm8562, %v8474, %v6591
  %v8634 = vsel %vm8562, %v8477, %v6593
  %v8636 = vsel %vm8562, %v8480, %v6595
  %v8638 = vsel %vm8562, %v8483, %v6597
  %v8640 = vsel %vm8562, %v8486, %v6599
  %v8642 = vsel %vm8562, %v8489, %v6601
  %v8644 = vsel %vm8562, %v8492, %v6603
  %v8646 = vsel %vm8562, %v8495, %v6605
  %v8648 = vsel %vm8562, %v8498, %v6607
  %v8650 = vsel %vm8562, %v8501, %v6609
  %v8652 = vsel %vm8562, %v8504, %v6611
  %v8654 = vsel %vm8562, %v8507, %v6613
  %v8656 = vsel %vm8562, %v8510, %v6615
  %v8658 = vsel %vm8562, %v8513, %v6617
  %v8660 = vsel %vm8562, %v8516, %v6619
  %v8662 = vsel %vm8562, %v8519, %v6621
  %v8664 = vsel %vm8562, %v8522, %v6623
  %v8666 = vsel %vm8562, %v8525, %v6625
  %v8668 = vsel %vm8562, %v8528, %v6627
  %v8670 = vsel %vm8562, %v8531, %v6629
  %v8672 = vsel %vm8562, %v8534, %v6631
  %v8674 = vsel %vm8562, %v8537, %v6633
  %v8676 = vsel %vm8562, %v8540, %v6635
  %v8678 = vsel %vm8562, %v8543, %v6637
  %v8680 = vsel %vm8562, %v8546, %v6639
  %v8682 = vsel %vm8562, %v8549, %v6641
  %v8684 = vsel %vm8562, %v8552, %v6643
  %v8686 = vsel %vm8562, %v8555, %v6645
  %v8688 = vsel %vm8562, %v8558, %v6647
  %v8690 = vsel %vm8562, %v8561, %v6649
  %vm8691 = vcmask 490496
  %v8693 = vsel %vm8691, %v8564, %v6659
  %v8695 = vsel %vm8691, %v8566, %v6661
  %v8697 = vsel %vm8691, %v8568, %v6663
  %v8699 = vsel %vm8691, %v8570, %v6665
  %v8701 = vsel %vm8691, %v8572, %v6667
  %v8703 = vsel %vm8691, %v8574, %v6669
  %v8705 = vsel %vm8691, %v8576, %v6671
  %v8707 = vsel %vm8691, %v8578, %v6673
  %v8709 = vsel %vm8691, %v8580, %v6675
  %v8711 = vsel %vm8691, %v8582, %v6677
  %v8713 = vsel %vm8691, %v8584, %v6679
  %v8715 = vsel %vm8691, %v8586, %v6681
  %v8717 = vsel %vm8691, %v8588, %v6683
  %v8719 = vsel %vm8691, %v8590, %v6685
  %v8721 = vsel %vm8691, %v8592, %v6687
  %v8723 = vsel %vm8691, %v8594, %v6689
  %v8725 = vsel %vm8691, %v8596, %v6691
  %v8727 = vsel %vm8691, %v8598, %v6693
  %v8729 = vsel %vm8691, %v8600, %v6695
  %v8731 = vsel %vm8691, %v8602, %v6697
  %v8733 = vsel %vm8691, %v8604, %v6699
  %v8735 = vsel %vm8691, %v8606, %v6701
  %v8737 = vsel %vm8691, %v8608, %v6703
  %v8739 = vsel %vm8691, %v8610, %v6705
  %v8741 = vsel %vm8691, %v8612, %v6707
  %v8743 = vsel %vm8691, %v8614, %v6709
  %v8745 = vsel %vm8691, %v8616, %v6711
  %v8747 = vsel %vm8691, %v8618, %v6713
  %v8749 = vsel %vm8691, %v8620, %v6715
  %v8751 = vsel %vm8691, %v8622, %v6717
  %v8753 = vsel %vm8691, %v8624, %v6719
  %v8755 = vsel %vm8691, %v8626, %v6721
  %v8757 = vsel %vm8691, %v8628, %v6723
  %v8759 = vsel %vm8691, %v8630, %v6725
  %v8761 = vsel %vm8691, %v8632, %v6727
  %v8763 = vsel %vm8691, %v8634, %v6729
  %v8765 = vsel %vm8691, %v8636, %v6731
  %v8767 = vsel %vm8691, %v8638, %v6733
  %v8769 = vsel %vm8691, %v8640, %v6735
  %v8771 = vsel %vm8691, %v8642, %v6737
  %v8773 = vsel %vm8691, %v8644, %v6739
  %v8775 = vsel %vm8691, %v8646, %v6741
  %v8777 = vsel %vm8691, %v8648, %v6743
  %v8779 = vsel %vm8691, %v8650, %v6745
  %v8781 = vsel %vm8691, %v8652, %v6747
  %v8783 = vsel %vm8691, %v8654, %v6749
  %v8785 = vsel %vm8691, %v8656, %v6751
  %v8787 = vsel %vm8691, %v8658, %v6753
  %v8789 = vsel %vm8691, %v8660, %v6755
  %v8791 = vsel %vm8691, %v8662, %v6757
  %v8793 = vsel %vm8691, %v8664, %v6759
  %v8795 = vsel %vm8691, %v8666, %v6761
  %v8797 = vsel %vm8691, %v8668, %v6763
  %v8799 = vsel %vm8691, %v8670, %v6765
  %v8801 = vsel %vm8691, %v8672, %v6767
  %v8803 = vsel %vm8691, %v8674, %v6769
  %v8805 = vsel %vm8691, %v8676, %v6771
  %v8807 = vsel %vm8691, %v8678, %v6773
  %v8809 = vsel %vm8691, %v8680, %v6775
  %v8811 = vsel %vm8691, %v8682, %v6777
  %v8813 = vsel %vm8691, %v8684, %v6779
  %v8815 = vsel %vm8691, %v8686, %v6781
  %v8817 = vsel %vm8691, %v8688, %v6783
  %v8819 = vsel %vm8691, %v8690, %v6785
  %vm8820 = vcmask 654336
  %v8822 = vsel %vm8820, %v8693, %v6795
  %v8824 = vsel %vm8820, %v8695, %v6797
  %v8826 = vsel %vm8820, %v8697, %v6799
  %v8828 = vsel %vm8820, %v8699, %v6801
  %v8830 = vsel %vm8820, %v8701, %v6803
  %v8832 = vsel %vm8820, %v8703, %v6805
  %v8834 = vsel %vm8820, %v8705, %v6807
  %v8836 = vsel %vm8820, %v8707, %v6809
  %v8838 = vsel %vm8820, %v8709, %v6811
  %v8840 = vsel %vm8820, %v8711, %v6813
  %v8842 = vsel %vm8820, %v8713, %v6815
  %v8844 = vsel %vm8820, %v8715, %v6817
  %v8846 = vsel %vm8820, %v8717, %v6819
  %v8848 = vsel %vm8820, %v8719, %v6821
  %v8850 = vsel %vm8820, %v8721, %v6823
  %v8852 = vsel %vm8820, %v8723, %v6825
  %v8854 = vsel %vm8820, %v8725, %v6827
  %v8856 = vsel %vm8820, %v8727, %v6829
  %v8858 = vsel %vm8820, %v8729, %v6831
  %v8860 = vsel %vm8820, %v8731, %v6833
  %v8862 = vsel %vm8820, %v8733, %v6835
  %v8864 = vsel %vm8820, %v8735, %v6837
  %v8866 = vsel %vm8820, %v8737, %v6839
  %v8868 = vsel %vm8820, %v8739, %v6841
  %v8870 = vsel %vm8820, %v8741, %v6843
  %v8872 = vsel %vm8820, %v8743, %v6845
  %v8874 = vsel %vm8820, %v8745, %v6847
  %v8876 = vsel %vm8820, %v8747, %v6849
  %v8878 = vsel %vm8820, %v8749, %v6851
  %v8880 = vsel %vm8820, %v8751, %v6853
  %v8882 = vsel %vm8820, %v8753, %v6855
  %v8884 = vsel %vm8820, %v8755, %v6857
  %v8886 = vsel %vm8820, %v8757, %v6859
  %v8888 = vsel %vm8820, %v8759, %v6861
  %v8890 = vsel %vm8820, %v8761, %v6863
  %v8892 = vsel %vm8820, %v8763, %v6865
  %v8894 = vsel %vm8820, %v8765, %v6867
  %v8896 = vsel %vm8820, %v8767, %v6869
  %v8898 = vsel %vm8820, %v8769, %v6871
  %v8900 = vsel %vm8820, %v8771, %v6873
  %v8902 = vsel %vm8820, %v8773, %v6875
  %v8904 = vsel %vm8820, %v8775, %v6877
  %v8906 = vsel %vm8820, %v8777, %v6879
  %v8908 = vsel %vm8820, %v8779, %v6881
  %v8910 = vsel %vm8820, %v8781, %v6883
  %v8912 = vsel %vm8820, %v8783, %v6885
  %v8914 = vsel %vm8820, %v8785, %v6887
  %v8916 = vsel %vm8820, %v8787, %v6889
  %v8918 = vsel %vm8820, %v8789, %v6891
  %v8920 = vsel %vm8820, %v8791, %v6893
  %v8922 = vsel %vm8820, %v8793, %v6895
  %v8924 = vsel %vm8820, %v8795, %v6897
  %v8926 = vsel %vm8820, %v8797, %v6899
  %v8928 = vsel %vm8820, %v8799, %v6901
  %v8930 = vsel %vm8820, %v8801, %v6903
  %v8932 = vsel %vm8820, %v8803, %v6905
  %v8934 = vsel %vm8820, %v8805, %v6907
  %v8936 = vsel %vm8820, %v8807, %v6909
  %v8938 = vsel %vm8820, %v8809, %v6911
  %v8940 = vsel %vm8820, %v8811, %v6913
  %v8942 = vsel %vm8820, %v8813, %v6915
  %v8944 = vsel %vm8820, %v8815, %v6917
  %v8946 = vsel %vm8820, %v8817, %v6919
  %v8948 = vsel %vm8820, %v8819, %v6921
  %v8950 = vsel %vm1093, %v8822, %v6938
  %v8952 = vsel %vm1093, %v8824, %v6940
  %v8954 = vsel %vm1093, %v8826, %v6942
  %v8956 = vsel %vm1093, %v8828, %v6944
  %v8958 = vsel %vm1093, %v8830, %v6946
  %v8960 = vsel %vm1093, %v8832, %v6948
  %v8962 = vsel %vm1093, %v8834, %v6950
  %v8964 = vsel %vm1093, %v8836, %v6952
  %v8966 = vsel %vm1093, %v8838, %v6954
  %v8968 = vsel %vm1093, %v8840, %v6956
  %v8970 = vsel %vm1093, %v8842, %v6958
  %v8972 = vsel %vm1093, %v8844, %v6960
  %v8974 = vsel %vm1093, %v8846, %v6962
  %v8976 = vsel %vm1093, %v8848, %v6964
  %v8978 = vsel %vm1093, %v8850, %v6966
  %v8980 = vsel %vm1093, %v8852, %v6968
  %v8982 = vsel %vm1093, %v8854, %v6970
  %v8984 = vsel %vm1093, %v8856, %v6972
  %v8986 = vsel %vm1093, %v8858, %v6974
  %v8988 = vsel %vm1093, %v8860, %v6976
  %v8990 = vsel %vm1093, %v8862, %v6978
  %v8992 = vsel %vm1093, %v8864, %v6980
  %v8994 = vsel %vm1093, %v8866, %v6982
  %v8996 = vsel %vm1093, %v8868, %v6984
  %v8998 = vsel %vm1093, %v8870, %v6986
  %v9000 = vsel %vm1093, %v8872, %v6988
  %v9002 = vsel %vm1093, %v8874, %v6990
  %v9004 = vsel %vm1093, %v8876, %v6992
  %v9006 = vsel %vm1093, %v8878, %v6994
  %v9008 = vsel %vm1093, %v8880, %v6996
  %v9010 = vsel %vm1093, %v8882, %v6998
  %v9012 = vsel %vm1093, %v8884, %v7000
  %v9014 = vsel %vm1093, %v8886, %v7002
  %v9016 = vsel %vm1093, %v8888, %v7004
  %v9018 = vsel %vm1093, %v8890, %v7006
  %v9020 = vsel %vm1093, %v8892, %v7008
  %v9022 = vsel %vm1093, %v8894, %v7010
  %v9024 = vsel %vm1093, %v8896, %v7012
  %v9026 = vsel %vm1093, %v8898, %v7014
  %v9028 = vsel %vm1093, %v8900, %v7016
  %v9030 = vsel %vm1093, %v8902, %v7018
  %v9032 = vsel %vm1093, %v8904, %v7020
  %v9034 = vsel %vm1093, %v8906, %v7022
  %v9036 = vsel %vm1093, %v8908, %v7024
  %v9038 = vsel %vm1093, %v8910, %v7026
  %v9040 = vsel %vm1093, %v8912, %v7028
  %v9042 = vsel %vm1093, %v8914, %v7030
  %v9044 = vsel %vm1093, %v8916, %v7032
  %v9046 = vsel %vm1093, %v8918, %v7034
  %v9048 = vsel %vm1093, %v8920, %v7036
  %v9050 = vsel %vm1093, %v8922, %v7038
  %v9052 = vsel %vm1093, %v8924, %v7040
  %v9054 = vsel %vm1093, %v8926, %v7042
  %v9056 = vsel %vm1093, %v8928, %v7044
  %v9058 = vsel %vm1093, %v8930, %v7046
  %v9060 = vsel %vm1093, %v8932, %v7048
  %v9062 = vsel %vm1093, %v8934, %v7050
  %v9064 = vsel %vm1093, %v8936, %v7052
  %v9066 = vsel %vm1093, %v8938, %v7054
  %v9068 = vsel %vm1093, %v8940, %v7056
  %v9070 = vsel %vm1093, %v8942, %v7058
  %v9072 = vsel %vm1093, %v8944, %v7060
  %v9074 = vsel %vm1093, %v8946, %v7062
  %v9076 = vsel %vm1093, %v8948, %v7064
  %vm9077 = vcmask 982016
  %v9079 = vsel %vm9077, %v8950, %v7067
  %v9082 = vsel %vm9077, %v8952, %v7069
  %v9085 = vsel %vm9077, %v8954, %v7071
  %v9088 = vsel %vm9077, %v8956, %v7073
  %v9091 = vsel %vm9077, %v8958, %v7075
  %v9094 = vsel %vm9077, %v8960, %v7077
  %v9097 = vsel %vm9077, %v8962, %v7079
  %v9100 = vsel %vm9077, %v8964, %v7081
  %v9103 = vsel %vm9077, %v8966, %v7083
  %v9106 = vsel %vm9077, %v8968, %v7085
  %v9109 = vsel %vm9077, %v8970, %v7087
  %v9112 = vsel %vm9077, %v8972, %v7089
  %v9115 = vsel %vm9077, %v8974, %v7091
  %v9118 = vsel %vm9077, %v8976, %v7093
  %v9121 = vsel %vm9077, %v8978, %v7095
  %v9124 = vsel %vm9077, %v8980, %v7097
  %v9127 = vsel %vm9077, %v8982, %v7099
  %v9130 = vsel %vm9077, %v8984, %v7101
  %v9133 = vsel %vm9077, %v8986, %v7103
  %v9136 = vsel %vm9077, %v8988, %v7105
  %v9139 = vsel %vm9077, %v8990, %v7107
  %v9142 = vsel %vm9077, %v8992, %v7109
  %v9145 = vsel %vm9077, %v8994, %v7111
  %v9148 = vsel %vm9077, %v8996, %v7113
  %v9151 = vsel %vm9077, %v8998, %v7115
  %v9154 = vsel %vm9077, %v9000, %v7117
  %v9157 = vsel %vm9077, %v9002, %v7119
  %v9160 = vsel %vm9077, %v9004, %v7121
  %v9163 = vsel %vm9077, %v9006, %v7123
  %v9166 = vsel %vm9077, %v9008, %v7125
  %v9169 = vsel %vm9077, %v9010, %v7127
  %v9172 = vsel %vm9077, %v9012, %v7129
  %v9175 = vsel %vm9077, %v9014, %v7131
  %v9178 = vsel %vm9077, %v9016, %v7133
  %v9181 = vsel %vm9077, %v9018, %v7135
  %v9184 = vsel %vm9077, %v9020, %v7137
  %v9187 = vsel %vm9077, %v9022, %v7139
  %v9190 = vsel %vm9077, %v9024, %v7141
  %v9193 = vsel %vm9077, %v9026, %v7143
  %v9196 = vsel %vm9077, %v9028, %v7145
  %v9199 = vsel %vm9077, %v9030, %v7147
  %v9202 = vsel %vm9077, %v9032, %v7149
  %v9205 = vsel %vm9077, %v9034, %v7151
  %v9208 = vsel %vm9077, %v9036, %v7153
  %v9211 = vsel %vm9077, %v9038, %v7155
  %v9214 = vsel %vm9077, %v9040, %v7157
  %v9217 = vsel %vm9077, %v9042, %v7159
  %v9220 = vsel %vm9077, %v9044, %v7161
  %v9223 = vsel %vm9077, %v9046, %v7163
  %v9226 = vsel %vm9077, %v9048, %v7165
  %v9229 = vsel %vm9077, %v9050, %v7167
  %v9232 = vsel %vm9077, %v9052, %v7169
  %v9235 = vsel %vm9077, %v9054, %v7171
  %v9238 = vsel %vm9077, %v9056, %v7173
  %v9241 = vsel %vm9077, %v9058, %v7175
  %v9244 = vsel %vm9077, %v9060, %v7177
  %v9247 = vsel %vm9077, %v9062, %v7179
  %v9250 = vsel %vm9077, %v9064, %v7181
  %v9253 = vsel %vm9077, %v9066, %v7183
  %v9256 = vsel %vm9077, %v9068, %v7185
  %v9259 = vsel %vm9077, %v9070, %v7187
  %v9262 = vsel %vm9077, %v9072, %v7189
  %v9265 = vsel %vm9077, %v9074, %v7191
  %v9268 = vsel %vm9077, %v9076, %v7193
  %vm9270 = vcmask 97280
  %v9272 = vsel %vm9270, %v7067, %v7196
  %v9274 = vsel %vm9270, %v7069, %v7198
  %v9276 = vsel %vm9270, %v7071, %v7200
  %v9278 = vsel %vm9270, %v7073, %v7202
  %v9280 = vsel %vm9270, %v7075, %v7204
  %v9282 = vsel %vm9270, %v7077, %v7206
  %v9284 = vsel %vm9270, %v7079, %v7208
  %v9286 = vsel %vm9270, %v7081, %v7210
  %v9288 = vsel %vm9270, %v7083, %v7212
  %v9290 = vsel %vm9270, %v7085, %v7214
  %v9292 = vsel %vm9270, %v7087, %v7216
  %v9294 = vsel %vm9270, %v7089, %v7218
  %v9296 = vsel %vm9270, %v7091, %v7220
  %v9298 = vsel %vm9270, %v7093, %v7222
  %v9300 = vsel %vm9270, %v7095, %v7224
  %v9302 = vsel %vm9270, %v7097, %v7226
  %v9304 = vsel %vm9270, %v7099, %v7228
  %v9306 = vsel %vm9270, %v7101, %v7230
  %v9308 = vsel %vm9270, %v7103, %v7232
  %v9310 = vsel %vm9270, %v7105, %v7234
  %v9312 = vsel %vm9270, %v7107, %v7236
  %v9314 = vsel %vm9270, %v7109, %v7238
  %v9316 = vsel %vm9270, %v7111, %v7240
  %v9318 = vsel %vm9270, %v7113, %v7242
  %v9320 = vsel %vm9270, %v7115, %v7244
  %v9322 = vsel %vm9270, %v7117, %v7246
  %v9324 = vsel %vm9270, %v7119, %v7248
  %v9326 = vsel %vm9270, %v7121, %v7250
  %v9328 = vsel %vm9270, %v7123, %v7252
  %v9330 = vsel %vm9270, %v7125, %v7254
  %v9332 = vsel %vm9270, %v7127, %v7256
  %v9334 = vsel %vm9270, %v7129, %v7258
  %v9336 = vsel %vm9270, %v7131, %v7260
  %v9338 = vsel %vm9270, %v7133, %v7262
  %v9340 = vsel %vm9270, %v7135, %v7264
  %v9342 = vsel %vm9270, %v7137, %v7266
  %v9344 = vsel %vm9270, %v7139, %v7268
  %v9346 = vsel %vm9270, %v7141, %v7270
  %v9348 = vsel %vm9270, %v7143, %v7272
  %v9350 = vsel %vm9270, %v7145, %v7274
  %v9352 = vsel %vm9270, %v7147, %v7276
  %v9354 = vsel %vm9270, %v7149, %v7278
  %v9356 = vsel %vm9270, %v7151, %v7280
  %v9358 = vsel %vm9270, %v7153, %v7282
  %v9360 = vsel %vm9270, %v7155, %v7284
  %v9362 = vsel %vm9270, %v7157, %v7286
  %v9364 = vsel %vm9270, %v7159, %v7288
  %v9366 = vsel %vm9270, %v7161, %v7290
  %v9368 = vsel %vm9270, %v7163, %v7292
  %v9370 = vsel %vm9270, %v7165, %v7294
  %v9372 = vsel %vm9270, %v7167, %v7296
  %v9374 = vsel %vm9270, %v7169, %v7298
  %v9376 = vsel %vm9270, %v7171, %v7300
  %v9378 = vsel %vm9270, %v7173, %v7302
  %v9380 = vsel %vm9270, %v7175, %v7304
  %v9382 = vsel %vm9270, %v7177, %v7306
  %v9384 = vsel %vm9270, %v7179, %v7308
  %v9386 = vsel %vm9270, %v7181, %v7310
  %v9388 = vsel %vm9270, %v7183, %v7312
  %v9390 = vsel %vm9270, %v7185, %v7314
  %v9392 = vsel %vm9270, %v7187, %v7316
  %v9394 = vsel %vm9270, %v7189, %v7318
  %v9396 = vsel %vm9270, %v7191, %v7320
  %v9398 = vsel %vm9270, %v7193, %v7322
  %vm9399 = vcmask 261120
  %v9401 = vsel %vm9399, %v9272, %v7325
  %v9403 = vsel %vm9399, %v9274, %v7327
  %v9405 = vsel %vm9399, %v9276, %v7329
  %v9407 = vsel %vm9399, %v9278, %v7331
  %v9409 = vsel %vm9399, %v9280, %v7333
  %v9411 = vsel %vm9399, %v9282, %v7335
  %v9413 = vsel %vm9399, %v9284, %v7337
  %v9415 = vsel %vm9399, %v9286, %v7339
  %v9417 = vsel %vm9399, %v9288, %v7341
  %v9419 = vsel %vm9399, %v9290, %v7343
  %v9421 = vsel %vm9399, %v9292, %v7345
  %v9423 = vsel %vm9399, %v9294, %v7347
  %v9425 = vsel %vm9399, %v9296, %v7349
  %v9427 = vsel %vm9399, %v9298, %v7351
  %v9429 = vsel %vm9399, %v9300, %v7353
  %v9431 = vsel %vm9399, %v9302, %v7355
  %v9433 = vsel %vm9399, %v9304, %v7357
  %v9435 = vsel %vm9399, %v9306, %v7359
  %v9437 = vsel %vm9399, %v9308, %v7361
  %v9439 = vsel %vm9399, %v9310, %v7363
  %v9441 = vsel %vm9399, %v9312, %v7365
  %v9443 = vsel %vm9399, %v9314, %v7367
  %v9445 = vsel %vm9399, %v9316, %v7369
  %v9447 = vsel %vm9399, %v9318, %v7371
  %v9449 = vsel %vm9399, %v9320, %v7373
  %v9451 = vsel %vm9399, %v9322, %v7375
  %v9453 = vsel %vm9399, %v9324, %v7377
  %v9455 = vsel %vm9399, %v9326, %v7379
  %v9457 = vsel %vm9399, %v9328, %v7381
  %v9459 = vsel %vm9399, %v9330, %v7383
  %v9461 = vsel %vm9399, %v9332, %v7385
  %v9463 = vsel %vm9399, %v9334, %v7387
  %v9465 = vsel %vm9399, %v9336, %v7389
  %v9467 = vsel %vm9399, %v9338, %v7391
  %v9469 = vsel %vm9399, %v9340, %v7393
  %v9471 = vsel %vm9399, %v9342, %v7395
  %v9473 = vsel %vm9399, %v9344, %v7397
  %v9475 = vsel %vm9399, %v9346, %v7399
  %v9477 = vsel %vm9399, %v9348, %v7401
  %v9479 = vsel %vm9399, %v9350, %v7403
  %v9481 = vsel %vm9399, %v9352, %v7405
  %v9483 = vsel %vm9399, %v9354, %v7407
  %v9485 = vsel %vm9399, %v9356, %v7409
  %v9487 = vsel %vm9399, %v9358, %v7411
  %v9489 = vsel %vm9399, %v9360, %v7413
  %v9491 = vsel %vm9399, %v9362, %v7415
  %v9493 = vsel %vm9399, %v9364, %v7417
  %v9495 = vsel %vm9399, %v9366, %v7419
  %v9497 = vsel %vm9399, %v9368, %v7421
  %v9499 = vsel %vm9399, %v9370, %v7423
  %v9501 = vsel %vm9399, %v9372, %v7425
  %v9503 = vsel %vm9399, %v9374, %v7427
  %v9505 = vsel %vm9399, %v9376, %v7429
  %v9507 = vsel %vm9399, %v9378, %v7431
  %v9509 = vsel %vm9399, %v9380, %v7433
  %v9511 = vsel %vm9399, %v9382, %v7435
  %v9513 = vsel %vm9399, %v9384, %v7437
  %v9515 = vsel %vm9399, %v9386, %v7439
  %v9517 = vsel %vm9399, %v9388, %v7441
  %v9519 = vsel %vm9399, %v9390, %v7443
  %v9521 = vsel %vm9399, %v9392, %v7445
  %v9523 = vsel %vm9399, %v9394, %v7447
  %v9525 = vsel %vm9399, %v9396, %v7449
  %v9527 = vsel %vm9399, %v9398, %v7451
  %vm9528 = vcmask 424960
  %v9530 = vsel %vm9528, %v9401, %v7454
  %v9532 = vsel %vm9528, %v9403, %v7456
  %v9534 = vsel %vm9528, %v9405, %v7458
  %v9536 = vsel %vm9528, %v9407, %v7460
  %v9538 = vsel %vm9528, %v9409, %v7462
  %v9540 = vsel %vm9528, %v9411, %v7464
  %v9542 = vsel %vm9528, %v9413, %v7466
  %v9544 = vsel %vm9528, %v9415, %v7468
  %v9546 = vsel %vm9528, %v9417, %v7470
  %v9548 = vsel %vm9528, %v9419, %v7472
  %v9550 = vsel %vm9528, %v9421, %v7474
  %v9552 = vsel %vm9528, %v9423, %v7476
  %v9554 = vsel %vm9528, %v9425, %v7478
  %v9556 = vsel %vm9528, %v9427, %v7480
  %v9558 = vsel %vm9528, %v9429, %v7482
  %v9560 = vsel %vm9528, %v9431, %v7484
  %v9562 = vsel %vm9528, %v9433, %v7486
  %v9564 = vsel %vm9528, %v9435, %v7488
  %v9566 = vsel %vm9528, %v9437, %v7490
  %v9568 = vsel %vm9528, %v9439, %v7492
  %v9570 = vsel %vm9528, %v9441, %v7494
  %v9572 = vsel %vm9528, %v9443, %v7496
  %v9574 = vsel %vm9528, %v9445, %v7498
  %v9576 = vsel %vm9528, %v9447, %v7500
  %v9578 = vsel %vm9528, %v9449, %v7502
  %v9580 = vsel %vm9528, %v9451, %v7504
  %v9582 = vsel %vm9528, %v9453, %v7506
  %v9584 = vsel %vm9528, %v9455, %v7508
  %v9586 = vsel %vm9528, %v9457, %v7510
  %v9588 = vsel %vm9528, %v9459, %v7512
  %v9590 = vsel %vm9528, %v9461, %v7514
  %v9592 = vsel %vm9528, %v9463, %v7516
  %v9594 = vsel %vm9528, %v9465, %v7518
  %v9596 = vsel %vm9528, %v9467, %v7520
  %v9598 = vsel %vm9528, %v9469, %v7522
  %v9600 = vsel %vm9528, %v9471, %v7524
  %v9602 = vsel %vm9528, %v9473, %v7526
  %v9604 = vsel %vm9528, %v9475, %v7528
  %v9606 = vsel %vm9528, %v9477, %v7530
  %v9608 = vsel %vm9528, %v9479, %v7532
  %v9610 = vsel %vm9528, %v9481, %v7534
  %v9612 = vsel %vm9528, %v9483, %v7536
  %v9614 = vsel %vm9528, %v9485, %v7538
  %v9616 = vsel %vm9528, %v9487, %v7540
  %v9618 = vsel %vm9528, %v9489, %v7542
  %v9620 = vsel %vm9528, %v9491, %v7544
  %v9622 = vsel %vm9528, %v9493, %v7546
  %v9624 = vsel %vm9528, %v9495, %v7548
  %v9626 = vsel %vm9528, %v9497, %v7550
  %v9628 = vsel %vm9528, %v9499, %v7552
  %v9630 = vsel %vm9528, %v9501, %v7554
  %v9632 = vsel %vm9528, %v9503, %v7556
  %v9634 = vsel %vm9528, %v9505, %v7558
  %v9636 = vsel %vm9528, %v9507, %v7560
  %v9638 = vsel %vm9528, %v9509, %v7562
  %v9640 = vsel %vm9528, %v9511, %v7564
  %v9642 = vsel %vm9528, %v9513, %v7566
  %v9644 = vsel %vm9528, %v9515, %v7568
  %v9646 = vsel %vm9528, %v9517, %v7570
  %v9648 = vsel %vm9528, %v9519, %v7572
  %v9650 = vsel %vm9528, %v9521, %v7574
  %v9652 = vsel %vm9528, %v9523, %v7576
  %v9654 = vsel %vm9528, %v9525, %v7578
  %v9656 = vsel %vm9528, %v9527, %v7580
  %vm9657 = vcmask 588800
  %v9659 = vsel %vm9657, %v9530, %v7590
  %v9661 = vsel %vm9657, %v9532, %v7592
  %v9663 = vsel %vm9657, %v9534, %v7594
  %v9665 = vsel %vm9657, %v9536, %v7596
  %v9667 = vsel %vm9657, %v9538, %v7598
  %v9669 = vsel %vm9657, %v9540, %v7600
  %v9671 = vsel %vm9657, %v9542, %v7602
  %v9673 = vsel %vm9657, %v9544, %v7604
  %v9675 = vsel %vm9657, %v9546, %v7606
  %v9677 = vsel %vm9657, %v9548, %v7608
  %v9679 = vsel %vm9657, %v9550, %v7610
  %v9681 = vsel %vm9657, %v9552, %v7612
  %v9683 = vsel %vm9657, %v9554, %v7614
  %v9685 = vsel %vm9657, %v9556, %v7616
  %v9687 = vsel %vm9657, %v9558, %v7618
  %v9689 = vsel %vm9657, %v9560, %v7620
  %v9691 = vsel %vm9657, %v9562, %v7622
  %v9693 = vsel %vm9657, %v9564, %v7624
  %v9695 = vsel %vm9657, %v9566, %v7626
  %v9697 = vsel %vm9657, %v9568, %v7628
  %v9699 = vsel %vm9657, %v9570, %v7630
  %v9701 = vsel %vm9657, %v9572, %v7632
  %v9703 = vsel %vm9657, %v9574, %v7634
  %v9705 = vsel %vm9657, %v9576, %v7636
  %v9707 = vsel %vm9657, %v9578, %v7638
  %v9709 = vsel %vm9657, %v9580, %v7640
  %v9711 = vsel %vm9657, %v9582, %v7642
  %v9713 = vsel %vm9657, %v9584, %v7644
  %v9715 = vsel %vm9657, %v9586, %v7646
  %v9717 = vsel %vm9657, %v9588, %v7648
  %v9719 = vsel %vm9657, %v9590, %v7650
  %v9721 = vsel %vm9657, %v9592, %v7652
  %v9723 = vsel %vm9657, %v9594, %v7654
  %v9725 = vsel %vm9657, %v9596, %v7656
  %v9727 = vsel %vm9657, %v9598, %v7658
  %v9729 = vsel %vm9657, %v9600, %v7660
  %v9731 = vsel %vm9657, %v9602, %v7662
  %v9733 = vsel %vm9657, %v9604, %v7664
  %v9735 = vsel %vm9657, %v9606, %v7666
  %v9737 = vsel %vm9657, %v9608, %v7668
  %v9739 = vsel %vm9657, %v9610, %v7670
  %v9741 = vsel %vm9657, %v9612, %v7672
  %v9743 = vsel %vm9657, %v9614, %v7674
  %v9745 = vsel %vm9657, %v9616, %v7676
  %v9747 = vsel %vm9657, %v9618, %v7678
  %v9749 = vsel %vm9657, %v9620, %v7680
  %v9751 = vsel %vm9657, %v9622, %v7682
  %v9753 = vsel %vm9657, %v9624, %v7684
  %v9755 = vsel %vm9657, %v9626, %v7686
  %v9757 = vsel %vm9657, %v9628, %v7688
  %v9759 = vsel %vm9657, %v9630, %v7690
  %v9761 = vsel %vm9657, %v9632, %v7692
  %v9763 = vsel %vm9657, %v9634, %v7694
  %v9765 = vsel %vm9657, %v9636, %v7696
  %v9767 = vsel %vm9657, %v9638, %v7698
  %v9769 = vsel %vm9657, %v9640, %v7700
  %v9771 = vsel %vm9657, %v9642, %v7702
  %v9773 = vsel %vm9657, %v9644, %v7704
  %v9775 = vsel %vm9657, %v9646, %v7706
  %v9777 = vsel %vm9657, %v9648, %v7708
  %v9779 = vsel %vm9657, %v9650, %v7710
  %v9781 = vsel %vm9657, %v9652, %v7712
  %v9783 = vsel %vm9657, %v9654, %v7714
  %v9785 = vsel %vm9657, %v9656, %v7716
  %vm9786 = vcmask 752640
  %v9788 = vsel %vm9786, %v9659, %v7719
  %v9790 = vsel %vm9786, %v9661, %v7721
  %v9792 = vsel %vm9786, %v9663, %v7723
  %v9794 = vsel %vm9786, %v9665, %v7725
  %v9796 = vsel %vm9786, %v9667, %v7727
  %v9798 = vsel %vm9786, %v9669, %v7729
  %v9800 = vsel %vm9786, %v9671, %v7731
  %v9802 = vsel %vm9786, %v9673, %v7733
  %v9804 = vsel %vm9786, %v9675, %v7735
  %v9806 = vsel %vm9786, %v9677, %v7737
  %v9808 = vsel %vm9786, %v9679, %v7739
  %v9810 = vsel %vm9786, %v9681, %v7741
  %v9812 = vsel %vm9786, %v9683, %v7743
  %v9814 = vsel %vm9786, %v9685, %v7745
  %v9816 = vsel %vm9786, %v9687, %v7747
  %v9818 = vsel %vm9786, %v9689, %v7749
  %v9820 = vsel %vm9786, %v9691, %v7751
  %v9822 = vsel %vm9786, %v9693, %v7753
  %v9824 = vsel %vm9786, %v9695, %v7755
  %v9826 = vsel %vm9786, %v9697, %v7757
  %v9828 = vsel %vm9786, %v9699, %v7759
  %v9830 = vsel %vm9786, %v9701, %v7761
  %v9832 = vsel %vm9786, %v9703, %v7763
  %v9834 = vsel %vm9786, %v9705, %v7765
  %v9836 = vsel %vm9786, %v9707, %v7767
  %v9838 = vsel %vm9786, %v9709, %v7769
  %v9840 = vsel %vm9786, %v9711, %v7771
  %v9842 = vsel %vm9786, %v9713, %v7773
  %v9844 = vsel %vm9786, %v9715, %v7775
  %v9846 = vsel %vm9786, %v9717, %v7777
  %v9848 = vsel %vm9786, %v9719, %v7779
  %v9850 = vsel %vm9786, %v9721, %v7781
  %v9852 = vsel %vm9786, %v9723, %v7783
  %v9854 = vsel %vm9786, %v9725, %v7785
  %v9856 = vsel %vm9786, %v9727, %v7787
  %v9858 = vsel %vm9786, %v9729, %v7789
  %v9860 = vsel %vm9786, %v9731, %v7791
  %v9862 = vsel %vm9786, %v9733, %v7793
  %v9864 = vsel %vm9786, %v9735, %v7795
  %v9866 = vsel %vm9786, %v9737, %v7797
  %v9868 = vsel %vm9786, %v9739, %v7799
  %v9870 = vsel %vm9786, %v9741, %v7801
  %v9872 = vsel %vm9786, %v9743, %v7803
  %v9874 = vsel %vm9786, %v9745, %v7805
  %v9876 = vsel %vm9786, %v9747, %v7807
  %v9878 = vsel %vm9786, %v9749, %v7809
  %v9880 = vsel %vm9786, %v9751, %v7811
  %v9882 = vsel %vm9786, %v9753, %v7813
  %v9884 = vsel %vm9786, %v9755, %v7815
  %v9886 = vsel %vm9786, %v9757, %v7817
  %v9888 = vsel %vm9786, %v9759, %v7819
  %v9890 = vsel %vm9786, %v9761, %v7821
  %v9892 = vsel %vm9786, %v9763, %v7823
  %v9894 = vsel %vm9786, %v9765, %v7825
  %v9896 = vsel %vm9786, %v9767, %v7827
  %v9898 = vsel %vm9786, %v9769, %v7829
  %v9900 = vsel %vm9786, %v9771, %v7831
  %v9902 = vsel %vm9786, %v9773, %v7833
  %v9904 = vsel %vm9786, %v9775, %v7835
  %v9906 = vsel %vm9786, %v9777, %v7837
  %v9908 = vsel %vm9786, %v9779, %v7839
  %v9910 = vsel %vm9786, %v9781, %v7841
  %v9912 = vsel %vm9786, %v9783, %v7843
  %v9914 = vsel %vm9786, %v9785, %v7845
  %vm9915 = vcmask 916480
  %v9917 = vsel %vm9915, %v9788, %v7848
  %v9920 = vsel %vm9915, %v9790, %v7850
  %v9923 = vsel %vm9915, %v9792, %v7852
  %v9926 = vsel %vm9915, %v9794, %v7854
  %v9929 = vsel %vm9915, %v9796, %v7856
  %v9932 = vsel %vm9915, %v9798, %v7858
  %v9935 = vsel %vm9915, %v9800, %v7860
  %v9938 = vsel %vm9915, %v9802, %v7862
  %v9941 = vsel %vm9915, %v9804, %v7864
  %v9944 = vsel %vm9915, %v9806, %v7866
  %v9947 = vsel %vm9915, %v9808, %v7868
  %v9950 = vsel %vm9915, %v9810, %v7870
  %v9953 = vsel %vm9915, %v9812, %v7872
  %v9956 = vsel %vm9915, %v9814, %v7874
  %v9959 = vsel %vm9915, %v9816, %v7876
  %v9962 = vsel %vm9915, %v9818, %v7878
  %v9965 = vsel %vm9915, %v9820, %v7880
  %v9968 = vsel %vm9915, %v9822, %v7882
  %v9971 = vsel %vm9915, %v9824, %v7884
  %v9974 = vsel %vm9915, %v9826, %v7886
  %v9977 = vsel %vm9915, %v9828, %v7888
  %v9980 = vsel %vm9915, %v9830, %v7890
  %v9983 = vsel %vm9915, %v9832, %v7892
  %v9986 = vsel %vm9915, %v9834, %v7894
  %v9989 = vsel %vm9915, %v9836, %v7896
  %v9992 = vsel %vm9915, %v9838, %v7898
  %v9995 = vsel %vm9915, %v9840, %v7900
  %v9998 = vsel %vm9915, %v9842, %v7902
  %v10001 = vsel %vm9915, %v9844, %v7904
  %v10004 = vsel %vm9915, %v9846, %v7906
  %v10007 = vsel %vm9915, %v9848, %v7908
  %v10010 = vsel %vm9915, %v9850, %v7910
  %v10013 = vsel %vm9915, %v9852, %v7912
  %v10016 = vsel %vm9915, %v9854, %v7914
  %v10019 = vsel %vm9915, %v9856, %v7916
  %v10022 = vsel %vm9915, %v9858, %v7918
  %v10025 = vsel %vm9915, %v9860, %v7920
  %v10028 = vsel %vm9915, %v9862, %v7922
  %v10031 = vsel %vm9915, %v9864, %v7924
  %v10034 = vsel %vm9915, %v9866, %v7926
  %v10037 = vsel %vm9915, %v9868, %v7928
  %v10040 = vsel %vm9915, %v9870, %v7930
  %v10043 = vsel %vm9915, %v9872, %v7932
  %v10046 = vsel %vm9915, %v9874, %v7934
  %v10049 = vsel %vm9915, %v9876, %v7936
  %v10052 = vsel %vm9915, %v9878, %v7938
  %v10055 = vsel %vm9915, %v9880, %v7940
  %v10058 = vsel %vm9915, %v9882, %v7942
  %v10061 = vsel %vm9915, %v9884, %v7944
  %v10064 = vsel %vm9915, %v9886, %v7946
  %v10067 = vsel %vm9915, %v9888, %v7948
  %v10070 = vsel %vm9915, %v9890, %v7950
  %v10073 = vsel %vm9915, %v9892, %v7952
  %v10076 = vsel %vm9915, %v9894, %v7954
  %v10079 = vsel %vm9915, %v9896, %v7956
  %v10082 = vsel %vm9915, %v9898, %v7958
  %v10085 = vsel %vm9915, %v9900, %v7960
  %v10088 = vsel %vm9915, %v9902, %v7962
  %v10091 = vsel %vm9915, %v9904, %v7964
  %v10094 = vsel %vm9915, %v9906, %v7966
  %v10097 = vsel %vm9915, %v9908, %v7968
  %v10100 = vsel %vm9915, %v9910, %v7970
  %v10103 = vsel %vm9915, %v9912, %v7972
  %v10106 = vsel %vm9915, %v9914, %v7974
  %vm10108 = vcmask 31744
  %v10110 = vsel %vm10108, %v7848, %v7977
  %v10112 = vsel %vm10108, %v7850, %v7979
  %v10114 = vsel %vm10108, %v7852, %v7981
  %v10116 = vsel %vm10108, %v7854, %v7983
  %v10118 = vsel %vm10108, %v7856, %v7985
  %v10120 = vsel %vm10108, %v7858, %v7987
  %v10122 = vsel %vm10108, %v7860, %v7989
  %v10124 = vsel %vm10108, %v7862, %v7991
  %v10126 = vsel %vm10108, %v7864, %v7993
  %v10128 = vsel %vm10108, %v7866, %v7995
  %v10130 = vsel %vm10108, %v7868, %v7997
  %v10132 = vsel %vm10108, %v7870, %v7999
  %v10134 = vsel %vm10108, %v7872, %v8001
  %v10136 = vsel %vm10108, %v7874, %v8003
  %v10138 = vsel %vm10108, %v7876, %v8005
  %v10140 = vsel %vm10108, %v7878, %v8007
  %v10142 = vsel %vm10108, %v7880, %v8009
  %v10144 = vsel %vm10108, %v7882, %v8011
  %v10146 = vsel %vm10108, %v7884, %v8013
  %v10148 = vsel %vm10108, %v7886, %v8015
  %v10150 = vsel %vm10108, %v7888, %v8017
  %v10152 = vsel %vm10108, %v7890, %v8019
  %v10154 = vsel %vm10108, %v7892, %v8021
  %v10156 = vsel %vm10108, %v7894, %v8023
  %v10158 = vsel %vm10108, %v7896, %v8025
  %v10160 = vsel %vm10108, %v7898, %v8027
  %v10162 = vsel %vm10108, %v7900, %v8029
  %v10164 = vsel %vm10108, %v7902, %v8031
  %v10166 = vsel %vm10108, %v7904, %v8033
  %v10168 = vsel %vm10108, %v7906, %v8035
  %v10170 = vsel %vm10108, %v7908, %v8037
  %v10172 = vsel %vm10108, %v7910, %v8039
  %v10174 = vsel %vm10108, %v7912, %v8041
  %v10176 = vsel %vm10108, %v7914, %v8043
  %v10178 = vsel %vm10108, %v7916, %v8045
  %v10180 = vsel %vm10108, %v7918, %v8047
  %v10182 = vsel %vm10108, %v7920, %v8049
  %v10184 = vsel %vm10108, %v7922, %v8051
  %v10186 = vsel %vm10108, %v7924, %v8053
  %v10188 = vsel %vm10108, %v7926, %v8055
  %v10190 = vsel %vm10108, %v7928, %v8057
  %v10192 = vsel %vm10108, %v7930, %v8059
  %v10194 = vsel %vm10108, %v7932, %v8061
  %v10196 = vsel %vm10108, %v7934, %v8063
  %v10198 = vsel %vm10108, %v7936, %v8065
  %v10200 = vsel %vm10108, %v7938, %v8067
  %v10202 = vsel %vm10108, %v7940, %v8069
  %v10204 = vsel %vm10108, %v7942, %v8071
  %v10206 = vsel %vm10108, %v7944, %v8073
  %v10208 = vsel %vm10108, %v7946, %v8075
  %v10210 = vsel %vm10108, %v7948, %v8077
  %v10212 = vsel %vm10108, %v7950, %v8079
  %v10214 = vsel %vm10108, %v7952, %v8081
  %v10216 = vsel %vm10108, %v7954, %v8083
  %v10218 = vsel %vm10108, %v7956, %v8085
  %v10220 = vsel %vm10108, %v7958, %v8087
  %v10222 = vsel %vm10108, %v7960, %v8089
  %v10224 = vsel %vm10108, %v7962, %v8091
  %v10226 = vsel %vm10108, %v7964, %v8093
  %v10228 = vsel %vm10108, %v7966, %v8095
  %v10230 = vsel %vm10108, %v7968, %v8097
  %v10232 = vsel %vm10108, %v7970, %v8099
  %v10234 = vsel %vm10108, %v7972, %v8101
  %v10236 = vsel %vm10108, %v7974, %v8103
  %vm10237 = vcmask 195584
  %v10239 = vsel %vm10237, %v10110, %v8106
  %v10241 = vsel %vm10237, %v10112, %v8108
  %v10243 = vsel %vm10237, %v10114, %v8110
  %v10245 = vsel %vm10237, %v10116, %v8112
  %v10247 = vsel %vm10237, %v10118, %v8114
  %v10249 = vsel %vm10237, %v10120, %v8116
  %v10251 = vsel %vm10237, %v10122, %v8118
  %v10253 = vsel %vm10237, %v10124, %v8120
  %v10255 = vsel %vm10237, %v10126, %v8122
  %v10257 = vsel %vm10237, %v10128, %v8124
  %v10259 = vsel %vm10237, %v10130, %v8126
  %v10261 = vsel %vm10237, %v10132, %v8128
  %v10263 = vsel %vm10237, %v10134, %v8130
  %v10265 = vsel %vm10237, %v10136, %v8132
  %v10267 = vsel %vm10237, %v10138, %v8134
  %v10269 = vsel %vm10237, %v10140, %v8136
  %v10271 = vsel %vm10237, %v10142, %v8138
  %v10273 = vsel %vm10237, %v10144, %v8140
  %v10275 = vsel %vm10237, %v10146, %v8142
  %v10277 = vsel %vm10237, %v10148, %v8144
  %v10279 = vsel %vm10237, %v10150, %v8146
  %v10281 = vsel %vm10237, %v10152, %v8148
  %v10283 = vsel %vm10237, %v10154, %v8150
  %v10285 = vsel %vm10237, %v10156, %v8152
  %v10287 = vsel %vm10237, %v10158, %v8154
  %v10289 = vsel %vm10237, %v10160, %v8156
  %v10291 = vsel %vm10237, %v10162, %v8158
  %v10293 = vsel %vm10237, %v10164, %v8160
  %v10295 = vsel %vm10237, %v10166, %v8162
  %v10297 = vsel %vm10237, %v10168, %v8164
  %v10299 = vsel %vm10237, %v10170, %v8166
  %v10301 = vsel %vm10237, %v10172, %v8168
  %v10303 = vsel %vm10237, %v10174, %v8170
  %v10305 = vsel %vm10237, %v10176, %v8172
  %v10307 = vsel %vm10237, %v10178, %v8174
  %v10309 = vsel %vm10237, %v10180, %v8176
  %v10311 = vsel %vm10237, %v10182, %v8178
  %v10313 = vsel %vm10237, %v10184, %v8180
  %v10315 = vsel %vm10237, %v10186, %v8182
  %v10317 = vsel %vm10237, %v10188, %v8184
  %v10319 = vsel %vm10237, %v10190, %v8186
  %v10321 = vsel %vm10237, %v10192, %v8188
  %v10323 = vsel %vm10237, %v10194, %v8190
  %v10325 = vsel %vm10237, %v10196, %v8192
  %v10327 = vsel %vm10237, %v10198, %v8194
  %v10329 = vsel %vm10237, %v10200, %v8196
  %v10331 = vsel %vm10237, %v10202, %v8198
  %v10333 = vsel %vm10237, %v10204, %v8200
  %v10335 = vsel %vm10237, %v10206, %v8202
  %v10337 = vsel %vm10237, %v10208, %v8204
  %v10339 = vsel %vm10237, %v10210, %v8206
  %v10341 = vsel %vm10237, %v10212, %v8208
  %v10343 = vsel %vm10237, %v10214, %v8210
  %v10345 = vsel %vm10237, %v10216, %v8212
  %v10347 = vsel %vm10237, %v10218, %v8214
  %v10349 = vsel %vm10237, %v10220, %v8216
  %v10351 = vsel %vm10237, %v10222, %v8218
  %v10353 = vsel %vm10237, %v10224, %v8220
  %v10355 = vsel %vm10237, %v10226, %v8222
  %v10357 = vsel %vm10237, %v10228, %v8224
  %v10359 = vsel %vm10237, %v10230, %v8226
  %v10361 = vsel %vm10237, %v10232, %v8228
  %v10363 = vsel %vm10237, %v10234, %v8230
  %v10365 = vsel %vm10237, %v10236, %v8232
  %vm10366 = vcmask 359424
  %v10368 = vsel %vm10366, %v10239, %v8242
  %v10370 = vsel %vm10366, %v10241, %v8244
  %v10372 = vsel %vm10366, %v10243, %v8246
  %v10374 = vsel %vm10366, %v10245, %v8248
  %v10376 = vsel %vm10366, %v10247, %v8250
  %v10378 = vsel %vm10366, %v10249, %v8252
  %v10380 = vsel %vm10366, %v10251, %v8254
  %v10382 = vsel %vm10366, %v10253, %v8256
  %v10384 = vsel %vm10366, %v10255, %v8258
  %v10386 = vsel %vm10366, %v10257, %v8260
  %v10388 = vsel %vm10366, %v10259, %v8262
  %v10390 = vsel %vm10366, %v10261, %v8264
  %v10392 = vsel %vm10366, %v10263, %v8266
  %v10394 = vsel %vm10366, %v10265, %v8268
  %v10396 = vsel %vm10366, %v10267, %v8270
  %v10398 = vsel %vm10366, %v10269, %v8272
  %v10400 = vsel %vm10366, %v10271, %v8274
  %v10402 = vsel %vm10366, %v10273, %v8276
  %v10404 = vsel %vm10366, %v10275, %v8278
  %v10406 = vsel %vm10366, %v10277, %v8280
  %v10408 = vsel %vm10366, %v10279, %v8282
  %v10410 = vsel %vm10366, %v10281, %v8284
  %v10412 = vsel %vm10366, %v10283, %v8286
  %v10414 = vsel %vm10366, %v10285, %v8288
  %v10416 = vsel %vm10366, %v10287, %v8290
  %v10418 = vsel %vm10366, %v10289, %v8292
  %v10420 = vsel %vm10366, %v10291, %v8294
  %v10422 = vsel %vm10366, %v10293, %v8296
  %v10424 = vsel %vm10366, %v10295, %v8298
  %v10426 = vsel %vm10366, %v10297, %v8300
  %v10428 = vsel %vm10366, %v10299, %v8302
  %v10430 = vsel %vm10366, %v10301, %v8304
  %v10432 = vsel %vm10366, %v10303, %v8306
  %v10434 = vsel %vm10366, %v10305, %v8308
  %v10436 = vsel %vm10366, %v10307, %v8310
  %v10438 = vsel %vm10366, %v10309, %v8312
  %v10440 = vsel %vm10366, %v10311, %v8314
  %v10442 = vsel %vm10366, %v10313, %v8316
  %v10444 = vsel %vm10366, %v10315, %v8318
  %v10446 = vsel %vm10366, %v10317, %v8320
  %v10448 = vsel %vm10366, %v10319, %v8322
  %v10450 = vsel %vm10366, %v10321, %v8324
  %v10452 = vsel %vm10366, %v10323, %v8326
  %v10454 = vsel %vm10366, %v10325, %v8328
  %v10456 = vsel %vm10366, %v10327, %v8330
  %v10458 = vsel %vm10366, %v10329, %v8332
  %v10460 = vsel %vm10366, %v10331, %v8334
  %v10462 = vsel %vm10366, %v10333, %v8336
  %v10464 = vsel %vm10366, %v10335, %v8338
  %v10466 = vsel %vm10366, %v10337, %v8340
  %v10468 = vsel %vm10366, %v10339, %v8342
  %v10470 = vsel %vm10366, %v10341, %v8344
  %v10472 = vsel %vm10366, %v10343, %v8346
  %v10474 = vsel %vm10366, %v10345, %v8348
  %v10476 = vsel %vm10366, %v10347, %v8350
  %v10478 = vsel %vm10366, %v10349, %v8352
  %v10480 = vsel %vm10366, %v10351, %v8354
  %v10482 = vsel %vm10366, %v10353, %v8356
  %v10484 = vsel %vm10366, %v10355, %v8358
  %v10486 = vsel %vm10366, %v10357, %v8360
  %v10488 = vsel %vm10366, %v10359, %v8362
  %v10490 = vsel %vm10366, %v10361, %v8364
  %v10492 = vsel %vm10366, %v10363, %v8366
  %v10494 = vsel %vm10366, %v10365, %v8368
  %10497 = vrot.lane.b32.xlu0 %v6223, 20
  %v10498 = vpop.permute.xlu0 %10497
  %10499 = vrot.lane.b32.xlu0 %v6235, 20
  %v10500 = vpop.permute.xlu0 %10499
  %10501 = vrot.lane.b32.xlu0 %v6247, 20
  %v10502 = vpop.permute.xlu0 %10501
  %10503 = vrot.lane.b32.xlu0 %v6259, 20
  %v10504 = vpop.permute.xlu0 %10503
  %10505 = vrot.lane.b32.xlu0 %v6271, 20
  %v10506 = vpop.permute.xlu0 %10505
  %10507 = vrot.lane.b32.xlu0 %v6276, 20
  %v10508 = vpop.permute.xlu0 %10507
  %10509 = vrot.lane.b32.xlu0 %v6277, 20
  %v10510 = vpop.permute.xlu0 %10509
  %10511 = vrot.lane.b32.xlu0 %v6278, 20
  %v10512 = vpop.permute.xlu0 %10511
  %10513 = vrot.lane.b32.xlu0 %v6279, 20
  %v10514 = vpop.permute.xlu0 %10513
  %10515 = vrot.lane.b32.xlu0 %v6280, 20
  %v10516 = vpop.permute.xlu0 %10515
  %10517 = vrot.lane.b32.xlu0 %v6281, 20
  %v10518 = vpop.permute.xlu0 %10517
  %10519 = vrot.lane.b32.xlu0 %v6282, 20
  %v10520 = vpop.permute.xlu0 %10519
  %10521 = vrot.lane.b32.xlu0 %v6283, 20
  %v10522 = vpop.permute.xlu0 %10521
  %10523 = vrot.lane.b32.xlu0 %v6288, 20
  %v10524 = vpop.permute.xlu0 %10523
  %10525 = vrot.lane.b32.xlu0 %v6289, 20
  %v10526 = vpop.permute.xlu0 %10525
  %10527 = vrot.lane.b32.xlu0 %v6290, 20
  %v10528 = vpop.permute.xlu0 %10527
  %10529 = vrot.lane.b32.xlu0 %v6291, 20
  %v10530 = vpop.permute.xlu0 %10529
  %10531 = vrot.lane.b32.xlu0 %v6292, 20
  %v10532 = vpop.permute.xlu0 %10531
  %10533 = vrot.lane.b32.xlu0 %v6293, 20
  %v10534 = vpop.permute.xlu0 %10533
  %10535 = vrot.lane.b32.xlu0 %v6294, 20
  %v10536 = vpop.permute.xlu0 %10535
  %10537 = vrot.lane.b32.xlu0 %v6295, 20
  %v10538 = vpop.permute.xlu0 %10537
  %10539 = vrot.lane.b32.xlu0 %v6300, 20
  %v10540 = vpop.permute.xlu0 %10539
  %10541 = vrot.lane.b32.xlu0 %v6301, 20
  %v10542 = vpop.permute.xlu0 %10541
  %10543 = vrot.lane.b32.xlu0 %v6302, 20
  %v10544 = vpop.permute.xlu0 %10543
  %10545 = vrot.lane.b32.xlu0 %v6303, 20
  %v10546 = vpop.permute.xlu0 %10545
  %10547 = vrot.lane.b32.xlu0 %v6304, 20
  %v10548 = vpop.permute.xlu0 %10547
  %10549 = vrot.lane.b32.xlu0 %v6305, 20
  %v10550 = vpop.permute.xlu0 %10549
  %10551 = vrot.lane.b32.xlu0 %v6306, 20
  %v10552 = vpop.permute.xlu0 %10551
  %10553 = vrot.lane.b32.xlu0 %v6307, 20
  %v10554 = vpop.permute.xlu0 %10553
  %10556 = vrot.lane.b32.xlu0 %v6224, 40
  %v10557 = vpop.permute.xlu0 %10556
  %10558 = vrot.lane.b32.xlu0 %v6236, 40
  %v10559 = vpop.permute.xlu0 %10558
  %10560 = vrot.lane.b32.xlu0 %v6248, 40
  %v10561 = vpop.permute.xlu0 %10560
  %10562 = vrot.lane.b32.xlu0 %v6260, 40
  %v10563 = vpop.permute.xlu0 %10562
  %10564 = vrot.lane.b32.xlu0 %v6272, 40
  %v10565 = vpop.permute.xlu0 %10564
  %10566 = vrot.lane.b32.xlu0 %v6277, 40
  %v10567 = vpop.permute.xlu0 %10566
  %10568 = vrot.lane.b32.xlu0 %v6278, 40
  %v10569 = vpop.permute.xlu0 %10568
  %10570 = vrot.lane.b32.xlu0 %v6279, 40
  %v10571 = vpop.permute.xlu0 %10570
  %10572 = vrot.lane.b32.xlu0 %v6280, 40
  %v10573 = vpop.permute.xlu0 %10572
  %10574 = vrot.lane.b32.xlu0 %v6281, 40
  %v10575 = vpop.permute.xlu0 %10574
  %10576 = vrot.lane.b32.xlu0 %v6282, 40
  %v10577 = vpop.permute.xlu0 %10576
  %10578 = vrot.lane.b32.xlu0 %v6283, 40
  %v10579 = vpop.permute.xlu0 %10578
  %10580 = vrot.lane.b32.xlu0 %v6284, 40
  %v10581 = vpop.permute.xlu0 %10580
  %10582 = vrot.lane.b32.xlu0 %v6289, 40
  %v10583 = vpop.permute.xlu0 %10582
  %10584 = vrot.lane.b32.xlu0 %v6290, 40
  %v10585 = vpop.permute.xlu0 %10584
  %10586 = vrot.lane.b32.xlu0 %v6291, 40
  %v10587 = vpop.permute.xlu0 %10586
  %10588 = vrot.lane.b32.xlu0 %v6292, 40
  %v10589 = vpop.permute.xlu0 %10588
  %10590 = vrot.lane.b32.xlu0 %v6293, 40
  %v10591 = vpop.permute.xlu0 %10590
  %10592 = vrot.lane.b32.xlu0 %v6294, 40
  %v10593 = vpop.permute.xlu0 %10592
  %10594 = vrot.lane.b32.xlu0 %v6295, 40
  %v10595 = vpop.permute.xlu0 %10594
  %10596 = vrot.lane.b32.xlu0 %v6296, 40
  %v10597 = vpop.permute.xlu0 %10596
  %10598 = vrot.lane.b32.xlu0 %v6301, 40
  %v10599 = vpop.permute.xlu0 %10598
  %10600 = vrot.lane.b32.xlu0 %v6302, 40
  %v10601 = vpop.permute.xlu0 %10600
  %10602 = vrot.lane.b32.xlu0 %v6303, 40
  %v10603 = vpop.permute.xlu0 %10602
  %10604 = vrot.lane.b32.xlu0 %v6304, 40
  %v10605 = vpop.permute.xlu0 %10604
  %10606 = vrot.lane.b32.xlu0 %v6305, 40
  %v10607 = vpop.permute.xlu0 %10606
  %10608 = vrot.lane.b32.xlu0 %v6306, 40
  %v10609 = vpop.permute.xlu0 %10608
  %10610 = vrot.lane.b32.xlu0 %v6307, 40
  %v10611 = vpop.permute.xlu0 %10610
  %10612 = vrot.lane.b32.xlu0 %v6308, 40
  %v10613 = vpop.permute.xlu0 %10612
  %10615 = vrot.lane.b32.xlu0 %v6225, 60
  %v10616 = vpop.permute.xlu0 %10615
  %10617 = vrot.lane.b32.xlu0 %v6237, 60
  %v10618 = vpop.permute.xlu0 %10617
  %10619 = vrot.lane.b32.xlu0 %v6249, 60
  %v10620 = vpop.permute.xlu0 %10619
  %10621 = vrot.lane.b32.xlu0 %v6261, 60
  %v10622 = vpop.permute.xlu0 %10621
  %10623 = vrot.lane.b32.xlu0 %v6273, 60
  %v10624 = vpop.permute.xlu0 %10623
  %10625 = vrot.lane.b32.xlu0 %v6278, 60
  %v10626 = vpop.permute.xlu0 %10625
  %10627 = vrot.lane.b32.xlu0 %v6279, 60
  %v10628 = vpop.permute.xlu0 %10627
  %10629 = vrot.lane.b32.xlu0 %v6280, 60
  %v10630 = vpop.permute.xlu0 %10629
  %10631 = vrot.lane.b32.xlu0 %v6281, 60
  %v10632 = vpop.permute.xlu0 %10631
  %10633 = vrot.lane.b32.xlu0 %v6282, 60
  %v10634 = vpop.permute.xlu0 %10633
  %10635 = vrot.lane.b32.xlu0 %v6283, 60
  %v10636 = vpop.permute.xlu0 %10635
  %10637 = vrot.lane.b32.xlu0 %v6284, 60
  %v10638 = vpop.permute.xlu0 %10637
  %10639 = vrot.lane.b32.xlu0 %v6285, 60
  %v10640 = vpop.permute.xlu0 %10639
  %10641 = vrot.lane.b32.xlu0 %v6290, 60
  %v10642 = vpop.permute.xlu0 %10641
  %10643 = vrot.lane.b32.xlu0 %v6291, 60
  %v10644 = vpop.permute.xlu0 %10643
  %10645 = vrot.lane.b32.xlu0 %v6292, 60
  %v10646 = vpop.permute.xlu0 %10645
  %10647 = vrot.lane.b32.xlu0 %v6293, 60
  %v10648 = vpop.permute.xlu0 %10647
  %10649 = vrot.lane.b32.xlu0 %v6294, 60
  %v10650 = vpop.permute.xlu0 %10649
  %10651 = vrot.lane.b32.xlu0 %v6295, 60
  %v10652 = vpop.permute.xlu0 %10651
  %10653 = vrot.lane.b32.xlu0 %v6296, 60
  %v10654 = vpop.permute.xlu0 %10653
  %10655 = vrot.lane.b32.xlu0 %v6297, 60
  %v10656 = vpop.permute.xlu0 %10655
  %10657 = vrot.lane.b32.xlu0 %v6302, 60
  %v10658 = vpop.permute.xlu0 %10657
  %10659 = vrot.lane.b32.xlu0 %v6303, 60
  %v10660 = vpop.permute.xlu0 %10659
  %10661 = vrot.lane.b32.xlu0 %v6304, 60
  %v10662 = vpop.permute.xlu0 %10661
  %10663 = vrot.lane.b32.xlu0 %v6305, 60
  %v10664 = vpop.permute.xlu0 %10663
  %10665 = vrot.lane.b32.xlu0 %v6306, 60
  %v10666 = vpop.permute.xlu0 %10665
  %10667 = vrot.lane.b32.xlu0 %v6307, 60
  %v10668 = vpop.permute.xlu0 %10667
  %10669 = vrot.lane.b32.xlu0 %v6308, 60
  %v10670 = vpop.permute.xlu0 %10669
  %10671 = vrot.lane.b32.xlu0 %v6309, 60
  %v10672 = vpop.permute.xlu0 %10671
  %10681 = vrot.lane.b32.xlu0 %v6226, 80
  %v10682 = vpop.permute.xlu0 %10681
  %10683 = vrot.lane.b32.xlu0 %v6227, 80
  %v10684 = vpop.permute.xlu0 %10683
  %10685 = vrot.lane.b32.xlu0 %v6228, 80
  %v10686 = vpop.permute.xlu0 %10685
  %10687 = vrot.lane.b32.xlu0 %v6229, 80
  %v10688 = vpop.permute.xlu0 %10687
  %10689 = vrot.lane.b32.xlu0 %v6238, 80
  %v10690 = vpop.permute.xlu0 %10689
  %10691 = vrot.lane.b32.xlu0 %v6239, 80
  %v10692 = vpop.permute.xlu0 %10691
  %10693 = vrot.lane.b32.xlu0 %v6240, 80
  %v10694 = vpop.permute.xlu0 %10693
  %10695 = vrot.lane.b32.xlu0 %v6241, 80
  %v10696 = vpop.permute.xlu0 %10695
  %10697 = vrot.lane.b32.xlu0 %v6250, 80
  %v10698 = vpop.permute.xlu0 %10697
  %10699 = vrot.lane.b32.xlu0 %v6251, 80
  %v10700 = vpop.permute.xlu0 %10699
  %10701 = vrot.lane.b32.xlu0 %v6252, 80
  %v10702 = vpop.permute.xlu0 %10701
  %10703 = vrot.lane.b32.xlu0 %v6253, 80
  %v10704 = vpop.permute.xlu0 %10703
  %10705 = vrot.lane.b32.xlu0 %v6262, 80
  %v10706 = vpop.permute.xlu0 %10705
  %10707 = vrot.lane.b32.xlu0 %v6263, 80
  %v10708 = vpop.permute.xlu0 %10707
  %10709 = vrot.lane.b32.xlu0 %v6264, 80
  %v10710 = vpop.permute.xlu0 %10709
  %10711 = vrot.lane.b32.xlu0 %v6265, 80
  %v10712 = vpop.permute.xlu0 %10711
  %10713 = vrot.lane.b32.xlu0 %v6274, 80
  %v10714 = vpop.permute.xlu0 %10713
  %10715 = vrot.lane.b32.xlu0 %v6275, 80
  %v10716 = vpop.permute.xlu0 %10715
  %10717 = vrot.lane.b32.xlu0 %v6276, 80
  %v10718 = vpop.permute.xlu0 %10717
  %10719 = vrot.lane.b32.xlu0 %v6277, 80
  %v10720 = vpop.permute.xlu0 %10719
  %10721 = vrot.lane.b32.xlu0 %v6278, 80
  %v10722 = vpop.permute.xlu0 %10721
  %10723 = vrot.lane.b32.xlu0 %v6279, 80
  %v10724 = vpop.permute.xlu0 %10723
  %10725 = vrot.lane.b32.xlu0 %v6280, 80
  %v10726 = vpop.permute.xlu0 %10725
  %10727 = vrot.lane.b32.xlu0 %v6281, 80
  %v10728 = vpop.permute.xlu0 %10727
  %10729 = vrot.lane.b32.xlu0 %v6286, 80
  %v10730 = vpop.permute.xlu0 %10729
  %10731 = vrot.lane.b32.xlu0 %v6287, 80
  %v10732 = vpop.permute.xlu0 %10731
  %10733 = vrot.lane.b32.xlu0 %v6288, 80
  %v10734 = vpop.permute.xlu0 %10733
  %10735 = vrot.lane.b32.xlu0 %v6289, 80
  %v10736 = vpop.permute.xlu0 %10735
  %10737 = vrot.lane.b32.xlu0 %v6290, 80
  %v10738 = vpop.permute.xlu0 %10737
  %10739 = vrot.lane.b32.xlu0 %v6291, 80
  %v10740 = vpop.permute.xlu0 %10739
  %10741 = vrot.lane.b32.xlu0 %v6292, 80
  %v10742 = vpop.permute.xlu0 %10741
  %10743 = vrot.lane.b32.xlu0 %v6293, 80
  %v10744 = vpop.permute.xlu0 %10743
  %10745 = vrot.lane.b32.xlu0 %v6298, 80
  %v10746 = vpop.permute.xlu0 %10745
  %10747 = vrot.lane.b32.xlu0 %v6299, 80
  %v10748 = vpop.permute.xlu0 %10747
  %10749 = vrot.lane.b32.xlu0 %v6300, 80
  %v10750 = vpop.permute.xlu0 %10749
  %10751 = vrot.lane.b32.xlu0 %v6301, 80
  %v10752 = vpop.permute.xlu0 %10751
  %10753 = vrot.lane.b32.xlu0 %v6302, 80
  %v10754 = vpop.permute.xlu0 %10753
  %10755 = vrot.lane.b32.xlu0 %v6303, 80
  %v10756 = vpop.permute.xlu0 %10755
  %10757 = vrot.lane.b32.xlu0 %v6304, 80
  %v10758 = vpop.permute.xlu0 %10757
  %10759 = vrot.lane.b32.xlu0 %v6305, 80
  %v10760 = vpop.permute.xlu0 %10759
  %10761 = vrot.lane.b32.xlu0 %v6310, 80
  %v10762 = vpop.permute.xlu0 %10761
  %10763 = vrot.lane.b32.xlu0 %v6311, 80
  %v10764 = vpop.permute.xlu0 %10763
  %10765 = vrot.lane.b32.xlu0 %v6312, 80
  %v10766 = vpop.permute.xlu0 %10765
  %10767 = vrot.lane.b32.xlu0 %v6313, 80
  %v10768 = vpop.permute.xlu0 %10767
  %10769 = vrot.lane.b32.xlu0 %v6314, 80
  %v10770 = vpop.permute.xlu0 %10769
  %10771 = vrot.lane.b32.xlu0 %v6315, 80
  %v10772 = vpop.permute.xlu0 %10771
  %10773 = vrot.lane.b32.xlu0 %v6316, 80
  %v10774 = vpop.permute.xlu0 %10773
  %10775 = vrot.lane.b32.xlu0 %v6317, 80
  %v10776 = vpop.permute.xlu0 %10775
  %10778 = vrot.lane.b32.xlu0 %v6234, 100
  %v10779 = vpop.permute.xlu0 %10778
  %10780 = vrot.lane.b32.xlu0 %v6246, 100
  %v10781 = vpop.permute.xlu0 %10780
  %10782 = vrot.lane.b32.xlu0 %v6258, 100
  %v10783 = vpop.permute.xlu0 %10782
  %10784 = vrot.lane.b32.xlu0 %v6270, 100
  %v10785 = vpop.permute.xlu0 %10784
  %10786 = vrot.lane.b32.xlu0 %v6282, 100
  %v10787 = vpop.permute.xlu0 %10786
  %10788 = vrot.lane.b32.xlu0 %v6287, 100
  %v10789 = vpop.permute.xlu0 %10788
  %10790 = vrot.lane.b32.xlu0 %v6288, 100
  %v10791 = vpop.permute.xlu0 %10790
  %10792 = vrot.lane.b32.xlu0 %v6289, 100
  %v10793 = vpop.permute.xlu0 %10792
  %10794 = vrot.lane.b32.xlu0 %v6290, 100
  %v10795 = vpop.permute.xlu0 %10794
  %10796 = vrot.lane.b32.xlu0 %v6291, 100
  %v10797 = vpop.permute.xlu0 %10796
  %10798 = vrot.lane.b32.xlu0 %v6292, 100
  %v10799 = vpop.permute.xlu0 %10798
  %10800 = vrot.lane.b32.xlu0 %v6293, 100
  %v10801 = vpop.permute.xlu0 %10800
  %10802 = vrot.lane.b32.xlu0 %v6294, 100
  %v10803 = vpop.permute.xlu0 %10802
  %10804 = vrot.lane.b32.xlu0 %v6299, 100
  %v10805 = vpop.permute.xlu0 %10804
  %10806 = vrot.lane.b32.xlu0 %v6300, 100
  %v10807 = vpop.permute.xlu0 %10806
  %10808 = vrot.lane.b32.xlu0 %v6301, 100
  %v10809 = vpop.permute.xlu0 %10808
  %10810 = vrot.lane.b32.xlu0 %v6302, 100
  %v10811 = vpop.permute.xlu0 %10810
  %10812 = vrot.lane.b32.xlu0 %v6303, 100
  %v10813 = vpop.permute.xlu0 %10812
  %10814 = vrot.lane.b32.xlu0 %v6304, 100
  %v10815 = vpop.permute.xlu0 %10814
  %10816 = vrot.lane.b32.xlu0 %v6305, 100
  %v10817 = vpop.permute.xlu0 %10816
  %10818 = vrot.lane.b32.xlu0 %v6306, 100
  %v10819 = vpop.permute.xlu0 %10818
  %10820 = vrot.lane.b32.xlu0 %v6311, 100
  %v10821 = vpop.permute.xlu0 %10820
  %10822 = vrot.lane.b32.xlu0 %v6312, 100
  %v10823 = vpop.permute.xlu0 %10822
  %10824 = vrot.lane.b32.xlu0 %v6313, 100
  %v10825 = vpop.permute.xlu0 %10824
  %10826 = vrot.lane.b32.xlu0 %v6314, 100
  %v10827 = vpop.permute.xlu0 %10826
  %10828 = vrot.lane.b32.xlu0 %v6315, 100
  %v10829 = vpop.permute.xlu0 %10828
  %10830 = vrot.lane.b32.xlu0 %v6316, 100
  %v10831 = vpop.permute.xlu0 %10830
  %10832 = vrot.lane.b32.xlu0 %v6317, 100
  %v10833 = vpop.permute.xlu0 %10832
  %10834 = vrot.lane.b32.xlu0 %v6318, 100
  %v10835 = vpop.permute.xlu0 %10834
  %10837 = vrot.lane.b32.xlu0 %v6235, 120
  %v10838 = vpop.permute.xlu0 %10837
  %10839 = vrot.lane.b32.xlu0 %v6247, 120
  %v10840 = vpop.permute.xlu0 %10839
  %10841 = vrot.lane.b32.xlu0 %v6259, 120
  %v10842 = vpop.permute.xlu0 %10841
  %10843 = vrot.lane.b32.xlu0 %v6271, 120
  %v10844 = vpop.permute.xlu0 %10843
  %10845 = vrot.lane.b32.xlu0 %v6283, 120
  %v10846 = vpop.permute.xlu0 %10845
  %10847 = vrot.lane.b32.xlu0 %v6288, 120
  %v10848 = vpop.permute.xlu0 %10847
  %10849 = vrot.lane.b32.xlu0 %v6289, 120
  %v10850 = vpop.permute.xlu0 %10849
  %10851 = vrot.lane.b32.xlu0 %v6290, 120
  %v10852 = vpop.permute.xlu0 %10851
  %10853 = vrot.lane.b32.xlu0 %v6291, 120
  %v10854 = vpop.permute.xlu0 %10853
  %10855 = vrot.lane.b32.xlu0 %v6292, 120
  %v10856 = vpop.permute.xlu0 %10855
  %10857 = vrot.lane.b32.xlu0 %v6293, 120
  %v10858 = vpop.permute.xlu0 %10857
  %10859 = vrot.lane.b32.xlu0 %v6294, 120
  %v10860 = vpop.permute.xlu0 %10859
  %10861 = vrot.lane.b32.xlu0 %v6295, 120
  %v10862 = vpop.permute.xlu0 %10861
  %10863 = vrot.lane.b32.xlu0 %v6300, 120
  %v10864 = vpop.permute.xlu0 %10863
  %10865 = vrot.lane.b32.xlu0 %v6301, 120
  %v10866 = vpop.permute.xlu0 %10865
  %10867 = vrot.lane.b32.xlu0 %v6302, 120
  %v10868 = vpop.permute.xlu0 %10867
  %10869 = vrot.lane.b32.xlu0 %v6303, 120
  %v10870 = vpop.permute.xlu0 %10869
  %10871 = vrot.lane.b32.xlu0 %v6304, 120
  %v10872 = vpop.permute.xlu0 %10871
  %10873 = vrot.lane.b32.xlu0 %v6305, 120
  %v10874 = vpop.permute.xlu0 %10873
  %10875 = vrot.lane.b32.xlu0 %v6306, 120
  %v10876 = vpop.permute.xlu0 %10875
  %10877 = vrot.lane.b32.xlu0 %v6307, 120
  %v10878 = vpop.permute.xlu0 %10877
  %10879 = vrot.lane.b32.xlu0 %v6312, 120
  %v10880 = vpop.permute.xlu0 %10879
  %10881 = vrot.lane.b32.xlu0 %v6313, 120
  %v10882 = vpop.permute.xlu0 %10881
  %10883 = vrot.lane.b32.xlu0 %v6314, 120
  %v10884 = vpop.permute.xlu0 %10883
  %10885 = vrot.lane.b32.xlu0 %v6315, 120
  %v10886 = vpop.permute.xlu0 %10885
  %10887 = vrot.lane.b32.xlu0 %v6316, 120
  %v10888 = vpop.permute.xlu0 %10887
  %10889 = vrot.lane.b32.xlu0 %v6317, 120
  %v10890 = vpop.permute.xlu0 %10889
  %10891 = vrot.lane.b32.xlu0 %v6318, 120
  %v10892 = vpop.permute.xlu0 %10891
  %10893 = vrot.lane.b32.xlu0 %v6319, 120
  %v10894 = vpop.permute.xlu0 %10893
  %10896 = vrot.lane.b32.xlu0 %v6236, 12
  %v10897 = vpop.permute.xlu0 %10896
  %10898 = vrot.lane.b32.xlu0 %v6248, 12
  %v10899 = vpop.permute.xlu0 %10898
  %10900 = vrot.lane.b32.xlu0 %v6260, 12
  %v10901 = vpop.permute.xlu0 %10900
  %10902 = vrot.lane.b32.xlu0 %v6272, 12
  %v10903 = vpop.permute.xlu0 %10902
  %10904 = vrot.lane.b32.xlu0 %v6284, 12
  %v10905 = vpop.permute.xlu0 %10904
  %10906 = vrot.lane.b32.xlu0 %v6289, 12
  %v10907 = vpop.permute.xlu0 %10906
  %10908 = vrot.lane.b32.xlu0 %v6290, 12
  %v10909 = vpop.permute.xlu0 %10908
  %10910 = vrot.lane.b32.xlu0 %v6291, 12
  %v10911 = vpop.permute.xlu0 %10910
  %10912 = vrot.lane.b32.xlu0 %v6292, 12
  %v10913 = vpop.permute.xlu0 %10912
  %10914 = vrot.lane.b32.xlu0 %v6293, 12
  %v10915 = vpop.permute.xlu0 %10914
  %10916 = vrot.lane.b32.xlu0 %v6294, 12
  %v10917 = vpop.permute.xlu0 %10916
  %10918 = vrot.lane.b32.xlu0 %v6295, 12
  %v10919 = vpop.permute.xlu0 %10918
  %10920 = vrot.lane.b32.xlu0 %v6296, 12
  %v10921 = vpop.permute.xlu0 %10920
  %10922 = vrot.lane.b32.xlu0 %v6301, 12
  %v10923 = vpop.permute.xlu0 %10922
  %10924 = vrot.lane.b32.xlu0 %v6302, 12
  %v10925 = vpop.permute.xlu0 %10924
  %10926 = vrot.lane.b32.xlu0 %v6303, 12
  %v10927 = vpop.permute.xlu0 %10926
  %10928 = vrot.lane.b32.xlu0 %v6304, 12
  %v10929 = vpop.permute.xlu0 %10928
  %10930 = vrot.lane.b32.xlu0 %v6305, 12
  %v10931 = vpop.permute.xlu0 %10930
  %10932 = vrot.lane.b32.xlu0 %v6306, 12
  %v10933 = vpop.permute.xlu0 %10932
  %10934 = vrot.lane.b32.xlu0 %v6307, 12
  %v10935 = vpop.permute.xlu0 %10934
  %10936 = vrot.lane.b32.xlu0 %v6308, 12
  %v10937 = vpop.permute.xlu0 %10936
  %10938 = vrot.lane.b32.xlu0 %v6313, 12
  %v10939 = vpop.permute.xlu0 %10938
  %10940 = vrot.lane.b32.xlu0 %v6314, 12
  %v10941 = vpop.permute.xlu0 %10940
  %10942 = vrot.lane.b32.xlu0 %v6315, 12
  %v10943 = vpop.permute.xlu0 %10942
  %10944 = vrot.lane.b32.xlu0 %v6316, 12
  %v10945 = vpop.permute.xlu0 %10944
  %10946 = vrot.lane.b32.xlu0 %v6317, 12
  %v10947 = vpop.permute.xlu0 %10946
  %10948 = vrot.lane.b32.xlu0 %v6318, 12
  %v10949 = vpop.permute.xlu0 %10948
  %10950 = vrot.lane.b32.xlu0 %v6319, 12
  %v10951 = vpop.permute.xlu0 %10950
  %10952 = vrot.lane.b32.xlu0 %v6320, 12
  %v10953 = vpop.permute.xlu0 %10952
  %10955 = vrot.lane.b32.xlu0 %v6237, 32
  %v10956 = vpop.permute.xlu0 %10955
  %10957 = vrot.lane.b32.xlu0 %v6249, 32
  %v10958 = vpop.permute.xlu0 %10957
  %10959 = vrot.lane.b32.xlu0 %v6261, 32
  %v10960 = vpop.permute.xlu0 %10959
  %10961 = vrot.lane.b32.xlu0 %v6273, 32
  %v10962 = vpop.permute.xlu0 %10961
  %10963 = vrot.lane.b32.xlu0 %v6285, 32
  %v10964 = vpop.permute.xlu0 %10963
  %10965 = vrot.lane.b32.xlu0 %v6290, 32
  %v10966 = vpop.permute.xlu0 %10965
  %10967 = vrot.lane.b32.xlu0 %v6291, 32
  %v10968 = vpop.permute.xlu0 %10967
  %10969 = vrot.lane.b32.xlu0 %v6292, 32
  %v10970 = vpop.permute.xlu0 %10969
  %10971 = vrot.lane.b32.xlu0 %v6293, 32
  %v10972 = vpop.permute.xlu0 %10971
  %10973 = vrot.lane.b32.xlu0 %v6294, 32
  %v10974 = vpop.permute.xlu0 %10973
  %10975 = vrot.lane.b32.xlu0 %v6295, 32
  %v10976 = vpop.permute.xlu0 %10975
  %10977 = vrot.lane.b32.xlu0 %v6296, 32
  %v10978 = vpop.permute.xlu0 %10977
  %10979 = vrot.lane.b32.xlu0 %v6297, 32
  %v10980 = vpop.permute.xlu0 %10979
  %10981 = vrot.lane.b32.xlu0 %v6302, 32
  %v10982 = vpop.permute.xlu0 %10981
  %10983 = vrot.lane.b32.xlu0 %v6303, 32
  %v10984 = vpop.permute.xlu0 %10983
  %10985 = vrot.lane.b32.xlu0 %v6304, 32
  %v10986 = vpop.permute.xlu0 %10985
  %10987 = vrot.lane.b32.xlu0 %v6305, 32
  %v10988 = vpop.permute.xlu0 %10987
  %10989 = vrot.lane.b32.xlu0 %v6306, 32
  %v10990 = vpop.permute.xlu0 %10989
  %10991 = vrot.lane.b32.xlu0 %v6307, 32
  %v10992 = vpop.permute.xlu0 %10991
  %10993 = vrot.lane.b32.xlu0 %v6308, 32
  %v10994 = vpop.permute.xlu0 %10993
  %10995 = vrot.lane.b32.xlu0 %v6309, 32
  %v10996 = vpop.permute.xlu0 %10995
  %10997 = vrot.lane.b32.xlu0 %v6314, 32
  %v10998 = vpop.permute.xlu0 %10997
  %10999 = vrot.lane.b32.xlu0 %v6315, 32
  %v11000 = vpop.permute.xlu0 %10999
  %11001 = vrot.lane.b32.xlu0 %v6316, 32
  %v11002 = vpop.permute.xlu0 %11001
  %11003 = vrot.lane.b32.xlu0 %v6317, 32
  %v11004 = vpop.permute.xlu0 %11003
  %11005 = vrot.lane.b32.xlu0 %v6318, 32
  %v11006 = vpop.permute.xlu0 %11005
  %11007 = vrot.lane.b32.xlu0 %v6319, 32
  %v11008 = vpop.permute.xlu0 %11007
  %11009 = vrot.lane.b32.xlu0 %v6320, 32
  %v11010 = vpop.permute.xlu0 %11009
  %11011 = vrot.lane.b32.xlu0 %v6321, 32
  %v11012 = vpop.permute.xlu0 %11011
  %v11015 = vsel %vm8369, %v6222, %v10498
  %v11018 = vsel %vm8369, %v6234, %v10500
  %v11021 = vsel %vm8369, %v6246, %v10502
  %v11024 = vsel %vm8369, %v6258, %v10504
  %v11027 = vsel %vm8369, %v6270, %v10506
  %v11030 = vsel %vm8369, %v6275, %v10508
  %v11033 = vsel %vm8369, %v6276, %v10510
  %v11036 = vsel %vm8369, %v6277, %v10512
  %v11039 = vsel %vm8369, %v6278, %v10514
  %v11042 = vsel %vm8369, %v6279, %v10516
  %v11045 = vsel %vm8369, %v6280, %v10518
  %v11048 = vsel %vm8369, %v6281, %v10520
  %v11051 = vsel %vm8369, %v6282, %v10522
  %v11054 = vsel %vm8369, %v6287, %v10524
  %v11057 = vsel %vm8369, %v6288, %v10526
  %v11060 = vsel %vm8369, %v6289, %v10528
  %v11063 = vsel %vm8369, %v6290, %v10530
  %v11066 = vsel %vm8369, %v6291, %v10532
  %v11069 = vsel %vm8369, %v6292, %v10534
  %v11072 = vsel %vm8369, %v6293, %v10536
  %v11075 = vsel %vm8369, %v6294, %v10538
  %v11078 = vsel %vm8369, %v6299, %v10540
  %v11081 = vsel %vm8369, %v6300, %v10542
  %v11084 = vsel %vm8369, %v6301, %v10544
  %v11087 = vsel %vm8369, %v6302, %v10546
  %v11090 = vsel %vm8369, %v6303, %v10548
  %v11093 = vsel %vm8369, %v6304, %v10550
  %v11096 = vsel %vm8369, %v6305, %v10552
  %v11099 = vsel %vm8369, %v6306, %v10554
  %v11101 = vsel %vm8562, %v11015, %v10557
  %v11103 = vsel %vm8562, %v11018, %v10559
  %v11105 = vsel %vm8562, %v11021, %v10561
  %v11107 = vsel %vm8562, %v11024, %v10563
  %v11109 = vsel %vm8562, %v11027, %v10565
  %v11111 = vsel %vm8562, %v11030, %v10567
  %v11113 = vsel %vm8562, %v11033, %v10569
  %v11115 = vsel %vm8562, %v11036, %v10571
  %v11117 = vsel %vm8562, %v11039, %v10573
  %v11119 = vsel %vm8562, %v11042, %v10575
  %v11121 = vsel %vm8562, %v11045, %v10577
  %v11123 = vsel %vm8562, %v11048, %v10579
  %v11125 = vsel %vm8562, %v11051, %v10581
  %v11127 = vsel %vm8562, %v11054, %v10583
  %v11129 = vsel %vm8562, %v11057, %v10585
  %v11131 = vsel %vm8562, %v11060, %v10587
  %v11133 = vsel %vm8562, %v11063, %v10589
  %v11135 = vsel %vm8562, %v11066, %v10591
  %v11137 = vsel %vm8562, %v11069, %v10593
  %v11139 = vsel %vm8562, %v11072, %v10595
  %v11141 = vsel %vm8562, %v11075, %v10597
  %v11143 = vsel %vm8562, %v11078, %v10599
  %v11145 = vsel %vm8562, %v11081, %v10601
  %v11147 = vsel %vm8562, %v11084, %v10603
  %v11149 = vsel %vm8562, %v11087, %v10605
  %v11151 = vsel %vm8562, %v11090, %v10607
  %v11153 = vsel %vm8562, %v11093, %v10609
  %v11155 = vsel %vm8562, %v11096, %v10611
  %v11157 = vsel %vm8562, %v11099, %v10613
  %v11159 = vsel %vm8691, %v11101, %v10616
  %v11161 = vsel %vm8691, %v11103, %v10618
  %v11163 = vsel %vm8691, %v11105, %v10620
  %v11165 = vsel %vm8691, %v11107, %v10622
  %v11167 = vsel %vm8691, %v11109, %v10624
  %v11169 = vsel %vm8691, %v11111, %v10626
  %v11171 = vsel %vm8691, %v11113, %v10628
  %v11173 = vsel %vm8691, %v11115, %v10630
  %v11175 = vsel %vm8691, %v11117, %v10632
  %v11177 = vsel %vm8691, %v11119, %v10634
  %v11179 = vsel %vm8691, %v11121, %v10636
  %v11181 = vsel %vm8691, %v11123, %v10638
  %v11183 = vsel %vm8691, %v11125, %v10640
  %v11185 = vsel %vm8691, %v11127, %v10642
  %v11187 = vsel %vm8691, %v11129, %v10644
  %v11189 = vsel %vm8691, %v11131, %v10646
  %v11191 = vsel %vm8691, %v11133, %v10648
  %v11193 = vsel %vm8691, %v11135, %v10650
  %v11195 = vsel %vm8691, %v11137, %v10652
  %v11197 = vsel %vm8691, %v11139, %v10654
  %v11199 = vsel %vm8691, %v11141, %v10656
  %v11201 = vsel %vm8691, %v11143, %v10658
  %v11203 = vsel %vm8691, %v11145, %v10660
  %v11205 = vsel %vm8691, %v11147, %v10662
  %v11207 = vsel %vm8691, %v11149, %v10664
  %v11209 = vsel %vm8691, %v11151, %v10666
  %v11211 = vsel %vm8691, %v11153, %v10668
  %v11213 = vsel %vm8691, %v11155, %v10670
  %v11215 = vsel %vm8691, %v11157, %v10672
  %v11217 = vsel %vm8820, %v8743, %v10682
  %v11219 = vsel %vm8820, %v8745, %v10684
  %v11221 = vsel %vm8820, %v8747, %v10686
  %v11223 = vsel %vm8820, %v8749, %v10688
  %v11224 = vsel %vm8820, %v8751, %v6859
  %v11225 = vsel %vm8820, %v8753, %v6861
  %v11226 = vsel %vm8820, %v8755, %v6863
  %v11227 = vsel %vm8820, %v11159, %v6865
  %v11229 = vsel %vm8820, %v8759, %v10690
  %v11231 = vsel %vm8820, %v8761, %v10692
  %v11233 = vsel %vm8820, %v8763, %v10694
  %v11235 = vsel %vm8820, %v8765, %v10696
  %v11236 = vsel %vm8820, %v8767, %v6875
  %v11237 = vsel %vm8820, %v8769, %v6877
  %v11238 = vsel %vm8820, %v8771, %v6879
  %v11239 = vsel %vm8820, %v11161, %v6881
  %v11241 = vsel %vm8820, %v8775, %v10698
  %v11243 = vsel %vm8820, %v8777, %v10700
  %v11245 = vsel %vm8820, %v8779, %v10702
  %v11247 = vsel %vm8820, %v8781, %v10704
  %v11248 = vsel %vm8820, %v8783, %v6891
  %v11249 = vsel %vm8820, %v8785, %v6893
  %v11250 = vsel %vm8820, %v8787, %v6895
  %v11251 = vsel %vm8820, %v11163, %v6897
  %v11253 = vsel %vm8820, %v8791, %v10706
  %v11255 = vsel %vm8820, %v8793, %v10708
  %v11257 = vsel %vm8820, %v8795, %v10710
  %v11259 = vsel %vm8820, %v8797, %v10712
  %v11260 = vsel %vm8820, %v8799, %v6907
  %v11261 = vsel %vm8820, %v8801, %v6909
  %v11262 = vsel %vm8820, %v8803, %v6911
  %v11263 = vsel %vm8820, %v11165, %v6913
  %v11265 = vsel %vm8820, %v8807, %v10714
  %v11267 = vsel %vm8820, %v8809, %v10716
  %v11269 = vsel %vm8820, %v8811, %v10718
  %v11271 = vsel %vm8820, %v8813, %v10720
  %v11273 = vsel %vm8820, %v8815, %v10722
  %v11275 = vsel %vm8820, %v8817, %v10724
  %v11277 = vsel %vm8820, %v8819, %v10726
  %v11279 = vsel %vm8820, %v11167, %v10728
  %v11281 = vsel %vm8820, %v11169, %v10730
  %v11283 = vsel %vm8820, %v11171, %v10732
  %v11285 = vsel %vm8820, %v11173, %v10734
  %v11287 = vsel %vm8820, %v11175, %v10736
  %v11289 = vsel %vm8820, %v11177, %v10738
  %v11291 = vsel %vm8820, %v11179, %v10740
  %v11293 = vsel %vm8820, %v11181, %v10742
  %v11295 = vsel %vm8820, %v11183, %v10744
  %v11297 = vsel %vm8820, %v11185, %v10746
  %v11299 = vsel %vm8820, %v11187, %v10748
  %v11301 = vsel %vm8820, %v11189, %v10750
  %v11303 = vsel %vm8820, %v11191, %v10752
  %v11305 = vsel %vm8820, %v11193, %v10754
  %v11307 = vsel %vm8820, %v11195, %v10756
  %v11309 = vsel %vm8820, %v11197, %v10758
  %v11311 = vsel %vm8820, %v11199, %v10760
  %v11313 = vsel %vm8820, %v11201, %v10762
  %v11315 = vsel %vm8820, %v11203, %v10764
  %v11317 = vsel %vm8820, %v11205, %v10766
  %v11319 = vsel %vm8820, %v11207, %v10768
  %v11321 = vsel %vm8820, %v11209, %v10770
  %v11323 = vsel %vm8820, %v11211, %v10772
  %v11325 = vsel %vm8820, %v11213, %v10774
  %v11327 = vsel %vm8820, %v11215, %v10776
  %v11328 = vsel %vm1093, %v11217, %v6988
  %v11329 = vsel %vm1093, %v11219, %v6990
  %v11330 = vsel %vm1093, %v11221, %v6992
  %v11331 = vsel %vm1093, %v11223, %v6994
  %v11332 = vsel %vm1093, %v11224, %v6996
  %v11333 = vsel %vm1093, %v11225, %v6998
  %v11334 = vsel %vm1093, %v11226, %v7000
  %v11336 = vsel %vm1093, %v11227, %v10779
  %v11337 = vsel %vm1093, %v11229, %v7004
  %v11338 = vsel %vm1093, %v11231, %v7006
  %v11339 = vsel %vm1093, %v11233, %v7008
  %v11340 = vsel %vm1093, %v11235, %v7010
  %v11341 = vsel %vm1093, %v11236, %v7012
  %v11342 = vsel %vm1093, %v11237, %v7014
  %v11343 = vsel %vm1093, %v11238, %v7016
  %v11345 = vsel %vm1093, %v11239, %v10781
  %v11346 = vsel %vm1093, %v11241, %v7020
  %v11347 = vsel %vm1093, %v11243, %v7022
  %v11348 = vsel %vm1093, %v11245, %v7024
  %v11349 = vsel %vm1093, %v11247, %v7026
  %v11350 = vsel %vm1093, %v11248, %v7028
  %v11351 = vsel %vm1093, %v11249, %v7030
  %v11352 = vsel %vm1093, %v11250, %v7032
  %v11354 = vsel %vm1093, %v11251, %v10783
  %v11355 = vsel %vm1093, %v11253, %v7036
  %v11356 = vsel %vm1093, %v11255, %v7038
  %v11357 = vsel %vm1093, %v11257, %v7040
  %v11358 = vsel %vm1093, %v11259, %v7042
  %v11359 = vsel %vm1093, %v11260, %v7044
  %v11360 = vsel %vm1093, %v11261, %v7046
  %v11361 = vsel %vm1093, %v11262, %v7048
  %v11363 = vsel %vm1093, %v11263, %v10785
  %v11364 = vsel %vm1093, %v11265, %v7052
  %v11365 = vsel %vm1093, %v11267, %v7054
  %v11366 = vsel %vm1093, %v11269, %v7056
  %v11367 = vsel %vm1093, %v11271, %v7058
  %v11368 = vsel %vm1093, %v11273, %v7060
  %v11369 = vsel %vm1093, %v11275, %v7062
  %v11370 = vsel %vm1093, %v11277, %v7064
  %v11372 = vsel %vm1093, %v11279, %v10787
  %v11374 = vsel %vm1093, %v11281, %v10789
  %v11376 = vsel %vm1093, %v11283, %v10791
  %v11378 = vsel %vm1093, %v11285, %v10793
  %v11380 = vsel %vm1093, %v11287, %v10795
  %v11382 = vsel %vm1093, %v11289, %v10797
  %v11384 = vsel %vm1093, %v11291, %v10799
  %v11386 = vsel %vm1093, %v11293, %v10801
  %v11388 = vsel %vm1093, %v11295, %v10803
  %v11390 = vsel %vm1093, %v11297, %v10805
  %v11392 = vsel %vm1093, %v11299, %v10807
  %v11394 = vsel %vm1093, %v11301, %v10809
  %v11396 = vsel %vm1093, %v11303, %v10811
  %v11398 = vsel %vm1093, %v11305, %v10813
  %v11400 = vsel %vm1093, %v11307, %v10815
  %v11402 = vsel %vm1093, %v11309, %v10817
  %v11404 = vsel %vm1093, %v11311, %v10819
  %v11406 = vsel %vm1093, %v11313, %v10821
  %v11408 = vsel %vm1093, %v11315, %v10823
  %v11410 = vsel %vm1093, %v11317, %v10825
  %v11412 = vsel %vm1093, %v11319, %v10827
  %v11414 = vsel %vm1093, %v11321, %v10829
  %v11416 = vsel %vm1093, %v11323, %v10831
  %v11418 = vsel %vm1093, %v11325, %v10833
  %v11420 = vsel %vm1093, %v11327, %v10835
  %v11421 = vsel %vm9077, %v11328, %v7117
  %v11422 = vsel %vm9077, %v11329, %v7119
  %v11423 = vsel %vm9077, %v11330, %v7121
  %v11424 = vsel %vm9077, %v11331, %v7123
  %v11425 = vsel %vm9077, %v11332, %v7125
  %v11426 = vsel %vm9077, %v11333, %v7127
  %v11427 = vsel %vm9077, %v11334, %v7129
  %v11429 = vsel %vm9077, %v11336, %v10838
  %v11430 = vsel %vm9077, %v11337, %v7133
  %v11431 = vsel %vm9077, %v11338, %v7135
  %v11432 = vsel %vm9077, %v11339, %v7137
  %v11433 = vsel %vm9077, %v11340, %v7139
  %v11434 = vsel %vm9077, %v11341, %v7141
  %v11435 = vsel %vm9077, %v11342, %v7143
  %v11436 = vsel %vm9077, %v11343, %v7145
  %v11438 = vsel %vm9077, %v11345, %v10840
  %v11439 = vsel %vm9077, %v11346, %v7149
  %v11440 = vsel %vm9077, %v11347, %v7151
  %v11441 = vsel %vm9077, %v11348, %v7153
  %v11442 = vsel %vm9077, %v11349, %v7155
  %v11443 = vsel %vm9077, %v11350, %v7157
  %v11444 = vsel %vm9077, %v11351, %v7159
  %v11445 = vsel %vm9077, %v11352, %v7161
  %v11447 = vsel %vm9077, %v11354, %v10842
  %v11448 = vsel %vm9077, %v11355, %v7165
  %v11449 = vsel %vm9077, %v11356, %v7167
  %v11450 = vsel %vm9077, %v11357, %v7169
  %v11451 = vsel %vm9077, %v11358, %v7171
  %v11452 = vsel %vm9077, %v11359, %v7173
  %v11453 = vsel %vm9077, %v11360, %v7175
  %v11454 = vsel %vm9077, %v11361, %v7177
  %v11456 = vsel %vm9077, %v11363, %v10844
  %v11457 = vsel %vm9077, %v11364, %v7181
  %v11458 = vsel %vm9077, %v11365, %v7183
  %v11459 = vsel %vm9077, %v11366, %v7185
  %v11460 = vsel %vm9077, %v11367, %v7187
  %v11461 = vsel %vm9077, %v11368, %v7189
  %v11462 = vsel %vm9077, %v11369, %v7191
  %v11463 = vsel %vm9077, %v11370, %v7193
  %v11465 = vsel %vm9077, %v11372, %v10846
  %v11467 = vsel %vm9077, %v11374, %v10848
  %v11469 = vsel %vm9077, %v11376, %v10850
  %v11471 = vsel %vm9077, %v11378, %v10852
  %v11473 = vsel %vm9077, %v11380, %v10854
  %v11475 = vsel %vm9077, %v11382, %v10856
  %v11477 = vsel %vm9077, %v11384, %v10858
  %v11479 = vsel %vm9077, %v11386, %v10860
  %v11481 = vsel %vm9077, %v11388, %v10862
  %v11483 = vsel %vm9077, %v11390, %v10864
  %v11485 = vsel %vm9077, %v11392, %v10866
  %v11487 = vsel %vm9077, %v11394, %v10868
  %v11489 = vsel %vm9077, %v11396, %v10870
  %v11491 = vsel %vm9077, %v11398, %v10872
  %v11493 = vsel %vm9077, %v11400, %v10874
  %v11495 = vsel %vm9077, %v11402, %v10876
  %v11497 = vsel %vm9077, %v11404, %v10878
  %v11499 = vsel %vm9077, %v11406, %v10880
  %v11501 = vsel %vm9077, %v11408, %v10882
  %v11503 = vsel %vm9077, %v11410, %v10884
  %v11505 = vsel %vm9077, %v11412, %v10886
  %v11507 = vsel %vm9077, %v11414, %v10888
  %v11509 = vsel %vm9077, %v11416, %v10890
  %v11511 = vsel %vm9077, %v11418, %v10892
  %v11513 = vsel %vm9077, %v11420, %v10894
  %v11515 = vsel %vm9270, %v10838, %v10897
  %v11517 = vsel %vm9270, %v10840, %v10899
  %v11519 = vsel %vm9270, %v10842, %v10901
  %v11521 = vsel %vm9270, %v10844, %v10903
  %v11523 = vsel %vm9270, %v10846, %v10905
  %v11525 = vsel %vm9270, %v10848, %v10907
  %v11527 = vsel %vm9270, %v10850, %v10909
  %v11529 = vsel %vm9270, %v10852, %v10911
  %v11531 = vsel %vm9270, %v10854, %v10913
  %v11533 = vsel %vm9270, %v10856, %v10915
  %v11535 = vsel %vm9270, %v10858, %v10917
  %v11537 = vsel %vm9270, %v10860, %v10919
  %v11539 = vsel %vm9270, %v10862, %v10921
  %v11541 = vsel %vm9270, %v10864, %v10923
  %v11543 = vsel %vm9270, %v10866, %v10925
  %v11545 = vsel %vm9270, %v10868, %v10927
  %v11547 = vsel %vm9270, %v10870, %v10929
  %v11549 = vsel %vm9270, %v10872, %v10931
  %v11551 = vsel %vm9270, %v10874, %v10933
  %v11553 = vsel %vm9270, %v10876, %v10935
  %v11555 = vsel %vm9270, %v10878, %v10937
  %v11557 = vsel %vm9270, %v10880, %v10939
  %v11559 = vsel %vm9270, %v10882, %v10941
  %v11561 = vsel %vm9270, %v10884, %v10943
  %v11563 = vsel %vm9270, %v10886, %v10945
  %v11565 = vsel %vm9270, %v10888, %v10947
  %v11567 = vsel %vm9270, %v10890, %v10949
  %v11569 = vsel %vm9270, %v10892, %v10951
  %v11571 = vsel %vm9270, %v10894, %v10953
  %v11573 = vsel %vm9399, %v11515, %v10956
  %v11575 = vsel %vm9399, %v11517, %v10958
  %v11577 = vsel %vm9399, %v11519, %v10960
  %v11579 = vsel %vm9399, %v11521, %v10962
  %v11581 = vsel %vm9399, %v11523, %v10964
  %v11583 = vsel %vm9399, %v11525, %v10966
  %v11585 = vsel %vm9399, %v11527, %v10968
  %v11587 = vsel %vm9399, %v11529, %v10970
  %v11589 = vsel %vm9399, %v11531, %v10972
  %v11591 = vsel %vm9399, %v11533, %v10974
  %v11593 = vsel %vm9399, %v11535, %v10976
  %v11595 = vsel %vm9399, %v11537, %v10978
  %v11597 = vsel %vm9399, %v11539, %v10980
  %v11599 = vsel %vm9399, %v11541, %v10982
  %v11601 = vsel %vm9399, %v11543, %v10984
  %v11603 = vsel %vm9399, %v11545, %v10986
  %v11605 = vsel %vm9399, %v11547, %v10988
  %v11607 = vsel %vm9399, %v11549, %v10990
  %v11609 = vsel %vm9399, %v11551, %v10992
  %v11611 = vsel %vm9399, %v11553, %v10994
  %v11613 = vsel %vm9399, %v11555, %v10996
  %v11615 = vsel %vm9399, %v11557, %v10998
  %v11617 = vsel %vm9399, %v11559, %v11000
  %v11619 = vsel %vm9399, %v11561, %v11002
  %v11621 = vsel %vm9399, %v11563, %v11004
  %v11623 = vsel %vm9399, %v11565, %v11006
  %v11625 = vsel %vm9399, %v11567, %v11008
  %v11627 = vsel %vm9399, %v11569, %v11010
  %v11629 = vsel %vm9399, %v11571, %v11012
  %11758 = vrot.lane.b32.xlu0 %v11421, 64
  %v11759 = vpop.permute.xlu0 %11758
  %11760 = vrot.lane.b32.xlu0 %v9451, 64
  %v11761 = vpop.permute.xlu0 %11760
  %11762 = vrot.lane.b32.xlu0 %v11422, 64
  %v11763 = vpop.permute.xlu0 %11762
  %11764 = vrot.lane.b32.xlu0 %v9453, 64
  %v11765 = vpop.permute.xlu0 %11764
  %11766 = vrot.lane.b32.xlu0 %v11423, 64
  %v11767 = vpop.permute.xlu0 %11766
  %11768 = vrot.lane.b32.xlu0 %v9455, 64
  %v11769 = vpop.permute.xlu0 %11768
  %11770 = vrot.lane.b32.xlu0 %v11424, 64
  %v11771 = vpop.permute.xlu0 %11770
  %11772 = vrot.lane.b32.xlu0 %v9457, 64
  %v11773 = vpop.permute.xlu0 %11772
  %11774 = vrot.lane.b32.xlu0 %v11425, 64
  %v11775 = vpop.permute.xlu0 %11774
  %11776 = vrot.lane.b32.xlu0 %v9459, 64
  %v11777 = vpop.permute.xlu0 %11776
  %11778 = vrot.lane.b32.xlu0 %v11426, 64
  %v11779 = vpop.permute.xlu0 %11778
  %11780 = vrot.lane.b32.xlu0 %v9461, 64
  %v11781 = vpop.permute.xlu0 %11780
  %11782 = vrot.lane.b32.xlu0 %v11427, 64
  %v11783 = vpop.permute.xlu0 %11782
  %11784 = vrot.lane.b32.xlu0 %v9463, 64
  %v11785 = vpop.permute.xlu0 %11784
  %11786 = vrot.lane.b32.xlu0 %v11429, 64
  %v11787 = vpop.permute.xlu0 %11786
  %11788 = vrot.lane.b32.xlu0 %v11573, 64
  %v11789 = vpop.permute.xlu0 %11788
  %11790 = vrot.lane.b32.xlu0 %v11430, 64
  %v11791 = vpop.permute.xlu0 %11790
  %11792 = vrot.lane.b32.xlu0 %v9467, 64
  %v11793 = vpop.permute.xlu0 %11792
  %11794 = vrot.lane.b32.xlu0 %v11431, 64
  %v11795 = vpop.permute.xlu0 %11794
  %11796 = vrot.lane.b32.xlu0 %v9469, 64
  %v11797 = vpop.permute.xlu0 %11796
  %11798 = vrot.lane.b32.xlu0 %v11432, 64
  %v11799 = vpop.permute.xlu0 %11798
  %11800 = vrot.lane.b32.xlu0 %v9471, 64
  %v11801 = vpop.permute.xlu0 %11800
  %11802 = vrot.lane.b32.xlu0 %v11433, 64
  %v11803 = vpop.permute.xlu0 %11802
  %11804 = vrot.lane.b32.xlu0 %v9473, 64
  %v11805 = vpop.permute.xlu0 %11804
  %11806 = vrot.lane.b32.xlu0 %v11434, 64
  %v11807 = vpop.permute.xlu0 %11806
  %11808 = vrot.lane.b32.xlu0 %v9475, 64
  %v11809 = vpop.permute.xlu0 %11808
  %11810 = vrot.lane.b32.xlu0 %v11435, 64
  %v11811 = vpop.permute.xlu0 %11810
  %11812 = vrot.lane.b32.xlu0 %v9477, 64
  %v11813 = vpop.permute.xlu0 %11812
  %11814 = vrot.lane.b32.xlu0 %v11436, 64
  %v11815 = vpop.permute.xlu0 %11814
  %11816 = vrot.lane.b32.xlu0 %v9479, 64
  %v11817 = vpop.permute.xlu0 %11816
  %11818 = vrot.lane.b32.xlu0 %v11438, 64
  %v11819 = vpop.permute.xlu0 %11818
  %11820 = vrot.lane.b32.xlu0 %v11575, 64
  %v11821 = vpop.permute.xlu0 %11820
  %11822 = vrot.lane.b32.xlu0 %v11439, 64
  %v11823 = vpop.permute.xlu0 %11822
  %11824 = vrot.lane.b32.xlu0 %v9483, 64
  %v11825 = vpop.permute.xlu0 %11824
  %11826 = vrot.lane.b32.xlu0 %v11440, 64
  %v11827 = vpop.permute.xlu0 %11826
  %11828 = vrot.lane.b32.xlu0 %v9485, 64
  %v11829 = vpop.permute.xlu0 %11828
  %11830 = vrot.lane.b32.xlu0 %v11441, 64
  %v11831 = vpop.permute.xlu0 %11830
  %11832 = vrot.lane.b32.xlu0 %v9487, 64
  %v11833 = vpop.permute.xlu0 %11832
  %11834 = vrot.lane.b32.xlu0 %v11442, 64
  %v11835 = vpop.permute.xlu0 %11834
  %11836 = vrot.lane.b32.xlu0 %v9489, 64
  %v11837 = vpop.permute.xlu0 %11836
  %11838 = vrot.lane.b32.xlu0 %v11443, 64
  %v11839 = vpop.permute.xlu0 %11838
  %11840 = vrot.lane.b32.xlu0 %v9491, 64
  %v11841 = vpop.permute.xlu0 %11840
  %11842 = vrot.lane.b32.xlu0 %v11444, 64
  %v11843 = vpop.permute.xlu0 %11842
  %11844 = vrot.lane.b32.xlu0 %v9493, 64
  %v11845 = vpop.permute.xlu0 %11844
  %11846 = vrot.lane.b32.xlu0 %v11445, 64
  %v11847 = vpop.permute.xlu0 %11846
  %11848 = vrot.lane.b32.xlu0 %v9495, 64
  %v11849 = vpop.permute.xlu0 %11848
  %11850 = vrot.lane.b32.xlu0 %v11447, 64
  %v11851 = vpop.permute.xlu0 %11850
  %11852 = vrot.lane.b32.xlu0 %v11577, 64
  %v11853 = vpop.permute.xlu0 %11852
  %11854 = vrot.lane.b32.xlu0 %v11448, 64
  %v11855 = vpop.permute.xlu0 %11854
  %11856 = vrot.lane.b32.xlu0 %v9499, 64
  %v11857 = vpop.permute.xlu0 %11856
  %11858 = vrot.lane.b32.xlu0 %v11449, 64
  %v11859 = vpop.permute.xlu0 %11858
  %11860 = vrot.lane.b32.xlu0 %v9501, 64
  %v11861 = vpop.permute.xlu0 %11860
  %11862 = vrot.lane.b32.xlu0 %v11450, 64
  %v11863 = vpop.permute.xlu0 %11862
  %11864 = vrot.lane.b32.xlu0 %v9503, 64
  %v11865 = vpop.permute.xlu0 %11864
  %11866 = vrot.lane.b32.xlu0 %v11451, 64
  %v11867 = vpop.permute.xlu0 %11866
  %11868 = vrot.lane.b32.xlu0 %v9505, 64
  %v11869 = vpop.permute.xlu0 %11868
  %11870 = vrot.lane.b32.xlu0 %v11452, 64
  %v11871 = vpop.permute.xlu0 %11870
  %11872 = vrot.lane.b32.xlu0 %v9507, 64
  %v11873 = vpop.permute.xlu0 %11872
  %11874 = vrot.lane.b32.xlu0 %v11453, 64
  %v11875 = vpop.permute.xlu0 %11874
  %11876 = vrot.lane.b32.xlu0 %v9509, 64
  %v11877 = vpop.permute.xlu0 %11876
  %11878 = vrot.lane.b32.xlu0 %v11454, 64
  %v11879 = vpop.permute.xlu0 %11878
  %11880 = vrot.lane.b32.xlu0 %v9511, 64
  %v11881 = vpop.permute.xlu0 %11880
  %11882 = vrot.lane.b32.xlu0 %v11456, 64
  %v11883 = vpop.permute.xlu0 %11882
  %11884 = vrot.lane.b32.xlu0 %v11579, 64
  %v11885 = vpop.permute.xlu0 %11884
  %11886 = vrot.lane.b32.xlu0 %v11457, 64
  %v11887 = vpop.permute.xlu0 %11886
  %11888 = vrot.lane.b32.xlu0 %v9515, 64
  %v11889 = vpop.permute.xlu0 %11888
  %11890 = vrot.lane.b32.xlu0 %v11458, 64
  %v11891 = vpop.permute.xlu0 %11890
  %11892 = vrot.lane.b32.xlu0 %v9517, 64
  %v11893 = vpop.permute.xlu0 %11892
  %11894 = vrot.lane.b32.xlu0 %v11459, 64
  %v11895 = vpop.permute.xlu0 %11894
  %11896 = vrot.lane.b32.xlu0 %v9519, 64
  %v11897 = vpop.permute.xlu0 %11896
  %11898 = vrot.lane.b32.xlu0 %v11460, 64
  %v11899 = vpop.permute.xlu0 %11898
  %11900 = vrot.lane.b32.xlu0 %v9521, 64
  %v11901 = vpop.permute.xlu0 %11900
  %11902 = vrot.lane.b32.xlu0 %v11461, 64
  %v11903 = vpop.permute.xlu0 %11902
  %11904 = vrot.lane.b32.xlu0 %v9523, 64
  %v11905 = vpop.permute.xlu0 %11904
  %11906 = vrot.lane.b32.xlu0 %v11462, 64
  %v11907 = vpop.permute.xlu0 %11906
  %11908 = vrot.lane.b32.xlu0 %v9525, 64
  %v11909 = vpop.permute.xlu0 %11908
  %11910 = vrot.lane.b32.xlu0 %v11463, 64
  %v11911 = vpop.permute.xlu0 %11910
  %11912 = vrot.lane.b32.xlu0 %v9527, 64
  %v11913 = vpop.permute.xlu0 %11912
  %11914 = vrot.lane.b32.xlu0 %v11465, 64
  %v11915 = vpop.permute.xlu0 %11914
  %11916 = vrot.lane.b32.xlu0 %v11581, 64
  %v11917 = vpop.permute.xlu0 %11916
  %11918 = vrot.lane.b32.xlu0 %v11467, 64
  %v11919 = vpop.permute.xlu0 %11918
  %11920 = vrot.lane.b32.xlu0 %v11583, 64
  %v11921 = vpop.permute.xlu0 %11920
  %11922 = vrot.lane.b32.xlu0 %v11469, 64
  %v11923 = vpop.permute.xlu0 %11922
  %11924 = vrot.lane.b32.xlu0 %v11585, 64
  %v11925 = vpop.permute.xlu0 %11924
  %11926 = vrot.lane.b32.xlu0 %v11471, 64
  %v11927 = vpop.permute.xlu0 %11926
  %11928 = vrot.lane.b32.xlu0 %v11587, 64
  %v11929 = vpop.permute.xlu0 %11928
  %11930 = vrot.lane.b32.xlu0 %v11473, 64
  %v11931 = vpop.permute.xlu0 %11930
  %11932 = vrot.lane.b32.xlu0 %v11589, 64
  %v11933 = vpop.permute.xlu0 %11932
  %11934 = vrot.lane.b32.xlu0 %v11475, 64
  %v11935 = vpop.permute.xlu0 %11934
  %11936 = vrot.lane.b32.xlu0 %v11591, 64
  %v11937 = vpop.permute.xlu0 %11936
  %11938 = vrot.lane.b32.xlu0 %v11477, 64
  %v11939 = vpop.permute.xlu0 %11938
  %11940 = vrot.lane.b32.xlu0 %v11593, 64
  %v11941 = vpop.permute.xlu0 %11940
  %11942 = vrot.lane.b32.xlu0 %v11479, 64
  %v11943 = vpop.permute.xlu0 %11942
  %11944 = vrot.lane.b32.xlu0 %v11595, 64
  %v11945 = vpop.permute.xlu0 %11944
  %11946 = vrot.lane.b32.xlu0 %v11481, 64
  %v11947 = vpop.permute.xlu0 %11946
  %11948 = vrot.lane.b32.xlu0 %v11597, 64
  %v11949 = vpop.permute.xlu0 %11948
  %11950 = vrot.lane.b32.xlu0 %v11483, 64
  %v11951 = vpop.permute.xlu0 %11950
  %11952 = vrot.lane.b32.xlu0 %v11599, 64
  %v11953 = vpop.permute.xlu0 %11952
  %11954 = vrot.lane.b32.xlu0 %v11485, 64
  %v11955 = vpop.permute.xlu0 %11954
  %11956 = vrot.lane.b32.xlu0 %v11601, 64
  %v11957 = vpop.permute.xlu0 %11956
  %11958 = vrot.lane.b32.xlu0 %v11487, 64
  %v11959 = vpop.permute.xlu0 %11958
  %11960 = vrot.lane.b32.xlu0 %v11603, 64
  %v11961 = vpop.permute.xlu0 %11960
  %11962 = vrot.lane.b32.xlu0 %v11489, 64
  %v11963 = vpop.permute.xlu0 %11962
  %11964 = vrot.lane.b32.xlu0 %v11605, 64
  %v11965 = vpop.permute.xlu0 %11964
  %11966 = vrot.lane.b32.xlu0 %v11491, 64
  %v11967 = vpop.permute.xlu0 %11966
  %11968 = vrot.lane.b32.xlu0 %v11607, 64
  %v11969 = vpop.permute.xlu0 %11968
  %11970 = vrot.lane.b32.xlu0 %v11493, 64
  %v11971 = vpop.permute.xlu0 %11970
  %11972 = vrot.lane.b32.xlu0 %v11609, 64
  %v11973 = vpop.permute.xlu0 %11972
  %11974 = vrot.lane.b32.xlu0 %v11495, 64
  %v11975 = vpop.permute.xlu0 %11974
  %11976 = vrot.lane.b32.xlu0 %v11611, 64
  %v11977 = vpop.permute.xlu0 %11976
  %11978 = vrot.lane.b32.xlu0 %v11497, 64
  %v11979 = vpop.permute.xlu0 %11978
  %11980 = vrot.lane.b32.xlu0 %v11613, 64
  %v11981 = vpop.permute.xlu0 %11980
  %11982 = vrot.lane.b32.xlu0 %v11499, 64
  %v11983 = vpop.permute.xlu0 %11982
  %11984 = vrot.lane.b32.xlu0 %v11615, 64
  %v11985 = vpop.permute.xlu0 %11984
  %11986 = vrot.lane.b32.xlu0 %v11501, 64
  %v11987 = vpop.permute.xlu0 %11986
  %11988 = vrot.lane.b32.xlu0 %v11617, 64
  %v11989 = vpop.permute.xlu0 %11988
  %11990 = vrot.lane.b32.xlu0 %v11503, 64
  %v11991 = vpop.permute.xlu0 %11990
  %11992 = vrot.lane.b32.xlu0 %v11619, 64
  %v11993 = vpop.permute.xlu0 %11992
  %11994 = vrot.lane.b32.xlu0 %v11505, 64
  %v11995 = vpop.permute.xlu0 %11994
  %11996 = vrot.lane.b32.xlu0 %v11621, 64
  %v11997 = vpop.permute.xlu0 %11996
  %11998 = vrot.lane.b32.xlu0 %v11507, 64
  %v11999 = vpop.permute.xlu0 %11998
  %12000 = vrot.lane.b32.xlu0 %v11623, 64
  %v12001 = vpop.permute.xlu0 %12000
  %12002 = vrot.lane.b32.xlu0 %v11509, 64
  %v12003 = vpop.permute.xlu0 %12002
  %12004 = vrot.lane.b32.xlu0 %v11625, 64
  %v12005 = vpop.permute.xlu0 %12004
  %12006 = vrot.lane.b32.xlu0 %v11511, 64
  %v12007 = vpop.permute.xlu0 %12006
  %12008 = vrot.lane.b32.xlu0 %v11627, 64
  %v12009 = vpop.permute.xlu0 %12008
  %12010 = vrot.lane.b32.xlu0 %v11513, 64
  %v12011 = vpop.permute.xlu0 %12010
  %12012 = vrot.lane.b32.xlu0 %v11629, 64
  %v12013 = vpop.permute.xlu0 %12012
  %vm12014 = vcmask 523264
  %v12015 = vsel %vm12014, %v11759, %v11761
  %v12016 = vsel %vm12014, %v11763, %v11765
  %v12017 = vsel %vm12014, %v11767, %v11769
  %v12018 = vsel %vm12014, %v11771, %v11773
  %v12019 = vsel %vm12014, %v11775, %v11777
  %v12020 = vsel %vm12014, %v11779, %v11781
  %v12021 = vsel %vm12014, %v11783, %v11785
  %v12022 = vsel %vm12014, %v11787, %v11789
  %v12023 = vsel %vm12014, %v11791, %v11793
  %v12024 = vsel %vm12014, %v11795, %v11797
  %v12025 = vsel %vm12014, %v11799, %v11801
  %v12026 = vsel %vm12014, %v11803, %v11805
  %v12027 = vsel %vm12014, %v11807, %v11809
  %v12028 = vsel %vm12014, %v11811, %v11813
  %v12029 = vsel %vm12014, %v11815, %v11817
  %v12030 = vsel %vm12014, %v11819, %v11821
  %v12031 = vsel %vm12014, %v11823, %v11825
  %v12032 = vsel %vm12014, %v11827, %v11829
  %v12033 = vsel %vm12014, %v11831, %v11833
  %v12034 = vsel %vm12014, %v11835, %v11837
  %v12035 = vsel %vm12014, %v11839, %v11841
  %v12036 = vsel %vm12014, %v11843, %v11845
  %v12037 = vsel %vm12014, %v11847, %v11849
  %v12038 = vsel %vm12014, %v11851, %v11853
  %v12039 = vsel %vm12014, %v11855, %v11857
  %v12040 = vsel %vm12014, %v11859, %v11861
  %v12041 = vsel %vm12014, %v11863, %v11865
  %v12042 = vsel %vm12014, %v11867, %v11869
  %v12043 = vsel %vm12014, %v11871, %v11873
  %v12044 = vsel %vm12014, %v11875, %v11877
  %v12045 = vsel %vm12014, %v11879, %v11881
  %v12046 = vsel %vm12014, %v11883, %v11885
  %v12047 = vsel %vm12014, %v11887, %v11889
  %v12048 = vsel %vm12014, %v11891, %v11893
  %v12049 = vsel %vm12014, %v11895, %v11897
  %v12050 = vsel %vm12014, %v11899, %v11901
  %v12051 = vsel %vm12014, %v11903, %v11905
  %v12052 = vsel %vm12014, %v11907, %v11909
  %v12053 = vsel %vm12014, %v11911, %v11913
  %v12054 = vsel %vm12014, %v11915, %v11917
  %v12055 = vsel %vm12014, %v11919, %v11921
  %v12056 = vsel %vm12014, %v11923, %v11925
  %v12057 = vsel %vm12014, %v11927, %v11929
  %v12058 = vsel %vm12014, %v11931, %v11933
  %v12059 = vsel %vm12014, %v11935, %v11937
  %v12060 = vsel %vm12014, %v11939, %v11941
  %v12061 = vsel %vm12014, %v11943, %v11945
  %v12062 = vsel %vm12014, %v11947, %v11949
  %v12063 = vsel %vm12014, %v11951, %v11953
  %v12064 = vsel %vm12014, %v11955, %v11957
  %v12065 = vsel %vm12014, %v11959, %v11961
  %v12066 = vsel %vm12014, %v11963, %v11965
  %v12067 = vsel %vm12014, %v11967, %v11969
  %v12068 = vsel %vm12014, %v11971, %v11973
  %v12069 = vsel %vm12014, %v11975, %v11977
  %v12070 = vsel %vm12014, %v11979, %v11981
  %v12071 = vsel %vm12014, %v11983, %v11985
  %v12072 = vsel %vm12014, %v11987, %v11989
  %v12073 = vsel %vm12014, %v11991, %v11993
  %v12074 = vsel %vm12014, %v11995, %v11997
  %v12075 = vsel %vm12014, %v11999, %v12001
  %v12076 = vsel %vm12014, %v12003, %v12005
  %v12077 = vsel %vm12014, %v12007, %v12009
  %v12078 = vsel %vm12014, %v12011, %v12013
  %vm12079 = vcmask 523264
  %v12081 = vsel %vm12079, %v10368, %v11759
  %v12084 = vsel %vm12079, %v10370, %v11763
  %v12087 = vsel %vm12079, %v10372, %v11767
  %v12090 = vsel %vm12079, %v10374, %v11771
  %v12093 = vsel %vm12079, %v10376, %v11775
  %v12096 = vsel %vm12079, %v10378, %v11779
  %v12099 = vsel %vm12079, %v10380, %v11783
  %v12102 = vsel %vm12079, %v10382, %v11787
  %v12105 = vsel %vm12079, %v10384, %v11791
  %v12108 = vsel %vm12079, %v10386, %v11795
  %v12111 = vsel %vm12079, %v10388, %v11799
  %v12114 = vsel %vm12079, %v10390, %v11803
  %v12117 = vsel %vm12079, %v10392, %v11807
  %v12120 = vsel %vm12079, %v10394, %v11811
  %v12123 = vsel %vm12079, %v10396, %v11815
  %v12126 = vsel %vm12079, %v10398, %v11819
  %v12129 = vsel %vm12079, %v10400, %v11823
  %v12132 = vsel %vm12079, %v10402, %v11827
  %v12135 = vsel %vm12079, %v10404, %v11831
  %v12138 = vsel %vm12079, %v10406, %v11835
  %v12141 = vsel %vm12079, %v10408, %v11839
  %v12144 = vsel %vm12079, %v10410, %v11843
  %v12147 = vsel %vm12079, %v10412, %v11847
  %v12150 = vsel %vm12079, %v10414, %v11851
  %v12153 = vsel %vm12079, %v10416, %v11855
  %v12156 = vsel %vm12079, %v10418, %v11859
  %v12159 = vsel %vm12079, %v10420, %v11863
  %v12162 = vsel %vm12079, %v10422, %v11867
  %v12165 = vsel %vm12079, %v10424, %v11871
  %v12168 = vsel %vm12079, %v10426, %v11875
  %v12171 = vsel %vm12079, %v10428, %v11879
  %v12174 = vsel %vm12079, %v10430, %v11883
  %v12177 = vsel %vm12079, %v10432, %v11887
  %v12180 = vsel %vm12079, %v10434, %v11891
  %v12183 = vsel %vm12079, %v10436, %v11895
  %v12186 = vsel %vm12079, %v10438, %v11899
  %v12189 = vsel %vm12079, %v10440, %v11903
  %v12192 = vsel %vm12079, %v10442, %v11907
  %v12195 = vsel %vm12079, %v10444, %v11911
  %v12198 = vsel %vm12079, %v10446, %v11915
  %v12201 = vsel %vm12079, %v10448, %v11919
  %v12204 = vsel %vm12079, %v10450, %v11923
  %v12207 = vsel %vm12079, %v10452, %v11927
  %v12210 = vsel %vm12079, %v10454, %v11931
  %v12213 = vsel %vm12079, %v10456, %v11935
  %v12216 = vsel %vm12079, %v10458, %v11939
  %v12219 = vsel %vm12079, %v10460, %v11943
  %v12222 = vsel %vm12079, %v10462, %v11947
  %v12225 = vsel %vm12079, %v10464, %v11951
  %v12228 = vsel %vm12079, %v10466, %v11955
  %v12231 = vsel %vm12079, %v10468, %v11959
  %v12234 = vsel %vm12079, %v10470, %v11963
  %v12237 = vsel %vm12079, %v10472, %v11967
  %v12240 = vsel %vm12079, %v10474, %v11971
  %v12243 = vsel %vm12079, %v10476, %v11975
  %v12246 = vsel %vm12079, %v10478, %v11979
  %v12249 = vsel %vm12079, %v10480, %v11983
  %v12252 = vsel %vm12079, %v10482, %v11987
  %v12255 = vsel %vm12079, %v10484, %v11991
  %v12258 = vsel %vm12079, %v10486, %v11995
  %v12261 = vsel %vm12079, %v10488, %v11999
  %v12264 = vsel %vm12079, %v10490, %v12003
  %v12267 = vsel %vm12079, %v10492, %v12007
  %v12270 = vsel %vm12079, %v10494, %v12011
  %v12272 = vld [vmem:[%s3] sm:$0xf]
  %v12273 = vld [vmem:[%s3 + $0x4] sm:$0xf]
  %v12274 = vld [vmem:[%s3 + $0x8] sm:$0xf]
  %v12275 = vld [vmem:[%s3 + $0xc] sm:$0xf]
  %v12276 = vld [vmem:[%s3 + $0x10] sm:$0xf]
  %v12277 = vld [vmem:[%s3 + $0x14] sm:$0xf]
  %v12278 = vld [vmem:[%s3 + $0x18] sm:$0xf]
  %v12279 = vld [vmem:[%s3 + $0x1c] sm:$0xf]
  %v12280 = vld [vmem:[%s3 + $0x20] sm:$0xf]
  %v12281 = vld [vmem:[%s3 + $0x24] sm:$0xf]
  %v12282 = vld [vmem:[%s3 + $0x28] sm:$0xf]
  %v12283 = vld [vmem:[%s3 + $0x2c] sm:$0xf]
  %v12284 = vld [vmem:[%s3 + $0x30] sm:$0xf]
  %v12285 = vld [vmem:[%s3 + $0x34] sm:$0xf]
  %v12286 = vld [vmem:[%s3 + $0x38] sm:$0xf]
  %v12287 = vld [vmem:[%s3 + $0x3c] sm:$0xf]
  %v12288 = vld [vmem:[%s3 + $0x40] sm:$0xf]
  %v12289 = vld [vmem:[%s3 + $0x44] sm:$0xf]
  %v12290 = vld [vmem:[%s3 + $0x48] sm:$0xf]
  %v12291 = vld [vmem:[%s3 + $0x4c] sm:$0xf]
  %v12292 = vld [vmem:[%s3 + $0x50] sm:$0xf]
  %v12293 = vld [vmem:[%s3 + $0x54] sm:$0xf]
  %v12294 = vld [vmem:[%s3 + $0x58] sm:$0xf]
  %v12295 = vld [vmem:[%s3 + $0x5c] sm:$0xf]
  %v12296 = vld [vmem:[%s3 + $0x60] sm:$0xf]
  %v12297 = vld [vmem:[%s3 + $0x64] sm:$0xf]
  %v12298 = vld [vmem:[%s3 + $0x68] sm:$0xf]
  %v12299 = vld [vmem:[%s3 + $0x6c] sm:$0xf]
  %v12300 = vld [vmem:[%s3 + $0x70] sm:$0xf]
  %v12301 = vld [vmem:[%s3 + $0x74] sm:$0xf]
  %v12302 = vld [vmem:[%s3 + $0x78] sm:$0xf]
  %v12303 = vld [vmem:[%s3 + $0x7c] sm:$0xf]
  %v12304 = vld [vmem:[%s3 + $0x80] sm:$0xf]
  %v12305 = vld [vmem:[%s3 + $0x84] sm:$0xf]
  %v12306 = vld [vmem:[%s3 + $0x88] sm:$0xf]
  %v12307 = vld [vmem:[%s3 + $0x8c] sm:$0xf]
  %v12308 = vld [vmem:[%s3 + $0x90] sm:$0xf]
  %v12309 = vld [vmem:[%s3 + $0x94] sm:$0xf]
  %v12310 = vld [vmem:[%s3 + $0x98] sm:$0xf]
  %v12311 = vld [vmem:[%s3 + $0x9c] sm:$0xf]
  %v12312 = vld [vmem:[%s3 + $0xa0] sm:$0xf]
  %v12313 = vld [vmem:[%s3 + $0xa4] sm:$0xf]
  %v12314 = vld [vmem:[%s3 + $0xa8] sm:$0xf]
  %v12315 = vld [vmem:[%s3 + $0xac] sm:$0xf]
  %v12316 = vld [vmem:[%s3 + $0xb0] sm:$0xf]
  %v12317 = vld [vmem:[%s3 + $0xb4] sm:$0xf]
  %v12318 = vld [vmem:[%s3 + $0xb8] sm:$0xf]
  %v12319 = vld [vmem:[%s3 + $0xbc] sm:$0xf]
  %v12320 = vld [vmem:[%s3 + $0xc0] sm:$0xf]
  %v12321 = vld [vmem:[%s3 + $0xc4] sm:$0xf]
  %v12322 = vld [vmem:[%s3 + $0xc8] sm:$0xf]
  %v12323 = vld [vmem:[%s3 + $0xcc] sm:$0xf]
  %v12324 = vld [vmem:[%s3 + $0xd0] sm:$0xf]
  %v12325 = vld [vmem:[%s3 + $0xd4] sm:$0xf]
  %v12326 = vld [vmem:[%s3 + $0xd8] sm:$0xf]
  %v12327 = vld [vmem:[%s3 + $0xdc] sm:$0xf]
  %v12328 = vld [vmem:[%s3 + $0xe0] sm:$0xf]
  %v12329 = vld [vmem:[%s3 + $0xe4] sm:$0xf]
  %v12330 = vld [vmem:[%s3 + $0xe8] sm:$0xf]
  %v12331 = vld [vmem:[%s3 + $0xec] sm:$0xf]
  %v12332 = vld [vmem:[%s3 + $0xf0] sm:$0xf]
  %v12333 = vld [vmem:[%s3 + $0xf4] sm:$0xf]
  %v12334 = vld [vmem:[%s3 + $0xf8] sm:$0x3]
  %v12398 = vunpack.c.l.b16 %v12272
  %v12399 = vunpack.c.l.b16 %v12273
  %v12400 = vunpack.c.l.b16 %v12274
  %v12401 = vunpack.c.l.b16 %v12275
  %v12402 = vunpack.c.l.b16 %v12276
  %v12403 = vunpack.c.l.b16 %v12277
  %v12404 = vunpack.c.l.b16 %v12278
  %v12405 = vunpack.c.l.b16 %v12279
  %v12406 = vunpack.c.l.b16 %v12280
  %v12407 = vunpack.c.l.b16 %v12281
  %v12408 = vunpack.c.l.b16 %v12282
  %v12409 = vunpack.c.l.b16 %v12283
  %v12410 = vunpack.c.l.b16 %v12284
  %v12411 = vunpack.c.l.b16 %v12285
  %v12412 = vunpack.c.l.b16 %v12286
  %v12413 = vunpack.c.l.b16 %v12287
  %v12414 = vunpack.c.l.b16 %v12288
  %v12415 = vunpack.c.l.b16 %v12289
  %v12416 = vunpack.c.l.b16 %v12290
  %v12417 = vunpack.c.l.b16 %v12291
  %v12418 = vunpack.c.l.b16 %v12292
  %v12419 = vunpack.c.l.b16 %v12293
  %v12420 = vunpack.c.l.b16 %v12294
  %v12421 = vunpack.c.l.b16 %v12295
  %v12422 = vunpack.c.l.b16 %v12296
  %v12423 = vunpack.c.l.b16 %v12297
  %v12424 = vunpack.c.l.b16 %v12298
  %v12425 = vunpack.c.l.b16 %v12299
  %v12426 = vunpack.c.l.b16 %v12300
  %v12427 = vunpack.c.l.b16 %v12301
  %v12428 = vunpack.c.l.b16 %v12302
  %v12429 = vunpack.c.l.b16 %v12303
  %v12430 = vunpack.c.l.b16 %v12304
  %v12431 = vunpack.c.l.b16 %v12305
  %v12432 = vunpack.c.l.b16 %v12306
  %v12433 = vunpack.c.l.b16 %v12307
  %v12434 = vunpack.c.l.b16 %v12308
  %v12435 = vunpack.c.l.b16 %v12309
  %v12436 = vunpack.c.l.b16 %v12310
  %v12437 = vunpack.c.l.b16 %v12311
  %v12438 = vunpack.c.l.b16 %v12312
  %v12439 = vunpack.c.l.b16 %v12313
  %v12440 = vunpack.c.l.b16 %v12314
  %v12441 = vunpack.c.l.b16 %v12315
  %v12442 = vunpack.c.l.b16 %v12316
  %v12443 = vunpack.c.l.b16 %v12317
  %v12444 = vunpack.c.l.b16 %v12318
  %v12445 = vunpack.c.l.b16 %v12319
  %v12446 = vunpack.c.l.b16 %v12320
  %v12447 = vunpack.c.l.b16 %v12321
  %v12448 = vunpack.c.l.b16 %v12322
  %v12449 = vunpack.c.l.b16 %v12323
  %v12450 = vunpack.c.l.b16 %v12324
  %v12451 = vunpack.c.l.b16 %v12325
  %v12452 = vunpack.c.l.b16 %v12326
  %v12453 = vunpack.c.l.b16 %v12327
  %v12454 = vunpack.c.l.b16 %v12328
  %v12455 = vunpack.c.l.b16 %v12329
  %v12456 = vunpack.c.l.b16 %v12330
  %v12457 = vunpack.c.l.b16 %v12331
  %v12458 = vunpack.c.l.b16 %v12332
  %v12459 = vunpack.c.l.b16 %v12333
  %v12460 = vunpack.c.l.b16 %v12334
  %v12461 = vpack.c.b16 %v12399, %v12398
  %v12462 = vpack.c.b16 %v12401, %v12400
  %v12463 = vpack.c.b16 %v12403, %v12402
  %v12464 = vpack.c.b16 %v12405, %v12404
  %v12465 = vpack.c.b16 %v12407, %v12406
  %v12466 = vpack.c.b16 %v12409, %v12408
  %v12467 = vpack.c.b16 %v12411, %v12410
  %v12468 = vpack.c.b16 %v12413, %v12412
  %v12469 = vpack.c.b16 %v12415, %v12414
  %v12470 = vpack.c.b16 %v12417, %v12416
  %v12471 = vpack.c.b16 %v12419, %v12418
  %v12472 = vpack.c.b16 %v12421, %v12420
  %v12473 = vpack.c.b16 %v12423, %v12422
  %v12474 = vpack.c.b16 %v12425, %v12424
  %v12475 = vpack.c.b16 %v12427, %v12426
  %v12476 = vpack.c.b16 %v12429, %v12428
  %v12477 = vpack.c.b16 %v12431, %v12430
  %v12478 = vpack.c.b16 %v12433, %v12432
  %v12479 = vpack.c.b16 %v12435, %v12434
  %v12480 = vpack.c.b16 %v12437, %v12436
  %v12481 = vpack.c.b16 %v12439, %v12438
  %v12482 = vpack.c.b16 %v12441, %v12440
  %v12483 = vpack.c.b16 %v12443, %v12442
  %v12484 = vpack.c.b16 %v12445, %v12444
  %v12485 = vpack.c.b16 %v12447, %v12446
  %v12486 = vpack.c.b16 %v12449, %v12448
  %v12487 = vpack.c.b16 %v12451, %v12450
  %v12488 = vpack.c.b16 %v12453, %v12452
  %v12489 = vpack.c.b16 %v12455, %v12454
  %v12490 = vpack.c.b16 %v12457, %v12456
  %v12491 = vpack.c.b16 %v12459, %v12458
  %v12492 = vpack.c.b16 %v12460, %v12460
  %vm12524 = vcmask 949248
  %v12526 = vsel %vm12524, %v12015, 0
  %v12529 = vsel %vm12524, %v12016, 0
  %v12532 = vsel %vm12524, %v12017, 0
  %v12535 = vsel %vm12524, %v12018, 0
  %v12538 = vsel %vm12524, %v12019, 0
  %v12541 = vsel %vm12524, %v12020, 0
  %v12544 = vsel %vm12524, %v12021, 0
  %v12547 = vsel %vm12524, %v12022, 0
  %v12550 = vsel %vm12524, %v12023, 0
  %v12553 = vsel %vm12524, %v12024, 0
  %v12556 = vsel %vm12524, %v12025, 0
  %v12559 = vsel %vm12524, %v12026, 0
  %v12562 = vsel %vm12524, %v12027, 0
  %v12565 = vsel %vm12524, %v12028, 0
  %v12568 = vsel %vm12524, %v12029, 0
  %v12571 = vsel %vm12524, %v12030, 0
  %v12574 = vsel %vm12524, %v12031, 0
  %v12577 = vsel %vm12524, %v12032, 0
  %v12580 = vsel %vm12524, %v12033, 0
  %v12583 = vsel %vm12524, %v12034, 0
  %v12586 = vsel %vm12524, %v12035, 0
  %v12589 = vsel %vm12524, %v12036, 0
  %v12592 = vsel %vm12524, %v12037, 0
  %v12595 = vsel %vm12524, %v12038, 0
  %v12598 = vsel %vm12524, %v12039, 0
  %v12601 = vsel %vm12524, %v12040, 0
  %v12604 = vsel %vm12524, %v12041, 0
  %v12607 = vsel %vm12524, %v12042, 0
  %v12610 = vsel %vm12524, %v12043, 0
  %v12613 = vsel %vm12524, %v12044, 0
  %v12616 = vsel %vm12524, %v12045, 0
  %v12619 = vsel %vm12524, %v12046, 0
  %v12622 = vsel %vm12524, %v12047, 0
  %v12625 = vsel %vm12524, %v12048, 0
  %v12628 = vsel %vm12524, %v12049, 0
  %v12631 = vsel %vm12524, %v12050, 0
  %v12634 = vsel %vm12524, %v12051, 0
  %v12637 = vsel %vm12524, %v12052, 0
  %v12640 = vsel %vm12524, %v12053, 0
  %v12643 = vsel %vm12524, %v12054, 0
  %v12646 = vsel %vm12524, %v12055, 0
  %v12649 = vsel %vm12524, %v12056, 0
  %v12652 = vsel %vm12524, %v12057, 0
  %v12655 = vsel %vm12524, %v12058, 0
  %v12658 = vsel %vm12524, %v12059, 0
  %v12661 = vsel %vm12524, %v12060, 0
  %v12664 = vsel %vm12524, %v12061, 0
  %v12667 = vsel %vm12524, %v12062, 0
  %v12670 = vsel %vm12524, %v12063, 0
  %v12673 = vsel %vm12524, %v12064, 0
  %v12676 = vsel %vm12524, %v12065, 0
  %v12679 = vsel %vm12524, %v12066, 0
  %v12682 = vsel %vm12524, %v12067, 0
  %v12685 = vsel %vm12524, %v12068, 0
  %v12688 = vsel %vm12524, %v12069, 0
  %v12691 = vsel %vm12524, %v12070, 0
  %v12694 = vsel %vm12524, %v12071, 0
  %v12697 = vsel %vm12524, %v12072, 0
  %v12700 = vsel %vm12524, %v12073, 0
  %v12703 = vsel %vm12524, %v12074, 0
  %v12706 = vsel %vm12524, %v12075, 0
  %v12709 = vsel %vm12524, %v12076, 0
  %v12712 = vsel %vm12524, %v12077, 0
  %v12715 = vsel %vm12524, %v12078, 0
  %v12718 = vsel %vm1526, %v12492, 0
  %12720 = vmatprep.subr.bf16.mxu0 0
  %12721 = vmatpush1.bf16.msra.mxu0 %v12461
  %12722 = vmatprep.subr.bf16.mxu0 0
  %12723 = vmatpush1.bf16.msra.mxu0 %v12462
  %12724 = vmatprep.subr.bf16.mxu0 0
  %12725 = vmatpush1.bf16.msra.mxu0 %v12463
  %12726 = vmatprep.subr.bf16.mxu0 0
  %12727 = vmatpush1.bf16.msra.mxu0 %v12464
  %12728 = vmatprep.subr.bf16.mxu0 0
  %12729 = vmatpush1.bf16.msra.mxu0 %v12465
  %12730 = vmatprep.subr.bf16.mxu0 0
  %12731 = vmatpush1.bf16.msra.mxu0 %v12466
  %12732 = vmatprep.subr.bf16.mxu0 0
  %12733 = vmatpush1.bf16.msra.mxu0 %v12467
  %12734 = vmatprep.subr.bf16.mxu0 0
  %12735 = vmatpush1.bf16.msra.mxu0 %v12468
  %12736 = vmatprep.subr.bf16.mxu0 0
  %12737 = vmatpush1.bf16.msra.mxu0 %v12469
  %12738 = vmatprep.subr.bf16.mxu0 0
  %12739 = vmatpush1.bf16.msra.mxu0 %v12470
  %12740 = vmatprep.subr.bf16.mxu0 0
  %12741 = vmatpush1.bf16.msra.mxu0 %v12471
  %12742 = vmatprep.subr.bf16.mxu0 0
  %12743 = vmatpush1.bf16.msra.mxu0 %v12472
  %12744 = vmatprep.subr.bf16.mxu0 0
  %12745 = vmatpush1.bf16.msra.mxu0 %v12473
  %12746 = vmatprep.subr.bf16.mxu0 0
  %12747 = vmatpush1.bf16.msra.mxu0 %v12474
  %12748 = vmatprep.subr.bf16.mxu0 0
  %12749 = vmatpush1.bf16.msra.mxu0 %v12475
  %12750 = vmatprep.subr.bf16.mxu0 0
  %12751 = vmatpush1.bf16.msra.mxu0 %v12476
  %12752 = vmatprep.mubr.bf16.mxu0 %v9917
  %12753 = vmatmul.mubr.bf16.gmra.mrb[0].mxu0 %v9079
  %v12754 = vpop.f32.mrb[0].mxu0
  %v12755 = vadd.f32 0.0, %v12754
  %v12756 = vpop.f32.mrb[0].mxu0
  %v12757 = vpop.f32.mrb[0].mxu0
  %v12758 = vadd.f32 0.0, %v12757
  %v12759 = vpop.f32.mrb[0].mxu0
  %12760 = vmatprep.mubr.bf16.mxu0 %v9920
  %12761 = vmatmul.mubr.bf16.gmra.mrb[0].mxu0 %v9082
  %v12762 = vpop.f32.mrb[0].mxu0
  %v12763 = vadd.f32 0.0, %v12762
  %v12764 = vpop.f32.mrb[0].mxu0
  %v12765 = vpop.f32.mrb[0].mxu0
  %v12766 = vadd.f32 0.0, %v12765
  %v12767 = vpop.f32.mrb[0].mxu0
  %12768 = vmatprep.mubr.bf16.mxu0 %v9923
  %12769 = vmatmul.mubr.bf16.gmra.mrb[0].mxu0 %v9085
  %v12770 = vpop.f32.mrb[0].mxu0
  %v12771 = vadd.f32 0.0, %v12770
  %v12772 = vpop.f32.mrb[0].mxu0
  %v12773 = vpop.f32.mrb[0].mxu0
  %v12774 = vadd.f32 0.0, %v12773
  %v12775 = vpop.f32.mrb[0].mxu0
  %12776 = vmatprep.mubr.bf16.mxu0 %v9926
  %12777 = vmatmul.mubr.bf16.gmra.mrb[0].mxu0 %v9088
  %v12778 = vpop.f32.mrb[0].mxu0
  %v12779 = vadd.f32 0.0, %v12778
  %v12780 = vpop.f32.mrb[0].mxu0
  %v12781 = vpop.f32.mrb[0].mxu0
  %v12782 = vadd.f32 0.0, %v12781
  %v12783 = vpop.f32.mrb[0].mxu0
  %12784 = vmatprep.mubr.bf16.mxu0 %v9929
  %12785 = vmatmul.mubr.bf16.gmra.mrb[0].mxu0 %v9091
  %v12786 = vpop.f32.mrb[0].mxu0
  %v12787 = vadd.f32 0.0, %v12786
  %v12788 = vpop.f32.mrb[0].mxu0
  %v12789 = vpop.f32.mrb[0].mxu0
  %v12790 = vadd.f32 0.0, %v12789
  %v12791 = vpop.f32.mrb[0].mxu0
  %12792 = vmatprep.mubr.bf16.mxu0 %v9932
  %12793 = vmatmul.mubr.bf16.gmra.mrb[0].mxu0 %v9094
  %v12794 = vpop.f32.mrb[0].mxu0
  %v12795 = vadd.f32 0.0, %v12794
  %v12796 = vpop.f32.mrb[0].mxu0
  %v12797 = vpop.f32.mrb[0].mxu0
  %v12798 = vadd.f32 0.0, %v12797
  %v12799 = vpop.f32.mrb[0].mxu0
  %12800 = vmatprep.mubr.bf16.mxu0 %v9935
  %12801 = vmatmul.mubr.bf16.gmra.mrb[0].mxu0 %v9097
  %v12802 = vpop.f32.mrb[0].mxu0
  %v12803 = vadd.f32 0.0, %v12802
  %v12804 = vpop.f32.mrb[0].mxu0
  %v12805 = vpop.f32.mrb[0].mxu0
  %v12806 = vadd.f32 0.0, %v12805
  %v12807 = vpop.f32.mrb[0].mxu0
  %12808 = vmatprep.mubr.bf16.mxu0 %v9938
  %12809 = vmatmul.mubr.bf16.gmra.mrb[0].mxu0 %v9100
  %v12810 = vpop.f32.mrb[0].mxu0
  %v12811 = vadd.f32 0.0, %v12810
  %v12812 = vpop.f32.mrb[0].mxu0
  %v12813 = vpop.f32.mrb[0].mxu0
  %v12814 = vadd.f32 0.0, %v12813
  %v12815 = vpop.f32.mrb[0].mxu0
  %12816 = vmatprep.mubr.bf16.mxu0 %v9941
  %12817 = vmatmul.mubr.bf16.gmra.mrb[0].mxu0 %v9103
  %v12818 = vpop.f32.mrb[0].mxu0
  %v12819 = vadd.f32 0.0, %v12818
  %v12820 = vpop.f32.mrb[0].mxu0
  %v12821 = vpop.f32.mrb[0].mxu0
  %v12822 = vadd.f32 0.0, %v12821
  %v12823 = vpop.f32.mrb[0].mxu0
  %12824 = vmatprep.mubr.bf16.mxu0 %v9944
  %12825 = vmatmul.mubr.bf16.gmra.mrb[0].mxu0 %v9106
  %v12826 = vpop.f32.mrb[0].mxu0
  %v12827 = vadd.f32 0.0, %v12826
  %v12828 = vpop.f32.mrb[0].mxu0
  %v12829 = vpop.f32.mrb[0].mxu0
  %v12830 = vadd.f32 0.0, %v12829
  %v12831 = vpop.f32.mrb[0].mxu0
  %12832 = vmatprep.mubr.bf16.mxu0 %v9947
  %12833 = vmatmul.mubr.bf16.gmra.mrb[0].mxu0 %v9109
  %v12834 = vpop.f32.mrb[0].mxu0
  %v12835 = vadd.f32 0.0, %v12834
  %v12836 = vpop.f32.mrb[0].mxu0
  %v12837 = vpop.f32.mrb[0].mxu0
  %v12838 = vadd.f32 0.0, %v12837
  %v12839 = vpop.f32.mrb[0].mxu0
  %12840 = vmatprep.mubr.bf16.mxu0 %v9950
  %12841 = vmatmul.mubr.bf16.gmra.mrb[0].mxu0 %v9112
  %v12842 = vpop.f32.mrb[0].mxu0
  %v12843 = vadd.f32 0.0, %v12842
  %v12844 = vpop.f32.mrb[0].mxu0
  %v12845 = vpop.f32.mrb[0].mxu0
  %v12846 = vadd.f32 0.0, %v12845
  %v12847 = vpop.f32.mrb[0].mxu0
  %12848 = vmatprep.mubr.bf16.mxu0 %v9953
  %12849 = vmatmul.mubr.bf16.gmra.mrb[0].mxu0 %v9115
  %v12850 = vpop.f32.mrb[0].mxu0
  %v12851 = vadd.f32 0.0, %v12850
  %v12852 = vpop.f32.mrb[0].mxu0
  %v12853 = vpop.f32.mrb[0].mxu0
  %v12854 = vadd.f32 0.0, %v12853
  %v12855 = vpop.f32.mrb[0].mxu0
  %12856 = vmatprep.mubr.bf16.mxu0 %v9956
  %12857 = vmatmul.mubr.bf16.gmra.mrb[0].mxu0 %v9118
  %v12858 = vpop.f32.mrb[0].mxu0
  %v12859 = vadd.f32 0.0, %v12858
  %v12860 = vpop.f32.mrb[0].mxu0
  %v12861 = vpop.f32.mrb[0].mxu0
  %v12862 = vadd.f32 0.0, %v12861
  %v12863 = vpop.f32.mrb[0].mxu0
  %12864 = vmatprep.mubr.bf16.mxu0 %v9959
  %12865 = vmatmul.mubr.bf16.gmra.mrb[0].mxu0 %v9121
  %v12866 = vpop.f32.mrb[0].mxu0
  %v12867 = vadd.f32 0.0, %v12866
  %v12868 = vpop.f32.mrb[0].mxu0
  %v12869 = vpop.f32.mrb[0].mxu0
  %v12870 = vadd.f32 0.0, %v12869
  %v12871 = vpop.f32.mrb[0].mxu0
  %12872 = vmatprep.mubr.bf16.mxu0 %v9962
  %12873 = vmatmul.mubr.bf16.gmra.mrb[0].mxu0 %v9124
  %v12874 = vpop.f32.mrb[0].mxu0
  %v12875 = vadd.f32 0.0, %v12874
  %v12876 = vpop.f32.mrb[0].mxu0
  %v12877 = vpop.f32.mrb[0].mxu0
  %v12878 = vadd.f32 0.0, %v12877
  %v12879 = vpop.f32.mrb[0].mxu0
  %12880 = vmatprep.mubr.bf16.mxu0 %v9965
  %12881 = vmatmul.mubr.bf16.gmra.mrb[0].mxu0 %v9127
  %v12882 = vpop.f32.mrb[0].mxu0
  %v12883 = vadd.f32 0.0, %v12882
  %v12884 = vpop.f32.mrb[0].mxu0
  %v12885 = vpop.f32.mrb[0].mxu0
  %v12886 = vadd.f32 0.0, %v12885
  %v12887 = vpop.f32.mrb[0].mxu0
  %12888 = vmatprep.mubr.bf16.mxu0 %v9968
  %12889 = vmatmul.mubr.bf16.gmra.mrb[0].mxu0 %v9130
  %v12890 = vpop.f32.mrb[0].mxu0
  %v12891 = vadd.f32 0.0, %v12890
  %v12892 = vpop.f32.mrb[0].mxu0
  %v12893 = vpop.f32.mrb[0].mxu0
  %v12894 = vadd.f32 0.0, %v12893
  %v12895 = vpop.f32.mrb[0].mxu0
  %12896 = vmatprep.mubr.bf16.mxu0 %v9971
  %12897 = vmatmul.mubr.bf16.gmra.mrb[0].mxu0 %v9133
  %v12898 = vpop.f32.mrb[0].mxu0
  %v12899 = vadd.f32 0.0, %v12898
  %v12900 = vpop.f32.mrb[0].mxu0
  %v12901 = vpop.f32.mrb[0].mxu0
  %v12902 = vadd.f32 0.0, %v12901
  %v12903 = vpop.f32.mrb[0].mxu0
  %12904 = vmatprep.mubr.bf16.mxu0 %v9974
  %12905 = vmatmul.mubr.bf16.gmra.mrb[0].mxu0 %v9136
  %v12906 = vpop.f32.mrb[0].mxu0
  %v12907 = vadd.f32 0.0, %v12906
  %v12908 = vpop.f32.mrb[0].mxu0
  %v12909 = vpop.f32.mrb[0].mxu0
  %v12910 = vadd.f32 0.0, %v12909
  %v12911 = vpop.f32.mrb[0].mxu0
  %12912 = vmatprep.mubr.bf16.mxu0 %v9977
  %12913 = vmatmul.mubr.bf16.gmra.mrb[0].mxu0 %v9139
  %v12914 = vpop.f32.mrb[0].mxu0
  %v12915 = vadd.f32 0.0, %v12914
  %v12916 = vpop.f32.mrb[0].mxu0
  %v12917 = vpop.f32.mrb[0].mxu0
  %v12918 = vadd.f32 0.0, %v12917
  %v12919 = vpop.f32.mrb[0].mxu0
  %12920 = vmatprep.mubr.bf16.mxu0 %v9980
  %12921 = vmatmul.mubr.bf16.gmra.mrb[0].mxu0 %v9142
  %v12922 = vpop.f32.mrb[0].mxu0
  %v12923 = vadd.f32 0.0, %v12922
  %v12924 = vpop.f32.mrb[0].mxu0
  %v12925 = vpop.f32.mrb[0].mxu0
  %v12926 = vadd.f32 0.0, %v12925
  %v12927 = vpop.f32.mrb[0].mxu0
  %12928 = vmatprep.mubr.bf16.mxu0 %v9983
  %12929 = vmatmul.mubr.bf16.gmra.mrb[0].mxu0 %v9145
  %v12930 = vpop.f32.mrb[0].mxu0
  %v12931 = vadd.f32 0.0, %v12930
  %v12932 = vpop.f32.mrb[0].mxu0
  %v12933 = vpop.f32.mrb[0].mxu0
  %v12934 = vadd.f32 0.0, %v12933
  %v12935 = vpop.f32.mrb[0].mxu0
  %12936 = vmatprep.mubr.bf16.mxu0 %v9986
  %12937 = vmatmul.mubr.bf16.gmra.mrb[0].mxu0 %v9148
  %v12938 = vpop.f32.mrb[0].mxu0
  %v12939 = vadd.f32 0.0, %v12938
  %v12940 = vpop.f32.mrb[0].mxu0
  %v12941 = vpop.f32.mrb[0].mxu0
  %v12942 = vadd.f32 0.0, %v12941
  %v12943 = vpop.f32.mrb[0].mxu0
  %12944 = vmatprep.mubr.bf16.mxu0 %v9989
  %12945 = vmatmul.mubr.bf16.gmra.mrb[0].mxu0 %v9151
  %v12946 = vpop.f32.mrb[0].mxu0
  %v12947 = vadd.f32 0.0, %v12946
  %v12948 = vpop.f32.mrb[0].mxu0
  %v12949 = vpop.f32.mrb[0].mxu0
  %v12950 = vadd.f32 0.0, %v12949
  %v12951 = vpop.f32.mrb[0].mxu0
  %12952 = vmatprep.mubr.bf16.mxu0 %v9992
  %12953 = vmatmul.mubr.bf16.gmra.mrb[0].mxu0 %v9154
  %v12954 = vpop.f32.mrb[0].mxu0
  %v12955 = vadd.f32 0.0, %v12954
  %v12956 = vpop.f32.mrb[0].mxu0
  %v12957 = vpop.f32.mrb[0].mxu0
  %v12958 = vadd.f32 0.0, %v12957
  %v12959 = vpop.f32.mrb[0].mxu0
  %12960 = vmatprep.mubr.bf16.mxu0 %v9995
  %12961 = vmatmul.mubr.bf16.gmra.mrb[0].mxu0 %v9157
  %v12962 = vpop.f32.mrb[0].mxu0
  %v12963 = vadd.f32 0.0, %v12962
  %v12964 = vpop.f32.mrb[0].mxu0
  %v12965 = vpop.f32.mrb[0].mxu0
  %v12966 = vadd.f32 0.0, %v12965
  %v12967 = vpop.f32.mrb[0].mxu0
  %12968 = vmatprep.mubr.bf16.mxu0 %v9998
  %12969 = vmatmul.mubr.bf16.gmra.mrb[0].mxu0 %v9160
  %v12970 = vpop.f32.mrb[0].mxu0
  %v12971 = vadd.f32 0.0, %v12970
  %v12972 = vpop.f32.mrb[0].mxu0
  %v12973 = vpop.f32.mrb[0].mxu0
  %v12974 = vadd.f32 0.0, %v12973
  %v12975 = vpop.f32.mrb[0].mxu0
  %12976 = vmatprep.mubr.bf16.mxu0 %v10001
  %12977 = vmatmul.mubr.bf16.gmra.mrb[0].mxu0 %v9163
  %v12978 = vpop.f32.mrb[0].mxu0
  %v12979 = vadd.f32 0.0, %v12978
  %v12980 = vpop.f32.mrb[0].mxu0
  %v12981 = vpop.f32.mrb[0].mxu0
  %v12982 = vadd.f32 0.0, %v12981
  %v12983 = vpop.f32.mrb[0].mxu0
  %12984 = vmatprep.mubr.bf16.mxu0 %v10004
  %12985 = vmatmul.mubr.bf16.gmra.mrb[0].mxu0 %v9166
  %v12986 = vpop.f32.mrb[0].mxu0
  %v12987 = vadd.f32 0.0, %v12986
  %v12988 = vpop.f32.mrb[0].mxu0
  %v12989 = vpop.f32.mrb[0].mxu0
  %v12990 = vadd.f32 0.0, %v12989
  %v12991 = vpop.f32.mrb[0].mxu0
  %12992 = vmatprep.mubr.bf16.mxu0 %v10007
  %12993 = vmatmul.mubr.bf16.gmra.mrb[0].mxu0 %v9169
  %v12994 = vpop.f32.mrb[0].mxu0
  %v12995 = vadd.f32 0.0, %v12994
  %v12996 = vpop.f32.mrb[0].mxu0
  %v12997 = vpop.f32.mrb[0].mxu0
  %v12998 = vadd.f32 0.0, %v12997
  %v12999 = vpop.f32.mrb[0].mxu0
  %13000 = vmatprep.mubr.bf16.mxu0 %v10010
  %13001 = vmatmul.mubr.bf16.gmra.mrb[0].mxu0 %v9172
  %v13002 = vpop.f32.mrb[0].mxu0
  %v13003 = vadd.f32 0.0, %v13002
  %v13004 = vpop.f32.mrb[0].mxu0
  %v13005 = vpop.f32.mrb[0].mxu0
  %v13006 = vadd.f32 0.0, %v13005
  %v13007 = vpop.f32.mrb[0].mxu0
  %13008 = vmatprep.mubr.bf16.mxu0 %v10013
  %13009 = vmatmul.mubr.bf16.gmra.mrb[0].mxu0 %v9175
  %v13010 = vpop.f32.mrb[0].mxu0
  %v13011 = vadd.f32 0.0, %v13010
  %v13012 = vpop.f32.mrb[0].mxu0
  %v13013 = vpop.f32.mrb[0].mxu0
  %v13014 = vadd.f32 0.0, %v13013
  %v13015 = vpop.f32.mrb[0].mxu0
  %13016 = vmatprep.mubr.bf16.mxu0 %v10016
  %13017 = vmatmul.mubr.bf16.gmra.mrb[0].mxu0 %v9178
  %v13018 = vpop.f32.mrb[0].mxu0
  %v13019 = vadd.f32 0.0, %v13018
  %v13020 = vpop.f32.mrb[0].mxu0
  %v13021 = vpop.f32.mrb[0].mxu0
  %v13022 = vadd.f32 0.0, %v13021
  %v13023 = vpop.f32.mrb[0].mxu0
  %13024 = vmatprep.mubr.bf16.mxu0 %v10019
  %13025 = vmatmul.mubr.bf16.gmra.mrb[0].mxu0 %v9181
  %v13026 = vpop.f32.mrb[0].mxu0
  %v13027 = vadd.f32 0.0, %v13026
  %v13028 = vpop.f32.mrb[0].mxu0
  %v13029 = vpop.f32.mrb[0].mxu0
  %v13030 = vadd.f32 0.0, %v13029
  %v13031 = vpop.f32.mrb[0].mxu0
  %13032 = vmatprep.mubr.bf16.mxu0 %v10022
  %13033 = vmatmul.mubr.bf16.gmra.mrb[0].mxu0 %v9184
  %v13034 = vpop.f32.mrb[0].mxu0
  %v13035 = vadd.f32 0.0, %v13034
  %v13036 = vpop.f32.mrb[0].mxu0
  %v13037 = vpop.f32.mrb[0].mxu0
  %v13038 = vadd.f32 0.0, %v13037
  %v13039 = vpop.f32.mrb[0].mxu0
  %13040 = vmatprep.mubr.bf16.mxu0 %v10025
  %13041 = vmatmul.mubr.bf16.gmra.mrb[0].mxu0 %v9187
  %v13042 = vpop.f32.mrb[0].mxu0
  %v13043 = vadd.f32 0.0, %v13042
  %v13044 = vpop.f32.mrb[0].mxu0
  %v13045 = vpop.f32.mrb[0].mxu0
  %v13046 = vadd.f32 0.0, %v13045
  %v13047 = vpop.f32.mrb[0].mxu0
  %13048 = vmatprep.mubr.bf16.mxu0 %v10028
  %13049 = vmatmul.mubr.bf16.gmra.mrb[0].mxu0 %v9190
  %v13050 = vpop.f32.mrb[0].mxu0
  %v13051 = vadd.f32 0.0, %v13050
  %v13052 = vpop.f32.mrb[0].mxu0
  %v13053 = vpop.f32.mrb[0].mxu0
  %v13054 = vadd.f32 0.0, %v13053
  %v13055 = vpop.f32.mrb[0].mxu0
  %13056 = vmatprep.mubr.bf16.mxu0 %v10031
  %13057 = vmatmul.mubr.bf16.gmra.mrb[0].mxu0 %v9193
  %v13058 = vpop.f32.mrb[0].mxu0
  %v13059 = vadd.f32 0.0, %v13058
  %v13060 = vpop.f32.mrb[0].mxu0
  %v13061 = vpop.f32.mrb[0].mxu0
  %v13062 = vadd.f32 0.0, %v13061
  %v13063 = vpop.f32.mrb[0].mxu0
  %13064 = vmatprep.mubr.bf16.mxu0 %v10034
  %13065 = vmatmul.mubr.bf16.gmra.mrb[0].mxu0 %v9196
  %v13066 = vpop.f32.mrb[0].mxu0
  %v13067 = vadd.f32 0.0, %v13066
  %v13068 = vpop.f32.mrb[0].mxu0
  %v13069 = vpop.f32.mrb[0].mxu0
  %v13070 = vadd.f32 0.0, %v13069
  %v13071 = vpop.f32.mrb[0].mxu0
  %13072 = vmatprep.mubr.bf16.mxu0 %v10037
  %13073 = vmatmul.mubr.bf16.gmra.mrb[0].mxu0 %v9199
  %v13074 = vpop.f32.mrb[0].mxu0
  %v13075 = vadd.f32 0.0, %v13074
  %v13076 = vpop.f32.mrb[0].mxu0
  %v13077 = vpop.f32.mrb[0].mxu0
  %v13078 = vadd.f32 0.0, %v13077
  %v13079 = vpop.f32.mrb[0].mxu0
  %13080 = vmatprep.mubr.bf16.mxu0 %v10040
  %13081 = vmatmul.mubr.bf16.gmra.mrb[0].mxu0 %v9202
  %v13082 = vpop.f32.mrb[0].mxu0
  %v13083 = vadd.f32 0.0, %v13082
  %v13084 = vpop.f32.mrb[0].mxu0
  %v13085 = vpop.f32.mrb[0].mxu0
  %v13086 = vadd.f32 0.0, %v13085
  %v13087 = vpop.f32.mrb[0].mxu0
  %13088 = vmatprep.mubr.bf16.mxu0 %v10043
  %13089 = vmatmul.mubr.bf16.gmra.mrb[0].mxu0 %v9205
  %v13090 = vpop.f32.mrb[0].mxu0
  %v13091 = vadd.f32 0.0, %v13090
  %v13092 = vpop.f32.mrb[0].mxu0
  %v13093 = vpop.f32.mrb[0].mxu0
  %v13094 = vadd.f32 0.0, %v13093
  %v13095 = vpop.f32.mrb[0].mxu0
  %13096 = vmatprep.mubr.bf16.mxu0 %v10046
  %13097 = vmatmul.mubr.bf16.gmra.mrb[0].mxu0 %v9208
  %v13098 = vpop.f32.mrb[0].mxu0
  %v13099 = vadd.f32 0.0, %v13098
  %v13100 = vpop.f32.mrb[0].mxu0
  %v13101 = vpop.f32.mrb[0].mxu0
  %v13102 = vadd.f32 0.0, %v13101
  %v13103 = vpop.f32.mrb[0].mxu0
  %13104 = vmatprep.mubr.bf16.mxu0 %v10049
  %13105 = vmatmul.mubr.bf16.gmra.mrb[0].mxu0 %v9211
  %v13106 = vpop.f32.mrb[0].mxu0
  %v13107 = vadd.f32 0.0, %v13106
  %v13108 = vpop.f32.mrb[0].mxu0
  %v13109 = vpop.f32.mrb[0].mxu0
  %v13110 = vadd.f32 0.0, %v13109
  %v13111 = vpop.f32.mrb[0].mxu0
  %13112 = vmatprep.mubr.bf16.mxu0 %v10052
  %13113 = vmatmul.mubr.bf16.gmra.mrb[0].mxu0 %v9214
  %v13114 = vpop.f32.mrb[0].mxu0
  %v13115 = vadd.f32 0.0, %v13114
  %v13116 = vpop.f32.mrb[0].mxu0
  %v13117 = vpop.f32.mrb[0].mxu0
  %v13118 = vadd.f32 0.0, %v13117
  %v13119 = vpop.f32.mrb[0].mxu0
  %13120 = vmatprep.mubr.bf16.mxu0 %v10055
  %13121 = vmatmul.mubr.bf16.gmra.mrb[0].mxu0 %v9217
  %v13122 = vpop.f32.mrb[0].mxu0
  %v13123 = vadd.f32 0.0, %v13122
  %v13124 = vpop.f32.mrb[0].mxu0
  %v13125 = vpop.f32.mrb[0].mxu0
  %v13126 = vadd.f32 0.0, %v13125
  %v13127 = vpop.f32.mrb[0].mxu0
  %13128 = vmatprep.mubr.bf16.mxu0 %v10058
  %13129 = vmatmul.mubr.bf16.gmra.mrb[0].mxu0 %v9220
  %v13130 = vpop.f32.mrb[0].mxu0
  %v13131 = vadd.f32 0.0, %v13130
  %v13132 = vpop.f32.mrb[0].mxu0
  %v13133 = vpop.f32.mrb[0].mxu0
  %v13134 = vadd.f32 0.0, %v13133
  %v13135 = vpop.f32.mrb[0].mxu0
  %13136 = vmatprep.mubr.bf16.mxu0 %v10061
  %13137 = vmatmul.mubr.bf16.gmra.mrb[0].mxu0 %v9223
  %v13138 = vpop.f32.mrb[0].mxu0
  %v13139 = vadd.f32 0.0, %v13138
  %v13140 = vpop.f32.mrb[0].mxu0
  %v13141 = vpop.f32.mrb[0].mxu0
  %v13142 = vadd.f32 0.0, %v13141
  %v13143 = vpop.f32.mrb[0].mxu0
  %13144 = vmatprep.mubr.bf16.mxu0 %v10064
  %13145 = vmatmul.mubr.bf16.gmra.mrb[0].mxu0 %v9226
  %v13146 = vpop.f32.mrb[0].mxu0
  %v13147 = vadd.f32 0.0, %v13146
  %v13148 = vpop.f32.mrb[0].mxu0
  %v13149 = vpop.f32.mrb[0].mxu0
  %v13150 = vadd.f32 0.0, %v13149
  %v13151 = vpop.f32.mrb[0].mxu0
  %13152 = vmatprep.mubr.bf16.mxu0 %v10067
  %13153 = vmatmul.mubr.bf16.gmra.mrb[0].mxu0 %v9229
  %v13154 = vpop.f32.mrb[0].mxu0
  %v13155 = vadd.f32 0.0, %v13154
  %v13156 = vpop.f32.mrb[0].mxu0
  %v13157 = vpop.f32.mrb[0].mxu0
  %v13158 = vadd.f32 0.0, %v13157
  %v13159 = vpop.f32.mrb[0].mxu0
  %13160 = vmatprep.mubr.bf16.mxu0 %v10070
  %13161 = vmatmul.mubr.bf16.gmra.mrb[0].mxu0 %v9232
  %v13162 = vpop.f32.mrb[0].mxu0
  %v13163 = vadd.f32 0.0, %v13162
  %v13164 = vpop.f32.mrb[0].mxu0
  %v13165 = vpop.f32.mrb[0].mxu0
  %v13166 = vadd.f32 0.0, %v13165
  %v13167 = vpop.f32.mrb[0].mxu0
  %13168 = vmatprep.mubr.bf16.mxu0 %v10073
  %13169 = vmatmul.mubr.bf16.gmra.mrb[0].mxu0 %v9235
  %v13170 = vpop.f32.mrb[0].mxu0
  %v13171 = vadd.f32 0.0, %v13170
  %v13172 = vpop.f32.mrb[0].mxu0
  %v13173 = vpop.f32.mrb[0].mxu0
  %v13174 = vadd.f32 0.0, %v13173
  %v13175 = vpop.f32.mrb[0].mxu0
  %13176 = vmatprep.mubr.bf16.mxu0 %v10076
  %13177 = vmatmul.mubr.bf16.gmra.mrb[0].mxu0 %v9238
  %v13178 = vpop.f32.mrb[0].mxu0
  %v13179 = vadd.f32 0.0, %v13178
  %v13180 = vpop.f32.mrb[0].mxu0
  %v13181 = vpop.f32.mrb[0].mxu0
  %v13182 = vadd.f32 0.0, %v13181
  %v13183 = vpop.f32.mrb[0].mxu0
  %13184 = vmatprep.mubr.bf16.mxu0 %v10079
  %13185 = vmatmul.mubr.bf16.gmra.mrb[0].mxu0 %v9241
  %v13186 = vpop.f32.mrb[0].mxu0
  %v13187 = vadd.f32 0.0, %v13186
  %v13188 = vpop.f32.mrb[0].mxu0
  %v13189 = vpop.f32.mrb[0].mxu0
  %v13190 = vadd.f32 0.0, %v13189
  %v13191 = vpop.f32.mrb[0].mxu0
  %13192 = vmatprep.mubr.bf16.mxu0 %v10082
  %13193 = vmatmul.mubr.bf16.gmra.mrb[0].mxu0 %v9244
  %v13194 = vpop.f32.mrb[0].mxu0
  %v13195 = vadd.f32 0.0, %v13194
  %v13196 = vpop.f32.mrb[0].mxu0
  %v13197 = vpop.f32.mrb[0].mxu0
  %v13198 = vadd.f32 0.0, %v13197
  %v13199 = vpop.f32.mrb[0].mxu0
  %13200 = vmatprep.mubr.bf16.mxu0 %v10085
  %13201 = vmatmul.mubr.bf16.gmra.mrb[0].mxu0 %v9247
  %v13202 = vpop.f32.mrb[0].mxu0
  %v13203 = vadd.f32 0.0, %v13202
  %v13204 = vpop.f32.mrb[0].mxu0
  %v13205 = vpop.f32.mrb[0].mxu0
  %v13206 = vadd.f32 0.0, %v13205
  %v13207 = vpop.f32.mrb[0].mxu0
  %13208 = vmatprep.mubr.bf16.mxu0 %v10088
  %13209 = vmatmul.mubr.bf16.gmra.mrb[0].mxu0 %v9250
  %v13210 = vpop.f32.mrb[0].mxu0
  %v13211 = vadd.f32 0.0, %v13210
  %v13212 = vpop.f32.mrb[0].mxu0
  %v13213 = vpop.f32.mrb[0].mxu0
  %v13214 = vadd.f32 0.0, %v13213
  %v13215 = vpop.f32.mrb[0].mxu0
  %13216 = vmatprep.mubr.bf16.mxu0 %v10091
  %13217 = vmatmul.mubr.bf16.gmra.mrb[0].mxu0 %v9253
  %v13218 = vpop.f32.mrb[0].mxu0
  %v13219 = vadd.f32 0.0, %v13218
  %v13220 = vpop.f32.mrb[0].mxu0
  %v13221 = vpop.f32.mrb[0].mxu0
  %v13222 = vadd.f32 0.0, %v13221
  %v13223 = vpop.f32.mrb[0].mxu0
  %13224 = vmatprep.mubr.bf16.mxu0 %v10094
  %13225 = vmatmul.mubr.bf16.gmra.mrb[0].mxu0 %v9256
  %v13226 = vpop.f32.mrb[0].mxu0
  %v13227 = vadd.f32 0.0, %v13226
  %v13228 = vpop.f32.mrb[0].mxu0
  %v13229 = vpop.f32.mrb[0].mxu0
  %v13230 = vadd.f32 0.0, %v13229
  %v13231 = vpop.f32.mrb[0].mxu0
  %13232 = vmatprep.mubr.bf16.mxu0 %v10097
  %13233 = vmatmul.mubr.bf16.gmra.mrb[0].mxu0 %v9259
  %v13234 = vpop.f32.mrb[0].mxu0
  %v13235 = vadd.f32 0.0, %v13234
  %v13236 = vpop.f32.mrb[0].mxu0
  %v13237 = vpop.f32.mrb[0].mxu0
  %v13238 = vadd.f32 0.0, %v13237
  %v13239 = vpop.f32.mrb[0].mxu0
  %13240 = vmatprep.mubr.bf16.mxu0 %v10100
  %13241 = vmatmul.mubr.bf16.gmra.mrb[0].mxu0 %v9262
  %v13242 = vpop.f32.mrb[0].mxu0
  %v13243 = vadd.f32 0.0, %v13242
  %v13244 = vpop.f32.mrb[0].mxu0
  %v13245 = vpop.f32.mrb[0].mxu0
  %v13246 = vadd.f32 0.0, %v13245
  %v13247 = vpop.f32.mrb[0].mxu0
  %13248 = vmatprep.mubr.bf16.mxu0 %v10103
  %13249 = vmatmul.mubr.bf16.gmra.mrb[0].mxu0 %v9265
  %v13250 = vpop.f32.mrb[0].mxu0
  %v13251 = vadd.f32 0.0, %v13250
  %v13252 = vpop.f32.mrb[0].mxu0
  %v13253 = vpop.f32.mrb[0].mxu0
  %v13254 = vadd.f32 0.0, %v13253
  %v13255 = vpop.f32.mrb[0].mxu0
  %13256 = vmatprep.mubr.bf16.mxu0 %v10106
  %13257 = vmatmul.mubr.bf16.gmra.mrb[0].mxu0 %v9268
  %v13258 = vpop.f32.mrb[0].mxu0
  %v13259 = vadd.f32 0.0, %v13258
  %v13260 = vpop.f32.mrb[0].mxu0
  %v13261 = vpop.f32.mrb[0].mxu0
  %v13262 = vadd.f32 0.0, %v13261
  %v13263 = vpop.f32.mrb[0].mxu0
  %13264 = vdwg.mxu0
  %13265 = vmatprep.subr.bf16.mxu0 0
  %13266 = vmatpush1.bf16.msra.mxu0 %v12477
  %13267 = vmatprep.subr.bf16.mxu0 0
  %13268 = vmatpush1.bf16.msra.mxu0 %v12478
  %13269 = vmatprep.subr.bf16.mxu0 0
  %13270 = vmatpush1.bf16.msra.mxu0 %v12479
  %13271 = vmatprep.subr.bf16.mxu0 0
  %13272 = vmatpush1.bf16.msra.mxu0 %v12480
  %13273 = vmatprep.subr.bf16.mxu0 0
  %13274 = vmatpush1.bf16.msra.mxu0 %v12481
  %13275 = vmatprep.subr.bf16.mxu0 0
  %13276 = vmatpush1.bf16.msra.mxu0 %v12482
  %13277 = vmatprep.subr.bf16.mxu0 0
  %13278 = vmatpush1.bf16.msra.mxu0 %v12483
  %13279 = vmatprep.subr.bf16.mxu0 0
  %13280 = vmatpush1.bf16.msra.mxu0 %v12484
  %13281 = vmatprep.subr.bf16.mxu0 0
  %13282 = vmatpush1.bf16.msra.mxu0 %v12485
  %13283 = vmatprep.subr.bf16.mxu0 0
  %13284 = vmatpush1.bf16.msra.mxu0 %v12486
  %13285 = vmatprep.subr.bf16.mxu0 0
  %13286 = vmatpush1.bf16.msra.mxu0 %v12487
  %13287 = vmatprep.subr.bf16.mxu0 0
  %13288 = vmatpush1.bf16.msra.mxu0 %v12488
  %13289 = vmatprep.subr.bf16.mxu0 0
  %13290 = vmatpush1.bf16.msra.mxu0 %v12489
  %13291 = vmatprep.subr.bf16.mxu0 0
  %13292 = vmatpush1.bf16.msra.mxu0 %v12490
  %13293 = vmatprep.subr.bf16.mxu0 0
  %13294 = vmatpush1.bf16.msra.mxu0 %v12491
  %13295 = vmatprep.subr.bf16.mxu0 0
  %13296 = vmatpush1.bf16.msra.mxu0 %v12718
  %13297 = vmatprep.mubr.bf16.mxu0 %v12526
  %13298 = vmatmul.mubr.bf16.gmra.mrb[0].mxu0 %v12081
  %v13299 = vpop.f32.mrb[0].mxu0
  %v13300 = vadd.f32 %v12755, %v13299
  %v13301 = vpop.f32.mrb[0].mxu0
  %v13302 = vpop.f32.mrb[0].mxu0
  %v13303 = vadd.f32 %v12758, %v13302
  %v13304 = vpop.f32.mrb[0].mxu0
  %13305 = vmatprep.mubr.bf16.mxu0 %v12529
  %13306 = vmatmul.mubr.bf16.gmra.mrb[0].mxu0 %v12084
  %v13307 = vpop.f32.mrb[0].mxu0
  %v13308 = vadd.f32 %v12763, %v13307
  %v13309 = vpop.f32.mrb[0].mxu0
  %v13310 = vpop.f32.mrb[0].mxu0
  %v13311 = vadd.f32 %v12766, %v13310
  %v13312 = vpop.f32.mrb[0].mxu0
  %13313 = vmatprep.mubr.bf16.mxu0 %v12532
  %13314 = vmatmul.mubr.bf16.gmra.mrb[0].mxu0 %v12087
  %v13315 = vpop.f32.mrb[0].mxu0
  %v13316 = vadd.f32 %v12771, %v13315
  %v13317 = vpop.f32.mrb[0].mxu0
  %v13318 = vpop.f32.mrb[0].mxu0
  %v13319 = vadd.f32 %v12774, %v13318
  %v13320 = vpop.f32.mrb[0].mxu0
  %13321 = vmatprep.mubr.bf16.mxu0 %v12535
  %13322 = vmatmul.mubr.bf16.gmra.mrb[0].mxu0 %v12090
  %v13323 = vpop.f32.mrb[0].mxu0
  %v13324 = vadd.f32 %v12779, %v13323
  %v13325 = vpop.f32.mrb[0].mxu0
  %v13326 = vpop.f32.mrb[0].mxu0
  %v13327 = vadd.f32 %v12782, %v13326
  %v13328 = vpop.f32.mrb[0].mxu0
  %13329 = vmatprep.mubr.bf16.mxu0 %v12538
  %13330 = vmatmul.mubr.bf16.gmra.mrb[0].mxu0 %v12093
  %v13331 = vpop.f32.mrb[0].mxu0
  %v13332 = vadd.f32 %v12787, %v13331
  %v13333 = vpop.f32.mrb[0].mxu0
  %v13334 = vpop.f32.mrb[0].mxu0
  %v13335 = vadd.f32 %v12790, %v13334
  %v13336 = vpop.f32.mrb[0].mxu0
  %13337 = vmatprep.mubr.bf16.mxu0 %v12541
  %13338 = vmatmul.mubr.bf16.gmra.mrb[0].mxu0 %v12096
  %v13339 = vpop.f32.mrb[0].mxu0
  %v13340 = vadd.f32 %v12795, %v13339
  %v13341 = vpop.f32.mrb[0].mxu0
  %v13342 = vpop.f32.mrb[0].mxu0
  %v13343 = vadd.f32 %v12798, %v13342
  %v13344 = vpop.f32.mrb[0].mxu0
  %13345 = vmatprep.mubr.bf16.mxu0 %v12544
  %13346 = vmatmul.mubr.bf16.gmra.mrb[0].mxu0 %v12099
  %v13347 = vpop.f32.mrb[0].mxu0
  %v13348 = vadd.f32 %v12803, %v13347
  %v13349 = vpop.f32.mrb[0].mxu0
  %v13350 = vpop.f32.mrb[0].mxu0
  %v13351 = vadd.f32 %v12806, %v13350
  %v13352 = vpop.f32.mrb[0].mxu0
  %13353 = vmatprep.mubr.bf16.mxu0 %v12547
  %13354 = vmatmul.mubr.bf16.gmra.mrb[0].mxu0 %v12102
  %v13355 = vpop.f32.mrb[0].mxu0
  %v13356 = vadd.f32 %v12811, %v13355
  %v13357 = vpop.f32.mrb[0].mxu0
  %v13358 = vpop.f32.mrb[0].mxu0
  %v13359 = vadd.f32 %v12814, %v13358
  %v13360 = vpop.f32.mrb[0].mxu0
  %13361 = vmatprep.mubr.bf16.mxu0 %v12550
  %13362 = vmatmul.mubr.bf16.gmra.mrb[0].mxu0 %v12105
  %v13363 = vpop.f32.mrb[0].mxu0
  %v13364 = vadd.f32 %v12819, %v13363
  %v13365 = vpop.f32.mrb[0].mxu0
  %v13366 = vpop.f32.mrb[0].mxu0
  %v13367 = vadd.f32 %v12822, %v13366
  %v13368 = vpop.f32.mrb[0].mxu0
  %13369 = vmatprep.mubr.bf16.mxu0 %v12553
  %13370 = vmatmul.mubr.bf16.gmra.mrb[0].mxu0 %v12108
  %v13371 = vpop.f32.mrb[0].mxu0
  %v13372 = vadd.f32 %v12827, %v13371
  %v13373 = vpop.f32.mrb[0].mxu0
  %v13374 = vpop.f32.mrb[0].mxu0
  %v13375 = vadd.f32 %v12830, %v13374
  %v13376 = vpop.f32.mrb[0].mxu0
  %13377 = vmatprep.mubr.bf16.mxu0 %v12556
  %13378 = vmatmul.mubr.bf16.gmra.mrb[0].mxu0 %v12111
  %v13379 = vpop.f32.mrb[0].mxu0
  %v13380 = vadd.f32 %v12835, %v13379
  %v13381 = vpop.f32.mrb[0].mxu0
  %v13382 = vpop.f32.mrb[0].mxu0
  %v13383 = vadd.f32 %v12838, %v13382
  %v13384 = vpop.f32.mrb[0].mxu0
  %13385 = vmatprep.mubr.bf16.mxu0 %v12559
  %13386 = vmatmul.mubr.bf16.gmra.mrb[0].mxu0 %v12114
  %v13387 = vpop.f32.mrb[0].mxu0
  %v13388 = vadd.f32 %v12843, %v13387
  %v13389 = vpop.f32.mrb[0].mxu0
  %v13390 = vpop.f32.mrb[0].mxu0
  %v13391 = vadd.f32 %v12846, %v13390
  %v13392 = vpop.f32.mrb[0].mxu0
  %13393 = vmatprep.mubr.bf16.mxu0 %v12562
  %13394 = vmatmul.mubr.bf16.gmra.mrb[0].mxu0 %v12117
  %v13395 = vpop.f32.mrb[0].mxu0
  %v13396 = vadd.f32 %v12851, %v13395
  %v13397 = vpop.f32.mrb[0].mxu0
  %v13398 = vpop.f32.mrb[0].mxu0
  %v13399 = vadd.f32 %v12854, %v13398
  %v13400 = vpop.f32.mrb[0].mxu0
  %13401 = vmatprep.mubr.bf16.mxu0 %v12565
  %13402 = vmatmul.mubr.bf16.gmra.mrb[0].mxu0 %v12120
  %v13403 = vpop.f32.mrb[0].mxu0
  %v13404 = vadd.f32 %v12859, %v13403
  %v13405 = vpop.f32.mrb[0].mxu0
  %v13406 = vpop.f32.mrb[0].mxu0
  %v13407 = vadd.f32 %v12862, %v13406
  %v13408 = vpop.f32.mrb[0].mxu0
  %13409 = vmatprep.mubr.bf16.mxu0 %v12568
  %13410 = vmatmul.mubr.bf16.gmra.mrb[0].mxu0 %v12123
  %v13411 = vpop.f32.mrb[0].mxu0
  %v13412 = vadd.f32 %v12867, %v13411
  %v13413 = vpop.f32.mrb[0].mxu0
  %v13414 = vpop.f32.mrb[0].mxu0
  %v13415 = vadd.f32 %v12870, %v13414
  %v13416 = vpop.f32.mrb[0].mxu0
  %13417 = vmatprep.mubr.bf16.mxu0 %v12571
  %13418 = vmatmul.mubr.bf16.gmra.mrb[0].mxu0 %v12126
  %v13419 = vpop.f32.mrb[0].mxu0
  %v13420 = vadd.f32 %v12875, %v13419
  %v13421 = vpop.f32.mrb[0].mxu0
  %v13422 = vpop.f32.mrb[0].mxu0
  %v13423 = vadd.f32 %v12878, %v13422
  %v13424 = vpop.f32.mrb[0].mxu0
  %13425 = vmatprep.mubr.bf16.mxu0 %v12574
  %13426 = vmatmul.mubr.bf16.gmra.mrb[0].mxu0 %v12129
  %v13427 = vpop.f32.mrb[0].mxu0
  %v13428 = vadd.f32 %v12883, %v13427
  %v13429 = vpop.f32.mrb[0].mxu0
  %v13430 = vpop.f32.mrb[0].mxu0
  %v13431 = vadd.f32 %v12886, %v13430
  %v13432 = vpop.f32.mrb[0].mxu0
  %13433 = vmatprep.mubr.bf16.mxu0 %v12577
  %13434 = vmatmul.mubr.bf16.gmra.mrb[0].mxu0 %v12132
  %v13435 = vpop.f32.mrb[0].mxu0
  %v13436 = vadd.f32 %v12891, %v13435
  %v13437 = vpop.f32.mrb[0].mxu0
  %v13438 = vpop.f32.mrb[0].mxu0
  %v13439 = vadd.f32 %v12894, %v13438
  %v13440 = vpop.f32.mrb[0].mxu0
  %13441 = vmatprep.mubr.bf16.mxu0 %v12580
  %13442 = vmatmul.mubr.bf16.gmra.mrb[0].mxu0 %v12135
  %v13443 = vpop.f32.mrb[0].mxu0
  %v13444 = vadd.f32 %v12899, %v13443
  %v13445 = vpop.f32.mrb[0].mxu0
  %v13446 = vpop.f32.mrb[0].mxu0
  %v13447 = vadd.f32 %v12902, %v13446
  %v13448 = vpop.f32.mrb[0].mxu0
  %13449 = vmatprep.mubr.bf16.mxu0 %v12583
  %13450 = vmatmul.mubr.bf16.gmra.mrb[0].mxu0 %v12138
  %v13451 = vpop.f32.mrb[0].mxu0
  %v13452 = vadd.f32 %v12907, %v13451
  %v13453 = vpop.f32.mrb[0].mxu0
  %v13454 = vpop.f32.mrb[0].mxu0
  %v13455 = vadd.f32 %v12910, %v13454
  %v13456 = vpop.f32.mrb[0].mxu0
  %13457 = vmatprep.mubr.bf16.mxu0 %v12586
  %13458 = vmatmul.mubr.bf16.gmra.mrb[0].mxu0 %v12141
  %v13459 = vpop.f32.mrb[0].mxu0
  %v13460 = vadd.f32 %v12915, %v13459
  %v13461 = vpop.f32.mrb[0].mxu0
  %v13462 = vpop.f32.mrb[0].mxu0
  %v13463 = vadd.f32 %v12918, %v13462
  %v13464 = vpop.f32.mrb[0].mxu0
  %13465 = vmatprep.mubr.bf16.mxu0 %v12589
  %13466 = vmatmul.mubr.bf16.gmra.mrb[0].mxu0 %v12144
  %v13467 = vpop.f32.mrb[0].mxu0
  %v13468 = vadd.f32 %v12923, %v13467
  %v13469 = vpop.f32.mrb[0].mxu0
  %v13470 = vpop.f32.mrb[0].mxu0
  %v13471 = vadd.f32 %v12926, %v13470
  %v13472 = vpop.f32.mrb[0].mxu0
  %13473 = vmatprep.mubr.bf16.mxu0 %v12592
  %13474 = vmatmul.mubr.bf16.gmra.mrb[0].mxu0 %v12147
  %v13475 = vpop.f32.mrb[0].mxu0
  %v13476 = vadd.f32 %v12931, %v13475
  %v13477 = vpop.f32.mrb[0].mxu0
  %v13478 = vpop.f32.mrb[0].mxu0
  %v13479 = vadd.f32 %v12934, %v13478
  %v13480 = vpop.f32.mrb[0].mxu0
  %13481 = vmatprep.mubr.bf16.mxu0 %v12595
  %13482 = vmatmul.mubr.bf16.gmra.mrb[0].mxu0 %v12150
  %v13483 = vpop.f32.mrb[0].mxu0
  %v13484 = vadd.f32 %v12939, %v13483
  %v13485 = vpop.f32.mrb[0].mxu0
  %v13486 = vpop.f32.mrb[0].mxu0
  %v13487 = vadd.f32 %v12942, %v13486
  %v13488 = vpop.f32.mrb[0].mxu0
  %13489 = vmatprep.mubr.bf16.mxu0 %v12598
  %13490 = vmatmul.mubr.bf16.gmra.mrb[0].mxu0 %v12153
  %v13491 = vpop.f32.mrb[0].mxu0
  %v13492 = vadd.f32 %v12947, %v13491
  %v13493 = vpop.f32.mrb[0].mxu0
  %v13494 = vpop.f32.mrb[0].mxu0
  %v13495 = vadd.f32 %v12950, %v13494
  %v13496 = vpop.f32.mrb[0].mxu0
  %13497 = vmatprep.mubr.bf16.mxu0 %v12601
  %13498 = vmatmul.mubr.bf16.gmra.mrb[0].mxu0 %v12156
  %v13499 = vpop.f32.mrb[0].mxu0
  %v13500 = vadd.f32 %v12955, %v13499
  %v13501 = vpop.f32.mrb[0].mxu0
  %v13502 = vpop.f32.mrb[0].mxu0
  %v13503 = vadd.f32 %v12958, %v13502
  %v13504 = vpop.f32.mrb[0].mxu0
  %13505 = vmatprep.mubr.bf16.mxu0 %v12604
  %13506 = vmatmul.mubr.bf16.gmra.mrb[0].mxu0 %v12159
  %v13507 = vpop.f32.mrb[0].mxu0
  %v13508 = vadd.f32 %v12963, %v13507
  %v13509 = vpop.f32.mrb[0].mxu0
  %v13510 = vpop.f32.mrb[0].mxu0
  %v13511 = vadd.f32 %v12966, %v13510
  %v13512 = vpop.f32.mrb[0].mxu0
  %13513 = vmatprep.mubr.bf16.mxu0 %v12607
  %13514 = vmatmul.mubr.bf16.gmra.mrb[0].mxu0 %v12162
  %v13515 = vpop.f32.mrb[0].mxu0
  %v13516 = vadd.f32 %v12971, %v13515
  %v13517 = vpop.f32.mrb[0].mxu0
  %v13518 = vpop.f32.mrb[0].mxu0
  %v13519 = vadd.f32 %v12974, %v13518
  %v13520 = vpop.f32.mrb[0].mxu0
  %13521 = vmatprep.mubr.bf16.mxu0 %v12610
  %13522 = vmatmul.mubr.bf16.gmra.mrb[0].mxu0 %v12165
  %v13523 = vpop.f32.mrb[0].mxu0
  %v13524 = vadd.f32 %v12979, %v13523
  %v13525 = vpop.f32.mrb[0].mxu0
  %v13526 = vpop.f32.mrb[0].mxu0
  %v13527 = vadd.f32 %v12982, %v13526
  %v13528 = vpop.f32.mrb[0].mxu0
  %13529 = vmatprep.mubr.bf16.mxu0 %v12613
  %13530 = vmatmul.mubr.bf16.gmra.mrb[0].mxu0 %v12168
  %v13531 = vpop.f32.mrb[0].mxu0
  %v13532 = vadd.f32 %v12987, %v13531
  %v13533 = vpop.f32.mrb[0].mxu0
  %v13534 = vpop.f32.mrb[0].mxu0
  %v13535 = vadd.f32 %v12990, %v13534
  %v13536 = vpop.f32.mrb[0].mxu0
  %13537 = vmatprep.mubr.bf16.mxu0 %v12616
  %13538 = vmatmul.mubr.bf16.gmra.mrb[0].mxu0 %v12171
  %v13539 = vpop.f32.mrb[0].mxu0
  %v13540 = vadd.f32 %v12995, %v13539
  %v13541 = vpop.f32.mrb[0].mxu0
  %v13542 = vpop.f32.mrb[0].mxu0
  %v13543 = vadd.f32 %v12998, %v13542
  %v13544 = vpop.f32.mrb[0].mxu0
  %13545 = vmatprep.mubr.bf16.mxu0 %v12619
  %13546 = vmatmul.mubr.bf16.gmra.mrb[0].mxu0 %v12174
  %v13547 = vpop.f32.mrb[0].mxu0
  %v13548 = vadd.f32 %v13003, %v13547
  %v13549 = vpop.f32.mrb[0].mxu0
  %v13550 = vpop.f32.mrb[0].mxu0
  %v13551 = vadd.f32 %v13006, %v13550
  %v13552 = vpop.f32.mrb[0].mxu0
  %13553 = vmatprep.mubr.bf16.mxu0 %v12622
  %13554 = vmatmul.mubr.bf16.gmra.mrb[0].mxu0 %v12177
  %v13555 = vpop.f32.mrb[0].mxu0
  %v13556 = vadd.f32 %v13011, %v13555
  %v13557 = vpop.f32.mrb[0].mxu0
  %v13558 = vpop.f32.mrb[0].mxu0
  %v13559 = vadd.f32 %v13014, %v13558
  %v13560 = vpop.f32.mrb[0].mxu0
  %13561 = vmatprep.mubr.bf16.mxu0 %v12625
  %13562 = vmatmul.mubr.bf16.gmra.mrb[0].mxu0 %v12180
  %v13563 = vpop.f32.mrb[0].mxu0
  %v13564 = vadd.f32 %v13019, %v13563
  %v13565 = vpop.f32.mrb[0].mxu0
  %v13566 = vpop.f32.mrb[0].mxu0
  %v13567 = vadd.f32 %v13022, %v13566
  %v13568 = vpop.f32.mrb[0].mxu0
  %13569 = vmatprep.mubr.bf16.mxu0 %v12628
  %13570 = vmatmul.mubr.bf16.gmra.mrb[0].mxu0 %v12183
  %v13571 = vpop.f32.mrb[0].mxu0
  %v13572 = vadd.f32 %v13027, %v13571
  %v13573 = vpop.f32.mrb[0].mxu0
  %v13574 = vpop.f32.mrb[0].mxu0
  %v13575 = vadd.f32 %v13030, %v13574
  %v13576 = vpop.f32.mrb[0].mxu0
  %13577 = vmatprep.mubr.bf16.mxu0 %v12631
  %13578 = vmatmul.mubr.bf16.gmra.mrb[0].mxu0 %v12186
  %v13579 = vpop.f32.mrb[0].mxu0
  %v13580 = vadd.f32 %v13035, %v13579
  %v13581 = vpop.f32.mrb[0].mxu0
  %v13582 = vpop.f32.mrb[0].mxu0
  %v13583 = vadd.f32 %v13038, %v13582
  %v13584 = vpop.f32.mrb[0].mxu0
  %13585 = vmatprep.mubr.bf16.mxu0 %v12634
  %13586 = vmatmul.mubr.bf16.gmra.mrb[0].mxu0 %v12189
  %v13587 = vpop.f32.mrb[0].mxu0
  %v13588 = vadd.f32 %v13043, %v13587
  %v13589 = vpop.f32.mrb[0].mxu0
  %v13590 = vpop.f32.mrb[0].mxu0
  %v13591 = vadd.f32 %v13046, %v13590
  %v13592 = vpop.f32.mrb[0].mxu0
  %13593 = vmatprep.mubr.bf16.mxu0 %v12637
  %13594 = vmatmul.mubr.bf16.gmra.mrb[0].mxu0 %v12192
  %v13595 = vpop.f32.mrb[0].mxu0
  %v13596 = vadd.f32 %v13051, %v13595
  %v13597 = vpop.f32.mrb[0].mxu0
  %v13598 = vpop.f32.mrb[0].mxu0
  %v13599 = vadd.f32 %v13054, %v13598
  %v13600 = vpop.f32.mrb[0].mxu0
  %13601 = vmatprep.mubr.bf16.mxu0 %v12640
  %13602 = vmatmul.mubr.bf16.gmra.mrb[0].mxu0 %v12195
  %v13603 = vpop.f32.mrb[0].mxu0
  %v13604 = vadd.f32 %v13059, %v13603
  %v13605 = vpop.f32.mrb[0].mxu0
  %v13606 = vpop.f32.mrb[0].mxu0
  %v13607 = vadd.f32 %v13062, %v13606
  %v13608 = vpop.f32.mrb[0].mxu0
  %13609 = vmatprep.mubr.bf16.mxu0 %v12643
  %13610 = vmatmul.mubr.bf16.gmra.mrb[0].mxu0 %v12198
  %v13611 = vpop.f32.mrb[0].mxu0
  %v13612 = vadd.f32 %v13067, %v13611
  %v13613 = vpop.f32.mrb[0].mxu0
  %v13614 = vpop.f32.mrb[0].mxu0
  %v13615 = vadd.f32 %v13070, %v13614
  %v13616 = vpop.f32.mrb[0].mxu0
  %13617 = vmatprep.mubr.bf16.mxu0 %v12646
  %13618 = vmatmul.mubr.bf16.gmra.mrb[0].mxu0 %v12201
  %v13619 = vpop.f32.mrb[0].mxu0
  %v13620 = vadd.f32 %v13075, %v13619
  %v13621 = vpop.f32.mrb[0].mxu0
  %v13622 = vpop.f32.mrb[0].mxu0
  %v13623 = vadd.f32 %v13078, %v13622
  %v13624 = vpop.f32.mrb[0].mxu0
  %13625 = vmatprep.mubr.bf16.mxu0 %v12649
  %13626 = vmatmul.mubr.bf16.gmra.mrb[0].mxu0 %v12204
  %v13627 = vpop.f32.mrb[0].mxu0
  %v13628 = vadd.f32 %v13083, %v13627
  %v13629 = vpop.f32.mrb[0].mxu0
  %v13630 = vpop.f32.mrb[0].mxu0
  %v13631 = vadd.f32 %v13086, %v13630
  %v13632 = vpop.f32.mrb[0].mxu0
  %13633 = vmatprep.mubr.bf16.mxu0 %v12652
  %13634 = vmatmul.mubr.bf16.gmra.mrb[0].mxu0 %v12207
  %v13635 = vpop.f32.mrb[0].mxu0
  %v13636 = vadd.f32 %v13091, %v13635
  %v13637 = vpop.f32.mrb[0].mxu0
  %v13638 = vpop.f32.mrb[0].mxu0
  %v13639 = vadd.f32 %v13094, %v13638
  %v13640 = vpop.f32.mrb[0].mxu0
  %13641 = vmatprep.mubr.bf16.mxu0 %v12655
  %13642 = vmatmul.mubr.bf16.gmra.mrb[0].mxu0 %v12210
  %v13643 = vpop.f32.mrb[0].mxu0
  %v13644 = vadd.f32 %v13099, %v13643
  %v13645 = vpop.f32.mrb[0].mxu0
  %v13646 = vpop.f32.mrb[0].mxu0
  %v13647 = vadd.f32 %v13102, %v13646
  %v13648 = vpop.f32.mrb[0].mxu0
  %13649 = vmatprep.mubr.bf16.mxu0 %v12658
  %13650 = vmatmul.mubr.bf16.gmra.mrb[0].mxu0 %v12213
  %v13651 = vpop.f32.mrb[0].mxu0
  %v13652 = vadd.f32 %v13107, %v13651
  %v13653 = vpop.f32.mrb[0].mxu0
  %v13654 = vpop.f32.mrb[0].mxu0
  %v13655 = vadd.f32 %v13110, %v13654
  %v13656 = vpop.f32.mrb[0].mxu0
  %13657 = vmatprep.mubr.bf16.mxu0 %v12661
  %13658 = vmatmul.mubr.bf16.gmra.mrb[0].mxu0 %v12216
  %v13659 = vpop.f32.mrb[0].mxu0
  %v13660 = vadd.f32 %v13115, %v13659
  %v13661 = vpop.f32.mrb[0].mxu0
  %v13662 = vpop.f32.mrb[0].mxu0
  %v13663 = vadd.f32 %v13118, %v13662
  %v13664 = vpop.f32.mrb[0].mxu0
  %13665 = vmatprep.mubr.bf16.mxu0 %v12664
  %13666 = vmatmul.mubr.bf16.gmra.mrb[0].mxu0 %v12219
  %v13667 = vpop.f32.mrb[0].mxu0
  %v13668 = vadd.f32 %v13123, %v13667
  %v13669 = vpop.f32.mrb[0].mxu0
  %v13670 = vpop.f32.mrb[0].mxu0
  %v13671 = vadd.f32 %v13126, %v13670
  %v13672 = vpop.f32.mrb[0].mxu0
  %13673 = vmatprep.mubr.bf16.mxu0 %v12667
  %13674 = vmatmul.mubr.bf16.gmra.mrb[0].mxu0 %v12222
  %v13675 = vpop.f32.mrb[0].mxu0
  %v13676 = vadd.f32 %v13131, %v13675
  %v13677 = vpop.f32.mrb[0].mxu0
  %v13678 = vpop.f32.mrb[0].mxu0
  %v13679 = vadd.f32 %v13134, %v13678
  %v13680 = vpop.f32.mrb[0].mxu0
  %13681 = vmatprep.mubr.bf16.mxu0 %v12670
  %13682 = vmatmul.mubr.bf16.gmra.mrb[0].mxu0 %v12225
  %v13683 = vpop.f32.mrb[0].mxu0
  %v13684 = vadd.f32 %v13139, %v13683
  %v13685 = vpop.f32.mrb[0].mxu0
  %v13686 = vpop.f32.mrb[0].mxu0
  %v13687 = vadd.f32 %v13142, %v13686
  %v13688 = vpop.f32.mrb[0].mxu0
  %13689 = vmatprep.mubr.bf16.mxu0 %v12673
  %13690 = vmatmul.mubr.bf16.gmra.mrb[0].mxu0 %v12228
  %v13691 = vpop.f32.mrb[0].mxu0
  %v13692 = vadd.f32 %v13147, %v13691
  %v13693 = vpop.f32.mrb[0].mxu0
  %v13694 = vpop.f32.mrb[0].mxu0
  %v13695 = vadd.f32 %v13150, %v13694
  %v13696 = vpop.f32.mrb[0].mxu0
  %13697 = vmatprep.mubr.bf16.mxu0 %v12676
  %13698 = vmatmul.mubr.bf16.gmra.mrb[0].mxu0 %v12231
  %v13699 = vpop.f32.mrb[0].mxu0
  %v13700 = vadd.f32 %v13155, %v13699
  %v13701 = vpop.f32.mrb[0].mxu0
  %v13702 = vpop.f32.mrb[0].mxu0
  %v13703 = vadd.f32 %v13158, %v13702
  %v13704 = vpop.f32.mrb[0].mxu0
  %13705 = vmatprep.mubr.bf16.mxu0 %v12679
  %13706 = vmatmul.mubr.bf16.gmra.mrb[0].mxu0 %v12234
  %v13707 = vpop.f32.mrb[0].mxu0
  %v13708 = vadd.f32 %v13163, %v13707
  %v13709 = vpop.f32.mrb[0].mxu0
  %v13710 = vpop.f32.mrb[0].mxu0
  %v13711 = vadd.f32 %v13166, %v13710
  %v13712 = vpop.f32.mrb[0].mxu0
  %13713 = vmatprep.mubr.bf16.mxu0 %v12682
  %13714 = vmatmul.mubr.bf16.gmra.mrb[0].mxu0 %v12237
  %v13715 = vpop.f32.mrb[0].mxu0
  %v13716 = vadd.f32 %v13171, %v13715
  %v13717 = vpop.f32.mrb[0].mxu0
  %v13718 = vpop.f32.mrb[0].mxu0
  %v13719 = vadd.f32 %v13174, %v13718
  %v13720 = vpop.f32.mrb[0].mxu0
  %13721 = vmatprep.mubr.bf16.mxu0 %v12685
  %13722 = vmatmul.mubr.bf16.gmra.mrb[0].mxu0 %v12240
  %v13723 = vpop.f32.mrb[0].mxu0
  %v13724 = vadd.f32 %v13179, %v13723
  %v13725 = vpop.f32.mrb[0].mxu0
  %v13726 = vpop.f32.mrb[0].mxu0
  %v13727 = vadd.f32 %v13182, %v13726
  %v13728 = vpop.f32.mrb[0].mxu0
  %13729 = vmatprep.mubr.bf16.mxu0 %v12688
  %13730 = vmatmul.mubr.bf16.gmra.mrb[0].mxu0 %v12243
  %v13731 = vpop.f32.mrb[0].mxu0
  %v13732 = vadd.f32 %v13187, %v13731
  %v13733 = vpop.f32.mrb[0].mxu0
  %v13734 = vpop.f32.mrb[0].mxu0
  %v13735 = vadd.f32 %v13190, %v13734
  %v13736 = vpop.f32.mrb[0].mxu0
  %13737 = vmatprep.mubr.bf16.mxu0 %v12691
  %13738 = vmatmul.mubr.bf16.gmra.mrb[0].mxu0 %v12246
  %v13739 = vpop.f32.mrb[0].mxu0
  %v13740 = vadd.f32 %v13195, %v13739
  %v13741 = vpop.f32.mrb[0].mxu0
  %v13742 = vpop.f32.mrb[0].mxu0
  %v13743 = vadd.f32 %v13198, %v13742
  %v13744 = vpop.f32.mrb[0].mxu0
  %13745 = vmatprep.mubr.bf16.mxu0 %v12694
  %13746 = vmatmul.mubr.bf16.gmra.mrb[0].mxu0 %v12249
  %v13747 = vpop.f32.mrb[0].mxu0
  %v13748 = vadd.f32 %v13203, %v13747
  %v13749 = vpop.f32.mrb[0].mxu0
  %v13750 = vpop.f32.mrb[0].mxu0
  %v13751 = vadd.f32 %v13206, %v13750
  %v13752 = vpop.f32.mrb[0].mxu0
  %13753 = vmatprep.mubr.bf16.mxu0 %v12697
  %13754 = vmatmul.mubr.bf16.gmra.mrb[0].mxu0 %v12252
  %v13755 = vpop.f32.mrb[0].mxu0
  %v13756 = vadd.f32 %v13211, %v13755
  %v13757 = vpop.f32.mrb[0].mxu0
  %v13758 = vpop.f32.mrb[0].mxu0
  %v13759 = vadd.f32 %v13214, %v13758
  %v13760 = vpop.f32.mrb[0].mxu0
  %13761 = vmatprep.mubr.bf16.mxu0 %v12700
  %13762 = vmatmul.mubr.bf16.gmra.mrb[0].mxu0 %v12255
  %v13763 = vpop.f32.mrb[0].mxu0
  %v13764 = vadd.f32 %v13219, %v13763
  %v13765 = vpop.f32.mrb[0].mxu0
  %v13766 = vpop.f32.mrb[0].mxu0
  %v13767 = vadd.f32 %v13222, %v13766
  %v13768 = vpop.f32.mrb[0].mxu0
  %13769 = vmatprep.mubr.bf16.mxu0 %v12703
  %13770 = vmatmul.mubr.bf16.gmra.mrb[0].mxu0 %v12258
  %v13771 = vpop.f32.mrb[0].mxu0
  %v13772 = vadd.f32 %v13227, %v13771
  %v13773 = vpop.f32.mrb[0].mxu0
  %v13774 = vpop.f32.mrb[0].mxu0
  %v13775 = vadd.f32 %v13230, %v13774
  %v13776 = vpop.f32.mrb[0].mxu0
  %13777 = vmatprep.mubr.bf16.mxu0 %v12706
  %13778 = vmatmul.mubr.bf16.gmra.mrb[0].mxu0 %v12261
  %v13779 = vpop.f32.mrb[0].mxu0
  %v13780 = vadd.f32 %v13235, %v13779
  %v13781 = vpop.f32.mrb[0].mxu0
  %v13782 = vpop.f32.mrb[0].mxu0
  %v13783 = vadd.f32 %v13238, %v13782
  %v13784 = vpop.f32.mrb[0].mxu0
  %13785 = vmatprep.mubr.bf16.mxu0 %v12709
  %13786 = vmatmul.mubr.bf16.gmra.mrb[0].mxu0 %v12264
  %v13787 = vpop.f32.mrb[0].mxu0
  %v13788 = vadd.f32 %v13243, %v13787
  %v13789 = vpop.f32.mrb[0].mxu0
  %v13790 = vpop.f32.mrb[0].mxu0
  %v13791 = vadd.f32 %v13246, %v13790
  %v13792 = vpop.f32.mrb[0].mxu0
  %13793 = vmatprep.mubr.bf16.mxu0 %v12712
  %13794 = vmatmul.mubr.bf16.gmra.mrb[0].mxu0 %v12267
  %v13795 = vpop.f32.mrb[0].mxu0
  %v13796 = vadd.f32 %v13251, %v13795
  %v13797 = vpop.f32.mrb[0].mxu0
  %v13798 = vpop.f32.mrb[0].mxu0
  %v13799 = vadd.f32 %v13254, %v13798
  %v13800 = vpop.f32.mrb[0].mxu0
  %13801 = vmatprep.mubr.bf16.mxu0 %v12715
  %13802 = vmatmul.mubr.bf16.gmra.mrb[0].mxu0 %v12270
  %v13803 = vpop.f32.mrb[0].mxu0
  %v13804 = vadd.f32 %v13259, %v13803
  %v13805 = vpop.f32.mrb[0].mxu0
  %v13806 = vpop.f32.mrb[0].mxu0
  %v13807 = vadd.f32 %v13262, %v13806
  %v13808 = vpop.f32.mrb[0].mxu0
  %13809 = vdwg.mxu0
  %v13810 = vmax.f32 %v13300, %v13364
  %v13811 = vmax.f32 %v13303, %v13367
  %v13812 = vmax.f32 %v13308, %v13372
  %v13813 = vmax.f32 %v13311, %v13375
  %v13814 = vmax.f32 %v13316, %v13380
  %v13815 = vmax.f32 %v13319, %v13383
  %v13816 = vmax.f32 %v13324, %v13388
  %v13817 = vmax.f32 %v13327, %v13391
  %v13818 = vmax.f32 %v13332, %v13396
  %v13819 = vmax.f32 %v13335, %v13399
  %v13820 = vmax.f32 %v13340, %v13404
  %v13821 = vmax.f32 %v13343, %v13407
  %v13822 = vmax.f32 %v13348, %v13412
  %v13823 = vmax.f32 %v13351, %v13415
  %v13824 = vmax.f32 %v13356, %v13420
  %v13825 = vmax.f32 %v13359, %v13423
  %v13826 = vmax.f32 %v13428, %v13492
  %v13827 = vmax.f32 %v13431, %v13495
  %v13828 = vmax.f32 %v13436, %v13500
  %v13829 = vmax.f32 %v13439, %v13503
  %v13830 = vmax.f32 %v13444, %v13508
  %v13831 = vmax.f32 %v13447, %v13511
  %v13832 = vmax.f32 %v13452, %v13516
  %v13833 = vmax.f32 %v13455, %v13519
  %v13834 = vmax.f32 %v13460, %v13524
  %v13835 = vmax.f32 %v13463, %v13527
  %v13836 = vmax.f32 %v13468, %v13532
  %v13837 = vmax.f32 %v13471, %v13535
  %v13838 = vmax.f32 %v13476, %v13540
  %v13839 = vmax.f32 %v13479, %v13543
  %v13840 = vmax.f32 %v13484, %v13548
  %v13841 = vmax.f32 %v13487, %v13551
  %v13842 = vmax.f32 %v13556, %v13620
  %v13843 = vmax.f32 %v13559, %v13623
  %v13844 = vmax.f32 %v13564, %v13628
  %v13845 = vmax.f32 %v13567, %v13631
  %v13846 = vmax.f32 %v13572, %v13636
  %v13847 = vmax.f32 %v13575, %v13639
  %v13848 = vmax.f32 %v13580, %v13644
  %v13849 = vmax.f32 %v13583, %v13647
  %v13850 = vmax.f32 %v13588, %v13652
  %v13851 = vmax.f32 %v13591, %v13655
  %v13852 = vmax.f32 %v13596, %v13660
  %v13853 = vmax.f32 %v13599, %v13663
  %v13854 = vmax.f32 %v13604, %v13668
  %v13855 = vmax.f32 %v13607, %v13671
  %v13856 = vmax.f32 %v13612, %v13676
  %v13857 = vmax.f32 %v13615, %v13679
  %v13858 = vmax.f32 %v13684, %v13748
  %v13859 = vmax.f32 %v13687, %v13751
  %v13860 = vmax.f32 %v13692, %v13756
  %v13861 = vmax.f32 %v13695, %v13759
  %v13862 = vmax.f32 %v13700, %v13764
  %v13863 = vmax.f32 %v13703, %v13767
  %v13864 = vmax.f32 %v13708, %v13772
  %v13865 = vmax.f32 %v13711, %v13775
  %v13866 = vmax.f32 %v13716, %v13780
  %v13867 = vmax.f32 %v13719, %v13783
  %v13868 = vmax.f32 %v13724, %v13788
  %v13869 = vmax.f32 %v13727, %v13791
  %v13870 = vmax.f32 %v13732, %v13796
  %v13871 = vmax.f32 %v13735, %v13799
  %v13872 = vmax.f32 %v13740, %v13804
  %v13873 = vmax.f32 %v13743, %v13807
  %v13874 = vmax.f32 %v13810, %v13812
  %v13875 = vmax.f32 %v13811, %v13813
  %v13876 = vmax.f32 %v13814, %v13816
  %v13877 = vmax.f32 %v13815, %v13817
  %v13878 = vmax.f32 %v13818, %v13820
  %v13879 = vmax.f32 %v13819, %v13821
  %v13880 = vmax.f32 %v13822, %v13824
  %v13881 = vmax.f32 %v13823, %v13825
  %v13882 = vmax.f32 %v13826, %v13828
  %v13883 = vmax.f32 %v13827, %v13829
  %v13884 = vmax.f32 %v13830, %v13832
  %v13885 = vmax.f32 %v13831, %v13833
  %v13886 = vmax.f32 %v13834, %v13836
  %v13887 = vmax.f32 %v13835, %v13837
  %v13888 = vmax.f32 %v13838, %v13840
  %v13889 = vmax.f32 %v13839, %v13841
  %v13890 = vmax.f32 %v13842, %v13844
  %v13891 = vmax.f32 %v13843, %v13845
  %v13892 = vmax.f32 %v13846, %v13848
  %v13893 = vmax.f32 %v13847, %v13849
  %v13894 = vmax.f32 %v13850, %v13852
  %v13895 = vmax.f32 %v13851, %v13853
  %v13896 = vmax.f32 %v13854, %v13856
  %v13897 = vmax.f32 %v13855, %v13857
  %v13898 = vmax.f32 %v13858, %v13860
  %v13899 = vmax.f32 %v13859, %v13861
  %v13900 = vmax.f32 %v13862, %v13864
  %v13901 = vmax.f32 %v13863, %v13865
  %v13902 = vmax.f32 %v13866, %v13868
  %v13903 = vmax.f32 %v13867, %v13869
  %v13904 = vmax.f32 %v13870, %v13872
  %v13905 = vmax.f32 %v13871, %v13873
  %v13906 = vld [vmem:[%s4] sm:$0x1]
  %v13908 = vlaneseq
  %v13909 = vshrl.u32 %v13908, 7
  %v13910 = vsub.s32 0, %v13909
  %v13911 = vrot.slane %v13906, %v13910
  %v13913 = vadd.f32 %v13874, %v13911
  %v13914 = vadd.f32 %v13875, %v13911
  %v13915 = vadd.f32 %v13876, %v13911
  %v13916 = vadd.f32 %v13877, %v13911
  %v13917 = vadd.f32 %v13878, %v13911
  %v13918 = vadd.f32 %v13879, %v13911
  %v13919 = vadd.f32 %v13880, %v13911
  %v13920 = vadd.f32 %v13881, %v13911
  %v13921 = vadd.f32 %v13882, %v13911
  %v13922 = vadd.f32 %v13883, %v13911
  %v13923 = vadd.f32 %v13884, %v13911
  %v13924 = vadd.f32 %v13885, %v13911
  %v13925 = vadd.f32 %v13886, %v13911
  %v13926 = vadd.f32 %v13887, %v13911
  %v13927 = vadd.f32 %v13888, %v13911
  %v13928 = vadd.f32 %v13889, %v13911
  %v13929 = vadd.f32 %v13890, %v13911
  %v13930 = vadd.f32 %v13891, %v13911
  %v13931 = vadd.f32 %v13892, %v13911
  %v13932 = vadd.f32 %v13893, %v13911
  %v13933 = vadd.f32 %v13894, %v13911
  %v13934 = vadd.f32 %v13895, %v13911
  %v13935 = vadd.f32 %v13896, %v13911
  %v13936 = vadd.f32 %v13897, %v13911
  %v13937 = vadd.f32 %v13898, %v13911
  %v13938 = vadd.f32 %v13899, %v13911
  %v13939 = vadd.f32 %v13900, %v13911
  %v13940 = vadd.f32 %v13901, %v13911
  %v13941 = vadd.f32 %v13902, %v13911
  %v13942 = vadd.f32 %v13903, %v13911
  %v13943 = vadd.f32 %v13904, %v13911
  %v13944 = vadd.f32 %v13905, %v13911
  %v13945 = vmax.f32 %v13913, 0.0
  %v13946 = vmax.f32 %v13914, 0.0
  %v13947 = vmax.f32 %v13915, 0.0
  %v13948 = vmax.f32 %v13916, 0.0
  %v13949 = vmax.f32 %v13917, 0.0
  %v13950 = vmax.f32 %v13918, 0.0
  %v13951 = vmax.f32 %v13919, 0.0
  %v13952 = vmax.f32 %v13920, 0.0
  %v13953 = vmax.f32 %v13921, 0.0
  %v13954 = vmax.f32 %v13922, 0.0
  %v13955 = vmax.f32 %v13923, 0.0
  %v13956 = vmax.f32 %v13924, 0.0
  %v13957 = vmax.f32 %v13925, 0.0
  %v13958 = vmax.f32 %v13926, 0.0
  %v13959 = vmax.f32 %v13927, 0.0
  %v13960 = vmax.f32 %v13928, 0.0
  %v13961 = vmax.f32 %v13929, 0.0
  %v13962 = vmax.f32 %v13930, 0.0
  %v13963 = vmax.f32 %v13931, 0.0
  %v13964 = vmax.f32 %v13932, 0.0
  %v13965 = vmax.f32 %v13933, 0.0
  %v13966 = vmax.f32 %v13934, 0.0
  %v13967 = vmax.f32 %v13935, 0.0
  %v13968 = vmax.f32 %v13936, 0.0
  %v13969 = vmax.f32 %v13937, 0.0
  %v13970 = vmax.f32 %v13938, 0.0
  %v13971 = vmax.f32 %v13939, 0.0
  %v13972 = vmax.f32 %v13940, 0.0
  %v13973 = vmax.f32 %v13941, 0.0
  %v13974 = vmax.f32 %v13942, 0.0
  %v13975 = vmax.f32 %v13943, 0.0
  %v13976 = vmax.f32 %v13944, 0.0
  %v13977 = vpack.c.bf16 %v13946, %v13945
  %v13978 = vpack.c.bf16 %v13948, %v13947
  %v13979 = vpack.c.bf16 %v13950, %v13949
  %v13980 = vpack.c.bf16 %v13952, %v13951
  %v13981 = vpack.c.bf16 %v13954, %v13953
  %v13982 = vpack.c.bf16 %v13956, %v13955
  %v13983 = vpack.c.bf16 %v13958, %v13957
  %v13984 = vpack.c.bf16 %v13960, %v13959
  %v13985 = vpack.c.bf16 %v13962, %v13961
  %v13986 = vpack.c.bf16 %v13964, %v13963
  %v13987 = vpack.c.bf16 %v13966, %v13965
  %v13988 = vpack.c.bf16 %v13968, %v13967
  %v13989 = vpack.c.bf16 %v13970, %v13969
  %v13990 = vpack.c.bf16 %v13972, %v13971
  %v13991 = vpack.c.bf16 %v13974, %v13973
  %v13992 = vpack.c.bf16 %v13976, %v13975
  %13994 = vrot.lane.b32.xlu0 %v13978, 50
  %v13995 = vpop.permute.xlu0 %13994
  %13997 = vrot.lane.b32.xlu0 %v13979, 100
  %v13998 = vpop.permute.xlu0 %13997
  %14000 = vrot.lane.b32.xlu0 %v13980, 22
  %v14001 = vpop.permute.xlu0 %14000
  %14003 = vrot.lane.b32.xlu0 %v13981, 72
  %v14004 = vpop.permute.xlu0 %14003
  %14006 = vrot.lane.b32.xlu0 %v13982, 122
  %v14007 = vpop.permute.xlu0 %14006
  %14009 = vrot.lane.b32.xlu0 %v13983, 44
  %v14010 = vpop.permute.xlu0 %14009
  %14012 = vrot.lane.b32.xlu0 %v13984, 94
  %v14013 = vpop.permute.xlu0 %14012
  %14015 = vrot.lane.b32.xlu0 %v13985, 16
  %v14016 = vpop.permute.xlu0 %14015
  %14018 = vrot.lane.b32.xlu0 %v13986, 66
  %v14019 = vpop.permute.xlu0 %14018
  %14021 = vrot.lane.b32.xlu0 %v13987, 116
  %v14022 = vpop.permute.xlu0 %14021
  %14024 = vrot.lane.b32.xlu0 %v13988, 38
  %v14025 = vpop.permute.xlu0 %14024
  %14027 = vrot.lane.b32.xlu0 %v13989, 88
  %v14028 = vpop.permute.xlu0 %14027
  %14030 = vrot.lane.b32.xlu0 %v13990, 10
  %v14031 = vpop.permute.xlu0 %14030
  %14033 = vrot.lane.b32.xlu0 %v13991, 60
  %v14034 = vpop.permute.xlu0 %14033
  %14036 = vrot.lane.b32.xlu0 %v13992, 110
  %v14037 = vpop.permute.xlu0 %14036
  %vm14038 = vcmask 408576
  %v14041 = vsel %vm14038, %v13977, %v13995
  %v14043 = vsel %vm1093, %v14041, %v13998
  %vm14045 = vcmask 179200
  %v14047 = vsel %vm14045, %v13998, %v14001
  %v14049 = vsel %vm9657, %v14047, %v14004
  %vm14050 = vcmask 998400
  %v14052 = vsel %vm14050, %v14049, %v14007
  %v14055 = vsel %vm10366, %v14007, %v14010
  %vm14056 = vcmask 769024
  %v14058 = vsel %vm14056, %v14055, %v14013
  %vm14060 = vcmask 130048
  %v14062 = vsel %vm14060, %v14013, %v14016
  %vm14063 = vcmask 539648
  %v14065 = vsel %vm14063, %v14062, %v14019
  %v14067 = vsel %vm12524, %v14065, %v14022
  %vm14069 = vcmask 310272
  %v14071 = vsel %vm14069, %v14022, %v14025
  %vm14072 = vcmask 719872
  %v14074 = vsel %vm14072, %v14071, %v14028
  %vm14076 = vcmask 80896
  %v14078 = vsel %vm14076, %v14028, %v14031
  %v14080 = vsel %vm8691, %v14078, %v14034
  %vm14081 = vcmask 900096
  %v14083 = vsel %vm14081, %v14080, %v14037
  %v14085 = vld [vmem:[%s5] sm:$0xff]
  %v14086 = vld [vmem:[%s5 + $0x8] sm:$0xff]
  %v14087 = vld [vmem:[%s5 + $0x10] sm:$0xff]
  %v14088 = vld [vmem:[%s5 + $0x18] sm:$0xff]
  %v14089 = vld [vmem:[%s5 + $0x20] sm:$0xff]
  %v14090 = vld [vmem:[%s5 + $0x28] sm:$0xff]
  %v14091 = vld [vmem:[%s5 + $0x30] sm:$0xff]
  %v14092 = vld [vmem:[%s5 + $0x38] sm:$0xff]
  %v14093 = vld [vmem:[%s5 + $0x40] sm:$0xff]
  %v14094 = vld [vmem:[%s5 + $0x48] sm:$0xff]
  %v14095 = vld [vmem:[%s5 + $0x50] sm:$0xff]
  %v14096 = vld [vmem:[%s5 + $0x58] sm:$0xff]
  %v14097 = vld [vmem:[%s5 + $0x60] sm:$0xff]
  %v14098 = vld [vmem:[%s5 + $0x68] sm:$0xff]
  %v14099 = vld [vmem:[%s5 + $0x70] sm:$0xff]
  %v14100 = vld [vmem:[%s5 + $0x78] sm:$0xff]
  %v14101 = vld [vmem:[%s5 + $0x80] sm:$0xff]
  %v14102 = vld [vmem:[%s5 + $0x88] sm:$0xff]
  %v14103 = vld [vmem:[%s5 + $0x90] sm:$0xff]
  %v14104 = vld [vmem:[%s5 + $0x98] sm:$0xff]
  %v14105 = vld [vmem:[%s5 + $0xa0] sm:$0xff]
  %v14106 = vld [vmem:[%s5 + $0xa8] sm:$0xff]
  %v14107 = vld [vmem:[%s5 + $0xb0] sm:$0xff]
  %v14108 = vld [vmem:[%s5 + $0xb8] sm:$0xff]
  %v14109 = vld [vmem:[%s5 + $0xc0] sm:$0xff]
  %v14110 = vld [vmem:[%s5 + $0xc8] sm:$0xff]
  %v14111 = vld [vmem:[%s5 + $0xd0] sm:$0xff]
  %v14112 = vld [vmem:[%s5 + $0xd8] sm:$0xff]
  %v14113 = vld [vmem:[%s5 + $0xe0] sm:$0xff]
  %v14114 = vld [vmem:[%s5 + $0xe8] sm:$0xff]
  %v14115 = vld [vmem:[%s5 + $0xf0] sm:$0xff]
  %v14116 = vld [vmem:[%s5 + $0xf8] sm:$0xff]
  %v14117 = vld [vmem:[%s5 + $0x100] sm:$0xff]
  %v14118 = vld [vmem:[%s5 + $0x108] sm:$0xff]
  %v14119 = vld [vmem:[%s5 + $0x110] sm:$0xff]
  %v14120 = vld [vmem:[%s5 + $0x118] sm:$0xff]
  %v14121 = vld [vmem:[%s5 + $0x120] sm:$0xff]
  %v14122 = vld [vmem:[%s5 + $0x128] sm:$0xff]
  %v14123 = vld [vmem:[%s5 + $0x130] sm:$0xff]
  %v14124 = vld [vmem:[%s5 + $0x138] sm:$0xff]
  %v14125 = vld [vmem:[%s5 + $0x140] sm:$0xff]
  %v14126 = vld [vmem:[%s5 + $0x148] sm:$0xff]
  %v14127 = vld [vmem:[%s5 + $0x150] sm:$0xff]
  %v14128 = vld [vmem:[%s5 + $0x158] sm:$0xff]
  %v14129 = vld [vmem:[%s5 + $0x160] sm:$0xff]
  %v14130 = vld [vmem:[%s5 + $0x168] sm:$0xff]
  %v14131 = vld [vmem:[%s5 + $0x170] sm:$0xff]
  %v14132 = vld [vmem:[%s5 + $0x178] sm:$0xff]
  %v14133 = vld [vmem:[%s5 + $0x180] sm:$0xff]
  %v14134 = vld [vmem:[%s5 + $0x188] sm:$0xff]
  %v14135 = vld [vmem:[%s5 + $0x190] sm:$0xff]
  %v14136 = vld [vmem:[%s5 + $0x198] sm:$0xff]
  %v14137 = vld [vmem:[%s5 + $0x1a0] sm:$0xff]
  %v14138 = vld [vmem:[%s5 + $0x1a8] sm:$0xff]
  %v14139 = vld [vmem:[%s5 + $0x1b0] sm:$0xff]
  %v14140 = vld [vmem:[%s5 + $0x1b8] sm:$0xff]
  %v14141 = vld [vmem:[%s5 + $0x1c0] sm:$0xff]
  %v14142 = vld [vmem:[%s5 + $0x1c8] sm:$0xff]
  %v14143 = vld [vmem:[%s5 + $0x1d0] sm:$0xff]
  %v14144 = vld [vmem:[%s5 + $0x1d8] sm:$0xff]
  %v14145 = vld [vmem:[%s5 + $0x1e0] sm:$0xff]
  %v14146 = vld [vmem:[%s5 + $0x1e8] sm:$0xff]
  %v14147 = vld [vmem:[%s5 + $0x1f0] sm:$0xff]
  %v14148 = vld [vmem:[%s5 + $0x1f8] sm:$0xff]
  %v14149 = vld [vmem:[%s5 + $0x200] sm:$0xff]
  %v14150 = vld [vmem:[%s5 + $0x208] sm:$0xff]
  %v14151 = vld [vmem:[%s5 + $0x210] sm:$0xff]
  %v14152 = vld [vmem:[%s5 + $0x218] sm:$0xff]
  %v14153 = vld [vmem:[%s5 + $0x220] sm:$0xff]
  %v14154 = vld [vmem:[%s5 + $0x228] sm:$0xff]
  %v14155 = vld [vmem:[%s5 + $0x230] sm:$0xff]
  %v14156 = vld [vmem:[%s5 + $0x238] sm:$0xff]
  %v14157 = vld [vmem:[%s5 + $0x240] sm:$0xff]
  %v14158 = vld [vmem:[%s5 + $0x248] sm:$0xff]
  %v14159 = vld [vmem:[%s5 + $0x250] sm:$0xff]
  %v14160 = vld [vmem:[%s5 + $0x258] sm:$0xff]
  %v14161 = vld [vmem:[%s5 + $0x260] sm:$0xff]
  %v14162 = vld [vmem:[%s5 + $0x268] sm:$0xff]
  %v14163 = vld [vmem:[%s5 + $0x270] sm:$0xff]
  %v14164 = vld [vmem:[%s5 + $0x278] sm:$0xff]
  %v14165 = vld [vmem:[%s5 + $0x280] sm:$0xff]
  %v14166 = vld [vmem:[%s5 + $0x288] sm:$0xff]
  %v14167 = vld [vmem:[%s5 + $0x290] sm:$0xff]
  %v14168 = vld [vmem:[%s5 + $0x298] sm:$0xff]
  %v14169 = vld [vmem:[%s5 + $0x2a0] sm:$0xff]
  %v14170 = vld [vmem:[%s5 + $0x2a8] sm:$0xff]
  %v14171 = vld [vmem:[%s5 + $0x2b0] sm:$0xff]
  %v14172 = vld [vmem:[%s5 + $0x2b8] sm:$0xff]
  %v14173 = vld [vmem:[%s5 + $0x2c0] sm:$0xff]
  %v14174 = vld [vmem:[%s5 + $0x2c8] sm:$0xff]
  %v14175 = vld [vmem:[%s5 + $0x2d0] sm:$0xff]
  %v14176 = vld [vmem:[%s5 + $0x2d8] sm:$0xff]
  %v14177 = vld [vmem:[%s5 + $0x2e0] sm:$0xff]
  %v14178 = vld [vmem:[%s5 + $0x2e8] sm:$0xff]
  %v14179 = vld [vmem:[%s5 + $0x2f0] sm:$0xff]
  %v14180 = vld [vmem:[%s5 + $0x2f8] sm:$0xff]
  %v14181 = vld [vmem:[%s5 + $0x300] sm:$0xff]
  %v14182 = vld [vmem:[%s5 + $0x308] sm:$0xff]
  %v14183 = vld [vmem:[%s5 + $0x310] sm:$0xff]
  %v14184 = vld [vmem:[%s5 + $0x318] sm:$0xff]
  %v14185 = vld [vmem:[%s5 + $0x320] sm:$0xff]
  %v14186 = vld [vmem:[%s5 + $0x328] sm:$0xff]
  %v14187 = vld [vmem:[%s5 + $0x330] sm:$0xff]
  %v14188 = vld [vmem:[%s5 + $0x338] sm:$0xff]
  %v14189 = vld [vmem:[%s5 + $0x340] sm:$0xff]
  %v14190 = vld [vmem:[%s5 + $0x348] sm:$0xff]
  %v14191 = vld [vmem:[%s5 + $0x350] sm:$0xff]
  %v14192 = vld [vmem:[%s5 + $0x358] sm:$0xff]
  %v14193 = vld [vmem:[%s5 + $0x360] sm:$0xff]
  %v14194 = vld [vmem:[%s5 + $0x368] sm:$0xff]
  %v14195 = vld [vmem:[%s5 + $0x370] sm:$0xff]
  %v14196 = vld [vmem:[%s5 + $0x378] sm:$0xff]
  %v14197 = vld [vmem:[%s5 + $0x380] sm:$0xff]
  %v14198 = vld [vmem:[%s5 + $0x388] sm:$0xff]
  %v14199 = vld [vmem:[%s5 + $0x390] sm:$0xff]
  %v14200 = vld [vmem:[%s5 + $0x398] sm:$0xff]
  %v14201 = vld [vmem:[%s5 + $0x3a0] sm:$0xff]
  %v14202 = vld [vmem:[%s5 + $0x3a8] sm:$0xff]
  %v14203 = vld [vmem:[%s5 + $0x3b0] sm:$0xff]
  %v14204 = vld [vmem:[%s5 + $0x3b8] sm:$0xff]
  %v14205 = vld [vmem:[%s5 + $0x3c0] sm:$0xff]
  %v14206 = vld [vmem:[%s5 + $0x3c8] sm:$0xff]
  %v14207 = vld [vmem:[%s5 + $0x3d0] sm:$0xff]
  %v14208 = vld [vmem:[%s5 + $0x3d8] sm:$0xff]
  %v14209 = vld [vmem:[%s5 + $0x3e0] sm:$0xff]
  %v14210 = vld [vmem:[%s5 + $0x3e8] sm:$0xff]
  %v14211 = vld [vmem:[%s5 + $0x3f0] sm:$0xff]
  %v14212 = vld [vmem:[%s5 + $0x3f8] sm:$0xff]
  %v14213 = vld [vmem:[%s5 + $0x400] sm:$0xff]
  %v14214 = vld [vmem:[%s5 + $0x408] sm:$0xff]
  %v14215 = vld [vmem:[%s5 + $0x410] sm:$0xff]
  %v14216 = vld [vmem:[%s5 + $0x418] sm:$0xff]
  %v14217 = vld [vmem:[%s5 + $0x420] sm:$0xff]
  %v14218 = vld [vmem:[%s5 + $0x428] sm:$0xff]
  %v14219 = vld [vmem:[%s5 + $0x430] sm:$0xff]
  %v14220 = vld [vmem:[%s5 + $0x438] sm:$0xff]
  %v14221 = vld [vmem:[%s5 + $0x440] sm:$0xff]
  %v14222 = vld [vmem:[%s5 + $0x448] sm:$0xff]
  %v14223 = vld [vmem:[%s5 + $0x450] sm:$0xff]
  %v14224 = vld [vmem:[%s5 + $0x458] sm:$0xff]
  %v14225 = vld [vmem:[%s5 + $0x460] sm:$0xff]
  %v14226 = vld [vmem:[%s5 + $0x468] sm:$0xff]
  %v14227 = vld [vmem:[%s5 + $0x470] sm:$0xff]
  %v14228 = vld [vmem:[%s5 + $0x478] sm:$0xff]
  %v14229 = vld [vmem:[%s5 + $0x480] sm:$0xff]
  %v14230 = vld [vmem:[%s5 + $0x488] sm:$0xff]
  %v14231 = vld [vmem:[%s5 + $0x490] sm:$0xff]
  %v14232 = vld [vmem:[%s5 + $0x498] sm:$0xff]
  %v14233 = vld [vmem:[%s5 + $0x4a0] sm:$0xff]
  %v14234 = vld [vmem:[%s5 + $0x4a8] sm:$0xff]
  %v14235 = vld [vmem:[%s5 + $0x4b0] sm:$0xff]
  %v14236 = vld [vmem:[%s5 + $0x4b8] sm:$0xff]
  %v14237 = vld [vmem:[%s5 + $0x4c0] sm:$0xff]
  %v14238 = vld [vmem:[%s5 + $0x4c8] sm:$0xff]
  %v14239 = vld [vmem:[%s5 + $0x4d0] sm:$0xff]
  %v14240 = vld [vmem:[%s5 + $0x4d8] sm:$0xff]
  %v14241 = vld [vmem:[%s5 + $0x4e0] sm:$0xff]
  %v14242 = vld [vmem:[%s5 + $0x4e8] sm:$0xff]
  %v14243 = vld [vmem:[%s5 + $0x4f0] sm:$0xff]
  %v14244 = vld [vmem:[%s5 + $0x4f8] sm:$0xff]
  %v14245 = vld [vmem:[%s5 + $0x500] sm:$0xff]
  %v14246 = vld [vmem:[%s5 + $0x508] sm:$0xff]
  %v14247 = vld [vmem:[%s5 + $0x510] sm:$0xff]
  %v14248 = vld [vmem:[%s5 + $0x518] sm:$0xff]
  %v14249 = vld [vmem:[%s5 + $0x520] sm:$0xff]
  %v14250 = vld [vmem:[%s5 + $0x528] sm:$0xff]
  %v14251 = vld [vmem:[%s5 + $0x530] sm:$0xff]
  %v14252 = vld [vmem:[%s5 + $0x538] sm:$0xff]
  %v14253 = vld [vmem:[%s5 + $0x540] sm:$0xff]
  %v14254 = vld [vmem:[%s5 + $0x548] sm:$0xff]
  %v14255 = vld [vmem:[%s5 + $0x550] sm:$0xff]
  %v14256 = vld [vmem:[%s5 + $0x558] sm:$0xff]
  %v14257 = vld [vmem:[%s5 + $0x560] sm:$0xff]
  %v14258 = vld [vmem:[%s5 + $0x568] sm:$0xff]
  %v14259 = vld [vmem:[%s5 + $0x570] sm:$0xff]
  %v14260 = vld [vmem:[%s5 + $0x578] sm:$0xff]
  %v14261 = vld [vmem:[%s5 + $0x580] sm:$0xff]
  %v14262 = vld [vmem:[%s5 + $0x588] sm:$0xff]
  %v14263 = vld [vmem:[%s5 + $0x590] sm:$0xff]
  %v14264 = vld [vmem:[%s5 + $0x598] sm:$0xff]
  %v14265 = vld [vmem:[%s5 + $0x5a0] sm:$0xff]
  %v14266 = vld [vmem:[%s5 + $0x5a8] sm:$0xff]
  %v14267 = vld [vmem:[%s5 + $0x5b0] sm:$0xff]
  %v14268 = vld [vmem:[%s5 + $0x5b8] sm:$0xff]
  %v14269 = vld [vmem:[%s5 + $0x5c0] sm:$0xff]
  %v14270 = vld [vmem:[%s5 + $0x5c8] sm:$0xff]
  %v14271 = vld [vmem:[%s5 + $0x5d0] sm:$0xff]
  %v14272 = vld [vmem:[%s5 + $0x5d8] sm:$0xff]
  %v14273 = vld [vmem:[%s5 + $0x5e0] sm:$0xff]
  %v14274 = vld [vmem:[%s5 + $0x5e8] sm:$0xff]
  %v14275 = vld [vmem:[%s5 + $0x5f0] sm:$0xff]
  %v14276 = vld [vmem:[%s5 + $0x5f8] sm:$0xff]
  %v14277 = vld [vmem:[%s5 + $0x600] sm:$0xff]
  %v14278 = vld [vmem:[%s5 + $0x608] sm:$0xff]
  %v14279 = vld [vmem:[%s5 + $0x610] sm:$0xff]
  %v14280 = vld [vmem:[%s5 + $0x618] sm:$0xff]
  %v14281 = vld [vmem:[%s5 + $0x620] sm:$0xff]
  %v14282 = vld [vmem:[%s5 + $0x628] sm:$0xff]
  %v14283 = vld [vmem:[%s5 + $0x630] sm:$0xff]
  %v14284 = vld [vmem:[%s5 + $0x638] sm:$0xff]
  %v14285 = vld [vmem:[%s6] sm:$0xf]
  %v14287 = vlaneseq
  %v14288 = vshrl.u32 %v14287, 7
  %v14289 = vsub.s32 0, %v14288
  %v14290 = vrot.slane %v14285, %v14289
  %v14291 = vlaneseq
  %v14292 = vshrl.u32 %v14291, 7
  %v14293 = vsub.s32 1, %v14292
  %v14294 = vrot.slane %v14285, %v14293
  %v14295 = vlaneseq
  %v14296 = vshrl.u32 %v14295, 7
  %v14297 = vsub.s32 2, %v14296
  %v14298 = vrot.slane %v14285, %v14297
  %v14299 = vlaneseq
  %v14300 = vshrl.u32 %v14299, 7
  %v14301 = vsub.s32 3, %v14300
  %v14302 = vrot.slane %v14285, %v14301
  %v14507 = vunpack.c.l.b16 %v14085
  %v14508 = vunpack.c.h.b16 %v14085
  %v14509 = vunpack.c.l.b16 %v14086
  %v14510 = vunpack.c.h.b16 %v14086
  %v14511 = vunpack.c.l.b16 %v14087
  %v14512 = vunpack.c.h.b16 %v14087
  %v14513 = vunpack.c.l.b16 %v14088
  %v14514 = vunpack.c.h.b16 %v14088
  %v14515 = vunpack.c.l.b16 %v14089
  %v14516 = vunpack.c.h.b16 %v14089
  %v14517 = vunpack.c.l.b16 %v14090
  %v14518 = vunpack.c.h.b16 %v14090
  %v14519 = vunpack.c.l.b16 %v14091
  %v14520 = vunpack.c.h.b16 %v14091
  %v14521 = vunpack.c.l.b16 %v14092
  %v14522 = vunpack.c.h.b16 %v14092
  %v14523 = vunpack.c.l.b16 %v14093
  %v14524 = vunpack.c.h.b16 %v14093
  %v14525 = vunpack.c.l.b16 %v14094
  %v14526 = vunpack.c.h.b16 %v14094
  %v14527 = vunpack.c.l.b16 %v14095
  %v14528 = vunpack.c.h.b16 %v14095
  %v14529 = vunpack.c.l.b16 %v14096
  %v14530 = vunpack.c.h.b16 %v14096
  %v14531 = vunpack.c.l.b16 %v14097
  %v14532 = vunpack.c.h.b16 %v14097
  %v14533 = vunpack.c.l.b16 %v14098
  %v14534 = vunpack.c.h.b16 %v14098
  %v14535 = vunpack.c.l.b16 %v14099
  %v14536 = vunpack.c.h.b16 %v14099
  %v14537 = vunpack.c.l.b16 %v14100
  %v14538 = vunpack.c.h.b16 %v14100
  %v14539 = vunpack.c.l.b16 %v14101
  %v14540 = vunpack.c.h.b16 %v14101
  %v14541 = vunpack.c.l.b16 %v14102
  %v14542 = vunpack.c.h.b16 %v14102
  %v14543 = vunpack.c.l.b16 %v14103
  %v14544 = vunpack.c.h.b16 %v14103
  %v14545 = vunpack.c.l.b16 %v14104
  %v14546 = vunpack.c.h.b16 %v14104
  %v14547 = vunpack.c.l.b16 %v14105
  %v14548 = vunpack.c.h.b16 %v14105
  %v14549 = vunpack.c.l.b16 %v14106
  %v14550 = vunpack.c.h.b16 %v14106
  %v14551 = vunpack.c.l.b16 %v14107
  %v14552 = vunpack.c.h.b16 %v14107
  %v14553 = vunpack.c.l.b16 %v14108
  %v14554 = vunpack.c.h.b16 %v14108
  %v14555 = vunpack.c.l.b16 %v14109
  %v14556 = vunpack.c.h.b16 %v14109
  %v14557 = vunpack.c.l.b16 %v14110
  %v14558 = vunpack.c.h.b16 %v14110
  %v14559 = vunpack.c.l.b16 %v14111
  %v14560 = vunpack.c.h.b16 %v14111
  %v14561 = vunpack.c.l.b16 %v14112
  %v14562 = vunpack.c.h.b16 %v14112
  %v14563 = vunpack.c.l.b16 %v14113
  %v14564 = vunpack.c.h.b16 %v14113
  %v14565 = vunpack.c.l.b16 %v14114
  %v14566 = vunpack.c.h.b16 %v14114
  %v14567 = vunpack.c.l.b16 %v14115
  %v14568 = vunpack.c.h.b16 %v14115
  %v14569 = vunpack.c.l.b16 %v14116
  %v14570 = vunpack.c.h.b16 %v14116
  %v14571 = vunpack.c.l.b16 %v14117
  %v14572 = vunpack.c.h.b16 %v14117
  %v14573 = vunpack.c.l.b16 %v14118
  %v14574 = vunpack.c.h.b16 %v14118
  %v14575 = vunpack.c.l.b16 %v14119
  %v14576 = vunpack.c.h.b16 %v14119
  %v14577 = vunpack.c.l.b16 %v14120
  %v14578 = vunpack.c.h.b16 %v14120
  %v14579 = vunpack.c.l.b16 %v14121
  %v14580 = vunpack.c.h.b16 %v14121
  %v14581 = vunpack.c.l.b16 %v14122
  %v14582 = vunpack.c.h.b16 %v14122
  %v14583 = vunpack.c.l.b16 %v14123
  %v14584 = vunpack.c.h.b16 %v14123
  %v14585 = vunpack.c.l.b16 %v14124
  %v14586 = vunpack.c.h.b16 %v14124
  %v14587 = vunpack.c.l.b16 %v14125
  %v14588 = vunpack.c.h.b16 %v14125
  %v14589 = vunpack.c.l.b16 %v14126
  %v14590 = vunpack.c.h.b16 %v14126
  %v14591 = vunpack.c.l.b16 %v14127
  %v14592 = vunpack.c.h.b16 %v14127
  %v14593 = vunpack.c.l.b16 %v14128
  %v14594 = vunpack.c.h.b16 %v14128
  %v14595 = vunpack.c.l.b16 %v14129
  %v14596 = vunpack.c.h.b16 %v14129
  %v14597 = vunpack.c.l.b16 %v14130
  %v14598 = vunpack.c.h.b16 %v14130
  %v14599 = vunpack.c.l.b16 %v14131
  %v14600 = vunpack.c.h.b16 %v14131
  %v14601 = vunpack.c.l.b16 %v14132
  %v14602 = vunpack.c.h.b16 %v14132
  %v14603 = vunpack.c.l.b16 %v14133
  %v14604 = vunpack.c.h.b16 %v14133
  %v14605 = vunpack.c.l.b16 %v14134
  %v14606 = vunpack.c.h.b16 %v14134
  %v14607 = vunpack.c.l.b16 %v14135
  %v14608 = vunpack.c.h.b16 %v14135
  %v14609 = vunpack.c.l.b16 %v14136
  %v14610 = vunpack.c.h.b16 %v14136
  %v14611 = vunpack.c.l.b16 %v14137
  %v14612 = vunpack.c.h.b16 %v14137
  %v14613 = vunpack.c.l.b16 %v14138
  %v14614 = vunpack.c.h.b16 %v14138
  %v14615 = vunpack.c.l.b16 %v14139
  %v14616 = vunpack.c.h.b16 %v14139
  %v14617 = vunpack.c.l.b16 %v14140
  %v14618 = vunpack.c.h.b16 %v14140
  %v14619 = vunpack.c.l.b16 %v14141
  %v14620 = vunpack.c.h.b16 %v14141
  %v14621 = vunpack.c.l.b16 %v14142
  %v14622 = vunpack.c.h.b16 %v14142
  %v14623 = vunpack.c.l.b16 %v14143
  %v14624 = vunpack.c.h.b16 %v14143
  %v14625 = vunpack.c.l.b16 %v14144
  %v14626 = vunpack.c.h.b16 %v14144
  %v14627 = vunpack.c.l.b16 %v14145
  %v14628 = vunpack.c.h.b16 %v14145
  %v14629 = vunpack.c.l.b16 %v14146
  %v14630 = vunpack.c.h.b16 %v14146
  %v14631 = vunpack.c.l.b16 %v14147
  %v14632 = vunpack.c.h.b16 %v14147
  %v14633 = vunpack.c.l.b16 %v14148
  %v14634 = vunpack.c.h.b16 %v14148
  %v14635 = vunpack.c.l.b16 %v14149
  %v14636 = vunpack.c.h.b16 %v14149
  %v14637 = vunpack.c.l.b16 %v14150
  %v14638 = vunpack.c.h.b16 %v14150
  %v14639 = vunpack.c.l.b16 %v14151
  %v14640 = vunpack.c.h.b16 %v14151
  %v14641 = vunpack.c.l.b16 %v14152
  %v14642 = vunpack.c.h.b16 %v14152
  %v14643 = vunpack.c.l.b16 %v14153
  %v14644 = vunpack.c.h.b16 %v14153
  %v14645 = vunpack.c.l.b16 %v14154
  %v14646 = vunpack.c.h.b16 %v14154
  %v14647 = vunpack.c.l.b16 %v14155
  %v14648 = vunpack.c.h.b16 %v14155
  %v14649 = vunpack.c.l.b16 %v14156
  %v14650 = vunpack.c.h.b16 %v14156
  %v14651 = vunpack.c.l.b16 %v14157
  %v14652 = vunpack.c.h.b16 %v14157
  %v14653 = vunpack.c.l.b16 %v14158
  %v14654 = vunpack.c.h.b16 %v14158
  %v14655 = vunpack.c.l.b16 %v14159
  %v14656 = vunpack.c.h.b16 %v14159
  %v14657 = vunpack.c.l.b16 %v14160
  %v14658 = vunpack.c.h.b16 %v14160
  %v14659 = vunpack.c.l.b16 %v14161
  %v14660 = vunpack.c.h.b16 %v14161
  %v14661 = vunpack.c.l.b16 %v14162
  %v14662 = vunpack.c.h.b16 %v14162
  %v14663 = vunpack.c.l.b16 %v14163
  %v14664 = vunpack.c.h.b16 %v14163
  %v14665 = vunpack.c.l.b16 %v14164
  %v14666 = vunpack.c.h.b16 %v14164
  %v14667 = vunpack.c.l.b16 %v14165
  %v14668 = vunpack.c.h.b16 %v14165
  %v14669 = vunpack.c.l.b16 %v14166
  %v14670 = vunpack.c.h.b16 %v14166
  %v14671 = vunpack.c.l.b16 %v14167
  %v14672 = vunpack.c.h.b16 %v14167
  %v14673 = vunpack.c.l.b16 %v14168
  %v14674 = vunpack.c.h.b16 %v14168
  %v14675 = vunpack.c.l.b16 %v14169
  %v14676 = vunpack.c.h.b16 %v14169
  %v14677 = vunpack.c.l.b16 %v14170
  %v14678 = vunpack.c.h.b16 %v14170
  %v14679 = vunpack.c.l.b16 %v14171
  %v14680 = vunpack.c.h.b16 %v14171
  %v14681 = vunpack.c.l.b16 %v14172
  %v14682 = vunpack.c.h.b16 %v14172
  %v14683 = vunpack.c.l.b16 %v14173
  %v14684 = vunpack.c.h.b16 %v14173
  %v14685 = vunpack.c.l.b16 %v14174
  %v14686 = vunpack.c.h.b16 %v14174
  %v14687 = vunpack.c.l.b16 %v14175
  %v14688 = vunpack.c.h.b16 %v14175
  %v14689 = vunpack.c.l.b16 %v14176
  %v14690 = vunpack.c.h.b16 %v14176
  %v14691 = vunpack.c.l.b16 %v14177
  %v14692 = vunpack.c.h.b16 %v14177
  %v14693 = vunpack.c.l.b16 %v14178
  %v14694 = vunpack.c.h.b16 %v14178
  %v14695 = vunpack.c.l.b16 %v14179
  %v14696 = vunpack.c.h.b16 %v14179
  %v14697 = vunpack.c.l.b16 %v14180
  %v14698 = vunpack.c.h.b16 %v14180
  %v14699 = vunpack.c.l.b16 %v14181
  %v14700 = vunpack.c.h.b16 %v14181
  %v14701 = vunpack.c.l.b16 %v14182
  %v14702 = vunpack.c.h.b16 %v14182
  %v14703 = vunpack.c.l.b16 %v14183
  %v14704 = vunpack.c.h.b16 %v14183
  %v14705 = vunpack.c.l.b16 %v14184
  %v14706 = vunpack.c.h.b16 %v14184
  %v14707 = vunpack.c.l.b16 %v14185
  %v14708 = vunpack.c.h.b16 %v14185
  %v14709 = vunpack.c.l.b16 %v14186
  %v14710 = vunpack.c.h.b16 %v14186
  %v14711 = vunpack.c.l.b16 %v14187
  %v14712 = vunpack.c.h.b16 %v14187
  %v14713 = vunpack.c.l.b16 %v14188
  %v14714 = vunpack.c.h.b16 %v14188
  %v14715 = vunpack.c.l.b16 %v14189
  %v14716 = vunpack.c.h.b16 %v14189
  %v14717 = vunpack.c.l.b16 %v14190
  %v14718 = vunpack.c.h.b16 %v14190
  %v14719 = vunpack.c.l.b16 %v14191
  %v14720 = vunpack.c.h.b16 %v14191
  %v14721 = vunpack.c.l.b16 %v14192
  %v14722 = vunpack.c.h.b16 %v14192
  %v14723 = vunpack.c.l.b16 %v14193
  %v14724 = vunpack.c.h.b16 %v14193
  %v14725 = vunpack.c.l.b16 %v14194
  %v14726 = vunpack.c.h.b16 %v14194
  %v14727 = vunpack.c.l.b16 %v14195
  %v14728 = vunpack.c.h.b16 %v14195
  %v14729 = vunpack.c.l.b16 %v14196
  %v14730 = vunpack.c.h.b16 %v14196
  %v14731 = vunpack.c.l.b16 %v14197
  %v14732 = vunpack.c.h.b16 %v14197
  %v14733 = vunpack.c.l.b16 %v14198
  %v14734 = vunpack.c.h.b16 %v14198
  %v14735 = vunpack.c.l.b16 %v14199
  %v14736 = vunpack.c.h.b16 %v14199
  %v14737 = vunpack.c.l.b16 %v14200
  %v14738 = vunpack.c.h.b16 %v14200
  %v14739 = vunpack.c.l.b16 %v14201
  %v14740 = vunpack.c.h.b16 %v14201
  %v14741 = vunpack.c.l.b16 %v14202
  %v14742 = vunpack.c.h.b16 %v14202
  %v14743 = vunpack.c.l.b16 %v14203
  %v14744 = vunpack.c.h.b16 %v14203
  %v14745 = vunpack.c.l.b16 %v14204
  %v14746 = vunpack.c.h.b16 %v14204
  %v14747 = vunpack.c.l.b16 %v14205
  %v14748 = vunpack.c.h.b16 %v14205
  %v14749 = vunpack.c.l.b16 %v14206
  %v14750 = vunpack.c.h.b16 %v14206
  %v14751 = vunpack.c.l.b16 %v14207
  %v14752 = vunpack.c.h.b16 %v14207
  %v14753 = vunpack.c.l.b16 %v14208
  %v14754 = vunpack.c.h.b16 %v14208
  %v14755 = vunpack.c.l.b16 %v14209
  %v14756 = vunpack.c.h.b16 %v14209
  %v14757 = vunpack.c.l.b16 %v14210
  %v14758 = vunpack.c.h.b16 %v14210
  %v14759 = vunpack.c.l.b16 %v14211
  %v14760 = vunpack.c.h.b16 %v14211
  %v14761 = vunpack.c.l.b16 %v14212
  %v14762 = vunpack.c.h.b16 %v14212
  %v14763 = vunpack.c.l.b16 %v14213
  %v14764 = vunpack.c.h.b16 %v14213
  %v14765 = vunpack.c.l.b16 %v14214
  %v14766 = vunpack.c.h.b16 %v14214
  %v14767 = vunpack.c.l.b16 %v14215
  %v14768 = vunpack.c.h.b16 %v14215
  %v14769 = vunpack.c.l.b16 %v14216
  %v14770 = vunpack.c.h.b16 %v14216
  %v14771 = vunpack.c.l.b16 %v14217
  %v14772 = vunpack.c.h.b16 %v14217
  %v14773 = vunpack.c.l.b16 %v14218
  %v14774 = vunpack.c.h.b16 %v14218
  %v14775 = vunpack.c.l.b16 %v14219
  %v14776 = vunpack.c.h.b16 %v14219
  %v14777 = vunpack.c.l.b16 %v14220
  %v14778 = vunpack.c.h.b16 %v14220
  %v14779 = vunpack.c.l.b16 %v14221
  %v14780 = vunpack.c.h.b16 %v14221
  %v14781 = vunpack.c.l.b16 %v14222
  %v14782 = vunpack.c.h.b16 %v14222
  %v14783 = vunpack.c.l.b16 %v14223
  %v14784 = vunpack.c.h.b16 %v14223
  %v14785 = vunpack.c.l.b16 %v14224
  %v14786 = vunpack.c.h.b16 %v14224
  %v14787 = vunpack.c.l.b16 %v14225
  %v14788 = vunpack.c.h.b16 %v14225
  %v14789 = vunpack.c.l.b16 %v14226
  %v14790 = vunpack.c.h.b16 %v14226
  %v14791 = vunpack.c.l.b16 %v14227
  %v14792 = vunpack.c.h.b16 %v14227
  %v14793 = vunpack.c.l.b16 %v14228
  %v14794 = vunpack.c.h.b16 %v14228
  %v14795 = vunpack.c.l.b16 %v14229
  %v14796 = vunpack.c.h.b16 %v14229
  %v14797 = vunpack.c.l.b16 %v14230
  %v14798 = vunpack.c.h.b16 %v14230
  %v14799 = vunpack.c.l.b16 %v14231
  %v14800 = vunpack.c.h.b16 %v14231
  %v14801 = vunpack.c.l.b16 %v14232
  %v14802 = vunpack.c.h.b16 %v14232
  %v14803 = vunpack.c.l.b16 %v14233
  %v14804 = vunpack.c.h.b16 %v14233
  %v14805 = vunpack.c.l.b16 %v14234
  %v14806 = vunpack.c.h.b16 %v14234
  %v14807 = vunpack.c.l.b16 %v14235
  %v14808 = vunpack.c.h.b16 %v14235
  %v14809 = vunpack.c.l.b16 %v14236
  %v14810 = vunpack.c.h.b16 %v14236
  %v14811 = vunpack.c.l.b16 %v14237
  %v14812 = vunpack.c.h.b16 %v14237
  %v14813 = vunpack.c.l.b16 %v14238
  %v14814 = vunpack.c.h.b16 %v14238
  %v14815 = vunpack.c.l.b16 %v14239
  %v14816 = vunpack.c.h.b16 %v14239
  %v14817 = vunpack.c.l.b16 %v14240
  %v14818 = vunpack.c.h.b16 %v14240
  %v14819 = vunpack.c.l.b16 %v14241
  %v14820 = vunpack.c.h.b16 %v14241
  %v14821 = vunpack.c.l.b16 %v14242
  %v14822 = vunpack.c.h.b16 %v14242
  %v14823 = vunpack.c.l.b16 %v14243
  %v14824 = vunpack.c.h.b16 %v14243
  %v14825 = vunpack.c.l.b16 %v14244
  %v14826 = vunpack.c.h.b16 %v14244
  %v14827 = vunpack.c.l.b16 %v14245
  %v14828 = vunpack.c.h.b16 %v14245
  %v14829 = vunpack.c.l.b16 %v14246
  %v14830 = vunpack.c.h.b16 %v14246
  %v14831 = vunpack.c.l.b16 %v14247
  %v14832 = vunpack.c.h.b16 %v14247
  %v14833 = vunpack.c.l.b16 %v14248
  %v14834 = vunpack.c.h.b16 %v14248
  %v14835 = vunpack.c.l.b16 %v14249
  %v14836 = vunpack.c.h.b16 %v14249
  %v14837 = vunpack.c.l.b16 %v14250
  %v14838 = vunpack.c.h.b16 %v14250
  %v14839 = vunpack.c.l.b16 %v14251
  %v14840 = vunpack.c.h.b16 %v14251
  %v14841 = vunpack.c.l.b16 %v14252
  %v14842 = vunpack.c.h.b16 %v14252
  %v14843 = vunpack.c.l.b16 %v14253
  %v14844 = vunpack.c.h.b16 %v14253
  %v14845 = vunpack.c.l.b16 %v14254
  %v14846 = vunpack.c.h.b16 %v14254
  %v14847 = vunpack.c.l.b16 %v14255
  %v14848 = vunpack.c.h.b16 %v14255
  %v14849 = vunpack.c.l.b16 %v14256
  %v14850 = vunpack.c.h.b16 %v14256
  %v14851 = vunpack.c.l.b16 %v14257
  %v14852 = vunpack.c.h.b16 %v14257
  %v14853 = vunpack.c.l.b16 %v14258
  %v14854 = vunpack.c.h.b16 %v14258
  %v14855 = vunpack.c.l.b16 %v14259
  %v14856 = vunpack.c.h.b16 %v14259
  %v14857 = vunpack.c.l.b16 %v14260
  %v14858 = vunpack.c.h.b16 %v14260
  %v14859 = vunpack.c.l.b16 %v14261
  %v14860 = vunpack.c.h.b16 %v14261
  %v14861 = vunpack.c.l.b16 %v14262
  %v14862 = vunpack.c.h.b16 %v14262
  %v14863 = vunpack.c.l.b16 %v14263
  %v14864 = vunpack.c.h.b16 %v14263
  %v14865 = vunpack.c.l.b16 %v14264
  %v14866 = vunpack.c.h.b16 %v14264
  %v14867 = vunpack.c.l.b16 %v14265
  %v14868 = vunpack.c.h.b16 %v14265
  %v14869 = vunpack.c.l.b16 %v14266
  %v14870 = vunpack.c.h.b16 %v14266
  %v14871 = vunpack.c.l.b16 %v14267
  %v14872 = vunpack.c.h.b16 %v14267
  %v14873 = vunpack.c.l.b16 %v14268
  %v14874 = vunpack.c.h.b16 %v14268
  %v14875 = vunpack.c.l.b16 %v14269
  %v14876 = vunpack.c.h.b16 %v14269
  %v14877 = vunpack.c.l.b16 %v14270
  %v14878 = vunpack.c.h.b16 %v14270
  %v14879 = vunpack.c.l.b16 %v14271
  %v14880 = vunpack.c.h.b16 %v14271
  %v14881 = vunpack.c.l.b16 %v14272
  %v14882 = vunpack.c.h.b16 %v14272
  %v14883 = vunpack.c.l.b16 %v14273
  %v14884 = vunpack.c.h.b16 %v14273
  %v14885 = vunpack.c.l.b16 %v14274
  %v14886 = vunpack.c.h.b16 %v14274
  %v14887 = vunpack.c.l.b16 %v14275
  %v14888 = vunpack.c.h.b16 %v14275
  %v14889 = vunpack.c.l.b16 %v14276
  %v14890 = vunpack.c.h.b16 %v14276
  %v14891 = vunpack.c.l.b16 %v14277
  %v14892 = vunpack.c.h.b16 %v14277
  %v14893 = vunpack.c.l.b16 %v14278
  %v14894 = vunpack.c.h.b16 %v14278
  %v14895 = vunpack.c.l.b16 %v14279
  %v14896 = vunpack.c.h.b16 %v14279
  %v14897 = vunpack.c.l.b16 %v14280
  %v14898 = vunpack.c.h.b16 %v14280
  %v14899 = vunpack.c.l.b16 %v14281
  %v14900 = vunpack.c.h.b16 %v14281
  %v14901 = vunpack.c.l.b16 %v14282
  %v14902 = vunpack.c.h.b16 %v14282
  %v14903 = vunpack.c.l.b16 %v14283
  %v14904 = vunpack.c.h.b16 %v14283
  %v14905 = vunpack.c.l.b16 %v14284
  %v14906 = vunpack.c.h.b16 %v14284
  %v14907 = vpack.c.b16 %v14511, %v14507
  %v14908 = vpack.c.b16 %v14512, %v14508
  %v14909 = vpack.c.b16 %v14513, %v14509
  %v14910 = vpack.c.b16 %v14514, %v14510
  %v14911 = vpack.c.b16 %v14519, %v14515
  %v14912 = vpack.c.b16 %v14520, %v14516
  %v14913 = vpack.c.b16 %v14521, %v14517
  %v14914 = vpack.c.b16 %v14522, %v14518
  %v14915 = vpack.c.b16 %v14527, %v14523
  %v14916 = vpack.c.b16 %v14528, %v14524
  %v14917 = vpack.c.b16 %v14529, %v14525
  %v14918 = vpack.c.b16 %v14530, %v14526
  %v14919 = vpack.c.b16 %v14535, %v14531
  %v14920 = vpack.c.b16 %v14536, %v14532
  %v14921 = vpack.c.b16 %v14537, %v14533
  %v14922 = vpack.c.b16 %v14538, %v14534
  %v14923 = vpack.c.b16 %v14543, %v14539
  %v14924 = vpack.c.b16 %v14544, %v14540
  %v14925 = vpack.c.b16 %v14545, %v14541
  %v14926 = vpack.c.b16 %v14546, %v14542
  %v14927 = vpack.c.b16 %v14551, %v14547
  %v14928 = vpack.c.b16 %v14552, %v14548
  %v14929 = vpack.c.b16 %v14553, %v14549
  %v14930 = vpack.c.b16 %v14554, %v14550
  %v14931 = vpack.c.b16 %v14559, %v14555
  %v14932 = vpack.c.b16 %v14560, %v14556
  %v14933 = vpack.c.b16 %v14561, %v14557
  %v14934 = vpack.c.b16 %v14562, %v14558
  %v14935 = vpack.c.b16 %v14567, %v14563
  %v14936 = vpack.c.b16 %v14568, %v14564
  %v14937 = vpack.c.b16 %v14569, %v14565
  %v14938 = vpack.c.b16 %v14570, %v14566
  %v14939 = vpack.c.b16 %v14575, %v14571
  %v14940 = vpack.c.b16 %v14576, %v14572
  %v14941 = vpack.c.b16 %v14577, %v14573
  %v14942 = vpack.c.b16 %v14578, %v14574
  %v14943 = vpack.c.b16 %v14583, %v14579
  %v14944 = vpack.c.b16 %v14584, %v14580
  %v14945 = vpack.c.b16 %v14585, %v14581
  %v14946 = vpack.c.b16 %v14586, %v14582
  %v14947 = vpack.c.b16 %v14591, %v14587
  %v14948 = vpack.c.b16 %v14592, %v14588
  %v14949 = vpack.c.b16 %v14593, %v14589
  %v14950 = vpack.c.b16 %v14594, %v14590
  %v14951 = vpack.c.b16 %v14599, %v14595
  %v14952 = vpack.c.b16 %v14600, %v14596
  %v14953 = vpack.c.b16 %v14601, %v14597
  %v14954 = vpack.c.b16 %v14602, %v14598
  %v14955 = vpack.c.b16 %v14607, %v14603
  %v14956 = vpack.c.b16 %v14608, %v14604
  %v14957 = vpack.c.b16 %v14609, %v14605
  %v14958 = vpack.c.b16 %v14610, %v14606
  %v14959 = vpack.c.b16 %v14615, %v14611
  %v14960 = vpack.c.b16 %v14616, %v14612
  %v14961 = vpack.c.b16 %v14617, %v14613
  %v14962 = vpack.c.b16 %v14618, %v14614
  %v14963 = vpack.c.b16 %v14623, %v14619
  %v14964 = vpack.c.b16 %v14624, %v14620
  %v14965 = vpack.c.b16 %v14625, %v14621
  %v14966 = vpack.c.b16 %v14626, %v14622
  %v14967 = vpack.c.b16 %v14631, %v14627
  %v14968 = vpack.c.b16 %v14632, %v14628
  %v14969 = vpack.c.b16 %v14633, %v14629
  %v14970 = vpack.c.b16 %v14634, %v14630
  %v14971 = vpack.c.b16 %v14639, %v14635
  %v14972 = vpack.c.b16 %v14640, %v14636
  %v14973 = vpack.c.b16 %v14641, %v14637
  %v14974 = vpack.c.b16 %v14642, %v14638
  %v14975 = vpack.c.b16 %v14647, %v14643
  %v14976 = vpack.c.b16 %v14648, %v14644
  %v14977 = vpack.c.b16 %v14649, %v14645
  %v14978 = vpack.c.b16 %v14650, %v14646
  %v14979 = vpack.c.b16 %v14655, %v14651
  %v14980 = vpack.c.b16 %v14656, %v14652
  %v14981 = vpack.c.b16 %v14657, %v14653
  %v14982 = vpack.c.b16 %v14658, %v14654
  %v14983 = vpack.c.b16 %v14663, %v14659
  %v14984 = vpack.c.b16 %v14664, %v14660
  %v14985 = vpack.c.b16 %v14665, %v14661
  %v14986 = vpack.c.b16 %v14666, %v14662
  %v14987 = vpack.c.b16 %v14671, %v14667
  %v14988 = vpack.c.b16 %v14672, %v14668
  %v14989 = vpack.c.b16 %v14673, %v14669
  %v14990 = vpack.c.b16 %v14674, %v14670
  %v14991 = vpack.c.b16 %v14679, %v14675
  %v14992 = vpack.c.b16 %v14680, %v14676
  %v14993 = vpack.c.b16 %v14681, %v14677
  %v14994 = vpack.c.b16 %v14682, %v14678
  %v14995 = vpack.c.b16 %v14687, %v14683
  %v14996 = vpack.c.b16 %v14688, %v14684
  %v14997 = vpack.c.b16 %v14689, %v14685
  %v14998 = vpack.c.b16 %v14690, %v14686
  %v14999 = vpack.c.b16 %v14695, %v14691
  %v15000 = vpack.c.b16 %v14696, %v14692
  %v15001 = vpack.c.b16 %v14697, %v14693
  %v15002 = vpack.c.b16 %v14698, %v14694
  %v15003 = vpack.c.b16 %v14703, %v14699
  %v15004 = vpack.c.b16 %v14704, %v14700
  %v15005 = vpack.c.b16 %v14705, %v14701
  %v15006 = vpack.c.b16 %v14706, %v14702
  %v15007 = vpack.c.b16 %v14711, %v14707
  %v15008 = vpack.c.b16 %v14712, %v14708
  %v15009 = vpack.c.b16 %v14713, %v14709
  %v15010 = vpack.c.b16 %v14714, %v14710
  %v15011 = vpack.c.b16 %v14719, %v14715
  %v15012 = vpack.c.b16 %v14720, %v14716
  %v15013 = vpack.c.b16 %v14721, %v14717
  %v15014 = vpack.c.b16 %v14722, %v14718
  %v15015 = vpack.c.b16 %v14727, %v14723
  %v15016 = vpack.c.b16 %v14728, %v14724
  %v15017 = vpack.c.b16 %v14729, %v14725
  %v15018 = vpack.c.b16 %v14730, %v14726
  %v15019 = vpack.c.b16 %v14735, %v14731
  %v15020 = vpack.c.b16 %v14736, %v14732
  %v15021 = vpack.c.b16 %v14737, %v14733
  %v15022 = vpack.c.b16 %v14738, %v14734
  %v15023 = vpack.c.b16 %v14743, %v14739
  %v15024 = vpack.c.b16 %v14744, %v14740
  %v15025 = vpack.c.b16 %v14745, %v14741
  %v15026 = vpack.c.b16 %v14746, %v14742
  %v15027 = vpack.c.b16 %v14751, %v14747
  %v15028 = vpack.c.b16 %v14752, %v14748
  %v15029 = vpack.c.b16 %v14753, %v14749
  %v15030 = vpack.c.b16 %v14754, %v14750
  %v15031 = vpack.c.b16 %v14759, %v14755
  %v15032 = vpack.c.b16 %v14760, %v14756
  %v15033 = vpack.c.b16 %v14761, %v14757
  %v15034 = vpack.c.b16 %v14762, %v14758
  %v15035 = vpack.c.b16 %v14767, %v14763
  %v15036 = vpack.c.b16 %v14768, %v14764
  %v15037 = vpack.c.b16 %v14769, %v14765
  %v15038 = vpack.c.b16 %v14770, %v14766
  %v15039 = vpack.c.b16 %v14775, %v14771
  %v15040 = vpack.c.b16 %v14776, %v14772
  %v15041 = vpack.c.b16 %v14777, %v14773
  %v15042 = vpack.c.b16 %v14778, %v14774
  %v15043 = vpack.c.b16 %v14783, %v14779
  %v15044 = vpack.c.b16 %v14784, %v14780
  %v15045 = vpack.c.b16 %v14785, %v14781
  %v15046 = vpack.c.b16 %v14786, %v14782
  %v15047 = vpack.c.b16 %v14791, %v14787
  %v15048 = vpack.c.b16 %v14792, %v14788
  %v15049 = vpack.c.b16 %v14793, %v14789
  %v15050 = vpack.c.b16 %v14794, %v14790
  %v15051 = vpack.c.b16 %v14799, %v14795
  %v15052 = vpack.c.b16 %v14800, %v14796
  %v15053 = vpack.c.b16 %v14801, %v14797
  %v15054 = vpack.c.b16 %v14802, %v14798
  %v15055 = vpack.c.b16 %v14807, %v14803
  %v15056 = vpack.c.b16 %v14808, %v14804
  %v15057 = vpack.c.b16 %v14809, %v14805
  %v15058 = vpack.c.b16 %v14810, %v14806
  %v15059 = vpack.c.b16 %v14815, %v14811
  %v15060 = vpack.c.b16 %v14816, %v14812
  %v15061 = vpack.c.b16 %v14817, %v14813
  %v15062 = vpack.c.b16 %v14818, %v14814
  %v15063 = vpack.c.b16 %v14823, %v14819
  %v15064 = vpack.c.b16 %v14824, %v14820
  %v15065 = vpack.c.b16 %v14825, %v14821
  %v15066 = vpack.c.b16 %v14826, %v14822
  %v15067 = vpack.c.b16 %v14831, %v14827
  %v15068 = vpack.c.b16 %v14832, %v14828
  %v15069 = vpack.c.b16 %v14833, %v14829
  %v15070 = vpack.c.b16 %v14834, %v14830
  %v15071 = vpack.c.b16 %v14839, %v14835
  %v15072 = vpack.c.b16 %v14840, %v14836
  %v15073 = vpack.c.b16 %v14841, %v14837
  %v15074 = vpack.c.b16 %v14842, %v14838
  %v15075 = vpack.c.b16 %v14847, %v14843
  %v15076 = vpack.c.b16 %v14848, %v14844
  %v15077 = vpack.c.b16 %v14849, %v14845
  %v15078 = vpack.c.b16 %v14850, %v14846
  %v15079 = vpack.c.b16 %v14855, %v14851
  %v15080 = vpack.c.b16 %v14856, %v14852
  %v15081 = vpack.c.b16 %v14857, %v14853
  %v15082 = vpack.c.b16 %v14858, %v14854
  %v15083 = vpack.c.b16 %v14863, %v14859
  %v15084 = vpack.c.b16 %v14864, %v14860
  %v15085 = vpack.c.b16 %v14865, %v14861
  %v15086 = vpack.c.b16 %v14866, %v14862
  %v15087 = vpack.c.b16 %v14871, %v14867
  %v15088 = vpack.c.b16 %v14872, %v14868
  %v15089 = vpack.c.b16 %v14873, %v14869
  %v15090 = vpack.c.b16 %v14874, %v14870
  %v15091 = vpack.c.b16 %v14879, %v14875
  %v15092 = vpack.c.b16 %v14880, %v14876
  %v15093 = vpack.c.b16 %v14881, %v14877
  %v15094 = vpack.c.b16 %v14882, %v14878
  %v15095 = vpack.c.b16 %v14887, %v14883
  %v15096 = vpack.c.b16 %v14888, %v14884
  %v15097 = vpack.c.b16 %v14889, %v14885
  %v15098 = vpack.c.b16 %v14890, %v14886
  %v15099 = vpack.c.b16 %v14895, %v14891
  %v15100 = vpack.c.b16 %v14896, %v14892
  %v15101 = vpack.c.b16 %v14897, %v14893
  %v15102 = vpack.c.b16 %v14898, %v14894
  %v15103 = vpack.c.b16 %v14903, %v14899
  %v15104 = vpack.c.b16 %v14904, %v14900
  %v15105 = vpack.c.b16 %v14905, %v14901
  %v15106 = vpack.c.b16 %v14906, %v14902
  %v15307 = vsel %vm9399, %v14037, 0
  %15309 = vmatprep.subr.bf16.mxu0 %v14908
  %15310 = vmatpush1.bf16.msra.mxu0 %v14907
  %15311 = vmatprep.subr.bf16.mxu0 %v14912
  %15312 = vmatpush1.bf16.msra.mxu0 %v14911
  %15313 = vmatprep.subr.bf16.mxu0 %v14916
  %15314 = vmatpush1.bf16.msra.mxu0 %v14915
  %15315 = vmatprep.subr.bf16.mxu0 %v14920
  %15316 = vmatpush1.bf16.msra.mxu0 %v14919
  %15317 = vmatprep.subr.bf16.mxu0 %v14924
  %15318 = vmatpush1.bf16.msra.mxu0 %v14923
  %15319 = vmatprep.subr.bf16.mxu0 %v14928
  %15320 = vmatpush1.bf16.msra.mxu0 %v14927
  %15321 = vmatprep.subr.bf16.mxu0 %v14932
  %15322 = vmatpush1.bf16.msra.mxu0 %v14931
  %15323 = vmatprep.subr.bf16.mxu0 %v14936
  %15324 = vmatpush1.bf16.msra.mxu0 %v14935
  %15325 = vmatprep.subr.bf16.mxu0 %v14940
  %15326 = vmatpush1.bf16.msra.mxu0 %v14939
  %15327 = vmatprep.subr.bf16.mxu0 %v14944
  %15328 = vmatpush1.bf16.msra.mxu0 %v14943
  %15329 = vmatprep.subr.bf16.mxu0 %v14948
  %15330 = vmatpush1.bf16.msra.mxu0 %v14947
  %15331 = vmatprep.subr.bf16.mxu0 %v14952
  %15332 = vmatpush1.bf16.msra.mxu0 %v14951
  %15333 = vmatprep.subr.bf16.mxu0 %v14956
  %15334 = vmatpush1.bf16.msra.mxu0 %v14955
  %15335 = vmatprep.subr.bf16.mxu0 %v14960
  %15336 = vmatpush1.bf16.msra.mxu0 %v14959
  %15337 = vmatprep.subr.bf16.mxu0 %v14964
  %15338 = vmatpush1.bf16.msra.mxu0 %v14963
  %15339 = vmatprep.subr.bf16.mxu0 %v14968
  %15340 = vmatpush1.bf16.msra.mxu0 %v14967
  %15341 = vmatprep.mubr.bf16.mxu0 %v14052
  %15342 = vmatmul.mubr.bf16.gmra.mrb[0].mxu0 %v14043
  %v15343 = vpop.f32.mrb[0].mxu0
  %v15344 = vadd.f32 %v14290, %v15343
  %v15345 = vpop.f32.mrb[0].mxu0
  %v15346 = vadd.f32 %v14294, %v15345
  %v15347 = vpop.f32.mrb[0].mxu0
  %v15348 = vadd.f32 %v14290, %v15347
  %v15349 = vpop.f32.mrb[0].mxu0
  %v15350 = vadd.f32 %v14294, %v15349
  %15351 = vdwg.mxu0
  %15352 = vmatprep.subr.bf16.mxu0 %v14972
  %15353 = vmatpush1.bf16.msra.mxu0 %v14971
  %15354 = vmatprep.subr.bf16.mxu0 %v14976
  %15355 = vmatpush1.bf16.msra.mxu0 %v14975
  %15356 = vmatprep.subr.bf16.mxu0 %v14980
  %15357 = vmatpush1.bf16.msra.mxu0 %v14979
  %15358 = vmatprep.subr.bf16.mxu0 %v14984
  %15359 = vmatpush1.bf16.msra.mxu0 %v14983
  %15360 = vmatprep.subr.bf16.mxu0 %v14988
  %15361 = vmatpush1.bf16.msra.mxu0 %v14987
  %15362 = vmatprep.subr.bf16.mxu0 %v14992
  %15363 = vmatpush1.bf16.msra.mxu0 %v14991
  %15364 = vmatprep.subr.bf16.mxu0 %v14996
  %15365 = vmatpush1.bf16.msra.mxu0 %v14995
  %15366 = vmatprep.subr.bf16.mxu0 %v15000
  %15367 = vmatpush1.bf16.msra.mxu0 %v14999
  %15368 = vmatprep.subr.bf16.mxu0 %v15004
  %15369 = vmatpush1.bf16.msra.mxu0 %v15003
  %15370 = vmatprep.subr.bf16.mxu0 %v15008
  %15371 = vmatpush1.bf16.msra.mxu0 %v15007
  %15372 = vmatprep.subr.bf16.mxu0 %v15012
  %15373 = vmatpush1.bf16.msra.mxu0 %v15011
  %15374 = vmatprep.subr.bf16.mxu0 %v15016
  %15375 = vmatpush1.bf16.msra.mxu0 %v15015
  %15376 = vmatprep.subr.bf16.mxu0 %v15020
  %15377 = vmatpush1.bf16.msra.mxu0 %v15019
  %15378 = vmatprep.subr.bf16.mxu0 %v15024
  %15379 = vmatpush1.bf16.msra.mxu0 %v15023
  %15380 = vmatprep.subr.bf16.mxu0 %v15028
  %15381 = vmatpush1.bf16.msra.mxu0 %v15027
  %15382 = vmatprep.subr.bf16.mxu0 %v15032
  %15383 = vmatpush1.bf16.msra.mxu0 %v15031
  %15384 = vmatprep.mubr.bf16.mxu0 %v14067
  %15385 = vmatmul.mubr.bf16.gmra.mrb[0].mxu0 %v14058
  %v15386 = vpop.f32.mrb[0].mxu0
  %v15387 = vadd.f32 %v15344, %v15386
  %v15388 = vpop.f32.mrb[0].mxu0
  %v15389 = vadd.f32 %v15346, %v15388
  %v15390 = vpop.f32.mrb[0].mxu0
  %v15391 = vadd.f32 %v15348, %v15390
  %v15392 = vpop.f32.mrb[0].mxu0
  %v15393 = vadd.f32 %v15350, %v15392
  %15394 = vdwg.mxu0
  %15395 = vmatprep.subr.bf16.mxu0 %v15036
  %15396 = vmatpush1.bf16.msra.mxu0 %v15035
  %15397 = vmatprep.subr.bf16.mxu0 %v15040
  %15398 = vmatpush1.bf16.msra.mxu0 %v15039
  %15399 = vmatprep.subr.bf16.mxu0 %v15044
  %15400 = vmatpush1.bf16.msra.mxu0 %v15043
  %15401 = vmatprep.subr.bf16.mxu0 %v15048
  %15402 = vmatpush1.bf16.msra.mxu0 %v15047
  %15403 = vmatprep.subr.bf16.mxu0 %v15052
  %15404 = vmatpush1.bf16.msra.mxu0 %v15051
  %15405 = vmatprep.subr.bf16.mxu0 %v15056
  %15406 = vmatpush1.bf16.msra.mxu0 %v15055
  %15407 = vmatprep.subr.bf16.mxu0 %v15060
  %15408 = vmatpush1.bf16.msra.mxu0 %v15059
  %15409 = vmatprep.subr.bf16.mxu0 %v15064
  %15410 = vmatpush1.bf16.msra.mxu0 %v15063
  %15411 = vmatprep.subr.bf16.mxu0 %v15068
  %15412 = vmatpush1.bf16.msra.mxu0 %v15067
  %15413 = vmatprep.subr.bf16.mxu0 %v15072
  %15414 = vmatpush1.bf16.msra.mxu0 %v15071
  %15415 = vmatprep.subr.bf16.mxu0 %v15076
  %15416 = vmatpush1.bf16.msra.mxu0 %v15075
  %15417 = vmatprep.subr.bf16.mxu0 %v15080
  %15418 = vmatpush1.bf16.msra.mxu0 %v15079
  %15419 = vmatprep.subr.bf16.mxu0 %v15084
  %15420 = vmatpush1.bf16.msra.mxu0 %v15083
  %15421 = vmatprep.subr.bf16.mxu0 %v15088
  %15422 = vmatpush1.bf16.msra.mxu0 %v15087
  %15423 = vmatprep.subr.bf16.mxu0 %v15092
  %15424 = vmatpush1.bf16.msra.mxu0 %v15091
  %15425 = vmatprep.subr.bf16.mxu0 %v15096
  %15426 = vmatpush1.bf16.msra.mxu0 %v15095
  %15427 = vmatprep.mubr.bf16.mxu0 %v14083
  %15428 = vmatmul.mubr.bf16.gmra.mrb[0].mxu0 %v14074
  %v15429 = vpop.f32.mrb[0].mxu0
  %v15430 = vadd.f32 %v15387, %v15429
  %v15431 = vpop.f32.mrb[0].mxu0
  %v15432 = vadd.f32 %v15389, %v15431
  %v15433 = vpop.f32.mrb[0].mxu0
  %v15434 = vadd.f32 %v15391, %v15433
  %v15435 = vpop.f32.mrb[0].mxu0
  %v15436 = vadd.f32 %v15393, %v15435
  %15437 = vdwg.mxu0
  %15438 = vmatprep.subr.bf16.mxu0 %v15100
  %15439 = vmatpush1.bf16.msra.mxu0 %v15099
  %15440 = vmatprep.subr.bf16.mxu0 %v15104
  %15441 = vmatpush1.bf16.msra.mxu0 %v15103
  %15442 = vmatprep.subr.bf16.mxu0 0
  %15443 = vmatpush1.bf16.msra.mxu0 0
  %15444 = vmatprep.subr.bf16.mxu0 0
  %15445 = vmatpush1.bf16.msra.mxu0 0
  %15446 = vmatprep.subr.bf16.mxu0 0
  %15447 = vmatpush1.bf16.msra.mxu0 0
  %15448 = vmatprep.subr.bf16.mxu0 0
  %15449 = vmatpush1.bf16.msra.mxu0 0
  %15450 = vmatprep.subr.bf16.mxu0 0
  %15451 = vmatpush1.bf16.msra.mxu0 0
  %15452 = vmatprep.subr.bf16.mxu0 0
  %15453 = vmatpush1.bf16.msra.mxu0 0
  %15454 = vmatprep.subr.bf16.mxu0 0
  %15455 = vmatpush1.bf16.msra.mxu0 0
  %15456 = vmatprep.subr.bf16.mxu0 0
  %15457 = vmatpush1.bf16.msra.mxu0 0
  %15458 = vmatprep.subr.bf16.mxu0 0
  %15459 = vmatpush1.bf16.msra.mxu0 0
  %15460 = vmatprep.subr.bf16.mxu0 0
  %15461 = vmatpush1.bf16.msra.mxu0 0
  %15462 = vmatprep.subr.bf16.mxu0 0
  %15463 = vmatpush1.bf16.msra.mxu0 0
  %15464 = vmatprep.subr.bf16.mxu0 0
  %15465 = vmatpush1.bf16.msra.mxu0 0
  %15466 = vmatprep.subr.bf16.mxu0 0
  %15467 = vmatpush1.bf16.msra.mxu0 0
  %15468 = vmatprep.subr.bf16.mxu0 0
  %15469 = vmatpush1.bf16.msra.mxu0 0
  %15470 = vmatprep.mubr.bf16.mxu0 0
  %15471 = vmatmul.mubr.bf16.gmra.mrb[0].mxu0 %v15307
  %v15472 = vpop.f32.mrb[0].mxu0
  %v15473 = vadd.f32 %v15430, %v15472
  %v15474 = vpop.f32.mrb[0].mxu0
  %v15475 = vadd.f32 %v15432, %v15474
  %v15476 = vpop.f32.mrb[0].mxu0
  %v15477 = vadd.f32 %v15434, %v15476
  %v15478 = vpop.f32.mrb[0].mxu0
  %v15479 = vadd.f32 %v15436, %v15478
  %15480 = vdwg.mxu0
  %15481 = vmatprep.subr.bf16.mxu0 %v14910
  %15482 = vmatpush1.bf16.msra.mxu0 %v14909
  %15483 = vmatprep.subr.bf16.mxu0 %v14914
  %15484 = vmatpush1.bf16.msra.mxu0 %v14913
  %15485 = vmatprep.subr.bf16.mxu0 %v14918
  %15486 = vmatpush1.bf16.msra.mxu0 %v14917
  %15487 = vmatprep.subr.bf16.mxu0 %v14922
  %15488 = vmatpush1.bf16.msra.mxu0 %v14921
  %15489 = vmatprep.subr.bf16.mxu0 %v14926
  %15490 = vmatpush1.bf16.msra.mxu0 %v14925
  %15491 = vmatprep.subr.bf16.mxu0 %v14930
  %15492 = vmatpush1.bf16.msra.mxu0 %v14929
  %15493 = vmatprep.subr.bf16.mxu0 %v14934
  %15494 = vmatpush1.bf16.msra.mxu0 %v14933
  %15495 = vmatprep.subr.bf16.mxu0 %v14938
  %15496 = vmatpush1.bf16.msra.mxu0 %v14937
  %15497 = vmatprep.subr.bf16.mxu0 %v14942
  %15498 = vmatpush1.bf16.msra.mxu0 %v14941
  %15499 = vmatprep.subr.bf16.mxu0 %v14946
  %15500 = vmatpush1.bf16.msra.mxu0 %v14945
  %15501 = vmatprep.subr.bf16.mxu0 %v14950
  %15502 = vmatpush1.bf16.msra.mxu0 %v14949
  %15503 = vmatprep.subr.bf16.mxu0 %v14954
  %15504 = vmatpush1.bf16.msra.mxu0 %v14953
  %15505 = vmatprep.subr.bf16.mxu0 %v14958
  %15506 = vmatpush1.bf16.msra.mxu0 %v14957
  %15507 = vmatprep.subr.bf16.mxu0 %v14962
  %15508 = vmatpush1.bf16.msra.mxu0 %v14961
  %15509 = vmatprep.subr.bf16.mxu0 %v14966
  %15510 = vmatpush1.bf16.msra.mxu0 %v14965
  %15511 = vmatprep.subr.bf16.mxu0 %v14970
  %15512 = vmatpush1.bf16.msra.mxu0 %v14969
  %15513 = vmatprep.mubr.bf16.mxu0 %v14052
  %15514 = vmatmul.mubr.bf16.gmra.mrb[0].mxu0 %v14043
  %v15515 = vpop.f32.mrb[0].mxu0
  %v15516 = vadd.f32 %v14298, %v15515
  %v15517 = vpop.f32.mrb[0].mxu0
  %v15518 = vadd.f32 %v14302, %v15517
  %v15519 = vpop.f32.mrb[0].mxu0
  %v15520 = vadd.f32 %v14298, %v15519
  %v15521 = vpop.f32.mrb[0].mxu0
  %v15522 = vadd.f32 %v14302, %v15521
  %15523 = vdwg.mxu0
  %15524 = vmatprep.subr.bf16.mxu0 %v14974
  %15525 = vmatpush1.bf16.msra.mxu0 %v14973
  %15526 = vmatprep.subr.bf16.mxu0 %v14978
  %15527 = vmatpush1.bf16.msra.mxu0 %v14977
  %15528 = vmatprep.subr.bf16.mxu0 %v14982
  %15529 = vmatpush1.bf16.msra.mxu0 %v14981
  %15530 = vmatprep.subr.bf16.mxu0 %v14986
  %15531 = vmatpush1.bf16.msra.mxu0 %v14985
  %15532 = vmatprep.subr.bf16.mxu0 %v14990
  %15533 = vmatpush1.bf16.msra.mxu0 %v14989
  %15534 = vmatprep.subr.bf16.mxu0 %v14994
  %15535 = vmatpush1.bf16.msra.mxu0 %v14993
  %15536 = vmatprep.subr.bf16.mxu0 %v14998
  %15537 = vmatpush1.bf16.msra.mxu0 %v14997
  %15538 = vmatprep.subr.bf16.mxu0 %v15002
  %15539 = vmatpush1.bf16.msra.mxu0 %v15001
  %15540 = vmatprep.subr.bf16.mxu0 %v15006
  %15541 = vmatpush1.bf16.msra.mxu0 %v15005
  %15542 = vmatprep.subr.bf16.mxu0 %v15010
  %15543 = vmatpush1.bf16.msra.mxu0 %v15009
  %15544 = vmatprep.subr.bf16.mxu0 %v15014
  %15545 = vmatpush1.bf16.msra.mxu0 %v15013
  %15546 = vmatprep.subr.bf16.mxu0 %v15018
  %15547 = vmatpush1.bf16.msra.mxu0 %v15017
  %15548 = vmatprep.subr.bf16.mxu0 %v15022
  %15549 = vmatpush1.bf16.msra.mxu0 %v15021
  %15550 = vmatprep.subr.bf16.mxu0 %v15026
  %15551 = vmatpush1.bf16.msra.mxu0 %v15025
  %15552 = vmatprep.subr.bf16.mxu0 %v15030
  %15553 = vmatpush1.bf16.msra.mxu0 %v15029
  %15554 = vmatprep.subr.bf16.mxu0 %v15034
  %15555 = vmatpush1.bf16.msra.mxu0 %v15033
  %15556 = vmatprep.mubr.bf16.mxu0 %v14067
  %15557 = vmatmul.mubr.bf16.gmra.mrb[0].mxu0 %v14058
  %v15558 = vpop.f32.mrb[0].mxu0
  %v15559 = vadd.f32 %v15516, %v15558
  %v15560 = vpop.f32.mrb[0].mxu0
  %v15561 = vadd.f32 %v15518, %v15560
  %v15562 = vpop.f32.mrb[0].mxu0
  %v15563 = vadd.f32 %v15520, %v15562
  %v15564 = vpop.f32.mrb[0].mxu0
  %v15565 = vadd.f32 %v15522, %v15564
  %15566 = vdwg.mxu0
  %15567 = vmatprep.subr.bf16.mxu0 %v15038
  %15568 = vmatpush1.bf16.msra.mxu0 %v15037
  %15569 = vmatprep.subr.bf16.mxu0 %v15042
  %15570 = vmatpush1.bf16.msra.mxu0 %v15041
  %15571 = vmatprep.subr.bf16.mxu0 %v15046
  %15572 = vmatpush1.bf16.msra.mxu0 %v15045
  %15573 = vmatprep.subr.bf16.mxu0 %v15050
  %15574 = vmatpush1.bf16.msra.mxu0 %v15049
  %15575 = vmatprep.subr.bf16.mxu0 %v15054
  %15576 = vmatpush1.bf16.msra.mxu0 %v15053
  %15577 = vmatprep.subr.bf16.mxu0 %v15058
  %15578 = vmatpush1.bf16.msra.mxu0 %v15057
  %15579 = vmatprep.subr.bf16.mxu0 %v15062
  %15580 = vmatpush1.bf16.msra.mxu0 %v15061
  %15581 = vmatprep.subr.bf16.mxu0 %v15066
  %15582 = vmatpush1.bf16.msra.mxu0 %v15065
  %15583 = vmatprep.subr.bf16.mxu0 %v15070
  %15584 = vmatpush1.bf16.msra.mxu0 %v15069
  %15585 = vmatprep.subr.bf16.mxu0 %v15074
  %15586 = vmatpush1.bf16.msra.mxu0 %v15073
  %15587 = vmatprep.subr.bf16.mxu0 %v15078
  %15588 = vmatpush1.bf16.msra.mxu0 %v15077
  %15589 = vmatprep.subr.bf16.mxu0 %v15082
  %15590 = vmatpush1.bf16.msra.mxu0 %v15081
  %15591 = vmatprep.subr.bf16.mxu0 %v15086
  %15592 = vmatpush1.bf16.msra.mxu0 %v15085
  %15593 = vmatprep.subr.bf16.mxu0 %v15090
  %15594 = vmatpush1.bf16.msra.mxu0 %v15089
  %15595 = vmatprep.subr.bf16.mxu0 %v15094
  %15596 = vmatpush1.bf16.msra.mxu0 %v15093
  %15597 = vmatprep.subr.bf16.mxu0 %v15098
  %15598 = vmatpush1.bf16.msra.mxu0 %v15097
  %15599 = vmatprep.mubr.bf16.mxu0 %v14083
  %15600 = vmatmul.mubr.bf16.gmra.mrb[0].mxu0 %v14074
  %v15601 = vpop.f32.mrb[0].mxu0
  %v15602 = vadd.f32 %v15559, %v15601
  %v15603 = vpop.f32.mrb[0].mxu0
  %v15604 = vadd.f32 %v15561, %v15603
  %v15605 = vpop.f32.mrb[0].mxu0
  %v15606 = vadd.f32 %v15563, %v15605
  %v15607 = vpop.f32.mrb[0].mxu0
  %v15608 = vadd.f32 %v15565, %v15607
  %15609 = vdwg.mxu0
  %15610 = vmatprep.subr.bf16.mxu0 %v15102
  %15611 = vmatpush1.bf16.msra.mxu0 %v15101
  %15612 = vmatprep.subr.bf16.mxu0 %v15106
  %15613 = vmatpush1.bf16.msra.mxu0 %v15105
  %15614 = vmatprep.subr.bf16.mxu0 0
  %15615 = vmatpush1.bf16.msra.mxu0 0
  %15616 = vmatprep.subr.bf16.mxu0 0
  %15617 = vmatpush1.bf16.msra.mxu0 0
  %15618 = vmatprep.subr.bf16.mxu0 0
  %15619 = vmatpush1.bf16.msra.mxu0 0
  %15620 = vmatprep.subr.bf16.mxu0 0
  %15621 = vmatpush1.bf16.msra.mxu0 0
  %15622 = vmatprep.subr.bf16.mxu0 0
  %15623 = vmatpush1.bf16.msra.mxu0 0
  %15624 = vmatprep.subr.bf16.mxu0 0
  %15625 = vmatpush1.bf16.msra.mxu0 0
  %15626 = vmatprep.subr.bf16.mxu0 0
  %15627 = vmatpush1.bf16.msra.mxu0 0
  %15628 = vmatprep.subr.bf16.mxu0 0
  %15629 = vmatpush1.bf16.msra.mxu0 0
  %15630 = vmatprep.subr.bf16.mxu0 0
  %15631 = vmatpush1.bf16.msra.mxu0 0
  %15632 = vmatprep.subr.bf16.mxu0 0
  %15633 = vmatpush1.bf16.msra.mxu0 0
  %15634 = vmatprep.subr.bf16.mxu0 0
  %15635 = vmatpush1.bf16.msra.mxu0 0
  %15636 = vmatprep.subr.bf16.mxu0 0
  %15637 = vmatpush1.bf16.msra.mxu0 0
  %15638 = vmatprep.subr.bf16.mxu0 0
  %15639 = vmatpush1.bf16.msra.mxu0 0
  %15640 = vmatprep.subr.bf16.mxu0 0
  %15641 = vmatpush1.bf16.msra.mxu0 0
  %15642 = vmatprep.mubr.bf16.mxu0 0
  %15643 = vmatmul.mubr.bf16.gmra.mrb[0].mxu0 %v15307
  %v15644 = vpop.f32.mrb[0].mxu0
  %v15645 = vadd.f32 %v15602, %v15644
  %v15646 = vpop.f32.mrb[0].mxu0
  %v15647 = vadd.f32 %v15604, %v15646
  %v15648 = vpop.f32.mrb[0].mxu0
  %v15649 = vadd.f32 %v15606, %v15648
  %v15650 = vpop.f32.mrb[0].mxu0
  %v15651 = vadd.f32 %v15608, %v15650
  %15652 = vdwg.mxu0
  %v15653 = vmax.f32 %v15473, 0.0
  %v15654 = vmax.f32 %v15475, 0.0
  %v15655 = vmax.f32 %v15645, 0.0
  %v15656 = vmax.f32 %v15647, 0.0
  %v15657 = vmax.f32 %v15477, 0.0
  %v15658 = vmax.f32 %v15479, 0.0
  %v15659 = vmax.f32 %v15649, 0.0
  %v15660 = vmax.f32 %v15651, 0.0
  %v15661 = vpack.c.bf16 %v15657, %v15653
  %v15662 = vpack.c.bf16 %v15658, %v15654
  %v15663 = vpack.c.bf16 %v15659, %v15655
  %v15664 = vpack.c.bf16 %v15660, %v15656
  %v15665 = vld [vmem:[%s7] sm:$0xf]
  %v15666 = vld [vmem:[%s7 + $0x4] sm:$0xf]
  %v15667 = vld [vmem:[%s7 + $0x8] sm:$0xf]
  %v15668 = vld [vmem:[%s7 + $0xc] sm:$0xf]
  %v15669 = vld [vmem:[%s7 + $0x10] sm:$0xf]
  %v15670 = vld [vmem:[%s7 + $0x14] sm:$0xf]
  %v15671 = vld [vmem:[%s7 + $0x18] sm:$0xf]
  %v15672 = vld [vmem:[%s7 + $0x1c] sm:$0xf]
  %v15673 = vld [vmem:[%s7 + $0x20] sm:$0xf]
  %v15674 = vld [vmem:[%s7 + $0x24] sm:$0xf]
  %v15675 = vld [vmem:[%s7 + $0x28] sm:$0xf]
  %v15676 = vld [vmem:[%s7 + $0x2c] sm:$0xf]
  %v15677 = vld [vmem:[%s7 + $0x30] sm:$0xf]
  %v15678 = vld [vmem:[%s7 + $0x34] sm:$0xf]
  %v15679 = vld [vmem:[%s7 + $0x38] sm:$0xf]
  %v15680 = vld [vmem:[%s7 + $0x3c] sm:$0xf]
  %v15681 = vld [vmem:[%s7 + $0x40] sm:$0xf]
  %v15682 = vld [vmem:[%s7 + $0x44] sm:$0xf]
  %v15683 = vld [vmem:[%s7 + $0x48] sm:$0xf]
  %v15684 = vld [vmem:[%s7 + $0x4c] sm:$0xf]
  %v15685 = vld [vmem:[%s7 + $0x50] sm:$0xf]
  %v15686 = vld [vmem:[%s7 + $0x54] sm:$0xf]
  %v15687 = vld [vmem:[%s7 + $0x58] sm:$0xf]
  %v15688 = vld [vmem:[%s7 + $0x5c] sm:$0xf]
  %v15689 = vld [vmem:[%s7 + $0x60] sm:$0xf]
  %v15690 = vld [vmem:[%s7 + $0x64] sm:$0xf]
  %v15691 = vld [vmem:[%s7 + $0x68] sm:$0xf]
  %v15692 = vld [vmem:[%s7 + $0x6c] sm:$0xf]
  %v15693 = vld [vmem:[%s7 + $0x70] sm:$0xf]
  %v15694 = vld [vmem:[%s7 + $0x74] sm:$0xf]
  %v15695 = vld [vmem:[%s7 + $0x78] sm:$0xf]
  %v15696 = vld [vmem:[%s7 + $0x7c] sm:$0xf]
  %v15697 = vld [vmem:[%s7 + $0x80] sm:$0xf]
  %v15698 = vld [vmem:[%s7 + $0x84] sm:$0xf]
  %v15699 = vld [vmem:[%s7 + $0x88] sm:$0xf]
  %v15700 = vld [vmem:[%s7 + $0x8c] sm:$0xf]
  %v15701 = vld [vmem:[%s7 + $0x90] sm:$0xf]
  %v15702 = vld [vmem:[%s7 + $0x94] sm:$0xf]
  %v15703 = vld [vmem:[%s7 + $0x98] sm:$0xf]
  %v15704 = vld [vmem:[%s7 + $0x9c] sm:$0xf]
  %v15705 = vld [vmem:[%s7 + $0xa0] sm:$0xf]
  %v15706 = vld [vmem:[%s7 + $0xa4] sm:$0xf]
  %v15707 = vld [vmem:[%s7 + $0xa8] sm:$0xf]
  %v15708 = vld [vmem:[%s7 + $0xac] sm:$0xf]
  %v15709 = vld [vmem:[%s7 + $0xb0] sm:$0xf]
  %v15710 = vld [vmem:[%s7 + $0xb4] sm:$0xf]
  %v15711 = vld [vmem:[%s7 + $0xb8] sm:$0xf]
  %v15712 = vld [vmem:[%s7 + $0xbc] sm:$0xf]
  %v15713 = vld [vmem:[%s7 + $0xc0] sm:$0xf]
  %v15714 = vld [vmem:[%s7 + $0xc4] sm:$0xf]
  %v15715 = vld [vmem:[%s7 + $0xc8] sm:$0xf]
  %v15716 = vld [vmem:[%s7 + $0xcc] sm:$0xf]
  %v15717 = vld [vmem:[%s7 + $0xd0] sm:$0xf]
  %v15718 = vld [vmem:[%s7 + $0xd4] sm:$0xf]
  %v15719 = vld [vmem:[%s7 + $0xd8] sm:$0xf]
  %v15720 = vld [vmem:[%s7 + $0xdc] sm:$0xf]
  %v15721 = vld [vmem:[%s7 + $0xe0] sm:$0xf]
  %v15722 = vld [vmem:[%s7 + $0xe4] sm:$0xf]
  %v15723 = vld [vmem:[%s7 + $0xe8] sm:$0xf]
  %v15724 = vld [vmem:[%s7 + $0xec] sm:$0xf]
  %v15725 = vld [vmem:[%s7 + $0xf0] sm:$0xf]
  %v15726 = vld [vmem:[%s7 + $0xf4] sm:$0xf]
  %v15727 = vld [vmem:[%s7 + $0xf8] sm:$0x3]
  %v15728 = vld [vmem:[%s8] sm:$0x1]
  %v15730 = vlaneseq
  %v15731 = vshrl.u32 %v15730, 7
  %v15732 = vsub.s32 0, %v15731
  %v15733 = vrot.slane %v15728, %v15732
  %v15798 = vunpack.c.l.b16 %v15665
  %v15799 = vunpack.c.l.b16 %v15666
  %v15800 = vunpack.c.l.b16 %v15667
  %v15801 = vunpack.c.l.b16 %v15668
  %v15802 = vunpack.c.l.b16 %v15669
  %v15803 = vunpack.c.l.b16 %v15670
  %v15804 = vunpack.c.l.b16 %v15671
  %v15805 = vunpack.c.l.b16 %v15672
  %v15806 = vunpack.c.l.b16 %v15673
  %v15807 = vunpack.c.l.b16 %v15674
  %v15808 = vunpack.c.l.b16 %v15675
  %v15809 = vunpack.c.l.b16 %v15676
  %v15810 = vunpack.c.l.b16 %v15677
  %v15811 = vunpack.c.l.b16 %v15678
  %v15812 = vunpack.c.l.b16 %v15679
  %v15813 = vunpack.c.l.b16 %v15680
  %v15814 = vunpack.c.l.b16 %v15681
  %v15815 = vunpack.c.l.b16 %v15682
  %v15816 = vunpack.c.l.b16 %v15683
  %v15817 = vunpack.c.l.b16 %v15684
  %v15818 = vunpack.c.l.b16 %v15685
  %v15819 = vunpack.c.l.b16 %v15686
  %v15820 = vunpack.c.l.b16 %v15687
  %v15821 = vunpack.c.l.b16 %v15688
  %v15822 = vunpack.c.l.b16 %v15689
  %v15823 = vunpack.c.l.b16 %v15690
  %v15824 = vunpack.c.l.b16 %v15691
  %v15825 = vunpack.c.l.b16 %v15692
  %v15826 = vunpack.c.l.b16 %v15693
  %v15827 = vunpack.c.l.b16 %v15694
  %v15828 = vunpack.c.l.b16 %v15695
  %v15829 = vunpack.c.l.b16 %v15696
  %v15830 = vunpack.c.l.b16 %v15697
  %v15831 = vunpack.c.l.b16 %v15698
  %v15832 = vunpack.c.l.b16 %v15699
  %v15833 = vunpack.c.l.b16 %v15700
  %v15834 = vunpack.c.l.b16 %v15701
  %v15835 = vunpack.c.l.b16 %v15702
  %v15836 = vunpack.c.l.b16 %v15703
  %v15837 = vunpack.c.l.b16 %v15704
  %v15838 = vunpack.c.l.b16 %v15705
  %v15839 = vunpack.c.l.b16 %v15706
  %v15840 = vunpack.c.l.b16 %v15707
  %v15841 = vunpack.c.l.b16 %v15708
  %v15842 = vunpack.c.l.b16 %v15709
  %v15843 = vunpack.c.l.b16 %v15710
  %v15844 = vunpack.c.l.b16 %v15711
  %v15845 = vunpack.c.l.b16 %v15712
  %v15846 = vunpack.c.l.b16 %v15713
  %v15847 = vunpack.c.l.b16 %v15714
  %v15848 = vunpack.c.l.b16 %v15715
  %v15849 = vunpack.c.l.b16 %v15716
  %v15850 = vunpack.c.l.b16 %v15717
  %v15851 = vunpack.c.l.b16 %v15718
  %v15852 = vunpack.c.l.b16 %v15719
  %v15853 = vunpack.c.l.b16 %v15720
  %v15854 = vunpack.c.l.b16 %v15721
  %v15855 = vunpack.c.l.b16 %v15722
  %v15856 = vunpack.c.l.b16 %v15723
  %v15857 = vunpack.c.l.b16 %v15724
  %v15858 = vunpack.c.l.b16 %v15725
  %v15859 = vunpack.c.l.b16 %v15726
  %v15860 = vunpack.c.l.b16 %v15727
  %v15861 = vpack.c.b16 %v15799, %v15798
  %v15862 = vpack.c.b16 %v15801, %v15800
  %v15863 = vpack.c.b16 %v15803, %v15802
  %v15864 = vpack.c.b16 %v15805, %v15804
  %v15865 = vpack.c.b16 %v15807, %v15806
  %v15866 = vpack.c.b16 %v15809, %v15808
  %v15867 = vpack.c.b16 %v15811, %v15810
  %v15868 = vpack.c.b16 %v15813, %v15812
  %v15869 = vpack.c.b16 %v15815, %v15814
  %v15870 = vpack.c.b16 %v15817, %v15816
  %v15871 = vpack.c.b16 %v15819, %v15818
  %v15872 = vpack.c.b16 %v15821, %v15820
  %v15873 = vpack.c.b16 %v15823, %v15822
  %v15874 = vpack.c.b16 %v15825, %v15824
  %v15875 = vpack.c.b16 %v15827, %v15826
  %v15876 = vpack.c.b16 %v15829, %v15828
  %v15877 = vpack.c.b16 %v15831, %v15830
  %v15878 = vpack.c.b16 %v15833, %v15832
  %v15879 = vpack.c.b16 %v15835, %v15834
  %v15880 = vpack.c.b16 %v15837, %v15836
  %v15881 = vpack.c.b16 %v15839, %v15838
  %v15882 = vpack.c.b16 %v15841, %v15840
  %v15883 = vpack.c.b16 %v15843, %v15842
  %v15884 = vpack.c.b16 %v15845, %v15844
  %v15885 = vpack.c.b16 %v15847, %v15846
  %v15886 = vpack.c.b16 %v15849, %v15848
  %v15887 = vpack.c.b16 %v15851, %v15850
  %v15888 = vpack.c.b16 %v15853, %v15852
  %v15889 = vpack.c.b16 %v15855, %v15854
  %v15890 = vpack.c.b16 %v15857, %v15856
  %v15891 = vpack.c.b16 %v15859, %v15858
  %v15892 = vpack.c.b16 %v15860, %v15860
  %v15925 = vsel %vm12524, %v15664, 0
  %v15928 = vsel %vm1526, %v15892, 0
  %15930 = vmatprep.subr.bf16.mxu0 0
  %15931 = vmatpush1.bf16.msra.mxu0 %v15861
  %15932 = vmatprep.subr.bf16.mxu0 0
  %15933 = vmatpush1.bf16.msra.mxu0 %v15862
  %15934 = vmatprep.subr.bf16.mxu0 0
  %15935 = vmatpush1.bf16.msra.mxu0 %v15863
  %15936 = vmatprep.subr.bf16.mxu0 0
  %15937 = vmatpush1.bf16.msra.mxu0 %v15864
  %15938 = vmatprep.subr.bf16.mxu0 0
  %15939 = vmatpush1.bf16.msra.mxu0 %v15865
  %15940 = vmatprep.subr.bf16.mxu0 0
  %15941 = vmatpush1.bf16.msra.mxu0 %v15866
  %15942 = vmatprep.subr.bf16.mxu0 0
  %15943 = vmatpush1.bf16.msra.mxu0 %v15867
  %15944 = vmatprep.subr.bf16.mxu0 0
  %15945 = vmatpush1.bf16.msra.mxu0 %v15868
  %15946 = vmatprep.subr.bf16.mxu0 0
  %15947 = vmatpush1.bf16.msra.mxu0 %v15869
  %15948 = vmatprep.subr.bf16.mxu0 0
  %15949 = vmatpush1.bf16.msra.mxu0 %v15870
  %15950 = vmatprep.subr.bf16.mxu0 0
  %15951 = vmatpush1.bf16.msra.mxu0 %v15871
  %15952 = vmatprep.subr.bf16.mxu0 0
  %15953 = vmatpush1.bf16.msra.mxu0 %v15872
  %15954 = vmatprep.subr.bf16.mxu0 0
  %15955 = vmatpush1.bf16.msra.mxu0 %v15873
  %15956 = vmatprep.subr.bf16.mxu0 0
  %15957 = vmatpush1.bf16.msra.mxu0 %v15874
  %15958 = vmatprep.subr.bf16.mxu0 0
  %15959 = vmatpush1.bf16.msra.mxu0 %v15875
  %15960 = vmatprep.subr.bf16.mxu0 0
  %15961 = vmatpush1.bf16.msra.mxu0 %v15876
  %15962 = vmatprep.mubr.bf16.mxu0 %v15662
  %15963 = vmatmul.mubr.bf16.gmra.mrb[0].mxu0 %v15661
  %v15964 = vpop.f32.mrb[0].mxu0
  %v15965 = vadd.f32 %v15733, %v15964
  %v15966 = vpop.f32.mrb[0].mxu0
  %v15967 = vpop.f32.mrb[0].mxu0
  %v15968 = vadd.f32 %v15733, %v15967
  %v15969 = vpop.f32.mrb[0].mxu0
  %15970 = vdwg.mxu0
  %15971 = vmatprep.subr.bf16.mxu0 0
  %15972 = vmatpush1.bf16.msra.mxu0 %v15877
  %15973 = vmatprep.subr.bf16.mxu0 0
  %15974 = vmatpush1.bf16.msra.mxu0 %v15878
  %15975 = vmatprep.subr.bf16.mxu0 0
  %15976 = vmatpush1.bf16.msra.mxu0 %v15879
  %15977 = vmatprep.subr.bf16.mxu0 0
  %15978 = vmatpush1.bf16.msra.mxu0 %v15880
  %15979 = vmatprep.subr.bf16.mxu0 0
  %15980 = vmatpush1.bf16.msra.mxu0 %v15881
  %15981 = vmatprep.subr.bf16.mxu0 0
  %15982 = vmatpush1.bf16.msra.mxu0 %v15882
  %15983 = vmatprep.subr.bf16.mxu0 0
  %15984 = vmatpush1.bf16.msra.mxu0 %v15883
  %15985 = vmatprep.subr.bf16.mxu0 0
  %15986 = vmatpush1.bf16.msra.mxu0 %v15884
  %15987 = vmatprep.subr.bf16.mxu0 0
  %15988 = vmatpush1.bf16.msra.mxu0 %v15885
  %15989 = vmatprep.subr.bf16.mxu0 0
  %15990 = vmatpush1.bf16.msra.mxu0 %v15886
  %15991 = vmatprep.subr.bf16.mxu0 0
  %15992 = vmatpush1.bf16.msra.mxu0 %v15887
  %15993 = vmatprep.subr.bf16.mxu0 0
  %15994 = vmatpush1.bf16.msra.mxu0 %v15888
  %15995 = vmatprep.subr.bf16.mxu0 0
  %15996 = vmatpush1.bf16.msra.mxu0 %v15889
  %15997 = vmatprep.subr.bf16.mxu0 0
  %15998 = vmatpush1.bf16.msra.mxu0 %v15890
  %15999 = vmatprep.subr.bf16.mxu0 0
  %16000 = vmatpush1.bf16.msra.mxu0 %v15891
  %16001 = vmatprep.subr.bf16.mxu0 0
  %16002 = vmatpush1.bf16.msra.mxu0 %v15928
  %16003 = vmatprep.mubr.bf16.mxu0 %v15925
  %16004 = vmatmul.mubr.bf16.gmra.mrb[0].mxu0 %v15663
  %v16005 = vpop.f32.mrb[0].mxu0
  %v16006 = vadd.f32 %v15965, %v16005
  %v16007 = vpop.f32.mrb[0].mxu0
  %v16008 = vpop.f32.mrb[0].mxu0
  %v16009 = vadd.f32 %v15968, %v16008
  %v16010 = vpop.f32.mrb[0].mxu0
  %16011 = vdwg.mxu0
  %16012 = vst [vmem:[%s9] sm:$0xff] %v16006
  %16013 = vst [vmem:[%s9 + $0x8] sm:$0xff] %v16009
  // Predicated region
  $region38: #{net_forward.1} parent=0 // pred_check
    _
  $region39: #{net_forward.1} parent=0 // pred_check_branch
    %16015 = sbr.rel (0) target = $region41
  $region40: #{net_forward.1} parent=0 // pred_region
    _
  $region41: #{net_forward.1} parent=0 // pred_fallthru
    _
  // Predicated region
  $region42: #{net_forward.1} parent=0 // pred_check
    _
  $region43: #{net_forward.1} parent=0 // pred_check_branch
    %16017 = sbr.rel (0) target = $region45
  $region44: #{net_forward.1} parent=0 // pred_region
    _
  $region45: #{net_forward.1} parent=0 // pred_fallthru
    _

</llo_original>
